<compile_context>
chip_gen: v5e
topology: v5e:2x2
jax: 0.10.0
libtpu: 0.0.40
codegen_flags: <defaults>
</compile_context>

<pallas_src>
import functools

import jax
import jax.numpy as jnp
import numpy as np
from jax.experimental import pallas as pl
from jax.experimental.pallas import tpu as pltpu


# --------------------------------------------------------------------------
# Fused Pallas kernel: all 5 layers for one batch sample
# --------------------------------------------------------------------------
def _disc_kernel(x_ref, m1_ref, w1_ref, b1_ref,
                 w2_ref, b2_ref, sel2_ref, m2_ref,
                 w3_ref, b3_ref, sel3_ref,
                 w4_ref, b4_ref, w5_ref, b5_ref,
                 out_ref, *, wp1, wp2):
    f32 = jnp.float32

    # ---- layer 1: Conv2d(1, C, 1x1) + ReLU  (VPU broadcast FMA) ------------
    # x_ref: (P1, 1) zero-padded, flattened image.  mask1 zeroes the pad ring
    # so it matches the zero-padding of ReLU(layer1) that layer 2 expects.
    a1 = jnp.maximum(x_ref[...] * w1_ref[...] + b1_ref[...], 0.0) * m1_ref[...]

    # ---- layer 2: Conv2d(C, C/2, 5x5, stride 2, pad 2) + ReLU ---------------
    # One bf16 MXU matmul against tap-concatenated weights, 25 static
    # shift-slice adds, then a 0/1 selection matmul that picks the stride-2
    # output rows and scatters them into layer 3's zero-padded grid.
    c2 = jnp.dot(a1.astype(jnp.bfloat16), w2_ref[...],
                 preferred_element_type=f32)                   # (P1, 25*C2)
    r2 = sel2_ref.shape[1]
    co2 = b2_ref.shape[1]
    d2 = c2[0:r2, 0:co2]
    for t in range(1, 25):
        i, j = divmod(t, 5)
        s = i * wp1 + j
        d2 = d2 + c2[s:s + r2, t * co2:(t + 1) * co2]
    a2 = jnp.dot(sel2_ref[...], d2, preferred_element_type=f32)  # (P2, C2)
    a2 = jnp.maximum(a2 + b2_ref[...], 0.0) * m2_ref[...]

    # ---- layer 3: Conv2d(C/2, C/4, 5x5, stride 2, pad 2) + ReLU -------------
    c3 = jnp.dot(a2.astype(jnp.bfloat16), w3_ref[...],
                 preferred_element_type=f32)                   # (P2, 25*C3)
    r3 = sel3_ref.shape[1]
    co3 = b3_ref.shape[1]
    d3 = c3[0:r3, 0:co3]
    for t in range(1, 25):
        i, j = divmod(t, 5)
        s = i * wp2 + j
        d3 = d3 + c3[s:s + r3, t * co3:(t + 1) * co3]
    o3 = jnp.dot(sel3_ref[...], d3, preferred_element_type=f32)  # (16, C3)
    o3 = jnp.maximum(o3 + b3_ref[...], 0.0)

    # ---- layers 4 + 5: global 4x4 conv -> ReLU -> 1x1 conv (VPU) ------------
    b4v = b4_ref[...]
    w5v = w5_ref[...]
    y = b5_ref[...]                                             # (1, 1)
    for d in range(w4_ref.shape[0]):
        prod = o3 * w4_ref[d]                                   # (16, C3)
        h = jnp.sum(jnp.sum(prod, axis=1, keepdims=True),
                    axis=0, keepdims=True)                      # (1, 1)
        h = jnp.maximum(h + b4v[:, d:d + 1], 0.0)
        y = y + h * w5v[:, d:d + 1]
    out_ref[...] = y


# --------------------------------------------------------------------------
# Wrapper-side helpers (tiny, run in plain JAX / numpy at trace time)
# --------------------------------------------------------------------------
def _wn(v, g):
    """PyTorch weight_norm (dim=0): w = g * v / ||v||, norm over (Cin, Kh, Kw)."""
    norm = jnp.sqrt(jnp.sum(v * v, axis=(1, 2, 3), keepdims=True))
    return v * (g.reshape(-1, 1, 1, 1) / norm)


def _build_static_tables(h, w):
    """Constant masks / selection matrices for an (h, w) input (numpy consts)."""
    hp1, wp1 = h + 4, w + 4                        # layer-2 input, padded by 2
    oh2, ow2 = (hp1 - 5) // 2 + 1, (wp1 - 5) // 2 + 1
    hp2, wp2 = oh2 + 4, ow2 + 4                    # layer-3 input, padded by 2
    oh3, ow3 = (hp2 - 5) // 2 + 1, (wp2 - 5) // 2 + 1

    m1 = np.zeros((hp1, wp1), np.float32)
    m1[2:2 + h, 2:2 + w] = 1.0
    mask1 = m1.reshape(hp1 * wp1, 1)

    m2 = np.zeros((hp2, wp2), np.float32)
    m2[2:2 + oh2, 2:2 + ow2] = 1.0
    mask2 = m2.reshape(hp2 * wp2, 1)

    # D2[r] = sum_t C2[r + i*wp1 + j]; output (y, x) lives at row 2*(y*wp1+x).
    r2 = 2 * ((oh2 - 1) * wp1 + (ow2 - 1)) + 1
    sel2p = np.zeros((hp2 * wp2, r2), np.float32)
    for y in range(oh2):
        for x in range(ow2):
            sel2p[(y + 2) * wp2 + (x + 2), 2 * (y * wp1 + x)] = 1.0

    r3 = 2 * ((oh3 - 1) * wp2 + (ow3 - 1)) + 1
    sel3 = np.zeros((oh3 * ow3, r3), np.float32)
    for y in range(oh3):
        for x in range(ow3):
            sel3[y * ow3 + x, 2 * (y * wp2 + x)] = 1.0

    return wp1, wp2, mask1, mask2, sel2p, sel3, (oh3, ow3)


def discriminator_forward(x_nchw, params):
    n, cin, h, w = x_nchw.shape
    assert cin == 1
    (v1, g1, b1), (v2, g2, b2), (v3, g3, b3), (v4, g4, b4), (v5, g5, b5) = params
    dm = v1.shape[0]
    ch2, ch3, ch4 = dm // 2, dm // 4, dm // 8

    wp1, wp2, mask1, mask2, sel2p, sel3, (oh3, ow3) = _build_static_tables(h, w)
    p1 = (h + 4) * (w + 4)
    p2 = sel2p.shape[0]
    r2, r3 = sel2p.shape[1], sel3.shape[1]
    # layer 4 is a (4,4) VALID conv, so the layer-3 output must be 4x4
    assert (oh3, ow3) == (4, 4), (oh3, ow3)

    # weight-norm scale folded into the packed weight matrices (single pass)
    w1r = _wn(v1, g1).reshape(1, dm)
    w2c = jnp.transpose(_wn(v2, g2), (1, 2, 3, 0)).reshape(dm, 25 * ch2)
    w3c = jnp.transpose(_wn(v3, g3), (1, 2, 3, 0)).reshape(ch2, 25 * ch3)
    w4p = jnp.transpose(_wn(v4, g4), (0, 2, 3, 1)).reshape(ch4, oh3 * ow3, ch3)
    w5r = _wn(v5, g5).reshape(1, ch4)
    w2c = w2c.astype(jnp.bfloat16)            # MXU operands in bf16
    w3c = w3c.astype(jnp.bfloat16)
    b1r, b2r, b3r = b1.reshape(1, dm), b2.reshape(1, ch2), b3.reshape(1, ch3)
    b4r, b5r = b4.reshape(1, ch4), b5.reshape(1, 1)

    # padded, flattened single-channel input -> one (P1, 1) column per sample
    xp = jnp.pad(x_nchw[:, 0], ((0, 0), (2, 2), (2, 2)))
    x_col = xp.reshape(n, p1, 1)

    kernel = functools.partial(_disc_kernel, wp1=wp1, wp2=wp2)

    def fixed(shape):
        nd = len(shape)
        return pl.BlockSpec(shape, lambda i: (0,) * nd)

    in_specs = [
        pl.BlockSpec((None, p1, 1), lambda i: (i, 0, 0)),   # x (per sample)
        fixed((p1, 1)),                                     # mask1
        fixed((1, dm)), fixed((1, dm)),                     # w1, b1
        fixed((dm, 25 * ch2)), fixed((1, ch2)),             # w2cat, b2
        fixed((p2, r2)), fixed((p2, 1)),                    # sel2p, mask2
        fixed((ch2, 25 * ch3)), fixed((1, ch3)),            # w3cat, b3
        fixed((oh3 * ow3, r3)),                             # sel3
        fixed((ch4, oh3 * ow3, ch3)),                       # w4 planes
        fixed((1, ch4)), fixed((1, ch4)), fixed((1, 1)),    # b4, w5, b5
    ]

    macs = (p1 * dm * 25 * ch2 + p2 * r2 * ch2 + p2 * ch2 * 25 * ch3
            + oh3 * ow3 * r3 * ch3 + oh3 * ow3 * ch3 * ch4)
    cost = pl.CostEstimate(flops=2 * macs * n, transcendentals=0,
                           bytes_accessed=4 * (n * p1 + p2 * r2)
                           + 2 * dm * 25 * ch2)

    out = pl.pallas_call(
        kernel,
        out_shape=jax.ShapeDtypeStruct((n, 1, 1), jnp.float32),
        grid=(n,),
        in_specs=in_specs,
        out_specs=pl.BlockSpec((None, 1, 1), lambda i: (i, 0, 0)),
        compiler_params=pltpu.CompilerParams(
            dimension_semantics=("parallel",)),
        cost_estimate=cost,
    )(x_col, jnp.asarray(mask1), w1r, b1r,
      w2c, b2r, jnp.asarray(sel2p), jnp.asarray(mask2),
      w3c, b3r, jnp.asarray(sel3),
      w4p, b4r, w5r, b5r)

    return out.reshape(n, 1, 1, 1)


# --------------------------------------------------------------------------
# Parameters + pure-JAX reference (for a numerical self-check)
# --------------------------------------------------------------------------
def init_params(key, d_model):
    shapes = [
        (d_model, 1, 1, 1),
        (d_model // 2, d_model, 5, 5),
        (d_model // 4, d_model // 2, 5, 5),
        (d_model // 8, d_model // 4, 4, 4),
        (1, d_model // 8, 1, 1),
    ]
    params = []
    for shp in shapes:
        key, k1, k2, k3 = jax.random.split(key, 4)
        v = jax.random.normal(k1, shp, jnp.float32) * 0.1
        g = jax.random.uniform(k2, (shp[0],), jnp.float32, 0.5, 1.5)
        b = jax.random.normal(k3, (shp[0],), jnp.float32) * 0.01
        params.append((v, g, b))
    return params


def _reference_forward(x_nchw, params):
    strides = [1, 2, 2, 1, 1]
    pads = [0, 2, 2, 0, 0]
    relus = [True, True, True, True, False]
    out = x_nchw
    for (v, g, b), s, p, r in zip(params, strides, pads, relus):
        wgt = _wn(v, g)
        out = jax.lax.conv_general_dilated(
            out, wgt, window_strides=(s, s), padding=((p, p), (p, p)),
            dimension_numbers=("NCHW", "OIHW", "NCHW"))
        out = out + b.reshape(1, -1, 1, 1)
        if r:
            out = jnp.maximum(out, 0.0)
    return out


if __name__ == "__main__":
    d_model = 32
    key = jax.random.PRNGKey(0)
    kx, kp = jax.random.split(key)
    # Discriminator expects a single-channel NCHW image.
    x = jax.random.normal(kx, (2, 1, 16, 16), jnp.float32)
    params = init_params(kp, d_model)

    out = jax.jit(discriminator_forward)(x, params)
    out = jax.block_until_ready(out)
    # 16 ->(1x1) 16 ->(5x5,s2,p2) 8 ->(5x5,s2,p2) 4 ->(4x4) 1 ->(1x1) 1
    assert out.shape == (2, 1, 1, 1), out.shape
    assert out.dtype == jnp.float32

    ref = _reference_forward(x, params)
    assert jnp.allclose(out, ref, atol=5e-2, rtol=5e-2), (out, ref)
    print("KERNEL_OK")
</pallas_src>

<mosaic_0001>
module attributes {stable_mosaic.version = 11 : i64} {
  func.func @_disc_kernel(%arg0: i32, %arg1: memref<1x400x1xf32, #tpu.memory_space<vmem>>, %arg2: memref<400x1xf32, #tpu.memory_space<vmem>>, %arg3: memref<1x32xf32, #tpu.memory_space<vmem>>, %arg4: memref<1x32xf32, #tpu.memory_space<vmem>>, %arg5: memref<32x400xbf16, #tpu.memory_space<vmem>>, %arg6: memref<1x16xf32, #tpu.memory_space<vmem>>, %arg7: memref<144x295xf32, #tpu.memory_space<vmem>>, %arg8: memref<144x1xf32, #tpu.memory_space<vmem>>, %arg9: memref<16x200xbf16, #tpu.memory_space<vmem>>, %arg10: memref<1x8xf32, #tpu.memory_space<vmem>>, %arg11: memref<16x79xf32, #tpu.memory_space<vmem>>, %arg12: memref<4x16x8xf32, #tpu.memory_space<vmem>>, %arg13: memref<1x4xf32, #tpu.memory_space<vmem>>, %arg14: memref<1x4xf32, #tpu.memory_space<vmem>>, %arg15: memref<1x1xf32, #tpu.memory_space<vmem>>, %arg16: memref<1x1x1xf32, #tpu.memory_space<vmem>>) attributes {dimension_semantics = [#tpu.dimension_semantics<parallel>], iteration_bounds = array<i64: 2>, scalar_prefetch = 0 : i64, scratch_operands = 0 : i64, tpu.core_type = #tpu.core_type<tc>, window_params = [{transform_indices = @transform_0, window_bounds = array<i64: 1, 400, 1>}, {pipeline_mode = #tpu.pipeline_mode<synchronous>, transform_indices = @transform_1, window_bounds = array<i64: 400, 1>}, {pipeline_mode = #tpu.pipeline_mode<synchronous>, transform_indices = @transform_2, window_bounds = array<i64: 1, 32>}, {pipeline_mode = #tpu.pipeline_mode<synchronous>, transform_indices = @transform_3, window_bounds = array<i64: 1, 32>}, {pipeline_mode = #tpu.pipeline_mode<synchronous>, transform_indices = @transform_4, window_bounds = array<i64: 32, 400>}, {pipeline_mode = #tpu.pipeline_mode<synchronous>, transform_indices = @transform_5, window_bounds = array<i64: 1, 16>}, {pipeline_mode = #tpu.pipeline_mode<synchronous>, transform_indices = @transform_6, window_bounds = array<i64: 144, 295>}, {pipeline_mode = #tpu.pipeline_mode<synchronous>, transform_indices = @transform_7, window_bounds = array<i64: 144, 1>}, {pipeline_mode = #tpu.pipeline_mode<synchronous>, transform_indices = @transform_8, window_bounds = array<i64: 16, 200>}, {pipeline_mode = #tpu.pipeline_mode<synchronous>, transform_indices = @transform_9, window_bounds = array<i64: 1, 8>}, {pipeline_mode = #tpu.pipeline_mode<synchronous>, transform_indices = @transform_10, window_bounds = array<i64: 16, 79>}, {pipeline_mode = #tpu.pipeline_mode<synchronous>, transform_indices = @transform_11, window_bounds = array<i64: 4, 16, 8>}, {pipeline_mode = #tpu.pipeline_mode<synchronous>, transform_indices = @transform_12, window_bounds = array<i64: 1, 4>}, {pipeline_mode = #tpu.pipeline_mode<synchronous>, transform_indices = @transform_13, window_bounds = array<i64: 1, 4>}, {pipeline_mode = #tpu.pipeline_mode<synchronous>, transform_indices = @transform_14, window_bounds = array<i64: 1, 1>}, {transform_indices = @transform_15, window_bounds = array<i64: 1, 1, 1>}]} {
    %c0 = arith.constant 0 : index
    %c0_0 = arith.constant 0 : index
    %c0_1 = arith.constant 0 : index
    %0 = vector.load %arg1[%c0, %c0_0, %c0_1] : memref<1x400x1xf32, #tpu.memory_space<vmem>>, vector<1x400x1xf32>
    %1 = vector.shape_cast %0 : vector<1x400x1xf32> to vector<400x1xf32>
    %c0_2 = arith.constant 0 : index
    %c0_3 = arith.constant 0 : index
    %2 = vector.load %arg3[%c0_2, %c0_3] : memref<1x32xf32, #tpu.memory_space<vmem>>, vector<1x32xf32>
    %3 = vector.broadcast %1 : vector<400x1xf32> to vector<400x32xf32>
    %4 = vector.broadcast %2 : vector<1x32xf32> to vector<400x32xf32>
    %5 = arith.mulf %3, %4 : vector<400x32xf32>
    %c0_4 = arith.constant 0 : index
    %c0_5 = arith.constant 0 : index
    %6 = vector.load %arg4[%c0_4, %c0_5] : memref<1x32xf32, #tpu.memory_space<vmem>>, vector<1x32xf32>
    %7 = vector.broadcast %6 : vector<1x32xf32> to vector<400x32xf32>
    %8 = arith.addf %5, %7 : vector<400x32xf32>
    %cst = arith.constant 0.000000e+00 : f32
    %9 = vector.broadcast %cst : f32 to vector<400x32xf32>
    %10 = arith.maximumf %8, %9 : vector<400x32xf32>
    %c0_6 = arith.constant 0 : index
    %c0_7 = arith.constant 0 : index
    %11 = vector.load %arg2[%c0_6, %c0_7] : memref<400x1xf32, #tpu.memory_space<vmem>>, vector<400x1xf32>
    %12 = vector.broadcast %11 : vector<400x1xf32> to vector<400x32xf32>
    %13 = arith.mulf %10, %12 : vector<400x32xf32>
    %14 = arith.truncf %13 : vector<400x32xf32> to vector<400x32xbf16>
    %c0_8 = arith.constant 0 : index
    %c0_9 = arith.constant 0 : index
    %15 = vector.load %arg5[%c0_8, %c0_9] : memref<32x400xbf16, #tpu.memory_space<vmem>>, vector<32x400xbf16>
    %cst_10 = arith.constant dense<0.000000e+00> : vector<400x400xf32>
    %16 = tpu.matmul %14, %15, %cst_10 {dimension_numbers = #tpu.dot_dimension_numbers<[1], [0], [0], [1], [0, 0, 1, 1], [], []>} : vector<400x32xbf16>, vector<32x400xbf16>, vector<400x400xf32> -> vector<400x400xf32>
    %17 = vector.extract_strided_slice %16 {offsets = [0, 0], sizes = [295, 16], strides = [1, 1]} : vector<400x400xf32> to vector<295x16xf32>
    %18 = vector.extract_strided_slice %16 {offsets = [1, 16], sizes = [295, 16], strides = [1, 1]} : vector<400x400xf32> to vector<295x16xf32>
    %19 = arith.addf %17, %18 : vector<295x16xf32>
    %20 = vector.extract_strided_slice %16 {offsets = [2, 32], sizes = [295, 16], strides = [1, 1]} : vector<400x400xf32> to vector<295x16xf32>
    %21 = arith.addf %19, %20 : vector<295x16xf32>
    %22 = vector.extract_strided_slice %16 {offsets = [3, 48], sizes = [295, 16], strides = [1, 1]} : vector<400x400xf32> to vector<295x16xf32>
    %23 = arith.addf %21, %22 : vector<295x16xf32>
    %24 = vector.extract_strided_slice %16 {offsets = [4, 64], sizes = [295, 16], strides = [1, 1]} : vector<400x400xf32> to vector<295x16xf32>
    %25 = arith.addf %23, %24 : vector<295x16xf32>
    %26 = vector.extract_strided_slice %16 {offsets = [20, 80], sizes = [295, 16], strides = [1, 1]} : vector<400x400xf32> to vector<295x16xf32>
    %27 = arith.addf %25, %26 : vector<295x16xf32>
    %28 = vector.extract_strided_slice %16 {offsets = [21, 96], sizes = [295, 16], strides = [1, 1]} : vector<400x400xf32> to vector<295x16xf32>
    %29 = arith.addf %27, %28 : vector<295x16xf32>
    %30 = vector.extract_strided_slice %16 {offsets = [22, 112], sizes = [295, 16], strides = [1, 1]} : vector<400x400xf32> to vector<295x16xf32>
    %31 = arith.addf %29, %30 : vector<295x16xf32>
    %32 = vector.extract_strided_slice %16 {offsets = [23, 128], sizes = [295, 16], strides = [1, 1]} : vector<400x400xf32> to vector<295x16xf32>
    %33 = arith.addf %31, %32 : vector<295x16xf32>
    %34 = vector.extract_strided_slice %16 {offsets = [24, 144], sizes = [295, 16], strides = [1, 1]} : vector<400x400xf32> to vector<295x16xf32>
    %35 = arith.addf %33, %34 : vector<295x16xf32>
    %36 = vector.extract_strided_slice %16 {offsets = [40, 160], sizes = [295, 16], strides = [1, 1]} : vector<400x400xf32> to vector<295x16xf32>
    %37 = arith.addf %35, %36 : vector<295x16xf32>
    %38 = vector.extract_strided_slice %16 {offsets = [41, 176], sizes = [295, 16], strides = [1, 1]} : vector<400x400xf32> to vector<295x16xf32>
    %39 = arith.addf %37, %38 : vector<295x16xf32>
    %40 = vector.extract_strided_slice %16 {offsets = [42, 192], sizes = [295, 16], strides = [1, 1]} : vector<400x400xf32> to vector<295x16xf32>
    %41 = arith.addf %39, %40 : vector<295x16xf32>
    %42 = vector.extract_strided_slice %16 {offsets = [43, 208], sizes = [295, 16], strides = [1, 1]} : vector<400x400xf32> to vector<295x16xf32>
    %43 = arith.addf %41, %42 : vector<295x16xf32>
    %44 = vector.extract_strided_slice %16 {offsets = [44, 224], sizes = [295, 16], strides = [1, 1]} : vector<400x400xf32> to vector<295x16xf32>
    %45 = arith.addf %43, %44 : vector<295x16xf32>
    %46 = vector.extract_strided_slice %16 {offsets = [60, 240], sizes = [295, 16], strides = [1, 1]} : vector<400x400xf32> to vector<295x16xf32>
    %47 = arith.addf %45, %46 : vector<295x16xf32>
    %48 = vector.extract_strided_slice %16 {offsets = [61, 256], sizes = [295, 16], strides = [1, 1]} : vector<400x400xf32> to vector<295x16xf32>
    %49 = arith.addf %47, %48 : vector<295x16xf32>
    %50 = vector.extract_strided_slice %16 {offsets = [62, 272], sizes = [295, 16], strides = [1, 1]} : vector<400x400xf32> to vector<295x16xf32>
    %51 = arith.addf %49, %50 : vector<295x16xf32>
    %52 = vector.extract_strided_slice %16 {offsets = [63, 288], sizes = [295, 16], strides = [1, 1]} : vector<400x400xf32> to vector<295x16xf32>
    %53 = arith.addf %51, %52 : vector<295x16xf32>
    %54 = vector.extract_strided_slice %16 {offsets = [64, 304], sizes = [295, 16], strides = [1, 1]} : vector<400x400xf32> to vector<295x16xf32>
    %55 = arith.addf %53, %54 : vector<295x16xf32>
    %56 = vector.extract_strided_slice %16 {offsets = [80, 320], sizes = [295, 16], strides = [1, 1]} : vector<400x400xf32> to vector<295x16xf32>
    %57 = arith.addf %55, %56 : vector<295x16xf32>
    %58 = vector.extract_strided_slice %16 {offsets = [81, 336], sizes = [295, 16], strides = [1, 1]} : vector<400x400xf32> to vector<295x16xf32>
    %59 = arith.addf %57, %58 : vector<295x16xf32>
    %60 = vector.extract_strided_slice %16 {offsets = [82, 352], sizes = [295, 16], strides = [1, 1]} : vector<400x400xf32> to vector<295x16xf32>
    %61 = arith.addf %59, %60 : vector<295x16xf32>
    %62 = vector.extract_strided_slice %16 {offsets = [83, 368], sizes = [295, 16], strides = [1, 1]} : vector<400x400xf32> to vector<295x16xf32>
    %63 = arith.addf %61, %62 : vector<295x16xf32>
    %64 = vector.extract_strided_slice %16 {offsets = [84, 384], sizes = [295, 16], strides = [1, 1]} : vector<400x400xf32> to vector<295x16xf32>
    %65 = arith.addf %63, %64 : vector<295x16xf32>
    %c0_11 = arith.constant 0 : index
    %c0_12 = arith.constant 0 : index
    %66 = vector.load %arg7[%c0_11, %c0_12] : memref<144x295xf32, #tpu.memory_space<vmem>>, vector<144x295xf32>
    %cst_13 = arith.constant dense<0.000000e+00> : vector<144x16xf32>
    %67 = tpu.matmul %66, %65, %cst_13 {dimension_numbers = #tpu.dot_dimension_numbers<[1], [0], [0], [1], [0, 0, 1, 1], [], []>} : vector<144x295xf32>, vector<295x16xf32>, vector<144x16xf32> -> vector<144x16xf32>
    %c0_14 = arith.constant 0 : index
    %c0_15 = arith.constant 0 : index
    %68 = vector.load %arg6[%c0_14, %c0_15] : memref<1x16xf32, #tpu.memory_space<vmem>>, vector<1x16xf32>
    %69 = vector.broadcast %68 : vector<1x16xf32> to vector<144x16xf32>
    %70 = arith.addf %67, %69 : vector<144x16xf32>
    %cst_16 = arith.constant 0.000000e+00 : f32
    %71 = vector.broadcast %cst_16 : f32 to vector<144x16xf32>
    %72 = arith.maximumf %70, %71 : vector<144x16xf32>
    %c0_17 = arith.constant 0 : index
    %c0_18 = arith.constant 0 : index
    %73 = vector.load %arg8[%c0_17, %c0_18] : memref<144x1xf32, #tpu.memory_space<vmem>>, vector<144x1xf32>
    %74 = vector.broadcast %73 : vector<144x1xf32> to vector<144x16xf32>
    %75 = arith.mulf %72, %74 : vector<144x16xf32>
    %76 = arith.truncf %75 : vector<144x16xf32> to vector<144x16xbf16>
    %c0_19 = arith.constant 0 : index
    %c0_20 = arith.constant 0 : index
    %77 = vector.load %arg9[%c0_19, %c0_20] : memref<16x200xbf16, #tpu.memory_space<vmem>>, vector<16x200xbf16>
    %cst_21 = arith.constant dense<0.000000e+00> : vector<144x200xf32>
    %78 = tpu.matmul %76, %77, %cst_21 {dimension_numbers = #tpu.dot_dimension_numbers<[1], [0], [0], [1], [0, 0, 1, 1], [], []>} : vector<144x16xbf16>, vector<16x200xbf16>, vector<144x200xf32> -> vector<144x200xf32>
    %79 = vector.extract_strided_slice %78 {offsets = [0, 0], sizes = [79, 8], strides = [1, 1]} : vector<144x200xf32> to vector<79x8xf32>
    %80 = vector.extract_strided_slice %78 {offsets = [1, 8], sizes = [79, 8], strides = [1, 1]} : vector<144x200xf32> to vector<79x8xf32>
    %81 = arith.addf %79, %80 : vector<79x8xf32>
    %82 = vector.extract_strided_slice %78 {offsets = [2, 16], sizes = [79, 8], strides = [1, 1]} : vector<144x200xf32> to vector<79x8xf32>
    %83 = arith.addf %81, %82 : vector<79x8xf32>
    %84 = vector.extract_strided_slice %78 {offsets = [3, 24], sizes = [79, 8], strides = [1, 1]} : vector<144x200xf32> to vector<79x8xf32>
    %85 = arith.addf %83, %84 : vector<79x8xf32>
    %86 = vector.extract_strided_slice %78 {offsets = [4, 32], sizes = [79, 8], strides = [1, 1]} : vector<144x200xf32> to vector<79x8xf32>
    %87 = arith.addf %85, %86 : vector<79x8xf32>
    %88 = vector.extract_strided_slice %78 {offsets = [12, 40], sizes = [79, 8], strides = [1, 1]} : vector<144x200xf32> to vector<79x8xf32>
    %89 = arith.addf %87, %88 : vector<79x8xf32>
    %90 = vector.extract_strided_slice %78 {offsets = [13, 48], sizes = [79, 8], strides = [1, 1]} : vector<144x200xf32> to vector<79x8xf32>
    %91 = arith.addf %89, %90 : vector<79x8xf32>
    %92 = vector.extract_strided_slice %78 {offsets = [14, 56], sizes = [79, 8], strides = [1, 1]} : vector<144x200xf32> to vector<79x8xf32>
    %93 = arith.addf %91, %92 : vector<79x8xf32>
    %94 = vector.extract_strided_slice %78 {offsets = [15, 64], sizes = [79, 8], strides = [1, 1]} : vector<144x200xf32> to vector<79x8xf32>
    %95 = arith.addf %93, %94 : vector<79x8xf32>
    %96 = vector.extract_strided_slice %78 {offsets = [16, 72], sizes = [79, 8], strides = [1, 1]} : vector<144x200xf32> to vector<79x8xf32>
    %97 = arith.addf %95, %96 : vector<79x8xf32>
    %98 = vector.extract_strided_slice %78 {offsets = [24, 80], sizes = [79, 8], strides = [1, 1]} : vector<144x200xf32> to vector<79x8xf32>
    %99 = arith.addf %97, %98 : vector<79x8xf32>
    %100 = vector.extract_strided_slice %78 {offsets = [25, 88], sizes = [79, 8], strides = [1, 1]} : vector<144x200xf32> to vector<79x8xf32>
    %101 = arith.addf %99, %100 : vector<79x8xf32>
    %102 = vector.extract_strided_slice %78 {offsets = [26, 96], sizes = [79, 8], strides = [1, 1]} : vector<144x200xf32> to vector<79x8xf32>
    %103 = arith.addf %101, %102 : vector<79x8xf32>
    %104 = vector.extract_strided_slice %78 {offsets = [27, 104], sizes = [79, 8], strides = [1, 1]} : vector<144x200xf32> to vector<79x8xf32>
    %105 = arith.addf %103, %104 : vector<79x8xf32>
    %106 = vector.extract_strided_slice %78 {offsets = [28, 112], sizes = [79, 8], strides = [1, 1]} : vector<144x200xf32> to vector<79x8xf32>
    %107 = arith.addf %105, %106 : vector<79x8xf32>
    %108 = vector.extract_strided_slice %78 {offsets = [36, 120], sizes = [79, 8], strides = [1, 1]} : vector<144x200xf32> to vector<79x8xf32>
    %109 = arith.addf %107, %108 : vector<79x8xf32>
    %110 = vector.extract_strided_slice %78 {offsets = [37, 128], sizes = [79, 8], strides = [1, 1]} : vector<144x200xf32> to vector<79x8xf32>
    %111 = arith.addf %109, %110 : vector<79x8xf32>
    %112 = vector.extract_strided_slice %78 {offsets = [38, 136], sizes = [79, 8], strides = [1, 1]} : vector<144x200xf32> to vector<79x8xf32>
    %113 = arith.addf %111, %112 : vector<79x8xf32>
    %114 = vector.extract_strided_slice %78 {offsets = [39, 144], sizes = [79, 8], strides = [1, 1]} : vector<144x200xf32> to vector<79x8xf32>
    %115 = arith.addf %113, %114 : vector<79x8xf32>
    %116 = vector.extract_strided_slice %78 {offsets = [40, 152], sizes = [79, 8], strides = [1, 1]} : vector<144x200xf32> to vector<79x8xf32>
    %117 = arith.addf %115, %116 : vector<79x8xf32>
    %118 = vector.extract_strided_slice %78 {offsets = [48, 160], sizes = [79, 8], strides = [1, 1]} : vector<144x200xf32> to vector<79x8xf32>
    %119 = arith.addf %117, %118 : vector<79x8xf32>
    %120 = vector.extract_strided_slice %78 {offsets = [49, 168], sizes = [79, 8], strides = [1, 1]} : vector<144x200xf32> to vector<79x8xf32>
    %121 = arith.addf %119, %120 : vector<79x8xf32>
    %122 = vector.extract_strided_slice %78 {offsets = [50, 176], sizes = [79, 8], strides = [1, 1]} : vector<144x200xf32> to vector<79x8xf32>
    %123 = arith.addf %121, %122 : vector<79x8xf32>
    %124 = vector.extract_strided_slice %78 {offsets = [51, 184], sizes = [79, 8], strides = [1, 1]} : vector<144x200xf32> to vector<79x8xf32>
    %125 = arith.addf %123, %124 : vector<79x8xf32>
    %126 = vector.extract_strided_slice %78 {offsets = [52, 192], sizes = [79, 8], strides = [1, 1]} : vector<144x200xf32> to vector<79x8xf32>
    %127 = arith.addf %125, %126 : vector<79x8xf32>
    %c0_22 = arith.constant 0 : index
    %c0_23 = arith.constant 0 : index
    %128 = vector.load %arg11[%c0_22, %c0_23] : memref<16x79xf32, #tpu.memory_space<vmem>>, vector<16x79xf32>
    %cst_24 = arith.constant dense<0.000000e+00> : vector<16x8xf32>
    %129 = tpu.matmul %128, %127, %cst_24 {dimension_numbers = #tpu.dot_dimension_numbers<[1], [0], [0], [1], [0, 0, 1, 1], [], []>} : vector<16x79xf32>, vector<79x8xf32>, vector<16x8xf32> -> vector<16x8xf32>
    %c0_25 = arith.constant 0 : index
    %c0_26 = arith.constant 0 : index
    %130 = vector.load %arg10[%c0_25, %c0_26] : memref<1x8xf32, #tpu.memory_space<vmem>>, vector<1x8xf32>
    %131 = vector.broadcast %130 : vector<1x8xf32> to vector<16x8xf32>
    %132 = arith.addf %129, %131 : vector<16x8xf32>
    %cst_27 = arith.constant 0.000000e+00 : f32
    %133 = vector.broadcast %cst_27 : f32 to vector<16x8xf32>
    %134 = arith.maximumf %132, %133 : vector<16x8xf32>
    %c0_28 = arith.constant 0 : index
    %c0_29 = arith.constant 0 : index
    %135 = vector.load %arg13[%c0_28, %c0_29] : memref<1x4xf32, #tpu.memory_space<vmem>>, vector<1x4xf32>
    %c0_30 = arith.constant 0 : index
    %c0_31 = arith.constant 0 : index
    %136 = vector.load %arg14[%c0_30, %c0_31] : memref<1x4xf32, #tpu.memory_space<vmem>>, vector<1x4xf32>
    %c0_32 = arith.constant 0 : index
    %c0_33 = arith.constant 0 : index
    %137 = vector.load %arg15[%c0_32, %c0_33] : memref<1x1xf32, #tpu.memory_space<vmem>>, vector<1x1xf32>
    %c0_34 = arith.constant 0 : index
    %c0_35 = arith.constant 0 : index
    %c0_36 = arith.constant 0 : index
    %138 = vector.load %arg12[%c0_34, %c0_35, %c0_36] : memref<4x16x8xf32, #tpu.memory_space<vmem>>, vector<1x16x8xf32>
    %139 = vector.shape_cast %138 : vector<1x16x8xf32> to vector<16x8xf32>
    %140 = arith.mulf %134, %139 : vector<16x8xf32>
    %cst_37 = arith.constant dense<0.000000e+00> : vector<16xf32>
    %141 = vector.multi_reduction <add>, %140, %cst_37 [1] : vector<16x8xf32> to vector<16xf32>
    %142 = vector.shape_cast %141 : vector<16xf32> to vector<16x1xf32>
    %cst_38 = arith.constant dense<0.000000e+00> : vector<1xf32>
    %143 = vector.multi_reduction <add>, %142, %cst_38 [0] : vector<16x1xf32> to vector<1xf32>
    %144 = vector.shape_cast %143 : vector<1xf32> to vector<1x1xf32>
    %145 = vector.extract_strided_slice %135 {offsets = [0, 0], sizes = [1, 1], strides = [1, 1]} : vector<1x4xf32> to vector<1x1xf32>
    %146 = arith.addf %144, %145 : vector<1x1xf32>
    %cst_39 = arith.constant 0.000000e+00 : f32
    %147 = vector.broadcast %cst_39 : f32 to vector<1x1xf32>
    %148 = arith.maximumf %146, %147 : vector<1x1xf32>
    %149 = vector.extract_strided_slice %136 {offsets = [0, 0], sizes = [1, 1], strides = [1, 1]} : vector<1x4xf32> to vector<1x1xf32>
    %150 = arith.mulf %148, %149 : vector<1x1xf32>
    %151 = arith.addf %137, %150 : vector<1x1xf32>
    %c1 = arith.constant 1 : index
    %c0_40 = arith.constant 0 : index
    %c0_41 = arith.constant 0 : index
    %152 = vector.load %arg12[%c1, %c0_40, %c0_41] : memref<4x16x8xf32, #tpu.memory_space<vmem>>, vector<1x16x8xf32>
    %153 = vector.shape_cast %152 : vector<1x16x8xf32> to vector<16x8xf32>
    %154 = arith.mulf %134, %153 : vector<16x8xf32>
    %cst_42 = arith.constant dense<0.000000e+00> : vector<16xf32>
    %155 = vector.multi_reduction <add>, %154, %cst_42 [1] : vector<16x8xf32> to vector<16xf32>
    %156 = vector.shape_cast %155 : vector<16xf32> to vector<16x1xf32>
    %cst_43 = arith.constant dense<0.000000e+00> : vector<1xf32>
    %157 = vector.multi_reduction <add>, %156, %cst_43 [0] : vector<16x1xf32> to vector<1xf32>
    %158 = vector.shape_cast %157 : vector<1xf32> to vector<1x1xf32>
    %159 = vector.extract_strided_slice %135 {offsets = [0, 1], sizes = [1, 1], strides = [1, 1]} : vector<1x4xf32> to vector<1x1xf32>
    %160 = arith.addf %158, %159 : vector<1x1xf32>
    %cst_44 = arith.constant 0.000000e+00 : f32
    %161 = vector.broadcast %cst_44 : f32 to vector<1x1xf32>
    %162 = arith.maximumf %160, %161 : vector<1x1xf32>
    %163 = vector.extract_strided_slice %136 {offsets = [0, 1], sizes = [1, 1], strides = [1, 1]} : vector<1x4xf32> to vector<1x1xf32>
    %164 = arith.mulf %162, %163 : vector<1x1xf32>
    %165 = arith.addf %151, %164 : vector<1x1xf32>
    %c2 = arith.constant 2 : index
    %c0_45 = arith.constant 0 : index
    %c0_46 = arith.constant 0 : index
    %166 = vector.load %arg12[%c2, %c0_45, %c0_46] : memref<4x16x8xf32, #tpu.memory_space<vmem>>, vector<1x16x8xf32>
    %167 = vector.shape_cast %166 : vector<1x16x8xf32> to vector<16x8xf32>
    %168 = arith.mulf %134, %167 : vector<16x8xf32>
    %cst_47 = arith.constant dense<0.000000e+00> : vector<16xf32>
    %169 = vector.multi_reduction <add>, %168, %cst_47 [1] : vector<16x8xf32> to vector<16xf32>
    %170 = vector.shape_cast %169 : vector<16xf32> to vector<16x1xf32>
    %cst_48 = arith.constant dense<0.000000e+00> : vector<1xf32>
    %171 = vector.multi_reduction <add>, %170, %cst_48 [0] : vector<16x1xf32> to vector<1xf32>
    %172 = vector.shape_cast %171 : vector<1xf32> to vector<1x1xf32>
    %173 = vector.extract_strided_slice %135 {offsets = [0, 2], sizes = [1, 1], strides = [1, 1]} : vector<1x4xf32> to vector<1x1xf32>
    %174 = arith.addf %172, %173 : vector<1x1xf32>
    %cst_49 = arith.constant 0.000000e+00 : f32
    %175 = vector.broadcast %cst_49 : f32 to vector<1x1xf32>
    %176 = arith.maximumf %174, %175 : vector<1x1xf32>
    %177 = vector.extract_strided_slice %136 {offsets = [0, 2], sizes = [1, 1], strides = [1, 1]} : vector<1x4xf32> to vector<1x1xf32>
    %178 = arith.mulf %176, %177 : vector<1x1xf32>
    %179 = arith.addf %165, %178 : vector<1x1xf32>
    %c3 = arith.constant 3 : index
    %c0_50 = arith.constant 0 : index
    %c0_51 = arith.constant 0 : index
    %180 = vector.load %arg12[%c3, %c0_50, %c0_51] : memref<4x16x8xf32, #tpu.memory_space<vmem>>, vector<1x16x8xf32>
    %181 = vector.shape_cast %180 : vector<1x16x8xf32> to vector<16x8xf32>
    %182 = arith.mulf %134, %181 : vector<16x8xf32>
    %cst_52 = arith.constant dense<0.000000e+00> : vector<16xf32>
    %183 = vector.multi_reduction <add>, %182, %cst_52 [1] : vector<16x8xf32> to vector<16xf32>
    %184 = vector.shape_cast %183 : vector<16xf32> to vector<16x1xf32>
    %cst_53 = arith.constant dense<0.000000e+00> : vector<1xf32>
    %185 = vector.multi_reduction <add>, %184, %cst_53 [0] : vector<16x1xf32> to vector<1xf32>
    %186 = vector.shape_cast %185 : vector<1xf32> to vector<1x1xf32>
    %187 = vector.extract_strided_slice %135 {offsets = [0, 3], sizes = [1, 1], strides = [1, 1]} : vector<1x4xf32> to vector<1x1xf32>
    %188 = arith.addf %186, %187 : vector<1x1xf32>
    %cst_54 = arith.constant 0.000000e+00 : f32
    %189 = vector.broadcast %cst_54 : f32 to vector<1x1xf32>
    %190 = arith.maximumf %188, %189 : vector<1x1xf32>
    %191 = vector.extract_strided_slice %136 {offsets = [0, 3], sizes = [1, 1], strides = [1, 1]} : vector<1x4xf32> to vector<1x1xf32>
    %192 = arith.mulf %190, %191 : vector<1x1xf32>
    %193 = arith.addf %179, %192 : vector<1x1xf32>
    %c0_55 = arith.constant 0 : index
    %c0_56 = arith.constant 0 : index
    %c0_57 = arith.constant 0 : index
    %194 = vector.load %arg16[%c0_55, %c0_56, %c0_57] : memref<1x1x1xf32, #tpu.memory_space<vmem>>, vector<1x1x1xf32>
    %195 = vector.shape_cast %194 : vector<1x1x1xf32> to vector<1x1xf32>
    %196 = vector.shape_cast %193 : vector<1x1xf32> to vector<1x1x1xf32>
    tpu.vector_store %arg16[%c0_55, %c0_56, %c0_57], %196 {strides = array<i32>} : memref<1x1x1xf32, #tpu.memory_space<vmem>>, vector<1x1x1xf32>,
    return
  }
  func.func @transform_0(%arg0: i32) -> (i32, i32, i32) {
    %c0_i32 = arith.constant 0 : i32
    %c0_i32_0 = arith.constant 0 : i32
    %c0_i32_1 = arith.constant 0 : i32
    return %arg0, %c0_i32, %c0_i32_0 : i32, i32, i32
  }
  func.func @transform_1(%arg0: i32) -> (i32, i32) {
    %c0_i32 = arith.constant 0 : i32
    %c0_i32_0 = arith.constant 0 : i32
    %c0_i32_1 = arith.constant 0 : i32
    return %c0_i32, %c0_i32_0 : i32, i32
  }
  func.func @transform_2(%arg0: i32) -> (i32, i32) {
    %c0_i32 = arith.constant 0 : i32
    %c0_i32_0 = arith.constant 0 : i32
    %c0_i32_1 = arith.constant 0 : i32
    return %c0_i32, %c0_i32_0 : i32, i32
  }
  func.func @transform_3(%arg0: i32) -> (i32, i32) {
    %c0_i32 = arith.constant 0 : i32
    %c0_i32_0 = arith.constant 0 : i32
    %c0_i32_1 = arith.constant 0 : i32
    return %c0_i32, %c0_i32_0 : i32, i32
  }
  func.func @transform_4(%arg0: i32) -> (i32, i32) {
    %c0_i32 = arith.constant 0 : i32
    %c0_i32_0 = arith.constant 0 : i32
    %c0_i32_1 = arith.constant 0 : i32
    return %c0_i32, %c0_i32_0 : i32, i32
  }
  func.func @transform_5(%arg0: i32) -> (i32, i32) {
    %c0_i32 = arith.constant 0 : i32
    %c0_i32_0 = arith.constant 0 : i32
    %c0_i32_1 = arith.constant 0 : i32
    return %c0_i32, %c0_i32_0 : i32, i32
  }
  func.func @transform_6(%arg0: i32) -> (i32, i32) {
    %c0_i32 = arith.constant 0 : i32
    %c0_i32_0 = arith.constant 0 : i32
    %c0_i32_1 = arith.constant 0 : i32
    return %c0_i32, %c0_i32_0 : i32, i32
  }
  func.func @transform_7(%arg0: i32) -> (i32, i32) {
    %c0_i32 = arith.constant 0 : i32
    %c0_i32_0 = arith.constant 0 : i32
    %c0_i32_1 = arith.constant 0 : i32
    return %c0_i32, %c0_i32_0 : i32, i32
  }
  func.func @transform_8(%arg0: i32) -> (i32, i32) {
    %c0_i32 = arith.constant 0 : i32
    %c0_i32_0 = arith.constant 0 : i32
    %c0_i32_1 = arith.constant 0 : i32
    return %c0_i32, %c0_i32_0 : i32, i32
  }
  func.func @transform_9(%arg0: i32) -> (i32, i32) {
    %c0_i32 = arith.constant 0 : i32
    %c0_i32_0 = arith.constant 0 : i32
    %c0_i32_1 = arith.constant 0 : i32
    return %c0_i32, %c0_i32_0 : i32, i32
  }
  func.func @transform_10(%arg0: i32) -> (i32, i32) {
    %c0_i32 = arith.constant 0 : i32
    %c0_i32_0 = arith.constant 0 : i32
    %c0_i32_1 = arith.constant 0 : i32
    return %c0_i32, %c0_i32_0 : i32, i32
  }
  func.func @transform_11(%arg0: i32) -> (i32, i32, i32) {
    %c0_i32 = arith.constant 0 : i32
    %c0_i32_0 = arith.constant 0 : i32
    %c0_i32_1 = arith.constant 0 : i32
    %c0_i32_2 = arith.constant 0 : i32
    return %c0_i32, %c0_i32_0, %c0_i32_1 : i32, i32, i32
  }
  func.func @transform_12(%arg0: i32) -> (i32, i32) {
    %c0_i32 = arith.constant 0 : i32
    %c0_i32_0 = arith.constant 0 : i32
    %c0_i32_1 = arith.constant 0 : i32
    return %c0_i32, %c0_i32_0 : i32, i32
  }
  func.func @transform_13(%arg0: i32) -> (i32, i32) {
    %c0_i32 = arith.constant 0 : i32
    %c0_i32_0 = arith.constant 0 : i32
    %c0_i32_1 = arith.constant 0 : i32
    return %c0_i32, %c0_i32_0 : i32, i32
  }
  func.func @transform_14(%arg0: i32) -> (i32, i32) {
    %c0_i32 = arith.constant 0 : i32
    %c0_i32_0 = arith.constant 0 : i32
    %c0_i32_1 = arith.constant 0 : i32
    return %c0_i32, %c0_i32_0 : i32, i32
  }
  func.func @transform_15(%arg0: i32) -> (i32, i32, i32) {
    %c0_i32 = arith.constant 0 : i32
    %c0_i32_0 = arith.constant 0 : i32
    %c0_i32_1 = arith.constant 0 : i32
    return %arg0, %c0_i32, %c0_i32_0 : i32, i32, i32
  }
}

</mosaic_0001>

<llo_original>
// kernel: discriminator_forward.1
$region0: #{discriminator_forward.1}
  #allocation0 [shape = 'u32[]', space=smem, size = 0x4, offset = 0x4, fixed_abs, tag = 'smem constant byte address 0x4 - core index']
  #allocation1 [shape = 'u32[72,128]{1,0:T(1,128)}', space=vmem, size = 0x9000, scoped, tag = 'internal scratch']
  #allocation2 [shape = 'f32[1,1]{1,0:T(1,128)S(1)}', space=vmem, size = 0x200, scoped, tag = 'scoped memory for discriminator_forward.1']
  %s0 = inlined_call_operand.vmem [shape: f32[2,400,1], index: 0, kind: input, shape index: {}]
  %s1 = inlined_call_operand.vmem [shape: f32[400,1], index: 1, kind: input, shape index: {}]
  %s2 = inlined_call_operand.vmem [shape: f32[1,32], index: 2, kind: input, shape index: {}]
  %s3 = inlined_call_operand.vmem [shape: f32[1,32], index: 3, kind: input, shape index: {}]
  %s4 = inlined_call_operand.vmem [shape: bf16[32,400], index: 4, kind: input, shape index: {}]
  %s5 = inlined_call_operand.vmem [shape: f32[1,16], index: 5, kind: input, shape index: {}]
  %s6 = inlined_call_operand.vmem [shape: f32[144,295], index: 6, kind: input, shape index: {}]
  %s7 = inlined_call_operand.vmem [shape: f32[144,1], index: 7, kind: input, shape index: {}]
  %s8 = inlined_call_operand.vmem [shape: bf16[16,200], index: 8, kind: input, shape index: {}]
  %s9 = inlined_call_operand.vmem [shape: f32[1,8], index: 9, kind: input, shape index: {}]
  %s10 = inlined_call_operand.vmem [shape: f32[16,79], index: 10, kind: input, shape index: {}]
  %s11 = inlined_call_operand.vmem [shape: f32[4,16,8], index: 11, kind: input, shape index: {}]
  %s12 = inlined_call_operand.vmem [shape: f32[1,4], index: 12, kind: input, shape index: {}]
  %s13 = inlined_call_operand.vmem [shape: f32[1,4], index: 13, kind: input, shape index: {}]
  %s14 = inlined_call_operand.<no memory space> [shape: f32[1,1], index: 14, kind: input, shape index: {}]
  %s15 = inlined_call_operand.vmem [shape: f32[2,1,1], index: 15, kind: output, shape index: {}]
  %s16 = sld [smem:[#allocation0]]
  $region93: #{discriminator_forward.1} parent=0
    _
  %s18 = ssub.s32 1, %s16
  %s19 = scalar_select 0, %s18, %s16
  %v20 = vstv %s14
  %21 = vst [vmem:[#allocation2] sm:$0x1] %v20
  loop: start=0, step=1, limit=4
  $region2: #{discriminator_forward.1} parent=0 // loop_pre_header
    _
  $region3: #{discriminator_forward.1} parent=0 // loop_header
    %s23 = sphi 0, %s27
    %p24 = scmp.ge.s32.totalorder %s23, 4
    %s33 = sphi 0, %s35
    %s36 = sphi 0, %s33
    %s37 = sphi 0, %s36
    %s53 = sphi 0, %s37
    %s57 = sphi 0, %s57
    %s59 = sphi 0, %s57
    %s60 = sphi 0, %s59
    %s74 = sphi 0, %s60
    %s78 = sphi 0, %s78
    %s80 = sphi 0, %s78
    %s81 = sphi 0, %s80
    %s95 = sphi 0, %s81
    %s99 = sphi 0, %s99
    %s101 = sphi 0, %s99
    %s102 = sphi 0, %s101
    %s116 = sphi 0, %s102
    %s120 = sphi 0, %s120
    %s122 = sphi 0, %s120
    %s123 = sphi 0, %s122
    %s137 = sphi 0, %s123
    %s141 = sphi 0, %s141
    %s143 = sphi 0, %s141
    %s144 = sphi 0, %s143
    %s158 = sphi 0, %s144
    %s162 = sphi 0, %s162
    %s164 = sphi 0, %s162
    %s165 = sphi 0, %s164
    %s179 = sphi 0, %s165
    %s183 = sphi 0, %s183
    %s185 = sphi 0, %s183
    %s186 = sphi 0, %s185
    %s200 = sphi 0, %s186
    %s204 = sphi 0, %s204
    %s206 = sphi 0, %s204
    %s207 = sphi 0, %s206
    %s221 = sphi 0, %s207
    %s225 = sphi 0, %s225
    %s227 = sphi 0, %s225
    %s228 = sphi 0, %s227
    %s242 = sphi 0, %s228
    %s246 = sphi 0, %s246
    %s248 = sphi 0, %s246
    %s249 = sphi 0, %s248
    %s263 = sphi 0, %s249
    %s267 = sphi 0, %s267
    %s269 = sphi 0, %s267
    %s270 = sphi 0, %s269
    %s284 = sphi 0, %s270
    %s288 = sphi 0, %s288
    %s290 = sphi 0, %s288
    %s291 = sphi 0, %s290
    %s305 = sphi 0, %s291
    %s309 = sphi 0, %s309
    %s311 = sphi 0, %s309
    %s312 = sphi 0, %s311
    %s326 = sphi 0, %s312
    %s330 = sphi 0, %s330
    %s332 = sphi 0, %s330
    %s333 = sphi 0, %s332
    %s347 = sphi 0, %s333
    %s353 = sphi 0, %s355
    %s356 = sphi 0, %s353
    %s357 = sphi 0, %s356
    %s373 = sphi 0, %s357
  $region4: #{discriminator_forward.1} parent=0 // loop_header_branch
    %26 = sbr.rel (%p24) target = $region8
  $region5: #{discriminator_forward.1} parent=0 // loop_body
    %s28 = ssub.s32 %s23, 1
    %s29 = ssub.s32 %s23, 2
    %s30 = sadd.s32 %s23, 1
    %s31 = ssub.s32 %s23, %s30
    %p32 = scmp.eq.s32.totalorder %s31, 0
    %s34 = sadd.s32 %s33, 1
    %s35 = scalar_select %p32, %s33, %s34
    %p38 = pneg %p32
    %p39 = scmp.eq.s32.totalorder %s23, 1
    %p40 = por %p38, %p39
    %p41 = scmp.ne.s32.totalorder %s33, %s36
    %p42 = scmp.eq.s32.totalorder %s23, 0
    %p43 = por %p41, %p42
    %p44 = scmp.ne.s32.totalorder %s33, %s36
    %p45 = scmp.eq.s32.totalorder %s28, 1
    %p46 = por %p44, %p45
    %p47 = scmp.ne.s32.totalorder %s36, %s37
    %p48 = scmp.eq.s32.totalorder %s28, 0
    %p49 = por %p47, %p48
    %p50 = scmp.ne.s32.totalorder %s36, %s37
    %p51 = scmp.eq.s32.totalorder %s29, 1
    %p52 = por %p50, %p51
    %p54 = scmp.ne.s32.totalorder %s37, %s53
    %p55 = scmp.eq.s32.totalorder %s29, 0
    %p56 = por %p54, %p55
    %s58 = sadd.s32 %s57, 1
    %p61 = scmp.eq.s32.totalorder %s23, 1
    %p62 = scmp.ne.s32.totalorder %s57, %s59
    %p63 = scmp.eq.s32.totalorder %s23, 0
    %p64 = por %p62, %p63
    %p65 = scmp.ne.s32.totalorder %s57, %s59
    %p66 = scmp.eq.s32.totalorder %s28, 1
    %p67 = por %p65, %p66
    %p68 = scmp.ne.s32.totalorder %s59, %s60
    %p69 = scmp.eq.s32.totalorder %s28, 0
    %p70 = por %p68, %p69
    %p71 = scmp.ne.s32.totalorder %s59, %s60
    %p72 = scmp.eq.s32.totalorder %s29, 1
    %p73 = por %p71, %p72
    %p75 = scmp.ne.s32.totalorder %s60, %s74
    %p76 = scmp.eq.s32.totalorder %s29, 0
    %p77 = por %p75, %p76
    %s79 = sadd.s32 %s78, 1
    %p82 = scmp.eq.s32.totalorder %s23, 1
    %p83 = scmp.ne.s32.totalorder %s78, %s80
    %p84 = scmp.eq.s32.totalorder %s23, 0
    %p85 = por %p83, %p84
    %p86 = scmp.ne.s32.totalorder %s78, %s80
    %p87 = scmp.eq.s32.totalorder %s28, 1
    %p88 = por %p86, %p87
    %p89 = scmp.ne.s32.totalorder %s80, %s81
    %p90 = scmp.eq.s32.totalorder %s28, 0
    %p91 = por %p89, %p90
    %p92 = scmp.ne.s32.totalorder %s80, %s81
    %p93 = scmp.eq.s32.totalorder %s29, 1
    %p94 = por %p92, %p93
    %p96 = scmp.ne.s32.totalorder %s81, %s95
    %p97 = scmp.eq.s32.totalorder %s29, 0
    %p98 = por %p96, %p97
    %s100 = sadd.s32 %s99, 1
    %p103 = scmp.eq.s32.totalorder %s23, 1
    %p104 = scmp.ne.s32.totalorder %s99, %s101
    %p105 = scmp.eq.s32.totalorder %s23, 0
    %p106 = por %p104, %p105
    %p107 = scmp.ne.s32.totalorder %s99, %s101
    %p108 = scmp.eq.s32.totalorder %s28, 1
    %p109 = por %p107, %p108
    %p110 = scmp.ne.s32.totalorder %s101, %s102
    %p111 = scmp.eq.s32.totalorder %s28, 0
    %p112 = por %p110, %p111
    %p113 = scmp.ne.s32.totalorder %s101, %s102
    %p114 = scmp.eq.s32.totalorder %s29, 1
    %p115 = por %p113, %p114
    %p117 = scmp.ne.s32.totalorder %s102, %s116
    %p118 = scmp.eq.s32.totalorder %s29, 0
    %p119 = por %p117, %p118
    %s121 = sadd.s32 %s120, 1
    %p124 = scmp.eq.s32.totalorder %s23, 1
    %p125 = scmp.ne.s32.totalorder %s120, %s122
    %p126 = scmp.eq.s32.totalorder %s23, 0
    %p127 = por %p125, %p126
    %p128 = scmp.ne.s32.totalorder %s120, %s122
    %p129 = scmp.eq.s32.totalorder %s28, 1
    %p130 = por %p128, %p129
    %p131 = scmp.ne.s32.totalorder %s122, %s123
    %p132 = scmp.eq.s32.totalorder %s28, 0
    %p133 = por %p131, %p132
    %p134 = scmp.ne.s32.totalorder %s122, %s123
    %p135 = scmp.eq.s32.totalorder %s29, 1
    %p136 = por %p134, %p135
    %p138 = scmp.ne.s32.totalorder %s123, %s137
    %p139 = scmp.eq.s32.totalorder %s29, 0
    %p140 = por %p138, %p139
    %s142 = sadd.s32 %s141, 1
    %p145 = scmp.eq.s32.totalorder %s23, 1
    %p146 = scmp.ne.s32.totalorder %s141, %s143
    %p147 = scmp.eq.s32.totalorder %s23, 0
    %p148 = por %p146, %p147
    %p149 = scmp.ne.s32.totalorder %s141, %s143
    %p150 = scmp.eq.s32.totalorder %s28, 1
    %p151 = por %p149, %p150
    %p152 = scmp.ne.s32.totalorder %s143, %s144
    %p153 = scmp.eq.s32.totalorder %s28, 0
    %p154 = por %p152, %p153
    %p155 = scmp.ne.s32.totalorder %s143, %s144
    %p156 = scmp.eq.s32.totalorder %s29, 1
    %p157 = por %p155, %p156
    %p159 = scmp.ne.s32.totalorder %s144, %s158
    %p160 = scmp.eq.s32.totalorder %s29, 0
    %p161 = por %p159, %p160
    %s163 = sadd.s32 %s162, 1
    %p166 = scmp.eq.s32.totalorder %s23, 1
    %p167 = scmp.ne.s32.totalorder %s162, %s164
    %p168 = scmp.eq.s32.totalorder %s23, 0
    %p169 = por %p167, %p168
    %p170 = scmp.ne.s32.totalorder %s162, %s164
    %p171 = scmp.eq.s32.totalorder %s28, 1
    %p172 = por %p170, %p171
    %p173 = scmp.ne.s32.totalorder %s164, %s165
    %p174 = scmp.eq.s32.totalorder %s28, 0
    %p175 = por %p173, %p174
    %p176 = scmp.ne.s32.totalorder %s164, %s165
    %p177 = scmp.eq.s32.totalorder %s29, 1
    %p178 = por %p176, %p177
    %p180 = scmp.ne.s32.totalorder %s165, %s179
    %p181 = scmp.eq.s32.totalorder %s29, 0
    %p182 = por %p180, %p181
    %s184 = sadd.s32 %s183, 1
    %p187 = scmp.eq.s32.totalorder %s23, 1
    %p188 = scmp.ne.s32.totalorder %s183, %s185
    %p189 = scmp.eq.s32.totalorder %s23, 0
    %p190 = por %p188, %p189
    %p191 = scmp.ne.s32.totalorder %s183, %s185
    %p192 = scmp.eq.s32.totalorder %s28, 1
    %p193 = por %p191, %p192
    %p194 = scmp.ne.s32.totalorder %s185, %s186
    %p195 = scmp.eq.s32.totalorder %s28, 0
    %p196 = por %p194, %p195
    %p197 = scmp.ne.s32.totalorder %s185, %s186
    %p198 = scmp.eq.s32.totalorder %s29, 1
    %p199 = por %p197, %p198
    %p201 = scmp.ne.s32.totalorder %s186, %s200
    %p202 = scmp.eq.s32.totalorder %s29, 0
    %p203 = por %p201, %p202
    %s205 = sadd.s32 %s204, 1
    %p208 = scmp.eq.s32.totalorder %s23, 1
    %p209 = scmp.ne.s32.totalorder %s204, %s206
    %p210 = scmp.eq.s32.totalorder %s23, 0
    %p211 = por %p209, %p210
    %p212 = scmp.ne.s32.totalorder %s204, %s206
    %p213 = scmp.eq.s32.totalorder %s28, 1
    %p214 = por %p212, %p213
    %p215 = scmp.ne.s32.totalorder %s206, %s207
    %p216 = scmp.eq.s32.totalorder %s28, 0
    %p217 = por %p215, %p216
    %p218 = scmp.ne.s32.totalorder %s206, %s207
    %p219 = scmp.eq.s32.totalorder %s29, 1
    %p220 = por %p218, %p219
    %p222 = scmp.ne.s32.totalorder %s207, %s221
    %p223 = scmp.eq.s32.totalorder %s29, 0
    %p224 = por %p222, %p223
    %s226 = sadd.s32 %s225, 1
    %p229 = scmp.eq.s32.totalorder %s23, 1
    %p230 = scmp.ne.s32.totalorder %s225, %s227
    %p231 = scmp.eq.s32.totalorder %s23, 0
    %p232 = por %p230, %p231
    %p233 = scmp.ne.s32.totalorder %s225, %s227
    %p234 = scmp.eq.s32.totalorder %s28, 1
    %p235 = por %p233, %p234
    %p236 = scmp.ne.s32.totalorder %s227, %s228
    %p237 = scmp.eq.s32.totalorder %s28, 0
    %p238 = por %p236, %p237
    %p239 = scmp.ne.s32.totalorder %s227, %s228
    %p240 = scmp.eq.s32.totalorder %s29, 1
    %p241 = por %p239, %p240
    %p243 = scmp.ne.s32.totalorder %s228, %s242
    %p244 = scmp.eq.s32.totalorder %s29, 0
    %p245 = por %p243, %p244
    %s247 = sadd.s32 %s246, 1
    %p250 = scmp.eq.s32.totalorder %s23, 1
    %p251 = scmp.ne.s32.totalorder %s246, %s248
    %p252 = scmp.eq.s32.totalorder %s23, 0
    %p253 = por %p251, %p252
    %p254 = scmp.ne.s32.totalorder %s246, %s248
    %p255 = scmp.eq.s32.totalorder %s28, 1
    %p256 = por %p254, %p255
    %p257 = scmp.ne.s32.totalorder %s248, %s249
    %p258 = scmp.eq.s32.totalorder %s28, 0
    %p259 = por %p257, %p258
    %p260 = scmp.ne.s32.totalorder %s248, %s249
    %p261 = scmp.eq.s32.totalorder %s29, 1
    %p262 = por %p260, %p261
    %p264 = scmp.ne.s32.totalorder %s249, %s263
    %p265 = scmp.eq.s32.totalorder %s29, 0
    %p266 = por %p264, %p265
    %s268 = sadd.s32 %s267, 1
    %p271 = scmp.eq.s32.totalorder %s23, 1
    %p272 = scmp.ne.s32.totalorder %s267, %s269
    %p273 = scmp.eq.s32.totalorder %s23, 0
    %p274 = por %p272, %p273
    %p275 = scmp.ne.s32.totalorder %s267, %s269
    %p276 = scmp.eq.s32.totalorder %s28, 1
    %p277 = por %p275, %p276
    %p278 = scmp.ne.s32.totalorder %s269, %s270
    %p279 = scmp.eq.s32.totalorder %s28, 0
    %p280 = por %p278, %p279
    %p281 = scmp.ne.s32.totalorder %s269, %s270
    %p282 = scmp.eq.s32.totalorder %s29, 1
    %p283 = por %p281, %p282
    %p285 = scmp.ne.s32.totalorder %s270, %s284
    %p286 = scmp.eq.s32.totalorder %s29, 0
    %p287 = por %p285, %p286
    %s289 = sadd.s32 %s288, 1
    %p292 = scmp.eq.s32.totalorder %s23, 1
    %p293 = scmp.ne.s32.totalorder %s288, %s290
    %p294 = scmp.eq.s32.totalorder %s23, 0
    %p295 = por %p293, %p294
    %p296 = scmp.ne.s32.totalorder %s288, %s290
    %p297 = scmp.eq.s32.totalorder %s28, 1
    %p298 = por %p296, %p297
    %p299 = scmp.ne.s32.totalorder %s290, %s291
    %p300 = scmp.eq.s32.totalorder %s28, 0
    %p301 = por %p299, %p300
    %p302 = scmp.ne.s32.totalorder %s290, %s291
    %p303 = scmp.eq.s32.totalorder %s29, 1
    %p304 = por %p302, %p303
    %p306 = scmp.ne.s32.totalorder %s291, %s305
    %p307 = scmp.eq.s32.totalorder %s29, 0
    %p308 = por %p306, %p307
    %s310 = sadd.s32 %s309, 1
    %p313 = scmp.eq.s32.totalorder %s23, 1
    %p314 = scmp.ne.s32.totalorder %s309, %s311
    %p315 = scmp.eq.s32.totalorder %s23, 0
    %p316 = por %p314, %p315
    %p317 = scmp.ne.s32.totalorder %s309, %s311
    %p318 = scmp.eq.s32.totalorder %s28, 1
    %p319 = por %p317, %p318
    %p320 = scmp.ne.s32.totalorder %s311, %s312
    %p321 = scmp.eq.s32.totalorder %s28, 0
    %p322 = por %p320, %p321
    %p323 = scmp.ne.s32.totalorder %s311, %s312
    %p324 = scmp.eq.s32.totalorder %s29, 1
    %p325 = por %p323, %p324
    %p327 = scmp.ne.s32.totalorder %s312, %s326
    %p328 = scmp.eq.s32.totalorder %s29, 0
    %p329 = por %p327, %p328
    %s331 = sadd.s32 %s330, 1
    %p334 = scmp.eq.s32.totalorder %s23, 1
    %p335 = scmp.ne.s32.totalorder %s330, %s332
    %p336 = scmp.eq.s32.totalorder %s23, 0
    %p337 = por %p335, %p336
    %p338 = scmp.ne.s32.totalorder %s330, %s332
    %p339 = scmp.eq.s32.totalorder %s28, 1
    %p340 = por %p338, %p339
    %p341 = scmp.ne.s32.totalorder %s332, %s333
    %p342 = scmp.eq.s32.totalorder %s28, 0
    %p343 = por %p341, %p342
    %p344 = scmp.ne.s32.totalorder %s332, %s333
    %p345 = scmp.eq.s32.totalorder %s29, 1
    %p346 = por %p344, %p345
    %p348 = scmp.ne.s32.totalorder %s333, %s347
    %p349 = scmp.eq.s32.totalorder %s29, 0
    %p350 = por %p348, %p349
    %s351 = ssub.s32 %s23, %s30
    %p352 = scmp.eq.s32.totalorder %s351, 0
    %s354 = sadd.s32 %s353, 1
    %s355 = scalar_select %p352, %s353, %s354
    %p358 = pneg %p352
    %p359 = scmp.eq.s32.totalorder %s23, 1
    %p360 = por %p358, %p359
    %p361 = scmp.ne.s32.totalorder %s353, %s356
    %p362 = scmp.eq.s32.totalorder %s23, 0
    %p363 = por %p361, %p362
    %p364 = scmp.ne.s32.totalorder %s353, %s356
    %p365 = scmp.eq.s32.totalorder %s28, 1
    %p366 = por %p364, %p365
    %p367 = scmp.ne.s32.totalorder %s356, %s357
    %p368 = scmp.eq.s32.totalorder %s28, 0
    %p369 = por %p367, %p368
    %p370 = scmp.ne.s32.totalorder %s356, %s357
    %p371 = scmp.eq.s32.totalorder %s29, 1
    %p372 = por %p370, %p371
    %p374 = scmp.ne.s32.totalorder %s357, %s373
    %p375 = scmp.eq.s32.totalorder %s29, 0
    %p376 = por %p374, %p375
    %p377 = scmp.le.s32.totalorder 1, %s23
    %p378 = scmp.lt.s32.totalorder %s23, 3
    %p379 = pnand %p377, %p378
    %p380 = pneg %p379
    // Predicated region
    $region9: #{discriminator_forward.1} parent=5 // pred_check
      _
    $region10: #{discriminator_forward.1} parent=5 // pred_check_branch
      %382 = sbr.rel (%p379) target = $region12
    $region11: #{discriminator_forward.1} parent=5 // pred_region
      %s383 = ssub.s32 %s23, 1
      // Predicated region
      $region13: #{discriminator_forward.1} parent=11 // pred_check
        %p384 = pneg %p70
      $region14: #{discriminator_forward.1} parent=11 // pred_check_branch
        %386 = sbr.rel (%p384) target = $region16
      $region15: #{discriminator_forward.1} parent=11 // pred_region
        _
      $region16: #{discriminator_forward.1} parent=11 // pred_fallthru
        _
      // Predicated region
      $region17: #{discriminator_forward.1} parent=11 // pred_check
        %p387 = pneg %p91
      $region18: #{discriminator_forward.1} parent=11 // pred_check_branch
        %389 = sbr.rel (%p387) target = $region20
      $region19: #{discriminator_forward.1} parent=11 // pred_region
        _
      $region20: #{discriminator_forward.1} parent=11 // pred_fallthru
        _
      // Predicated region
      $region21: #{discriminator_forward.1} parent=11 // pred_check
        %p390 = pneg %p112
      $region22: #{discriminator_forward.1} parent=11 // pred_check_branch
        %392 = sbr.rel (%p390) target = $region24
      $region23: #{discriminator_forward.1} parent=11 // pred_region
        _
      $region24: #{discriminator_forward.1} parent=11 // pred_fallthru
        _
      // Predicated region
      $region25: #{discriminator_forward.1} parent=11 // pred_check
        %p393 = pneg %p133
      $region26: #{discriminator_forward.1} parent=11 // pred_check_branch
        %395 = sbr.rel (%p393) target = $region28
      $region27: #{discriminator_forward.1} parent=11 // pred_region
        _
      $region28: #{discriminator_forward.1} parent=11 // pred_fallthru
        _
      // Predicated region
      $region29: #{discriminator_forward.1} parent=11 // pred_check
        %p396 = pneg %p154
      $region30: #{discriminator_forward.1} parent=11 // pred_check_branch
        %398 = sbr.rel (%p396) target = $region32
      $region31: #{discriminator_forward.1} parent=11 // pred_region
        _
      $region32: #{discriminator_forward.1} parent=11 // pred_fallthru
        _
      // Predicated region
      $region33: #{discriminator_forward.1} parent=11 // pred_check
        %p399 = pneg %p175
      $region34: #{discriminator_forward.1} parent=11 // pred_check_branch
        %401 = sbr.rel (%p399) target = $region36
      $region35: #{discriminator_forward.1} parent=11 // pred_region
        _
      $region36: #{discriminator_forward.1} parent=11 // pred_fallthru
        _
      // Predicated region
      $region37: #{discriminator_forward.1} parent=11 // pred_check
        %p402 = pneg %p196
      $region38: #{discriminator_forward.1} parent=11 // pred_check_branch
        %404 = sbr.rel (%p402) target = $region40
      $region39: #{discriminator_forward.1} parent=11 // pred_region
        _
      $region40: #{discriminator_forward.1} parent=11 // pred_fallthru
        _
      // Predicated region
      $region41: #{discriminator_forward.1} parent=11 // pred_check
        %p405 = pneg %p217
      $region42: #{discriminator_forward.1} parent=11 // pred_check_branch
        %407 = sbr.rel (%p405) target = $region44
      $region43: #{discriminator_forward.1} parent=11 // pred_region
        _
      $region44: #{discriminator_forward.1} parent=11 // pred_fallthru
        _
      // Predicated region
      $region45: #{discriminator_forward.1} parent=11 // pred_check
        %p408 = pneg %p238
      $region46: #{discriminator_forward.1} parent=11 // pred_check_branch
        %410 = sbr.rel (%p408) target = $region48
      $region47: #{discriminator_forward.1} parent=11 // pred_region
        _
      $region48: #{discriminator_forward.1} parent=11 // pred_fallthru
        _
      // Predicated region
      $region49: #{discriminator_forward.1} parent=11 // pred_check
        %p411 = pneg %p259
      $region50: #{discriminator_forward.1} parent=11 // pred_check_branch
        %413 = sbr.rel (%p411) target = $region52
      $region51: #{discriminator_forward.1} parent=11 // pred_region
        _
      $region52: #{discriminator_forward.1} parent=11 // pred_fallthru
        _
      // Predicated region
      $region53: #{discriminator_forward.1} parent=11 // pred_check
        %p414 = pneg %p280
      $region54: #{discriminator_forward.1} parent=11 // pred_check_branch
        %416 = sbr.rel (%p414) target = $region56
      $region55: #{discriminator_forward.1} parent=11 // pred_region
        _
      $region56: #{discriminator_forward.1} parent=11 // pred_fallthru
        _
      // Predicated region
      $region57: #{discriminator_forward.1} parent=11 // pred_check
        %p417 = pneg %p301
      $region58: #{discriminator_forward.1} parent=11 // pred_check_branch
        %419 = sbr.rel (%p417) target = $region60
      $region59: #{discriminator_forward.1} parent=11 // pred_region
        _
      $region60: #{discriminator_forward.1} parent=11 // pred_fallthru
        _
      // Predicated region
      $region61: #{discriminator_forward.1} parent=11 // pred_check
        %p420 = pneg %p322
      $region62: #{discriminator_forward.1} parent=11 // pred_check_branch
        %422 = sbr.rel (%p420) target = $region64
      $region63: #{discriminator_forward.1} parent=11 // pred_region
        _
      $region64: #{discriminator_forward.1} parent=11 // pred_fallthru
        _
      // Predicated region
      $region65: #{discriminator_forward.1} parent=11 // pred_check
        %p423 = pneg %p343
      $region66: #{discriminator_forward.1} parent=11 // pred_check_branch
        %425 = sbr.rel (%p423) target = $region68
      $region67: #{discriminator_forward.1} parent=11 // pred_region
        _
      $region68: #{discriminator_forward.1} parent=11 // pred_fallthru
        _
    $region12: #{discriminator_forward.1} parent=5 // pred_fallthru
      _
    %p426 = scmp.lt.s32.totalorder %s23, 2
    // Predicated region
    $region69: #{discriminator_forward.1} parent=5 // pred_check
      %p427 = pneg %p426
    $region70: #{discriminator_forward.1} parent=5 // pred_check_branch
      %429 = sbr.rel (%p427) target = $region72
    $region71: #{discriminator_forward.1} parent=5 // pred_region
      // Predicated region
      $region73: #{discriminator_forward.1} parent=71 // pred_check
        %p430 = pneg %p43
      $region74: #{discriminator_forward.1} parent=71 // pred_check_branch
        %432 = sbr.rel (%p430) target = $region76
      $region75: #{discriminator_forward.1} parent=71 // pred_region
        %p433 = scmp.lt.s32.totalorder %s23, 1
        %s434 = scalar_select %p433, %s23, 1
        %s435 = smul.addr %s434, 50
        %s436 = smul.addr %s435, 8
        %s437 = scalar_lea.vmem %s0, %s436
      $region76: #{discriminator_forward.1} parent=71 // pred_fallthru
        _
    $region72: #{discriminator_forward.1} parent=5 // pred_fallthru
      _
    %p438 = scmp.le.s32.totalorder 1, %s23
    %p439 = scmp.lt.s32.totalorder %s23, 3
    %p440 = pnand %p438, %p439
    %p441 = pneg %p440
    // Predicated region
    $region77: #{discriminator_forward.1} parent=5 // pred_check
      _
    $region78: #{discriminator_forward.1} parent=5 // pred_check_branch
      %443 = sbr.rel (%p440) target = $region80
    $region79: #{discriminator_forward.1} parent=5 // pred_region
      %s444 = ssub.s32 %s23, 1
      %p445 = scmp.lt.s32.totalorder %s28, 1
      %s446 = scalar_select %p445, %s28, 1
      %s447 = smul.addr %s446, 50
      %s448 = smul.addr %s447, 8
      %s449 = scalar_lea.vmem %s0, %s448
      %p450 = pneg %p49
      %p451 = pneg %p46
      %p452 = pneg %p70
      %p453 = pneg %p67
      %p454 = pneg %p91
      %p455 = pneg %p88
      %p456 = pneg %p112
      %p457 = pneg %p109
      %p458 = pneg %p133
      %p459 = pneg %p130
      %p460 = pneg %p154
      %p461 = pneg %p151
      %p462 = pneg %p175
      %p463 = pneg %p172
      %p464 = pneg %p196
      %p465 = pneg %p193
      %p466 = pneg %p217
      %p467 = pneg %p214
      %p468 = pneg %p238
      %p469 = pneg %p235
      %p470 = pneg %p259
      %p471 = pneg %p256
      %p472 = pneg %p280
      %p473 = pneg %p277
      %p474 = pneg %p301
      %p475 = pneg %p298
      %p476 = pneg %p322
      %p477 = pneg %p319
      %p478 = pneg %p343
      %p479 = pneg %p340
      %p480 = pneg %p369
      %p481 = pneg %p366
      %p482 = scmp.lt.s32.totalorder %s28, 1
      %s483 = scalar_select %p482, %s28, 1
      %s484 = scalar_lea.vmem %s15, %s483
      %p485 = scmp.lt.s32.totalorder %s28, 1
      %s486 = scalar_select %p485, %s28, 1
      %s487 = smul.addr %s486, 50
      %s488 = smul.addr %s487, 8
      %s489 = scalar_lea.vmem %s0, %s488
      %p490 = scmp.lt.s32.totalorder %s28, 1
      %s491 = scalar_select %p490, %s28, 1
      %s492 = scalar_lea.vmem %s15, %s491
      %v494 = vld [vmem:[%s489] sm:$0xff]
      %v495 = vld [vmem:[%s489 + $0x8] sm:$0xff]
      %v496 = vld [vmem:[%s489 + $0x10] sm:$0xff]
      %v497 = vld [vmem:[%s489 + $0x18] sm:$0xff]
      %v498 = vld [vmem:[%s489 + $0x20] sm:$0xff]
      %v499 = vld [vmem:[%s489 + $0x28] sm:$0xff]
      %v500 = vld [vmem:[%s489 + $0x30] sm:$0xff]
      %v501 = vld [vmem:[%s489 + $0x38] sm:$0xff]
      %v502 = vld [vmem:[%s489 + $0x40] sm:$0xff]
      %v503 = vld [vmem:[%s489 + $0x48] sm:$0xff]
      %v504 = vld [vmem:[%s489 + $0x50] sm:$0xff]
      %v505 = vld [vmem:[%s489 + $0x58] sm:$0xff]
      %v506 = vld [vmem:[%s489 + $0x60] sm:$0xff]
      %v507 = vld [vmem:[%s489 + $0x68] sm:$0xff]
      %v508 = vld [vmem:[%s489 + $0x70] sm:$0xff]
      %v509 = vld [vmem:[%s489 + $0x78] sm:$0xff]
      %v510 = vld [vmem:[%s489 + $0x80] sm:$0xff]
      %v511 = vld [vmem:[%s489 + $0x88] sm:$0xff]
      %v512 = vld [vmem:[%s489 + $0x90] sm:$0xff]
      %v513 = vld [vmem:[%s489 + $0x98] sm:$0xff]
      %v514 = vld [vmem:[%s489 + $0xa0] sm:$0xff]
      %v515 = vld [vmem:[%s489 + $0xa8] sm:$0xff]
      %v516 = vld [vmem:[%s489 + $0xb0] sm:$0xff]
      %v517 = vld [vmem:[%s489 + $0xb8] sm:$0xff]
      %v518 = vld [vmem:[%s489 + $0xc0] sm:$0xff]
      %v519 = vld [vmem:[%s489 + $0xc8] sm:$0xff]
      %v520 = vld [vmem:[%s489 + $0xd0] sm:$0xff]
      %v521 = vld [vmem:[%s489 + $0xd8] sm:$0xff]
      %v522 = vld [vmem:[%s489 + $0xe0] sm:$0xff]
      %v523 = vld [vmem:[%s489 + $0xe8] sm:$0xff]
      %v524 = vld [vmem:[%s489 + $0xf0] sm:$0xff]
      %v525 = vld [vmem:[%s489 + $0xf8] sm:$0xff]
      %v526 = vld [vmem:[%s489 + $0x100] sm:$0xff]
      %v527 = vld [vmem:[%s489 + $0x108] sm:$0xff]
      %v528 = vld [vmem:[%s489 + $0x110] sm:$0xff]
      %v529 = vld [vmem:[%s489 + $0x118] sm:$0xff]
      %v530 = vld [vmem:[%s489 + $0x120] sm:$0xff]
      %v531 = vld [vmem:[%s489 + $0x128] sm:$0xff]
      %v532 = vld [vmem:[%s489 + $0x130] sm:$0xff]
      %v533 = vld [vmem:[%s489 + $0x138] sm:$0xff]
      %v534 = vld [vmem:[%s489 + $0x140] sm:$0xff]
      %v535 = vld [vmem:[%s489 + $0x148] sm:$0xff]
      %v536 = vld [vmem:[%s489 + $0x150] sm:$0xff]
      %v537 = vld [vmem:[%s489 + $0x158] sm:$0xff]
      %v538 = vld [vmem:[%s489 + $0x160] sm:$0xff]
      %v539 = vld [vmem:[%s489 + $0x168] sm:$0xff]
      %v540 = vld [vmem:[%s489 + $0x170] sm:$0xff]
      %v541 = vld [vmem:[%s489 + $0x178] sm:$0xff]
      %v542 = vld [vmem:[%s489 + $0x180] sm:$0xff]
      %v543 = vld [vmem:[%s489 + $0x188] sm:$0xff]
      %v544 = vld [vmem:[%s2] sm:$0x1]
      %546 = vset.pattern.permute.xlu0 0
      %547 = vperm.xlu0 %546, %v494
      %v548 = vpop.permute.xlu0 %547
      %551 = vset.pattern.permute.xlu0 0
      %552 = vperm.xlu0 %551, %v495
      %v553 = vpop.permute.xlu0 %552
      %556 = vset.pattern.permute.xlu0 0
      %557 = vperm.xlu0 %556, %v496
      %v558 = vpop.permute.xlu0 %557
      %561 = vset.pattern.permute.xlu0 0
      %562 = vperm.xlu0 %561, %v497
      %v563 = vpop.permute.xlu0 %562
      %566 = vset.pattern.permute.xlu0 0
      %567 = vperm.xlu0 %566, %v498
      %v568 = vpop.permute.xlu0 %567
      %571 = vset.pattern.permute.xlu0 0
      %572 = vperm.xlu0 %571, %v499
      %v573 = vpop.permute.xlu0 %572
      %576 = vset.pattern.permute.xlu0 0
      %577 = vperm.xlu0 %576, %v500
      %v578 = vpop.permute.xlu0 %577
      %581 = vset.pattern.permute.xlu0 0
      %582 = vperm.xlu0 %581, %v501
      %v583 = vpop.permute.xlu0 %582
      %586 = vset.pattern.permute.xlu0 0
      %587 = vperm.xlu0 %586, %v502
      %v588 = vpop.permute.xlu0 %587
      %591 = vset.pattern.permute.xlu0 0
      %592 = vperm.xlu0 %591, %v503
      %v593 = vpop.permute.xlu0 %592
      %596 = vset.pattern.permute.xlu0 0
      %597 = vperm.xlu0 %596, %v504
      %v598 = vpop.permute.xlu0 %597
      %601 = vset.pattern.permute.xlu0 0
      %602 = vperm.xlu0 %601, %v505
      %v603 = vpop.permute.xlu0 %602
      %606 = vset.pattern.permute.xlu0 0
      %607 = vperm.xlu0 %606, %v506
      %v608 = vpop.permute.xlu0 %607
      %611 = vset.pattern.permute.xlu0 0
      %612 = vperm.xlu0 %611, %v507
      %v613 = vpop.permute.xlu0 %612
      %616 = vset.pattern.permute.xlu0 0
      %617 = vperm.xlu0 %616, %v508
      %v618 = vpop.permute.xlu0 %617
      %621 = vset.pattern.permute.xlu0 0
      %622 = vperm.xlu0 %621, %v509
      %v623 = vpop.permute.xlu0 %622
      %626 = vset.pattern.permute.xlu0 0
      %627 = vperm.xlu0 %626, %v510
      %v628 = vpop.permute.xlu0 %627
      %631 = vset.pattern.permute.xlu0 0
      %632 = vperm.xlu0 %631, %v511
      %v633 = vpop.permute.xlu0 %632
      %636 = vset.pattern.permute.xlu0 0
      %637 = vperm.xlu0 %636, %v512
      %v638 = vpop.permute.xlu0 %637
      %641 = vset.pattern.permute.xlu0 0
      %642 = vperm.xlu0 %641, %v513
      %v643 = vpop.permute.xlu0 %642
      %646 = vset.pattern.permute.xlu0 0
      %647 = vperm.xlu0 %646, %v514
      %v648 = vpop.permute.xlu0 %647
      %651 = vset.pattern.permute.xlu0 0
      %652 = vperm.xlu0 %651, %v515
      %v653 = vpop.permute.xlu0 %652
      %656 = vset.pattern.permute.xlu0 0
      %657 = vperm.xlu0 %656, %v516
      %v658 = vpop.permute.xlu0 %657
      %661 = vset.pattern.permute.xlu0 0
      %662 = vperm.xlu0 %661, %v517
      %v663 = vpop.permute.xlu0 %662
      %666 = vset.pattern.permute.xlu0 0
      %667 = vperm.xlu0 %666, %v518
      %v668 = vpop.permute.xlu0 %667
      %671 = vset.pattern.permute.xlu0 0
      %672 = vperm.xlu0 %671, %v519
      %v673 = vpop.permute.xlu0 %672
      %676 = vset.pattern.permute.xlu0 0
      %677 = vperm.xlu0 %676, %v520
      %v678 = vpop.permute.xlu0 %677
      %681 = vset.pattern.permute.xlu0 0
      %682 = vperm.xlu0 %681, %v521
      %v683 = vpop.permute.xlu0 %682
      %686 = vset.pattern.permute.xlu0 0
      %687 = vperm.xlu0 %686, %v522
      %v688 = vpop.permute.xlu0 %687
      %691 = vset.pattern.permute.xlu0 0
      %692 = vperm.xlu0 %691, %v523
      %v693 = vpop.permute.xlu0 %692
      %696 = vset.pattern.permute.xlu0 0
      %697 = vperm.xlu0 %696, %v524
      %v698 = vpop.permute.xlu0 %697
      %701 = vset.pattern.permute.xlu0 0
      %702 = vperm.xlu0 %701, %v525
      %v703 = vpop.permute.xlu0 %702
      %706 = vset.pattern.permute.xlu0 0
      %707 = vperm.xlu0 %706, %v526
      %v708 = vpop.permute.xlu0 %707
      %711 = vset.pattern.permute.xlu0 0
      %712 = vperm.xlu0 %711, %v527
      %v713 = vpop.permute.xlu0 %712
      %716 = vset.pattern.permute.xlu0 0
      %717 = vperm.xlu0 %716, %v528
      %v718 = vpop.permute.xlu0 %717
      %721 = vset.pattern.permute.xlu0 0
      %722 = vperm.xlu0 %721, %v529
      %v723 = vpop.permute.xlu0 %722
      %726 = vset.pattern.permute.xlu0 0
      %727 = vperm.xlu0 %726, %v530
      %v728 = vpop.permute.xlu0 %727
      %731 = vset.pattern.permute.xlu0 0
      %732 = vperm.xlu0 %731, %v531
      %v733 = vpop.permute.xlu0 %732
      %736 = vset.pattern.permute.xlu0 0
      %737 = vperm.xlu0 %736, %v532
      %v738 = vpop.permute.xlu0 %737
      %741 = vset.pattern.permute.xlu0 0
      %742 = vperm.xlu0 %741, %v533
      %v743 = vpop.permute.xlu0 %742
      %746 = vset.pattern.permute.xlu0 0
      %747 = vperm.xlu0 %746, %v534
      %v748 = vpop.permute.xlu0 %747
      %751 = vset.pattern.permute.xlu0 0
      %752 = vperm.xlu0 %751, %v535
      %v753 = vpop.permute.xlu0 %752
      %756 = vset.pattern.permute.xlu0 0
      %757 = vperm.xlu0 %756, %v536
      %v758 = vpop.permute.xlu0 %757
      %761 = vset.pattern.permute.xlu0 0
      %762 = vperm.xlu0 %761, %v537
      %v763 = vpop.permute.xlu0 %762
      %766 = vset.pattern.permute.xlu0 0
      %767 = vperm.xlu0 %766, %v538
      %v768 = vpop.permute.xlu0 %767
      %771 = vset.pattern.permute.xlu0 0
      %772 = vperm.xlu0 %771, %v539
      %v773 = vpop.permute.xlu0 %772
      %776 = vset.pattern.permute.xlu0 0
      %777 = vperm.xlu0 %776, %v540
      %v778 = vpop.permute.xlu0 %777
      %781 = vset.pattern.permute.xlu0 0
      %782 = vperm.xlu0 %781, %v541
      %v783 = vpop.permute.xlu0 %782
      %786 = vset.pattern.permute.xlu0 0
      %787 = vperm.xlu0 %786, %v542
      %v788 = vpop.permute.xlu0 %787
      %791 = vset.pattern.permute.xlu0 0
      %792 = vperm.xlu0 %791, %v543
      %v793 = vpop.permute.xlu0 %792
      %v796 = vperm.slane %v544, 0
      %v798 = vmul.f32 %v548, %v796
      %v799 = vmul.f32 %v553, %v796
      %v800 = vmul.f32 %v558, %v796
      %v801 = vmul.f32 %v563, %v796
      %v802 = vmul.f32 %v568, %v796
      %v803 = vmul.f32 %v573, %v796
      %v804 = vmul.f32 %v578, %v796
      %v805 = vmul.f32 %v583, %v796
      %v806 = vmul.f32 %v588, %v796
      %v807 = vmul.f32 %v593, %v796
      %v808 = vmul.f32 %v598, %v796
      %v809 = vmul.f32 %v603, %v796
      %v810 = vmul.f32 %v608, %v796
      %v811 = vmul.f32 %v613, %v796
      %v812 = vmul.f32 %v618, %v796
      %v813 = vmul.f32 %v623, %v796
      %v814 = vmul.f32 %v628, %v796
      %v815 = vmul.f32 %v633, %v796
      %v816 = vmul.f32 %v638, %v796
      %v817 = vmul.f32 %v643, %v796
      %v818 = vmul.f32 %v648, %v796
      %v819 = vmul.f32 %v653, %v796
      %v820 = vmul.f32 %v658, %v796
      %v821 = vmul.f32 %v663, %v796
      %v822 = vmul.f32 %v668, %v796
      %v823 = vmul.f32 %v673, %v796
      %v824 = vmul.f32 %v678, %v796
      %v825 = vmul.f32 %v683, %v796
      %v826 = vmul.f32 %v688, %v796
      %v827 = vmul.f32 %v693, %v796
      %v828 = vmul.f32 %v698, %v796
      %v829 = vmul.f32 %v703, %v796
      %v830 = vmul.f32 %v708, %v796
      %v831 = vmul.f32 %v713, %v796
      %v832 = vmul.f32 %v718, %v796
      %v833 = vmul.f32 %v723, %v796
      %v834 = vmul.f32 %v728, %v796
      %v835 = vmul.f32 %v733, %v796
      %v836 = vmul.f32 %v738, %v796
      %v837 = vmul.f32 %v743, %v796
      %v838 = vmul.f32 %v748, %v796
      %v839 = vmul.f32 %v753, %v796
      %v840 = vmul.f32 %v758, %v796
      %v841 = vmul.f32 %v763, %v796
      %v842 = vmul.f32 %v768, %v796
      %v843 = vmul.f32 %v773, %v796
      %v844 = vmul.f32 %v778, %v796
      %v845 = vmul.f32 %v783, %v796
      %v846 = vmul.f32 %v788, %v796
      %v847 = vmul.f32 %v793, %v796
      %v848 = vld [vmem:[%s3] sm:$0x1]
      %v850 = vperm.slane %v848, 0
      %v852 = vadd.f32 %v798, %v850
      %v853 = vadd.f32 %v799, %v850
      %v854 = vadd.f32 %v800, %v850
      %v855 = vadd.f32 %v801, %v850
      %v856 = vadd.f32 %v802, %v850
      %v857 = vadd.f32 %v803, %v850
      %v858 = vadd.f32 %v804, %v850
      %v859 = vadd.f32 %v805, %v850
      %v860 = vadd.f32 %v806, %v850
      %v861 = vadd.f32 %v807, %v850
      %v862 = vadd.f32 %v808, %v850
      %v863 = vadd.f32 %v809, %v850
      %v864 = vadd.f32 %v810, %v850
      %v865 = vadd.f32 %v811, %v850
      %v866 = vadd.f32 %v812, %v850
      %v867 = vadd.f32 %v813, %v850
      %v868 = vadd.f32 %v814, %v850
      %v869 = vadd.f32 %v815, %v850
      %v870 = vadd.f32 %v816, %v850
      %v871 = vadd.f32 %v817, %v850
      %v872 = vadd.f32 %v818, %v850
      %v873 = vadd.f32 %v819, %v850
      %v874 = vadd.f32 %v820, %v850
      %v875 = vadd.f32 %v821, %v850
      %v876 = vadd.f32 %v822, %v850
      %v877 = vadd.f32 %v823, %v850
      %v878 = vadd.f32 %v824, %v850
      %v879 = vadd.f32 %v825, %v850
      %v880 = vadd.f32 %v826, %v850
      %v881 = vadd.f32 %v827, %v850
      %v882 = vadd.f32 %v828, %v850
      %v883 = vadd.f32 %v829, %v850
      %v884 = vadd.f32 %v830, %v850
      %v885 = vadd.f32 %v831, %v850
      %v886 = vadd.f32 %v832, %v850
      %v887 = vadd.f32 %v833, %v850
      %v888 = vadd.f32 %v834, %v850
      %v889 = vadd.f32 %v835, %v850
      %v890 = vadd.f32 %v836, %v850
      %v891 = vadd.f32 %v837, %v850
      %v892 = vadd.f32 %v838, %v850
      %v893 = vadd.f32 %v839, %v850
      %v894 = vadd.f32 %v840, %v850
      %v895 = vadd.f32 %v841, %v850
      %v896 = vadd.f32 %v842, %v850
      %v897 = vadd.f32 %v843, %v850
      %v898 = vadd.f32 %v844, %v850
      %v899 = vadd.f32 %v845, %v850
      %v900 = vadd.f32 %v846, %v850
      %v901 = vadd.f32 %v847, %v850
      %v902 = vmax.f32 %v852, 0.0
      %v903 = vmax.f32 %v853, 0.0
      %v904 = vmax.f32 %v854, 0.0
      %v905 = vmax.f32 %v855, 0.0
      %v906 = vmax.f32 %v856, 0.0
      %v907 = vmax.f32 %v857, 0.0
      %v908 = vmax.f32 %v858, 0.0
      %v909 = vmax.f32 %v859, 0.0
      %v910 = vmax.f32 %v860, 0.0
      %v911 = vmax.f32 %v861, 0.0
      %v912 = vmax.f32 %v862, 0.0
      %v913 = vmax.f32 %v863, 0.0
      %v914 = vmax.f32 %v864, 0.0
      %v915 = vmax.f32 %v865, 0.0
      %v916 = vmax.f32 %v866, 0.0
      %v917 = vmax.f32 %v867, 0.0
      %v918 = vmax.f32 %v868, 0.0
      %v919 = vmax.f32 %v869, 0.0
      %v920 = vmax.f32 %v870, 0.0
      %v921 = vmax.f32 %v871, 0.0
      %v922 = vmax.f32 %v872, 0.0
      %v923 = vmax.f32 %v873, 0.0
      %v924 = vmax.f32 %v874, 0.0
      %v925 = vmax.f32 %v875, 0.0
      %v926 = vmax.f32 %v876, 0.0
      %v927 = vmax.f32 %v877, 0.0
      %v928 = vmax.f32 %v878, 0.0
      %v929 = vmax.f32 %v879, 0.0
      %v930 = vmax.f32 %v880, 0.0
      %v931 = vmax.f32 %v881, 0.0
      %v932 = vmax.f32 %v882, 0.0
      %v933 = vmax.f32 %v883, 0.0
      %v934 = vmax.f32 %v884, 0.0
      %v935 = vmax.f32 %v885, 0.0
      %v936 = vmax.f32 %v886, 0.0
      %v937 = vmax.f32 %v887, 0.0
      %v938 = vmax.f32 %v888, 0.0
      %v939 = vmax.f32 %v889, 0.0
      %v940 = vmax.f32 %v890, 0.0
      %v941 = vmax.f32 %v891, 0.0
      %v942 = vmax.f32 %v892, 0.0
      %v943 = vmax.f32 %v893, 0.0
      %v944 = vmax.f32 %v894, 0.0
      %v945 = vmax.f32 %v895, 0.0
      %v946 = vmax.f32 %v896, 0.0
      %v947 = vmax.f32 %v897, 0.0
      %v948 = vmax.f32 %v898, 0.0
      %v949 = vmax.f32 %v899, 0.0
      %v950 = vmax.f32 %v900, 0.0
      %v951 = vmax.f32 %v901, 0.0
      %v952 = vld [vmem:[%s1] sm:$0xff]
      %v953 = vld [vmem:[%s1 + $0x8] sm:$0xff]
      %v954 = vld [vmem:[%s1 + $0x10] sm:$0xff]
      %v955 = vld [vmem:[%s1 + $0x18] sm:$0xff]
      %v956 = vld [vmem:[%s1 + $0x20] sm:$0xff]
      %v957 = vld [vmem:[%s1 + $0x28] sm:$0xff]
      %v958 = vld [vmem:[%s1 + $0x30] sm:$0xff]
      %v959 = vld [vmem:[%s1 + $0x38] sm:$0xff]
      %v960 = vld [vmem:[%s1 + $0x40] sm:$0xff]
      %v961 = vld [vmem:[%s1 + $0x48] sm:$0xff]
      %v962 = vld [vmem:[%s1 + $0x50] sm:$0xff]
      %v963 = vld [vmem:[%s1 + $0x58] sm:$0xff]
      %v964 = vld [vmem:[%s1 + $0x60] sm:$0xff]
      %v965 = vld [vmem:[%s1 + $0x68] sm:$0xff]
      %v966 = vld [vmem:[%s1 + $0x70] sm:$0xff]
      %v967 = vld [vmem:[%s1 + $0x78] sm:$0xff]
      %v968 = vld [vmem:[%s1 + $0x80] sm:$0xff]
      %v969 = vld [vmem:[%s1 + $0x88] sm:$0xff]
      %v970 = vld [vmem:[%s1 + $0x90] sm:$0xff]
      %v971 = vld [vmem:[%s1 + $0x98] sm:$0xff]
      %v972 = vld [vmem:[%s1 + $0xa0] sm:$0xff]
      %v973 = vld [vmem:[%s1 + $0xa8] sm:$0xff]
      %v974 = vld [vmem:[%s1 + $0xb0] sm:$0xff]
      %v975 = vld [vmem:[%s1 + $0xb8] sm:$0xff]
      %v976 = vld [vmem:[%s1 + $0xc0] sm:$0xff]
      %v977 = vld [vmem:[%s1 + $0xc8] sm:$0xff]
      %v978 = vld [vmem:[%s1 + $0xd0] sm:$0xff]
      %v979 = vld [vmem:[%s1 + $0xd8] sm:$0xff]
      %v980 = vld [vmem:[%s1 + $0xe0] sm:$0xff]
      %v981 = vld [vmem:[%s1 + $0xe8] sm:$0xff]
      %v982 = vld [vmem:[%s1 + $0xf0] sm:$0xff]
      %v983 = vld [vmem:[%s1 + $0xf8] sm:$0xff]
      %v984 = vld [vmem:[%s1 + $0x100] sm:$0xff]
      %v985 = vld [vmem:[%s1 + $0x108] sm:$0xff]
      %v986 = vld [vmem:[%s1 + $0x110] sm:$0xff]
      %v987 = vld [vmem:[%s1 + $0x118] sm:$0xff]
      %v988 = vld [vmem:[%s1 + $0x120] sm:$0xff]
      %v989 = vld [vmem:[%s1 + $0x128] sm:$0xff]
      %v990 = vld [vmem:[%s1 + $0x130] sm:$0xff]
      %v991 = vld [vmem:[%s1 + $0x138] sm:$0xff]
      %v992 = vld [vmem:[%s1 + $0x140] sm:$0xff]
      %v993 = vld [vmem:[%s1 + $0x148] sm:$0xff]
      %v994 = vld [vmem:[%s1 + $0x150] sm:$0xff]
      %v995 = vld [vmem:[%s1 + $0x158] sm:$0xff]
      %v996 = vld [vmem:[%s1 + $0x160] sm:$0xff]
      %v997 = vld [vmem:[%s1 + $0x168] sm:$0xff]
      %v998 = vld [vmem:[%s1 + $0x170] sm:$0xff]
      %v999 = vld [vmem:[%s1 + $0x178] sm:$0xff]
      %v1000 = vld [vmem:[%s1 + $0x180] sm:$0xff]
      %v1001 = vld [vmem:[%s1 + $0x188] sm:$0xff]
      %1003 = vset.pattern.permute.xlu0 0
      %1004 = vperm.xlu0 %1003, %v952
      %v1005 = vpop.permute.xlu0 %1004
      %1008 = vset.pattern.permute.xlu0 0
      %1009 = vperm.xlu0 %1008, %v953
      %v1010 = vpop.permute.xlu0 %1009
      %1013 = vset.pattern.permute.xlu0 0
      %1014 = vperm.xlu0 %1013, %v954
      %v1015 = vpop.permute.xlu0 %1014
      %1018 = vset.pattern.permute.xlu0 0
      %1019 = vperm.xlu0 %1018, %v955
      %v1020 = vpop.permute.xlu0 %1019
      %1023 = vset.pattern.permute.xlu0 0
      %1024 = vperm.xlu0 %1023, %v956
      %v1025 = vpop.permute.xlu0 %1024
      %1028 = vset.pattern.permute.xlu0 0
      %1029 = vperm.xlu0 %1028, %v957
      %v1030 = vpop.permute.xlu0 %1029
      %1033 = vset.pattern.permute.xlu0 0
      %1034 = vperm.xlu0 %1033, %v958
      %v1035 = vpop.permute.xlu0 %1034
      %1038 = vset.pattern.permute.xlu0 0
      %1039 = vperm.xlu0 %1038, %v959
      %v1040 = vpop.permute.xlu0 %1039
      %1043 = vset.pattern.permute.xlu0 0
      %1044 = vperm.xlu0 %1043, %v960
      %v1045 = vpop.permute.xlu0 %1044
      %1048 = vset.pattern.permute.xlu0 0
      %1049 = vperm.xlu0 %1048, %v961
      %v1050 = vpop.permute.xlu0 %1049
      %1053 = vset.pattern.permute.xlu0 0
      %1054 = vperm.xlu0 %1053, %v962
      %v1055 = vpop.permute.xlu0 %1054
      %1058 = vset.pattern.permute.xlu0 0
      %1059 = vperm.xlu0 %1058, %v963
      %v1060 = vpop.permute.xlu0 %1059
      %1063 = vset.pattern.permute.xlu0 0
      %1064 = vperm.xlu0 %1063, %v964
      %v1065 = vpop.permute.xlu0 %1064
      %1068 = vset.pattern.permute.xlu0 0
      %1069 = vperm.xlu0 %1068, %v965
      %v1070 = vpop.permute.xlu0 %1069
      %1073 = vset.pattern.permute.xlu0 0
      %1074 = vperm.xlu0 %1073, %v966
      %v1075 = vpop.permute.xlu0 %1074
      %1078 = vset.pattern.permute.xlu0 0
      %1079 = vperm.xlu0 %1078, %v967
      %v1080 = vpop.permute.xlu0 %1079
      %1083 = vset.pattern.permute.xlu0 0
      %1084 = vperm.xlu0 %1083, %v968
      %v1085 = vpop.permute.xlu0 %1084
      %1088 = vset.pattern.permute.xlu0 0
      %1089 = vperm.xlu0 %1088, %v969
      %v1090 = vpop.permute.xlu0 %1089
      %1093 = vset.pattern.permute.xlu0 0
      %1094 = vperm.xlu0 %1093, %v970
      %v1095 = vpop.permute.xlu0 %1094
      %1098 = vset.pattern.permute.xlu0 0
      %1099 = vperm.xlu0 %1098, %v971
      %v1100 = vpop.permute.xlu0 %1099
      %1103 = vset.pattern.permute.xlu0 0
      %1104 = vperm.xlu0 %1103, %v972
      %v1105 = vpop.permute.xlu0 %1104
      %1108 = vset.pattern.permute.xlu0 0
      %1109 = vperm.xlu0 %1108, %v973
      %v1110 = vpop.permute.xlu0 %1109
      %1113 = vset.pattern.permute.xlu0 0
      %1114 = vperm.xlu0 %1113, %v974
      %v1115 = vpop.permute.xlu0 %1114
      %1118 = vset.pattern.permute.xlu0 0
      %1119 = vperm.xlu0 %1118, %v975
      %v1120 = vpop.permute.xlu0 %1119
      %1123 = vset.pattern.permute.xlu0 0
      %1124 = vperm.xlu0 %1123, %v976
      %v1125 = vpop.permute.xlu0 %1124
      %1128 = vset.pattern.permute.xlu0 0
      %1129 = vperm.xlu0 %1128, %v977
      %v1130 = vpop.permute.xlu0 %1129
      %1133 = vset.pattern.permute.xlu0 0
      %1134 = vperm.xlu0 %1133, %v978
      %v1135 = vpop.permute.xlu0 %1134
      %1138 = vset.pattern.permute.xlu0 0
      %1139 = vperm.xlu0 %1138, %v979
      %v1140 = vpop.permute.xlu0 %1139
      %1143 = vset.pattern.permute.xlu0 0
      %1144 = vperm.xlu0 %1143, %v980
      %v1145 = vpop.permute.xlu0 %1144
      %1148 = vset.pattern.permute.xlu0 0
      %1149 = vperm.xlu0 %1148, %v981
      %v1150 = vpop.permute.xlu0 %1149
      %1153 = vset.pattern.permute.xlu0 0
      %1154 = vperm.xlu0 %1153, %v982
      %v1155 = vpop.permute.xlu0 %1154
      %1158 = vset.pattern.permute.xlu0 0
      %1159 = vperm.xlu0 %1158, %v983
      %v1160 = vpop.permute.xlu0 %1159
      %1163 = vset.pattern.permute.xlu0 0
      %1164 = vperm.xlu0 %1163, %v984
      %v1165 = vpop.permute.xlu0 %1164
      %1168 = vset.pattern.permute.xlu0 0
      %1169 = vperm.xlu0 %1168, %v985
      %v1170 = vpop.permute.xlu0 %1169
      %1173 = vset.pattern.permute.xlu0 0
      %1174 = vperm.xlu0 %1173, %v986
      %v1175 = vpop.permute.xlu0 %1174
      %1178 = vset.pattern.permute.xlu0 0
      %1179 = vperm.xlu0 %1178, %v987
      %v1180 = vpop.permute.xlu0 %1179
      %1183 = vset.pattern.permute.xlu0 0
      %1184 = vperm.xlu0 %1183, %v988
      %v1185 = vpop.permute.xlu0 %1184
      %1188 = vset.pattern.permute.xlu0 0
      %1189 = vperm.xlu0 %1188, %v989
      %v1190 = vpop.permute.xlu0 %1189
      %1193 = vset.pattern.permute.xlu0 0
      %1194 = vperm.xlu0 %1193, %v990
      %v1195 = vpop.permute.xlu0 %1194
      %1198 = vset.pattern.permute.xlu0 0
      %1199 = vperm.xlu0 %1198, %v991
      %v1200 = vpop.permute.xlu0 %1199
      %1203 = vset.pattern.permute.xlu0 0
      %1204 = vperm.xlu0 %1203, %v992
      %v1205 = vpop.permute.xlu0 %1204
      %1208 = vset.pattern.permute.xlu0 0
      %1209 = vperm.xlu0 %1208, %v993
      %v1210 = vpop.permute.xlu0 %1209
      %1213 = vset.pattern.permute.xlu0 0
      %1214 = vperm.xlu0 %1213, %v994
      %v1215 = vpop.permute.xlu0 %1214
      %1218 = vset.pattern.permute.xlu0 0
      %1219 = vperm.xlu0 %1218, %v995
      %v1220 = vpop.permute.xlu0 %1219
      %1223 = vset.pattern.permute.xlu0 0
      %1224 = vperm.xlu0 %1223, %v996
      %v1225 = vpop.permute.xlu0 %1224
      %1228 = vset.pattern.permute.xlu0 0
      %1229 = vperm.xlu0 %1228, %v997
      %v1230 = vpop.permute.xlu0 %1229
      %1233 = vset.pattern.permute.xlu0 0
      %1234 = vperm.xlu0 %1233, %v998
      %v1235 = vpop.permute.xlu0 %1234
      %1238 = vset.pattern.permute.xlu0 0
      %1239 = vperm.xlu0 %1238, %v999
      %v1240 = vpop.permute.xlu0 %1239
      %1243 = vset.pattern.permute.xlu0 0
      %1244 = vperm.xlu0 %1243, %v1000
      %v1245 = vpop.permute.xlu0 %1244
      %1248 = vset.pattern.permute.xlu0 0
      %1249 = vperm.xlu0 %1248, %v1001
      %v1250 = vpop.permute.xlu0 %1249
      %v1252 = vmul.f32 %v902, %v1005
      %v1253 = vmul.f32 %v903, %v1010
      %v1254 = vmul.f32 %v904, %v1015
      %v1255 = vmul.f32 %v905, %v1020
      %v1256 = vmul.f32 %v906, %v1025
      %v1257 = vmul.f32 %v907, %v1030
      %v1258 = vmul.f32 %v908, %v1035
      %v1259 = vmul.f32 %v909, %v1040
      %v1260 = vmul.f32 %v910, %v1045
      %v1261 = vmul.f32 %v911, %v1050
      %v1262 = vmul.f32 %v912, %v1055
      %v1263 = vmul.f32 %v913, %v1060
      %v1264 = vmul.f32 %v914, %v1065
      %v1265 = vmul.f32 %v915, %v1070
      %v1266 = vmul.f32 %v916, %v1075
      %v1267 = vmul.f32 %v917, %v1080
      %v1268 = vmul.f32 %v918, %v1085
      %v1269 = vmul.f32 %v919, %v1090
      %v1270 = vmul.f32 %v920, %v1095
      %v1271 = vmul.f32 %v921, %v1100
      %v1272 = vmul.f32 %v922, %v1105
      %v1273 = vmul.f32 %v923, %v1110
      %v1274 = vmul.f32 %v924, %v1115
      %v1275 = vmul.f32 %v925, %v1120
      %v1276 = vmul.f32 %v926, %v1125
      %v1277 = vmul.f32 %v927, %v1130
      %v1278 = vmul.f32 %v928, %v1135
      %v1279 = vmul.f32 %v929, %v1140
      %v1280 = vmul.f32 %v930, %v1145
      %v1281 = vmul.f32 %v931, %v1150
      %v1282 = vmul.f32 %v932, %v1155
      %v1283 = vmul.f32 %v933, %v1160
      %v1284 = vmul.f32 %v934, %v1165
      %v1285 = vmul.f32 %v935, %v1170
      %v1286 = vmul.f32 %v936, %v1175
      %v1287 = vmul.f32 %v937, %v1180
      %v1288 = vmul.f32 %v938, %v1185
      %v1289 = vmul.f32 %v939, %v1190
      %v1290 = vmul.f32 %v940, %v1195
      %v1291 = vmul.f32 %v941, %v1200
      %v1292 = vmul.f32 %v942, %v1205
      %v1293 = vmul.f32 %v943, %v1210
      %v1294 = vmul.f32 %v944, %v1215
      %v1295 = vmul.f32 %v945, %v1220
      %v1296 = vmul.f32 %v946, %v1225
      %v1297 = vmul.f32 %v947, %v1230
      %v1298 = vmul.f32 %v948, %v1235
      %v1299 = vmul.f32 %v949, %v1240
      %v1300 = vmul.f32 %v950, %v1245
      %v1301 = vmul.f32 %v951, %v1250
      %v1302 = vpack.c.bf16 %v1253, %v1252
      %v1303 = vpack.c.bf16 %v1255, %v1254
      %v1304 = vpack.c.bf16 %v1257, %v1256
      %v1305 = vpack.c.bf16 %v1259, %v1258
      %v1306 = vpack.c.bf16 %v1261, %v1260
      %v1307 = vpack.c.bf16 %v1263, %v1262
      %v1308 = vpack.c.bf16 %v1265, %v1264
      %v1309 = vpack.c.bf16 %v1267, %v1266
      %v1310 = vpack.c.bf16 %v1269, %v1268
      %v1311 = vpack.c.bf16 %v1271, %v1270
      %v1312 = vpack.c.bf16 %v1273, %v1272
      %v1313 = vpack.c.bf16 %v1275, %v1274
      %v1314 = vpack.c.bf16 %v1277, %v1276
      %v1315 = vpack.c.bf16 %v1279, %v1278
      %v1316 = vpack.c.bf16 %v1281, %v1280
      %v1317 = vpack.c.bf16 %v1283, %v1282
      %v1318 = vpack.c.bf16 %v1285, %v1284
      %v1319 = vpack.c.bf16 %v1287, %v1286
      %v1320 = vpack.c.bf16 %v1289, %v1288
      %v1321 = vpack.c.bf16 %v1291, %v1290
      %v1322 = vpack.c.bf16 %v1293, %v1292
      %v1323 = vpack.c.bf16 %v1295, %v1294
      %v1324 = vpack.c.bf16 %v1297, %v1296
      %v1325 = vpack.c.bf16 %v1299, %v1298
      %v1326 = vpack.c.bf16 %v1301, %v1300
      %v1327 = vld [vmem:[%s4] sm:$0xff]
      %v1328 = vld [vmem:[%s4 + $0x8] sm:$0xff]
      %v1329 = vld [vmem:[%s4 + $0x10] sm:$0xff]
      %v1330 = vld [vmem:[%s4 + $0x18] sm:$0xff]
      %v1331 = vld [vmem:[%s4 + $0x20] sm:$0xff]
      %v1332 = vld [vmem:[%s4 + $0x28] sm:$0xff]
      %v1333 = vld [vmem:[%s4 + $0x30] sm:$0xff]
      %v1334 = vld [vmem:[%s4 + $0x38] sm:$0xff]
      %v1343 = vunpack.c.l.b16 %v1327
      %v1344 = vunpack.c.h.b16 %v1327
      %v1345 = vunpack.c.l.b16 %v1328
      %v1346 = vunpack.c.h.b16 %v1328
      %v1347 = vunpack.c.l.b16 %v1329
      %v1348 = vunpack.c.h.b16 %v1329
      %v1349 = vunpack.c.l.b16 %v1330
      %v1350 = vunpack.c.h.b16 %v1330
      %v1351 = vunpack.c.l.b16 %v1331
      %v1352 = vunpack.c.h.b16 %v1331
      %v1353 = vunpack.c.l.b16 %v1332
      %v1354 = vunpack.c.h.b16 %v1332
      %v1355 = vunpack.c.l.b16 %v1333
      %v1356 = vunpack.c.h.b16 %v1333
      %v1357 = vunpack.c.l.b16 %v1334
      %v1358 = vunpack.c.h.b16 %v1334
      %v1359 = vpack.c.b16 %v1347, %v1343
      %v1360 = vpack.c.b16 %v1348, %v1344
      %v1361 = vpack.c.b16 %v1349, %v1345
      %v1362 = vpack.c.b16 %v1350, %v1346
      %v1363 = vpack.c.b16 %v1355, %v1351
      %v1364 = vpack.c.b16 %v1356, %v1352
      %v1365 = vpack.c.b16 %v1357, %v1353
      %v1366 = vpack.c.b16 %v1358, %v1354
      %vm1375 = vcmask 261120
      %v1377 = vsel %vm1375, %v1302, 0
      %v1380 = vsel %vm1375, %v1303, 0
      %v1383 = vsel %vm1375, %v1304, 0
      %v1386 = vsel %vm1375, %v1305, 0
      %v1389 = vsel %vm1375, %v1306, 0
      %v1392 = vsel %vm1375, %v1307, 0
      %v1395 = vsel %vm1375, %v1308, 0
      %v1398 = vsel %vm1375, %v1309, 0
      %v1401 = vsel %vm1375, %v1310, 0
      %v1404 = vsel %vm1375, %v1311, 0
      %v1407 = vsel %vm1375, %v1312, 0
      %v1410 = vsel %vm1375, %v1313, 0
      %v1413 = vsel %vm1375, %v1314, 0
      %v1416 = vsel %vm1375, %v1315, 0
      %v1419 = vsel %vm1375, %v1316, 0
      %v1422 = vsel %vm1375, %v1317, 0
      %v1425 = vsel %vm1375, %v1318, 0
      %v1428 = vsel %vm1375, %v1319, 0
      %v1431 = vsel %vm1375, %v1320, 0
      %v1434 = vsel %vm1375, %v1321, 0
      %v1437 = vsel %vm1375, %v1322, 0
      %v1440 = vsel %vm1375, %v1323, 0
      %v1443 = vsel %vm1375, %v1324, 0
      %v1446 = vsel %vm1375, %v1325, 0
      %v1449 = vsel %vm1375, %v1326, 0
      %1451 = vmatpush.bf16.msra.mxu0 0
      %1452 = vmatpush.bf16.msra.mxu0 0
      %1453 = vmatpush.bf16.msra.mxu0 0
      %1454 = vmatpush.bf16.msra.mxu0 0
      %1455 = vmatpush.bf16.msra.mxu0 0
      %1456 = vmatpush.bf16.msra.mxu0 0
      %1457 = vmatpush.bf16.msra.mxu0 %v1363
      %1458 = vmatpush.bf16.msra.mxu0 %v1359
      %1459 = vmatmul.bf16.gmra.mxu0 %v1377
      %v1460 = vpop.f32.mrf.mxu0
      %v1461 = vadd.f32 0.0, %v1460
      %v1462 = vpop.f32.mrf.mxu0
      %v1463 = vadd.f32 0.0, %v1462
      %1464 = vmatmul.bf16.gmra.mxu0 %v1380
      %v1465 = vpop.f32.mrf.mxu0
      %v1466 = vadd.f32 0.0, %v1465
      %v1467 = vpop.f32.mrf.mxu0
      %v1468 = vadd.f32 0.0, %v1467
      %1469 = vmatmul.bf16.gmra.mxu0 %v1383
      %v1470 = vpop.f32.mrf.mxu0
      %v1471 = vadd.f32 0.0, %v1470
      %v1472 = vpop.f32.mrf.mxu0
      %v1473 = vadd.f32 0.0, %v1472
      %1474 = vmatmul.bf16.gmra.mxu0 %v1386
      %v1475 = vpop.f32.mrf.mxu0
      %v1476 = vadd.f32 0.0, %v1475
      %v1477 = vpop.f32.mrf.mxu0
      %v1478 = vadd.f32 0.0, %v1477
      %1479 = vmatmul.bf16.gmra.mxu0 %v1389
      %v1480 = vpop.f32.mrf.mxu0
      %v1481 = vadd.f32 0.0, %v1480
      %v1482 = vpop.f32.mrf.mxu0
      %v1483 = vadd.f32 0.0, %v1482
      %1484 = vmatmul.bf16.gmra.mxu0 %v1392
      %v1485 = vpop.f32.mrf.mxu0
      %v1486 = vadd.f32 0.0, %v1485
      %v1487 = vpop.f32.mrf.mxu0
      %v1488 = vadd.f32 0.0, %v1487
      %1489 = vmatmul.bf16.gmra.mxu0 %v1395
      %v1490 = vpop.f32.mrf.mxu0
      %v1491 = vadd.f32 0.0, %v1490
      %v1492 = vpop.f32.mrf.mxu0
      %v1493 = vadd.f32 0.0, %v1492
      %1494 = vmatmul.bf16.gmra.mxu0 %v1398
      %v1495 = vpop.f32.mrf.mxu0
      %v1496 = vadd.f32 0.0, %v1495
      %v1497 = vpop.f32.mrf.mxu0
      %v1498 = vadd.f32 0.0, %v1497
      %1499 = vmatmul.bf16.gmra.mxu0 %v1401
      %v1500 = vpop.f32.mrf.mxu0
      %v1501 = vadd.f32 0.0, %v1500
      %v1502 = vpop.f32.mrf.mxu0
      %v1503 = vadd.f32 0.0, %v1502
      %1504 = vmatmul.bf16.gmra.mxu0 %v1404
      %v1505 = vpop.f32.mrf.mxu0
      %v1506 = vadd.f32 0.0, %v1505
      %v1507 = vpop.f32.mrf.mxu0
      %v1508 = vadd.f32 0.0, %v1507
      %1509 = vmatmul.bf16.gmra.mxu0 %v1407
      %v1510 = vpop.f32.mrf.mxu0
      %v1511 = vadd.f32 0.0, %v1510
      %v1512 = vpop.f32.mrf.mxu0
      %v1513 = vadd.f32 0.0, %v1512
      %1514 = vmatmul.bf16.gmra.mxu0 %v1410
      %v1515 = vpop.f32.mrf.mxu0
      %v1516 = vadd.f32 0.0, %v1515
      %v1517 = vpop.f32.mrf.mxu0
      %v1518 = vadd.f32 0.0, %v1517
      %1519 = vmatmul.bf16.gmra.mxu0 %v1413
      %v1520 = vpop.f32.mrf.mxu0
      %v1521 = vadd.f32 0.0, %v1520
      %v1522 = vpop.f32.mrf.mxu0
      %v1523 = vadd.f32 0.0, %v1522
      %1524 = vmatmul.bf16.gmra.mxu0 %v1416
      %v1525 = vpop.f32.mrf.mxu0
      %v1526 = vadd.f32 0.0, %v1525
      %v1527 = vpop.f32.mrf.mxu0
      %v1528 = vadd.f32 0.0, %v1527
      %1529 = vmatmul.bf16.gmra.mxu0 %v1419
      %v1530 = vpop.f32.mrf.mxu0
      %v1531 = vadd.f32 0.0, %v1530
      %v1532 = vpop.f32.mrf.mxu0
      %v1533 = vadd.f32 0.0, %v1532
      %1534 = vmatmul.bf16.gmra.mxu0 %v1422
      %v1535 = vpop.f32.mrf.mxu0
      %v1536 = vadd.f32 0.0, %v1535
      %v1537 = vpop.f32.mrf.mxu0
      %v1538 = vadd.f32 0.0, %v1537
      %1539 = vmatmul.bf16.gmra.mxu0 %v1425
      %v1540 = vpop.f32.mrf.mxu0
      %v1541 = vadd.f32 0.0, %v1540
      %v1542 = vpop.f32.mrf.mxu0
      %v1543 = vadd.f32 0.0, %v1542
      %1544 = vmatmul.bf16.gmra.mxu0 %v1428
      %v1545 = vpop.f32.mrf.mxu0
      %v1546 = vadd.f32 0.0, %v1545
      %v1547 = vpop.f32.mrf.mxu0
      %v1548 = vadd.f32 0.0, %v1547
      %1549 = vmatmul.bf16.gmra.mxu0 %v1431
      %v1550 = vpop.f32.mrf.mxu0
      %v1551 = vadd.f32 0.0, %v1550
      %v1552 = vpop.f32.mrf.mxu0
      %v1553 = vadd.f32 0.0, %v1552
      %1554 = vmatmul.bf16.gmra.mxu0 %v1434
      %v1555 = vpop.f32.mrf.mxu0
      %v1556 = vadd.f32 0.0, %v1555
      %v1557 = vpop.f32.mrf.mxu0
      %v1558 = vadd.f32 0.0, %v1557
      %1559 = vmatmul.bf16.gmra.mxu0 %v1437
      %v1560 = vpop.f32.mrf.mxu0
      %v1561 = vpop.f32.mrf.mxu0
      %1562 = vmatmul.bf16.gmra.mxu0 %v1440
      %v1563 = vpop.f32.mrf.mxu0
      %v1564 = vpop.f32.mrf.mxu0
      %1565 = vmatmul.bf16.gmra.mxu0 %v1443
      %v1566 = vpop.f32.mrf.mxu0
      %v1567 = vpop.f32.mrf.mxu0
      %1568 = vmatmul.bf16.gmra.mxu0 %v1446
      %v1569 = vpop.f32.mrf.mxu0
      %v1570 = vpop.f32.mrf.mxu0
      %1571 = vmatmul.bf16.gmra.mxu0 %v1449
      %v1572 = vpop.f32.mrf.mxu0
      %v1573 = vpop.f32.mrf.mxu0
      %1574 = vdwg.mxu0
      %1575 = vmatpush.bf16.msra.mxu0 0
      %1576 = vmatpush.bf16.msra.mxu0 0
      %1577 = vmatpush.bf16.msra.mxu0 0
      %1578 = vmatpush.bf16.msra.mxu0 0
      %1579 = vmatpush.bf16.msra.mxu0 0
      %1580 = vmatpush.bf16.msra.mxu0 0
      %1581 = vmatpush.bf16.msra.mxu0 %v1364
      %1582 = vmatpush.bf16.msra.mxu0 %v1360
      %1583 = vmatmul.bf16.gmra.mxu0 %v1377
      %v1584 = vpop.f32.mrf.mxu0
      %v1585 = vpop.f32.mrf.mxu0
      %1586 = vmatmul.bf16.gmra.mxu0 %v1380
      %v1587 = vpop.f32.mrf.mxu0
      %v1588 = vadd.f32 0.0, %v1587
      %v1589 = vpop.f32.mrf.mxu0
      %v1590 = vadd.f32 0.0, %v1589
      %1591 = vmatmul.bf16.gmra.mxu0 %v1383
      %v1592 = vpop.f32.mrf.mxu0
      %v1593 = vadd.f32 0.0, %v1592
      %v1594 = vpop.f32.mrf.mxu0
      %v1595 = vadd.f32 0.0, %v1594
      %1596 = vmatmul.bf16.gmra.mxu0 %v1386
      %v1597 = vpop.f32.mrf.mxu0
      %v1598 = vadd.f32 0.0, %v1597
      %v1599 = vpop.f32.mrf.mxu0
      %v1600 = vadd.f32 0.0, %v1599
      %1601 = vmatmul.bf16.gmra.mxu0 %v1389
      %v1602 = vpop.f32.mrf.mxu0
      %v1603 = vadd.f32 0.0, %v1602
      %v1604 = vpop.f32.mrf.mxu0
      %v1605 = vadd.f32 0.0, %v1604
      %1606 = vmatmul.bf16.gmra.mxu0 %v1392
      %v1607 = vpop.f32.mrf.mxu0
      %v1608 = vadd.f32 0.0, %v1607
      %v1609 = vpop.f32.mrf.mxu0
      %v1610 = vadd.f32 0.0, %v1609
      %1611 = vmatmul.bf16.gmra.mxu0 %v1395
      %v1612 = vpop.f32.mrf.mxu0
      %v1613 = vadd.f32 0.0, %v1612
      %v1614 = vpop.f32.mrf.mxu0
      %v1615 = vadd.f32 0.0, %v1614
      %1616 = vmatmul.bf16.gmra.mxu0 %v1398
      %v1617 = vpop.f32.mrf.mxu0
      %v1618 = vadd.f32 0.0, %v1617
      %v1619 = vpop.f32.mrf.mxu0
      %v1620 = vadd.f32 0.0, %v1619
      %1621 = vmatmul.bf16.gmra.mxu0 %v1401
      %v1622 = vpop.f32.mrf.mxu0
      %v1623 = vadd.f32 0.0, %v1622
      %v1624 = vpop.f32.mrf.mxu0
      %v1625 = vadd.f32 0.0, %v1624
      %1626 = vmatmul.bf16.gmra.mxu0 %v1404
      %v1627 = vpop.f32.mrf.mxu0
      %v1628 = vadd.f32 0.0, %v1627
      %v1629 = vpop.f32.mrf.mxu0
      %v1630 = vadd.f32 0.0, %v1629
      %1631 = vmatmul.bf16.gmra.mxu0 %v1407
      %v1632 = vpop.f32.mrf.mxu0
      %v1633 = vadd.f32 0.0, %v1632
      %v1634 = vpop.f32.mrf.mxu0
      %v1635 = vadd.f32 0.0, %v1634
      %1636 = vmatmul.bf16.gmra.mxu0 %v1410
      %v1637 = vpop.f32.mrf.mxu0
      %v1638 = vadd.f32 0.0, %v1637
      %v1639 = vpop.f32.mrf.mxu0
      %v1640 = vadd.f32 0.0, %v1639
      %1641 = vmatmul.bf16.gmra.mxu0 %v1413
      %v1642 = vpop.f32.mrf.mxu0
      %v1643 = vadd.f32 0.0, %v1642
      %v1644 = vpop.f32.mrf.mxu0
      %v1645 = vadd.f32 0.0, %v1644
      %1646 = vmatmul.bf16.gmra.mxu0 %v1416
      %v1647 = vpop.f32.mrf.mxu0
      %v1648 = vadd.f32 0.0, %v1647
      %v1649 = vpop.f32.mrf.mxu0
      %v1650 = vadd.f32 0.0, %v1649
      %1651 = vmatmul.bf16.gmra.mxu0 %v1419
      %v1652 = vpop.f32.mrf.mxu0
      %v1653 = vadd.f32 0.0, %v1652
      %v1654 = vpop.f32.mrf.mxu0
      %v1655 = vadd.f32 0.0, %v1654
      %1656 = vmatmul.bf16.gmra.mxu0 %v1422
      %v1657 = vpop.f32.mrf.mxu0
      %v1658 = vadd.f32 0.0, %v1657
      %v1659 = vpop.f32.mrf.mxu0
      %v1660 = vadd.f32 0.0, %v1659
      %1661 = vmatmul.bf16.gmra.mxu0 %v1425
      %v1662 = vpop.f32.mrf.mxu0
      %v1663 = vadd.f32 0.0, %v1662
      %v1664 = vpop.f32.mrf.mxu0
      %v1665 = vadd.f32 0.0, %v1664
      %1666 = vmatmul.bf16.gmra.mxu0 %v1428
      %v1667 = vpop.f32.mrf.mxu0
      %v1668 = vadd.f32 0.0, %v1667
      %v1669 = vpop.f32.mrf.mxu0
      %v1670 = vadd.f32 0.0, %v1669
      %1671 = vmatmul.bf16.gmra.mxu0 %v1431
      %v1672 = vpop.f32.mrf.mxu0
      %v1673 = vadd.f32 0.0, %v1672
      %v1674 = vpop.f32.mrf.mxu0
      %v1675 = vadd.f32 0.0, %v1674
      %1676 = vmatmul.bf16.gmra.mxu0 %v1434
      %v1677 = vpop.f32.mrf.mxu0
      %v1678 = vadd.f32 0.0, %v1677
      %v1679 = vpop.f32.mrf.mxu0
      %v1680 = vadd.f32 0.0, %v1679
      %1681 = vmatmul.bf16.gmra.mxu0 %v1437
      %v1682 = vpop.f32.mrf.mxu0
      %v1683 = vadd.f32 0.0, %v1682
      %v1684 = vpop.f32.mrf.mxu0
      %v1685 = vadd.f32 0.0, %v1684
      %1686 = vmatmul.bf16.gmra.mxu0 %v1440
      %v1687 = vpop.f32.mrf.mxu0
      %v1688 = vadd.f32 0.0, %v1687
      %v1689 = vpop.f32.mrf.mxu0
      %v1690 = vadd.f32 0.0, %v1689
      %1691 = vmatmul.bf16.gmra.mxu0 %v1443
      %v1692 = vpop.f32.mrf.mxu0
      %v1693 = vadd.f32 0.0, %v1692
      %v1694 = vpop.f32.mrf.mxu0
      %1695 = vmatmul.bf16.gmra.mxu0 %v1446
      %v1696 = vpop.f32.mrf.mxu0
      %v1697 = vpop.f32.mrf.mxu0
      %1698 = vmatmul.bf16.gmra.mxu0 %v1449
      %v1699 = vpop.f32.mrf.mxu0
      %v1700 = vpop.f32.mrf.mxu0
      %1701 = vdwg.mxu0
      %1702 = vmatpush.bf16.msra.mxu0 0
      %1703 = vmatpush.bf16.msra.mxu0 0
      %1704 = vmatpush.bf16.msra.mxu0 0
      %1705 = vmatpush.bf16.msra.mxu0 0
      %1706 = vmatpush.bf16.msra.mxu0 0
      %1707 = vmatpush.bf16.msra.mxu0 0
      %1708 = vmatpush.bf16.msra.mxu0 %v1365
      %1709 = vmatpush.bf16.msra.mxu0 %v1361
      %1710 = vmatmul.bf16.gmra.mxu0 %v1377
      %v1711 = vpop.f32.mrf.mxu0
      %v1712 = vpop.f32.mrf.mxu0
      %1713 = vmatmul.bf16.gmra.mxu0 %v1380
      %v1714 = vpop.f32.mrf.mxu0
      %v1715 = vpop.f32.mrf.mxu0
      %1716 = vmatmul.bf16.gmra.mxu0 %v1383
      %v1717 = vpop.f32.mrf.mxu0
      %v1718 = vpop.f32.mrf.mxu0
      %1719 = vmatmul.bf16.gmra.mxu0 %v1386
      %v1720 = vpop.f32.mrf.mxu0
      %v1721 = vpop.f32.mrf.mxu0
      %v1722 = vadd.f32 0.0, %v1721
      %1723 = vmatmul.bf16.gmra.mxu0 %v1389
      %v1724 = vpop.f32.mrf.mxu0
      %v1725 = vadd.f32 0.0, %v1724
      %v1726 = vpop.f32.mrf.mxu0
      %v1727 = vadd.f32 0.0, %v1726
      %1728 = vmatmul.bf16.gmra.mxu0 %v1392
      %v1729 = vpop.f32.mrf.mxu0
      %v1730 = vadd.f32 0.0, %v1729
      %v1731 = vpop.f32.mrf.mxu0
      %v1732 = vadd.f32 0.0, %v1731
      %1733 = vmatmul.bf16.gmra.mxu0 %v1395
      %v1734 = vpop.f32.mrf.mxu0
      %v1735 = vadd.f32 0.0, %v1734
      %v1736 = vpop.f32.mrf.mxu0
      %v1737 = vadd.f32 0.0, %v1736
      %1738 = vmatmul.bf16.gmra.mxu0 %v1398
      %v1739 = vpop.f32.mrf.mxu0
      %v1740 = vadd.f32 0.0, %v1739
      %v1741 = vpop.f32.mrf.mxu0
      %v1742 = vadd.f32 0.0, %v1741
      %1743 = vmatmul.bf16.gmra.mxu0 %v1401
      %v1744 = vpop.f32.mrf.mxu0
      %v1745 = vadd.f32 0.0, %v1744
      %v1746 = vpop.f32.mrf.mxu0
      %v1747 = vadd.f32 0.0, %v1746
      %1748 = vmatmul.bf16.gmra.mxu0 %v1404
      %v1749 = vpop.f32.mrf.mxu0
      %v1750 = vadd.f32 0.0, %v1749
      %v1751 = vpop.f32.mrf.mxu0
      %v1752 = vadd.f32 0.0, %v1751
      %1753 = vmatmul.bf16.gmra.mxu0 %v1407
      %v1754 = vpop.f32.mrf.mxu0
      %v1755 = vadd.f32 0.0, %v1754
      %v1756 = vpop.f32.mrf.mxu0
      %v1757 = vadd.f32 0.0, %v1756
      %1758 = vmatmul.bf16.gmra.mxu0 %v1410
      %v1759 = vpop.f32.mrf.mxu0
      %v1760 = vadd.f32 0.0, %v1759
      %v1761 = vpop.f32.mrf.mxu0
      %v1762 = vadd.f32 0.0, %v1761
      %1763 = vmatmul.bf16.gmra.mxu0 %v1413
      %v1764 = vpop.f32.mrf.mxu0
      %v1765 = vadd.f32 0.0, %v1764
      %v1766 = vpop.f32.mrf.mxu0
      %v1767 = vadd.f32 0.0, %v1766
      %1768 = vmatmul.bf16.gmra.mxu0 %v1416
      %v1769 = vpop.f32.mrf.mxu0
      %v1770 = vadd.f32 0.0, %v1769
      %v1771 = vpop.f32.mrf.mxu0
      %v1772 = vadd.f32 0.0, %v1771
      %1773 = vmatmul.bf16.gmra.mxu0 %v1419
      %v1774 = vpop.f32.mrf.mxu0
      %v1775 = vadd.f32 0.0, %v1774
      %v1776 = vpop.f32.mrf.mxu0
      %v1777 = vadd.f32 0.0, %v1776
      %1778 = vmatmul.bf16.gmra.mxu0 %v1422
      %v1779 = vpop.f32.mrf.mxu0
      %v1780 = vadd.f32 0.0, %v1779
      %v1781 = vpop.f32.mrf.mxu0
      %v1782 = vadd.f32 0.0, %v1781
      %1783 = vmatmul.bf16.gmra.mxu0 %v1425
      %v1784 = vpop.f32.mrf.mxu0
      %v1785 = vadd.f32 0.0, %v1784
      %v1786 = vpop.f32.mrf.mxu0
      %v1787 = vadd.f32 0.0, %v1786
      %1788 = vmatmul.bf16.gmra.mxu0 %v1428
      %v1789 = vpop.f32.mrf.mxu0
      %v1790 = vadd.f32 0.0, %v1789
      %v1791 = vpop.f32.mrf.mxu0
      %v1792 = vadd.f32 0.0, %v1791
      %1793 = vmatmul.bf16.gmra.mxu0 %v1431
      %v1794 = vpop.f32.mrf.mxu0
      %v1795 = vadd.f32 0.0, %v1794
      %v1796 = vpop.f32.mrf.mxu0
      %v1797 = vadd.f32 0.0, %v1796
      %1798 = vmatmul.bf16.gmra.mxu0 %v1434
      %v1799 = vpop.f32.mrf.mxu0
      %v1800 = vadd.f32 0.0, %v1799
      %v1801 = vpop.f32.mrf.mxu0
      %v1802 = vadd.f32 0.0, %v1801
      %1803 = vmatmul.bf16.gmra.mxu0 %v1437
      %v1804 = vpop.f32.mrf.mxu0
      %v1805 = vadd.f32 0.0, %v1804
      %v1806 = vpop.f32.mrf.mxu0
      %v1807 = vadd.f32 0.0, %v1806
      %1808 = vmatmul.bf16.gmra.mxu0 %v1440
      %v1809 = vpop.f32.mrf.mxu0
      %v1810 = vadd.f32 0.0, %v1809
      %v1811 = vpop.f32.mrf.mxu0
      %v1812 = vadd.f32 0.0, %v1811
      %1813 = vmatmul.bf16.gmra.mxu0 %v1443
      %v1814 = vpop.f32.mrf.mxu0
      %v1815 = vadd.f32 0.0, %v1814
      %v1816 = vpop.f32.mrf.mxu0
      %v1817 = vadd.f32 0.0, %v1816
      %1818 = vmatmul.bf16.gmra.mxu0 %v1446
      %v1819 = vpop.f32.mrf.mxu0
      %v1820 = vadd.f32 0.0, %v1819
      %v1821 = vpop.f32.mrf.mxu0
      %v1822 = vadd.f32 0.0, %v1821
      %1823 = vmatmul.bf16.gmra.mxu0 %v1449
      %v1824 = vpop.f32.mrf.mxu0
      %v1825 = vpop.f32.mrf.mxu0
      %1826 = vdwg.mxu0
      %1827 = vmatpush.bf16.msra.mxu0 0
      %1828 = vmatpush.bf16.msra.mxu0 0
      %1829 = vmatpush.bf16.msra.mxu0 0
      %1830 = vmatpush.bf16.msra.mxu0 0
      %1831 = vmatpush.bf16.msra.mxu0 0
      %1832 = vmatpush.bf16.msra.mxu0 0
      %1833 = vmatpush.bf16.msra.mxu0 %v1366
      %1834 = vmatpush.bf16.msra.mxu0 %v1362
      %1835 = vmatmul.bf16.gmra.mxu0 %v1377
      %v1836 = vpop.f32.mrf.mxu0
      %v1837 = vpop.f32.mrf.mxu0
      %1838 = vmatmul.bf16.gmra.mxu0 %v1380
      %v1839 = vpop.f32.mrf.mxu0
      %v1840 = vpop.f32.mrf.mxu0
      %1841 = vmatmul.bf16.gmra.mxu0 %v1383
      %v1842 = vpop.f32.mrf.mxu0
      %v1843 = vpop.f32.mrf.mxu0
      %1844 = vmatmul.bf16.gmra.mxu0 %v1386
      %v1845 = vpop.f32.mrf.mxu0
      %v1846 = vpop.f32.mrf.mxu0
      %1847 = vmatmul.bf16.gmra.mxu0 %v1389
      %v1848 = vpop.f32.mrf.mxu0
      %v1849 = vpop.f32.mrf.mxu0
      %1850 = vmatmul.bf16.gmra.mxu0 %v1392
      %v1851 = vpop.f32.mrf.mxu0
      %v1852 = vadd.f32 0.0, %v1851
      %v1853 = vpop.f32.mrf.mxu0
      %v1854 = vadd.f32 0.0, %v1853
      %1855 = vmatmul.bf16.gmra.mxu0 %v1395
      %v1856 = vpop.f32.mrf.mxu0
      %v1857 = vadd.f32 0.0, %v1856
      %v1858 = vpop.f32.mrf.mxu0
      %v1859 = vadd.f32 0.0, %v1858
      %1860 = vmatmul.bf16.gmra.mxu0 %v1398
      %v1861 = vpop.f32.mrf.mxu0
      %v1862 = vadd.f32 0.0, %v1861
      %v1863 = vpop.f32.mrf.mxu0
      %v1864 = vadd.f32 0.0, %v1863
      %1865 = vmatmul.bf16.gmra.mxu0 %v1401
      %v1866 = vpop.f32.mrf.mxu0
      %v1867 = vadd.f32 0.0, %v1866
      %v1868 = vpop.f32.mrf.mxu0
      %v1869 = vadd.f32 0.0, %v1868
      %1870 = vmatmul.bf16.gmra.mxu0 %v1404
      %v1871 = vpop.f32.mrf.mxu0
      %v1872 = vadd.f32 0.0, %v1871
      %v1873 = vpop.f32.mrf.mxu0
      %v1874 = vadd.f32 0.0, %v1873
      %1875 = vmatmul.bf16.gmra.mxu0 %v1407
      %v1876 = vpop.f32.mrf.mxu0
      %v1877 = vadd.f32 0.0, %v1876
      %v1878 = vpop.f32.mrf.mxu0
      %v1879 = vadd.f32 0.0, %v1878
      %1880 = vmatmul.bf16.gmra.mxu0 %v1410
      %v1881 = vpop.f32.mrf.mxu0
      %v1882 = vadd.f32 0.0, %v1881
      %v1883 = vpop.f32.mrf.mxu0
      %v1884 = vadd.f32 0.0, %v1883
      %1885 = vmatmul.bf16.gmra.mxu0 %v1413
      %v1886 = vpop.f32.mrf.mxu0
      %v1887 = vadd.f32 0.0, %v1886
      %v1888 = vpop.f32.mrf.mxu0
      %v1889 = vadd.f32 0.0, %v1888
      %1890 = vmatmul.bf16.gmra.mxu0 %v1416
      %v1891 = vpop.f32.mrf.mxu0
      %v1892 = vadd.f32 0.0, %v1891
      %v1893 = vpop.f32.mrf.mxu0
      %v1894 = vadd.f32 0.0, %v1893
      %1895 = vmatmul.bf16.gmra.mxu0 %v1419
      %v1896 = vpop.f32.mrf.mxu0
      %v1897 = vadd.f32 0.0, %v1896
      %v1898 = vpop.f32.mrf.mxu0
      %v1899 = vadd.f32 0.0, %v1898
      %1900 = vmatmul.bf16.gmra.mxu0 %v1422
      %v1901 = vpop.f32.mrf.mxu0
      %v1902 = vadd.f32 0.0, %v1901
      %v1903 = vpop.f32.mrf.mxu0
      %v1904 = vadd.f32 0.0, %v1903
      %1905 = vmatmul.bf16.gmra.mxu0 %v1425
      %v1906 = vpop.f32.mrf.mxu0
      %v1907 = vadd.f32 0.0, %v1906
      %v1908 = vpop.f32.mrf.mxu0
      %v1909 = vadd.f32 0.0, %v1908
      %1910 = vmatmul.bf16.gmra.mxu0 %v1428
      %v1911 = vpop.f32.mrf.mxu0
      %v1912 = vadd.f32 0.0, %v1911
      %v1913 = vpop.f32.mrf.mxu0
      %v1914 = vadd.f32 0.0, %v1913
      %1915 = vmatmul.bf16.gmra.mxu0 %v1431
      %v1916 = vpop.f32.mrf.mxu0
      %v1917 = vadd.f32 0.0, %v1916
      %v1918 = vpop.f32.mrf.mxu0
      %v1919 = vadd.f32 0.0, %v1918
      %1920 = vmatmul.bf16.gmra.mxu0 %v1434
      %v1921 = vpop.f32.mrf.mxu0
      %v1922 = vadd.f32 0.0, %v1921
      %v1923 = vpop.f32.mrf.mxu0
      %v1924 = vadd.f32 0.0, %v1923
      %1925 = vmatmul.bf16.gmra.mxu0 %v1437
      %v1926 = vpop.f32.mrf.mxu0
      %v1927 = vadd.f32 0.0, %v1926
      %v1928 = vpop.f32.mrf.mxu0
      %v1929 = vadd.f32 0.0, %v1928
      %1930 = vmatmul.bf16.gmra.mxu0 %v1440
      %v1931 = vpop.f32.mrf.mxu0
      %v1932 = vadd.f32 0.0, %v1931
      %v1933 = vpop.f32.mrf.mxu0
      %v1934 = vadd.f32 0.0, %v1933
      %1935 = vmatmul.bf16.gmra.mxu0 %v1443
      %v1936 = vpop.f32.mrf.mxu0
      %v1937 = vadd.f32 0.0, %v1936
      %v1938 = vpop.f32.mrf.mxu0
      %v1939 = vadd.f32 0.0, %v1938
      %1940 = vmatmul.bf16.gmra.mxu0 %v1446
      %v1941 = vpop.f32.mrf.mxu0
      %v1942 = vadd.f32 0.0, %v1941
      %v1943 = vpop.f32.mrf.mxu0
      %v1944 = vadd.f32 0.0, %v1943
      %1945 = vmatmul.bf16.gmra.mxu0 %v1449
      %v1946 = vpop.f32.mrf.mxu0
      %v1947 = vpop.f32.mrf.mxu0
      %1948 = vdwg.mxu0
      %vm1986 = vcmask 1046528
      %v1987 = vrot.slane %v1461, 1
      %v1988 = vrot.slane %v1463, 1
      %v1989 = vsel %vm1986, %v1987, %v1988
      %v1990 = vrot.slane %v1466, 1
      %v1991 = vsel %vm1986, %v1988, %v1990
      %v1992 = vrot.slane %v1468, 1
      %v1993 = vsel %vm1986, %v1990, %v1992
      %v1994 = vrot.slane %v1471, 1
      %v1995 = vsel %vm1986, %v1992, %v1994
      %v1996 = vrot.slane %v1473, 1
      %v1997 = vsel %vm1986, %v1994, %v1996
      %v1998 = vrot.slane %v1476, 1
      %v1999 = vsel %vm1986, %v1996, %v1998
      %v2000 = vrot.slane %v1478, 1
      %v2001 = vsel %vm1986, %v1998, %v2000
      %v2002 = vrot.slane %v1481, 1
      %v2003 = vsel %vm1986, %v2000, %v2002
      %v2004 = vrot.slane %v1483, 1
      %v2005 = vsel %vm1986, %v2002, %v2004
      %v2006 = vrot.slane %v1486, 1
      %v2007 = vsel %vm1986, %v2004, %v2006
      %v2008 = vrot.slane %v1488, 1
      %v2009 = vsel %vm1986, %v2006, %v2008
      %v2010 = vrot.slane %v1491, 1
      %v2011 = vsel %vm1986, %v2008, %v2010
      %v2012 = vrot.slane %v1493, 1
      %v2013 = vsel %vm1986, %v2010, %v2012
      %v2014 = vrot.slane %v1496, 1
      %v2015 = vsel %vm1986, %v2012, %v2014
      %v2016 = vrot.slane %v1498, 1
      %v2017 = vsel %vm1986, %v2014, %v2016
      %v2018 = vrot.slane %v1501, 1
      %v2019 = vsel %vm1986, %v2016, %v2018
      %v2020 = vrot.slane %v1503, 1
      %v2021 = vsel %vm1986, %v2018, %v2020
      %v2022 = vrot.slane %v1506, 1
      %v2023 = vsel %vm1986, %v2020, %v2022
      %v2024 = vrot.slane %v1508, 1
      %v2025 = vsel %vm1986, %v2022, %v2024
      %v2026 = vrot.slane %v1511, 1
      %v2027 = vsel %vm1986, %v2024, %v2026
      %v2028 = vrot.slane %v1513, 1
      %v2029 = vsel %vm1986, %v2026, %v2028
      %v2030 = vrot.slane %v1516, 1
      %v2031 = vsel %vm1986, %v2028, %v2030
      %v2032 = vrot.slane %v1518, 1
      %v2033 = vsel %vm1986, %v2030, %v2032
      %v2034 = vrot.slane %v1521, 1
      %v2035 = vsel %vm1986, %v2032, %v2034
      %v2036 = vrot.slane %v1523, 1
      %v2037 = vsel %vm1986, %v2034, %v2036
      %v2038 = vrot.slane %v1526, 1
      %v2039 = vsel %vm1986, %v2036, %v2038
      %v2040 = vrot.slane %v1528, 1
      %v2041 = vsel %vm1986, %v2038, %v2040
      %v2042 = vrot.slane %v1531, 1
      %v2043 = vsel %vm1986, %v2040, %v2042
      %v2044 = vrot.slane %v1533, 1
      %v2045 = vsel %vm1986, %v2042, %v2044
      %v2046 = vrot.slane %v1536, 1
      %v2047 = vsel %vm1986, %v2044, %v2046
      %v2048 = vrot.slane %v1538, 1
      %v2049 = vsel %vm1986, %v2046, %v2048
      %v2050 = vrot.slane %v1541, 1
      %v2051 = vsel %vm1986, %v2048, %v2050
      %v2052 = vrot.slane %v1543, 1
      %v2053 = vsel %vm1986, %v2050, %v2052
      %v2054 = vrot.slane %v1546, 1
      %v2055 = vsel %vm1986, %v2052, %v2054
      %v2056 = vrot.slane %v1548, 1
      %v2057 = vsel %vm1986, %v2054, %v2056
      %v2058 = vrot.slane %v1551, 1
      %v2059 = vsel %vm1986, %v2056, %v2058
      %2060 = vrot.lane.b32.xlu0 %v1989, 112
      %v2061 = vpop.permute.xlu0 %2060
      %2062 = vrot.lane.b32.xlu0 %v1991, 112
      %v2063 = vpop.permute.xlu0 %2062
      %2064 = vrot.lane.b32.xlu0 %v1993, 112
      %v2065 = vpop.permute.xlu0 %2064
      %2066 = vrot.lane.b32.xlu0 %v1995, 112
      %v2067 = vpop.permute.xlu0 %2066
      %2068 = vrot.lane.b32.xlu0 %v1997, 112
      %v2069 = vpop.permute.xlu0 %2068
      %2070 = vrot.lane.b32.xlu0 %v1999, 112
      %v2071 = vpop.permute.xlu0 %2070
      %2072 = vrot.lane.b32.xlu0 %v2001, 112
      %v2073 = vpop.permute.xlu0 %2072
      %2074 = vrot.lane.b32.xlu0 %v2003, 112
      %v2075 = vpop.permute.xlu0 %2074
      %2076 = vrot.lane.b32.xlu0 %v2005, 112
      %v2077 = vpop.permute.xlu0 %2076
      %2078 = vrot.lane.b32.xlu0 %v2007, 112
      %v2079 = vpop.permute.xlu0 %2078
      %2080 = vrot.lane.b32.xlu0 %v2009, 112
      %v2081 = vpop.permute.xlu0 %2080
      %2082 = vrot.lane.b32.xlu0 %v2011, 112
      %v2083 = vpop.permute.xlu0 %2082
      %2084 = vrot.lane.b32.xlu0 %v2013, 112
      %v2085 = vpop.permute.xlu0 %2084
      %2086 = vrot.lane.b32.xlu0 %v2015, 112
      %v2087 = vpop.permute.xlu0 %2086
      %2088 = vrot.lane.b32.xlu0 %v2017, 112
      %v2089 = vpop.permute.xlu0 %2088
      %2090 = vrot.lane.b32.xlu0 %v2019, 112
      %v2091 = vpop.permute.xlu0 %2090
      %2092 = vrot.lane.b32.xlu0 %v2021, 112
      %v2093 = vpop.permute.xlu0 %2092
      %2094 = vrot.lane.b32.xlu0 %v2023, 112
      %v2095 = vpop.permute.xlu0 %2094
      %2096 = vrot.lane.b32.xlu0 %v2025, 112
      %v2097 = vpop.permute.xlu0 %2096
      %2098 = vrot.lane.b32.xlu0 %v2027, 112
      %v2099 = vpop.permute.xlu0 %2098
      %2100 = vrot.lane.b32.xlu0 %v2029, 112
      %v2101 = vpop.permute.xlu0 %2100
      %2102 = vrot.lane.b32.xlu0 %v2031, 112
      %v2103 = vpop.permute.xlu0 %2102
      %2104 = vrot.lane.b32.xlu0 %v2033, 112
      %v2105 = vpop.permute.xlu0 %2104
      %2106 = vrot.lane.b32.xlu0 %v2035, 112
      %v2107 = vpop.permute.xlu0 %2106
      %2108 = vrot.lane.b32.xlu0 %v2037, 112
      %v2109 = vpop.permute.xlu0 %2108
      %2110 = vrot.lane.b32.xlu0 %v2039, 112
      %v2111 = vpop.permute.xlu0 %2110
      %2112 = vrot.lane.b32.xlu0 %v2041, 112
      %v2113 = vpop.permute.xlu0 %2112
      %2114 = vrot.lane.b32.xlu0 %v2043, 112
      %v2115 = vpop.permute.xlu0 %2114
      %2116 = vrot.lane.b32.xlu0 %v2045, 112
      %v2117 = vpop.permute.xlu0 %2116
      %2118 = vrot.lane.b32.xlu0 %v2047, 112
      %v2119 = vpop.permute.xlu0 %2118
      %2120 = vrot.lane.b32.xlu0 %v2049, 112
      %v2121 = vpop.permute.xlu0 %2120
      %2122 = vrot.lane.b32.xlu0 %v2051, 112
      %v2123 = vpop.permute.xlu0 %2122
      %2124 = vrot.lane.b32.xlu0 %v2053, 112
      %v2125 = vpop.permute.xlu0 %2124
      %2126 = vrot.lane.b32.xlu0 %v2055, 112
      %v2127 = vpop.permute.xlu0 %2126
      %2128 = vrot.lane.b32.xlu0 %v2057, 112
      %v2129 = vpop.permute.xlu0 %2128
      %2130 = vrot.lane.b32.xlu0 %v2059, 112
      %v2131 = vpop.permute.xlu0 %2130
      %2132 = vrot.lane.b32.xlu0 %v2058, 112
      %v2133 = vpop.permute.xlu0 %2132
      %v2171 = vadd.f32 %v1461, %v2061
      %v2172 = vadd.f32 %v1463, %v2063
      %v2173 = vadd.f32 %v1466, %v2065
      %v2174 = vadd.f32 %v1468, %v2067
      %v2175 = vadd.f32 %v1471, %v2069
      %v2176 = vadd.f32 %v1473, %v2071
      %v2177 = vadd.f32 %v1476, %v2073
      %v2178 = vadd.f32 %v1478, %v2075
      %v2179 = vadd.f32 %v1481, %v2077
      %v2180 = vadd.f32 %v1483, %v2079
      %v2181 = vadd.f32 %v1486, %v2081
      %v2182 = vadd.f32 %v1488, %v2083
      %v2183 = vadd.f32 %v1491, %v2085
      %v2184 = vadd.f32 %v1493, %v2087
      %v2185 = vadd.f32 %v1496, %v2089
      %v2186 = vadd.f32 %v1498, %v2091
      %v2187 = vadd.f32 %v1501, %v2093
      %v2188 = vadd.f32 %v1503, %v2095
      %v2189 = vadd.f32 %v1506, %v2097
      %v2190 = vadd.f32 %v1508, %v2099
      %v2191 = vadd.f32 %v1511, %v2101
      %v2192 = vadd.f32 %v1513, %v2103
      %v2193 = vadd.f32 %v1516, %v2105
      %v2194 = vadd.f32 %v1518, %v2107
      %v2195 = vadd.f32 %v1521, %v2109
      %v2196 = vadd.f32 %v1523, %v2111
      %v2197 = vadd.f32 %v1526, %v2113
      %v2198 = vadd.f32 %v1528, %v2115
      %v2199 = vadd.f32 %v1531, %v2117
      %v2200 = vadd.f32 %v1533, %v2119
      %v2201 = vadd.f32 %v1536, %v2121
      %v2202 = vadd.f32 %v1538, %v2123
      %v2203 = vadd.f32 %v1541, %v2125
      %v2204 = vadd.f32 %v1543, %v2127
      %v2205 = vadd.f32 %v1546, %v2129
      %v2206 = vadd.f32 %v1548, %v2131
      %v2207 = vadd.f32 %v1551, %v2133
      %vm2209 = vcmask 1045504
      %v2210 = vrot.slane %v1461, 2
      %v2211 = vrot.slane %v1463, 2
      %v2212 = vsel %vm2209, %v2210, %v2211
      %v2213 = vrot.slane %v1466, 2
      %v2214 = vsel %vm2209, %v2211, %v2213
      %v2215 = vrot.slane %v1468, 2
      %v2216 = vsel %vm2209, %v2213, %v2215
      %v2217 = vrot.slane %v1471, 2
      %v2218 = vsel %vm2209, %v2215, %v2217
      %v2219 = vrot.slane %v1473, 2
      %v2220 = vsel %vm2209, %v2217, %v2219
      %v2221 = vrot.slane %v1476, 2
      %v2222 = vsel %vm2209, %v2219, %v2221
      %v2223 = vrot.slane %v1478, 2
      %v2224 = vsel %vm2209, %v2221, %v2223
      %v2225 = vrot.slane %v1481, 2
      %v2226 = vsel %vm2209, %v2223, %v2225
      %v2227 = vrot.slane %v1483, 2
      %v2228 = vsel %vm2209, %v2225, %v2227
      %v2229 = vrot.slane %v1486, 2
      %v2230 = vsel %vm2209, %v2227, %v2229
      %v2231 = vrot.slane %v1488, 2
      %v2232 = vsel %vm2209, %v2229, %v2231
      %v2233 = vrot.slane %v1491, 2
      %v2234 = vsel %vm2209, %v2231, %v2233
      %v2235 = vrot.slane %v1493, 2
      %v2236 = vsel %vm2209, %v2233, %v2235
      %v2237 = vrot.slane %v1496, 2
      %v2238 = vsel %vm2209, %v2235, %v2237
      %v2239 = vrot.slane %v1498, 2
      %v2240 = vsel %vm2209, %v2237, %v2239
      %v2241 = vrot.slane %v1501, 2
      %v2242 = vsel %vm2209, %v2239, %v2241
      %v2243 = vrot.slane %v1503, 2
      %v2244 = vsel %vm2209, %v2241, %v2243
      %v2245 = vrot.slane %v1506, 2
      %v2246 = vsel %vm2209, %v2243, %v2245
      %v2247 = vrot.slane %v1508, 2
      %v2248 = vsel %vm2209, %v2245, %v2247
      %v2249 = vrot.slane %v1511, 2
      %v2250 = vsel %vm2209, %v2247, %v2249
      %v2251 = vrot.slane %v1513, 2
      %v2252 = vsel %vm2209, %v2249, %v2251
      %v2253 = vrot.slane %v1516, 2
      %v2254 = vsel %vm2209, %v2251, %v2253
      %v2255 = vrot.slane %v1518, 2
      %v2256 = vsel %vm2209, %v2253, %v2255
      %v2257 = vrot.slane %v1521, 2
      %v2258 = vsel %vm2209, %v2255, %v2257
      %v2259 = vrot.slane %v1523, 2
      %v2260 = vsel %vm2209, %v2257, %v2259
      %v2261 = vrot.slane %v1526, 2
      %v2262 = vsel %vm2209, %v2259, %v2261
      %v2263 = vrot.slane %v1528, 2
      %v2264 = vsel %vm2209, %v2261, %v2263
      %v2265 = vrot.slane %v1531, 2
      %v2266 = vsel %vm2209, %v2263, %v2265
      %v2267 = vrot.slane %v1533, 2
      %v2268 = vsel %vm2209, %v2265, %v2267
      %v2269 = vrot.slane %v1536, 2
      %v2270 = vsel %vm2209, %v2267, %v2269
      %v2271 = vrot.slane %v1538, 2
      %v2272 = vsel %vm2209, %v2269, %v2271
      %v2273 = vrot.slane %v1541, 2
      %v2274 = vsel %vm2209, %v2271, %v2273
      %v2275 = vrot.slane %v1543, 2
      %v2276 = vsel %vm2209, %v2273, %v2275
      %v2277 = vrot.slane %v1546, 2
      %v2278 = vsel %vm2209, %v2275, %v2277
      %v2279 = vrot.slane %v1548, 2
      %v2280 = vsel %vm2209, %v2277, %v2279
      %v2281 = vrot.slane %v1551, 2
      %v2282 = vsel %vm2209, %v2279, %v2281
      %v2283 = vrot.slane %v1553, 2
      %v2284 = vsel %vm2209, %v2281, %v2283
      %2285 = vrot.lane.b32.xlu0 %v2212, 96
      %v2286 = vpop.permute.xlu0 %2285
      %2287 = vrot.lane.b32.xlu0 %v2214, 96
      %v2288 = vpop.permute.xlu0 %2287
      %2289 = vrot.lane.b32.xlu0 %v2216, 96
      %v2290 = vpop.permute.xlu0 %2289
      %2291 = vrot.lane.b32.xlu0 %v2218, 96
      %v2292 = vpop.permute.xlu0 %2291
      %2293 = vrot.lane.b32.xlu0 %v2220, 96
      %v2294 = vpop.permute.xlu0 %2293
      %2295 = vrot.lane.b32.xlu0 %v2222, 96
      %v2296 = vpop.permute.xlu0 %2295
      %2297 = vrot.lane.b32.xlu0 %v2224, 96
      %v2298 = vpop.permute.xlu0 %2297
      %2299 = vrot.lane.b32.xlu0 %v2226, 96
      %v2300 = vpop.permute.xlu0 %2299
      %2301 = vrot.lane.b32.xlu0 %v2228, 96
      %v2302 = vpop.permute.xlu0 %2301
      %2303 = vrot.lane.b32.xlu0 %v2230, 96
      %v2304 = vpop.permute.xlu0 %2303
      %2305 = vrot.lane.b32.xlu0 %v2232, 96
      %v2306 = vpop.permute.xlu0 %2305
      %2307 = vrot.lane.b32.xlu0 %v2234, 96
      %v2308 = vpop.permute.xlu0 %2307
      %2309 = vrot.lane.b32.xlu0 %v2236, 96
      %v2310 = vpop.permute.xlu0 %2309
      %2311 = vrot.lane.b32.xlu0 %v2238, 96
      %v2312 = vpop.permute.xlu0 %2311
      %2313 = vrot.lane.b32.xlu0 %v2240, 96
      %v2314 = vpop.permute.xlu0 %2313
      %2315 = vrot.lane.b32.xlu0 %v2242, 96
      %v2316 = vpop.permute.xlu0 %2315
      %2317 = vrot.lane.b32.xlu0 %v2244, 96
      %v2318 = vpop.permute.xlu0 %2317
      %2319 = vrot.lane.b32.xlu0 %v2246, 96
      %v2320 = vpop.permute.xlu0 %2319
      %2321 = vrot.lane.b32.xlu0 %v2248, 96
      %v2322 = vpop.permute.xlu0 %2321
      %2323 = vrot.lane.b32.xlu0 %v2250, 96
      %v2324 = vpop.permute.xlu0 %2323
      %2325 = vrot.lane.b32.xlu0 %v2252, 96
      %v2326 = vpop.permute.xlu0 %2325
      %2327 = vrot.lane.b32.xlu0 %v2254, 96
      %v2328 = vpop.permute.xlu0 %2327
      %2329 = vrot.lane.b32.xlu0 %v2256, 96
      %v2330 = vpop.permute.xlu0 %2329
      %2331 = vrot.lane.b32.xlu0 %v2258, 96
      %v2332 = vpop.permute.xlu0 %2331
      %2333 = vrot.lane.b32.xlu0 %v2260, 96
      %v2334 = vpop.permute.xlu0 %2333
      %2335 = vrot.lane.b32.xlu0 %v2262, 96
      %v2336 = vpop.permute.xlu0 %2335
      %2337 = vrot.lane.b32.xlu0 %v2264, 96
      %v2338 = vpop.permute.xlu0 %2337
      %2339 = vrot.lane.b32.xlu0 %v2266, 96
      %v2340 = vpop.permute.xlu0 %2339
      %2341 = vrot.lane.b32.xlu0 %v2268, 96
      %v2342 = vpop.permute.xlu0 %2341
      %2343 = vrot.lane.b32.xlu0 %v2270, 96
      %v2344 = vpop.permute.xlu0 %2343
      %2345 = vrot.lane.b32.xlu0 %v2272, 96
      %v2346 = vpop.permute.xlu0 %2345
      %2347 = vrot.lane.b32.xlu0 %v2274, 96
      %v2348 = vpop.permute.xlu0 %2347
      %2349 = vrot.lane.b32.xlu0 %v2276, 96
      %v2350 = vpop.permute.xlu0 %2349
      %2351 = vrot.lane.b32.xlu0 %v2278, 96
      %v2352 = vpop.permute.xlu0 %2351
      %2353 = vrot.lane.b32.xlu0 %v2280, 96
      %v2354 = vpop.permute.xlu0 %2353
      %2355 = vrot.lane.b32.xlu0 %v2282, 96
      %v2356 = vpop.permute.xlu0 %2355
      %2357 = vrot.lane.b32.xlu0 %v2284, 96
      %v2358 = vpop.permute.xlu0 %2357
      %v2396 = vadd.f32 %v2171, %v2286
      %v2397 = vadd.f32 %v2172, %v2288
      %v2398 = vadd.f32 %v2173, %v2290
      %v2399 = vadd.f32 %v2174, %v2292
      %v2400 = vadd.f32 %v2175, %v2294
      %v2401 = vadd.f32 %v2176, %v2296
      %v2402 = vadd.f32 %v2177, %v2298
      %v2403 = vadd.f32 %v2178, %v2300
      %v2404 = vadd.f32 %v2179, %v2302
      %v2405 = vadd.f32 %v2180, %v2304
      %v2406 = vadd.f32 %v2181, %v2306
      %v2407 = vadd.f32 %v2182, %v2308
      %v2408 = vadd.f32 %v2183, %v2310
      %v2409 = vadd.f32 %v2184, %v2312
      %v2410 = vadd.f32 %v2185, %v2314
      %v2411 = vadd.f32 %v2186, %v2316
      %v2412 = vadd.f32 %v2187, %v2318
      %v2413 = vadd.f32 %v2188, %v2320
      %v2414 = vadd.f32 %v2189, %v2322
      %v2415 = vadd.f32 %v2190, %v2324
      %v2416 = vadd.f32 %v2191, %v2326
      %v2417 = vadd.f32 %v2192, %v2328
      %v2418 = vadd.f32 %v2193, %v2330
      %v2419 = vadd.f32 %v2194, %v2332
      %v2420 = vadd.f32 %v2195, %v2334
      %v2421 = vadd.f32 %v2196, %v2336
      %v2422 = vadd.f32 %v2197, %v2338
      %v2423 = vadd.f32 %v2198, %v2340
      %v2424 = vadd.f32 %v2199, %v2342
      %v2425 = vadd.f32 %v2200, %v2344
      %v2426 = vadd.f32 %v2201, %v2346
      %v2427 = vadd.f32 %v2202, %v2348
      %v2428 = vadd.f32 %v2203, %v2350
      %v2429 = vadd.f32 %v2204, %v2352
      %v2430 = vadd.f32 %v2205, %v2354
      %v2431 = vadd.f32 %v2206, %v2356
      %v2432 = vadd.f32 %v2207, %v2358
      %vm2433 = vcmask 1044480
      %v2434 = vrot.slane %v1461, 3
      %v2435 = vrot.slane %v1463, 3
      %v2436 = vsel %vm2433, %v2434, %v2435
      %v2437 = vrot.slane %v1466, 3
      %v2438 = vsel %vm2433, %v2435, %v2437
      %v2439 = vrot.slane %v1468, 3
      %v2440 = vsel %vm2433, %v2437, %v2439
      %v2441 = vrot.slane %v1471, 3
      %v2442 = vsel %vm2433, %v2439, %v2441
      %v2443 = vrot.slane %v1473, 3
      %v2444 = vsel %vm2433, %v2441, %v2443
      %v2445 = vrot.slane %v1476, 3
      %v2446 = vsel %vm2433, %v2443, %v2445
      %v2447 = vrot.slane %v1478, 3
      %v2448 = vsel %vm2433, %v2445, %v2447
      %v2449 = vrot.slane %v1481, 3
      %v2450 = vsel %vm2433, %v2447, %v2449
      %v2451 = vrot.slane %v1483, 3
      %v2452 = vsel %vm2433, %v2449, %v2451
      %v2453 = vrot.slane %v1486, 3
      %v2454 = vsel %vm2433, %v2451, %v2453
      %v2455 = vrot.slane %v1488, 3
      %v2456 = vsel %vm2433, %v2453, %v2455
      %v2457 = vrot.slane %v1491, 3
      %v2458 = vsel %vm2433, %v2455, %v2457
      %v2459 = vrot.slane %v1493, 3
      %v2460 = vsel %vm2433, %v2457, %v2459
      %v2461 = vrot.slane %v1496, 3
      %v2462 = vsel %vm2433, %v2459, %v2461
      %v2463 = vrot.slane %v1498, 3
      %v2464 = vsel %vm2433, %v2461, %v2463
      %v2465 = vrot.slane %v1501, 3
      %v2466 = vsel %vm2433, %v2463, %v2465
      %v2467 = vrot.slane %v1503, 3
      %v2468 = vsel %vm2433, %v2465, %v2467
      %v2469 = vrot.slane %v1506, 3
      %v2470 = vsel %vm2433, %v2467, %v2469
      %v2471 = vrot.slane %v1508, 3
      %v2472 = vsel %vm2433, %v2469, %v2471
      %v2473 = vrot.slane %v1511, 3
      %v2474 = vsel %vm2433, %v2471, %v2473
      %v2475 = vrot.slane %v1513, 3
      %v2476 = vsel %vm2433, %v2473, %v2475
      %v2477 = vrot.slane %v1516, 3
      %v2478 = vsel %vm2433, %v2475, %v2477
      %v2479 = vrot.slane %v1518, 3
      %v2480 = vsel %vm2433, %v2477, %v2479
      %v2481 = vrot.slane %v1521, 3
      %v2482 = vsel %vm2433, %v2479, %v2481
      %v2483 = vrot.slane %v1523, 3
      %v2484 = vsel %vm2433, %v2481, %v2483
      %v2485 = vrot.slane %v1526, 3
      %v2486 = vsel %vm2433, %v2483, %v2485
      %v2487 = vrot.slane %v1528, 3
      %v2488 = vsel %vm2433, %v2485, %v2487
      %v2489 = vrot.slane %v1531, 3
      %v2490 = vsel %vm2433, %v2487, %v2489
      %v2491 = vrot.slane %v1533, 3
      %v2492 = vsel %vm2433, %v2489, %v2491
      %v2493 = vrot.slane %v1536, 3
      %v2494 = vsel %vm2433, %v2491, %v2493
      %v2495 = vrot.slane %v1538, 3
      %v2496 = vsel %vm2433, %v2493, %v2495
      %v2497 = vrot.slane %v1541, 3
      %v2498 = vsel %vm2433, %v2495, %v2497
      %v2499 = vrot.slane %v1543, 3
      %v2500 = vsel %vm2433, %v2497, %v2499
      %v2501 = vrot.slane %v1546, 3
      %v2502 = vsel %vm2433, %v2499, %v2501
      %v2503 = vrot.slane %v1548, 3
      %v2504 = vsel %vm2433, %v2501, %v2503
      %v2505 = vrot.slane %v1551, 3
      %v2506 = vsel %vm2433, %v2503, %v2505
      %v2507 = vrot.slane %v1553, 3
      %v2508 = vsel %vm2433, %v2505, %v2507
      %2509 = vrot.lane.b32.xlu0 %v2436, 80
      %v2510 = vpop.permute.xlu0 %2509
      %2511 = vrot.lane.b32.xlu0 %v2438, 80
      %v2512 = vpop.permute.xlu0 %2511
      %2513 = vrot.lane.b32.xlu0 %v2440, 80
      %v2514 = vpop.permute.xlu0 %2513
      %2515 = vrot.lane.b32.xlu0 %v2442, 80
      %v2516 = vpop.permute.xlu0 %2515
      %2517 = vrot.lane.b32.xlu0 %v2444, 80
      %v2518 = vpop.permute.xlu0 %2517
      %2519 = vrot.lane.b32.xlu0 %v2446, 80
      %v2520 = vpop.permute.xlu0 %2519
      %2521 = vrot.lane.b32.xlu0 %v2448, 80
      %v2522 = vpop.permute.xlu0 %2521
      %2523 = vrot.lane.b32.xlu0 %v2450, 80
      %v2524 = vpop.permute.xlu0 %2523
      %2525 = vrot.lane.b32.xlu0 %v2452, 80
      %v2526 = vpop.permute.xlu0 %2525
      %2527 = vrot.lane.b32.xlu0 %v2454, 80
      %v2528 = vpop.permute.xlu0 %2527
      %2529 = vrot.lane.b32.xlu0 %v2456, 80
      %v2530 = vpop.permute.xlu0 %2529
      %2531 = vrot.lane.b32.xlu0 %v2458, 80
      %v2532 = vpop.permute.xlu0 %2531
      %2533 = vrot.lane.b32.xlu0 %v2460, 80
      %v2534 = vpop.permute.xlu0 %2533
      %2535 = vrot.lane.b32.xlu0 %v2462, 80
      %v2536 = vpop.permute.xlu0 %2535
      %2537 = vrot.lane.b32.xlu0 %v2464, 80
      %v2538 = vpop.permute.xlu0 %2537
      %2539 = vrot.lane.b32.xlu0 %v2466, 80
      %v2540 = vpop.permute.xlu0 %2539
      %2541 = vrot.lane.b32.xlu0 %v2468, 80
      %v2542 = vpop.permute.xlu0 %2541
      %2543 = vrot.lane.b32.xlu0 %v2470, 80
      %v2544 = vpop.permute.xlu0 %2543
      %2545 = vrot.lane.b32.xlu0 %v2472, 80
      %v2546 = vpop.permute.xlu0 %2545
      %2547 = vrot.lane.b32.xlu0 %v2474, 80
      %v2548 = vpop.permute.xlu0 %2547
      %2549 = vrot.lane.b32.xlu0 %v2476, 80
      %v2550 = vpop.permute.xlu0 %2549
      %2551 = vrot.lane.b32.xlu0 %v2478, 80
      %v2552 = vpop.permute.xlu0 %2551
      %2553 = vrot.lane.b32.xlu0 %v2480, 80
      %v2554 = vpop.permute.xlu0 %2553
      %2555 = vrot.lane.b32.xlu0 %v2482, 80
      %v2556 = vpop.permute.xlu0 %2555
      %2557 = vrot.lane.b32.xlu0 %v2484, 80
      %v2558 = vpop.permute.xlu0 %2557
      %2559 = vrot.lane.b32.xlu0 %v2486, 80
      %v2560 = vpop.permute.xlu0 %2559
      %2561 = vrot.lane.b32.xlu0 %v2488, 80
      %v2562 = vpop.permute.xlu0 %2561
      %2563 = vrot.lane.b32.xlu0 %v2490, 80
      %v2564 = vpop.permute.xlu0 %2563
      %2565 = vrot.lane.b32.xlu0 %v2492, 80
      %v2566 = vpop.permute.xlu0 %2565
      %2567 = vrot.lane.b32.xlu0 %v2494, 80
      %v2568 = vpop.permute.xlu0 %2567
      %2569 = vrot.lane.b32.xlu0 %v2496, 80
      %v2570 = vpop.permute.xlu0 %2569
      %2571 = vrot.lane.b32.xlu0 %v2498, 80
      %v2572 = vpop.permute.xlu0 %2571
      %2573 = vrot.lane.b32.xlu0 %v2500, 80
      %v2574 = vpop.permute.xlu0 %2573
      %2575 = vrot.lane.b32.xlu0 %v2502, 80
      %v2576 = vpop.permute.xlu0 %2575
      %2577 = vrot.lane.b32.xlu0 %v2504, 80
      %v2578 = vpop.permute.xlu0 %2577
      %2579 = vrot.lane.b32.xlu0 %v2506, 80
      %v2580 = vpop.permute.xlu0 %2579
      %2581 = vrot.lane.b32.xlu0 %v2508, 80
      %v2582 = vpop.permute.xlu0 %2581
      %v2620 = vadd.f32 %v2396, %v2510
      %v2621 = vadd.f32 %v2397, %v2512
      %v2622 = vadd.f32 %v2398, %v2514
      %v2623 = vadd.f32 %v2399, %v2516
      %v2624 = vadd.f32 %v2400, %v2518
      %v2625 = vadd.f32 %v2401, %v2520
      %v2626 = vadd.f32 %v2402, %v2522
      %v2627 = vadd.f32 %v2403, %v2524
      %v2628 = vadd.f32 %v2404, %v2526
      %v2629 = vadd.f32 %v2405, %v2528
      %v2630 = vadd.f32 %v2406, %v2530
      %v2631 = vadd.f32 %v2407, %v2532
      %v2632 = vadd.f32 %v2408, %v2534
      %v2633 = vadd.f32 %v2409, %v2536
      %v2634 = vadd.f32 %v2410, %v2538
      %v2635 = vadd.f32 %v2411, %v2540
      %v2636 = vadd.f32 %v2412, %v2542
      %v2637 = vadd.f32 %v2413, %v2544
      %v2638 = vadd.f32 %v2414, %v2546
      %v2639 = vadd.f32 %v2415, %v2548
      %v2640 = vadd.f32 %v2416, %v2550
      %v2641 = vadd.f32 %v2417, %v2552
      %v2642 = vadd.f32 %v2418, %v2554
      %v2643 = vadd.f32 %v2419, %v2556
      %v2644 = vadd.f32 %v2420, %v2558
      %v2645 = vadd.f32 %v2421, %v2560
      %v2646 = vadd.f32 %v2422, %v2562
      %v2647 = vadd.f32 %v2423, %v2564
      %v2648 = vadd.f32 %v2424, %v2566
      %v2649 = vadd.f32 %v2425, %v2568
      %v2650 = vadd.f32 %v2426, %v2570
      %v2651 = vadd.f32 %v2427, %v2572
      %v2652 = vadd.f32 %v2428, %v2574
      %v2653 = vadd.f32 %v2429, %v2576
      %v2654 = vadd.f32 %v2430, %v2578
      %v2655 = vadd.f32 %v2431, %v2580
      %v2656 = vadd.f32 %v2432, %v2582
      %vm2657 = vcmask 1043456
      %v2658 = vrot.slane %v1461, 4
      %v2659 = vrot.slane %v1463, 4
      %v2660 = vsel %vm2657, %v2658, %v2659
      %v2661 = vrot.slane %v1466, 4
      %v2662 = vsel %vm2657, %v2659, %v2661
      %v2663 = vrot.slane %v1468, 4
      %v2664 = vsel %vm2657, %v2661, %v2663
      %v2665 = vrot.slane %v1471, 4
      %v2666 = vsel %vm2657, %v2663, %v2665
      %v2667 = vrot.slane %v1473, 4
      %v2668 = vsel %vm2657, %v2665, %v2667
      %v2669 = vrot.slane %v1476, 4
      %v2670 = vsel %vm2657, %v2667, %v2669
      %v2671 = vrot.slane %v1478, 4
      %v2672 = vsel %vm2657, %v2669, %v2671
      %v2673 = vrot.slane %v1481, 4
      %v2674 = vsel %vm2657, %v2671, %v2673
      %v2675 = vrot.slane %v1483, 4
      %v2676 = vsel %vm2657, %v2673, %v2675
      %v2677 = vrot.slane %v1486, 4
      %v2678 = vsel %vm2657, %v2675, %v2677
      %v2679 = vrot.slane %v1488, 4
      %v2680 = vsel %vm2657, %v2677, %v2679
      %v2681 = vrot.slane %v1491, 4
      %v2682 = vsel %vm2657, %v2679, %v2681
      %v2683 = vrot.slane %v1493, 4
      %v2684 = vsel %vm2657, %v2681, %v2683
      %v2685 = vrot.slane %v1496, 4
      %v2686 = vsel %vm2657, %v2683, %v2685
      %v2687 = vrot.slane %v1498, 4
      %v2688 = vsel %vm2657, %v2685, %v2687
      %v2689 = vrot.slane %v1501, 4
      %v2690 = vsel %vm2657, %v2687, %v2689
      %v2691 = vrot.slane %v1503, 4
      %v2692 = vsel %vm2657, %v2689, %v2691
      %v2693 = vrot.slane %v1506, 4
      %v2694 = vsel %vm2657, %v2691, %v2693
      %v2695 = vrot.slane %v1508, 4
      %v2696 = vsel %vm2657, %v2693, %v2695
      %v2697 = vrot.slane %v1511, 4
      %v2698 = vsel %vm2657, %v2695, %v2697
      %v2699 = vrot.slane %v1513, 4
      %v2700 = vsel %vm2657, %v2697, %v2699
      %v2701 = vrot.slane %v1516, 4
      %v2702 = vsel %vm2657, %v2699, %v2701
      %v2703 = vrot.slane %v1518, 4
      %v2704 = vsel %vm2657, %v2701, %v2703
      %v2705 = vrot.slane %v1521, 4
      %v2706 = vsel %vm2657, %v2703, %v2705
      %v2707 = vrot.slane %v1523, 4
      %v2708 = vsel %vm2657, %v2705, %v2707
      %v2709 = vrot.slane %v1526, 4
      %v2710 = vsel %vm2657, %v2707, %v2709
      %v2711 = vrot.slane %v1528, 4
      %v2712 = vsel %vm2657, %v2709, %v2711
      %v2713 = vrot.slane %v1531, 4
      %v2714 = vsel %vm2657, %v2711, %v2713
      %v2715 = vrot.slane %v1533, 4
      %v2716 = vsel %vm2657, %v2713, %v2715
      %v2717 = vrot.slane %v1536, 4
      %v2718 = vsel %vm2657, %v2715, %v2717
      %v2719 = vrot.slane %v1538, 4
      %v2720 = vsel %vm2657, %v2717, %v2719
      %v2721 = vrot.slane %v1541, 4
      %v2722 = vsel %vm2657, %v2719, %v2721
      %v2723 = vrot.slane %v1543, 4
      %v2724 = vsel %vm2657, %v2721, %v2723
      %v2725 = vrot.slane %v1546, 4
      %v2726 = vsel %vm2657, %v2723, %v2725
      %v2727 = vrot.slane %v1548, 4
      %v2728 = vsel %vm2657, %v2725, %v2727
      %v2729 = vrot.slane %v1551, 4
      %v2730 = vsel %vm2657, %v2727, %v2729
      %v2731 = vrot.slane %v1553, 4
      %v2732 = vsel %vm2657, %v2729, %v2731
      %2733 = vrot.lane.b32.xlu0 %v2660, 64
      %v2734 = vpop.permute.xlu0 %2733
      %2735 = vrot.lane.b32.xlu0 %v2662, 64
      %v2736 = vpop.permute.xlu0 %2735
      %2737 = vrot.lane.b32.xlu0 %v2664, 64
      %v2738 = vpop.permute.xlu0 %2737
      %2739 = vrot.lane.b32.xlu0 %v2666, 64
      %v2740 = vpop.permute.xlu0 %2739
      %2741 = vrot.lane.b32.xlu0 %v2668, 64
      %v2742 = vpop.permute.xlu0 %2741
      %2743 = vrot.lane.b32.xlu0 %v2670, 64
      %v2744 = vpop.permute.xlu0 %2743
      %2745 = vrot.lane.b32.xlu0 %v2672, 64
      %v2746 = vpop.permute.xlu0 %2745
      %2747 = vrot.lane.b32.xlu0 %v2674, 64
      %v2748 = vpop.permute.xlu0 %2747
      %2749 = vrot.lane.b32.xlu0 %v2676, 64
      %v2750 = vpop.permute.xlu0 %2749
      %2751 = vrot.lane.b32.xlu0 %v2678, 64
      %v2752 = vpop.permute.xlu0 %2751
      %2753 = vrot.lane.b32.xlu0 %v2680, 64
      %v2754 = vpop.permute.xlu0 %2753
      %2755 = vrot.lane.b32.xlu0 %v2682, 64
      %v2756 = vpop.permute.xlu0 %2755
      %2757 = vrot.lane.b32.xlu0 %v2684, 64
      %v2758 = vpop.permute.xlu0 %2757
      %2759 = vrot.lane.b32.xlu0 %v2686, 64
      %v2760 = vpop.permute.xlu0 %2759
      %2761 = vrot.lane.b32.xlu0 %v2688, 64
      %v2762 = vpop.permute.xlu0 %2761
      %2763 = vrot.lane.b32.xlu0 %v2690, 64
      %v2764 = vpop.permute.xlu0 %2763
      %2765 = vrot.lane.b32.xlu0 %v2692, 64
      %v2766 = vpop.permute.xlu0 %2765
      %2767 = vrot.lane.b32.xlu0 %v2694, 64
      %v2768 = vpop.permute.xlu0 %2767
      %2769 = vrot.lane.b32.xlu0 %v2696, 64
      %v2770 = vpop.permute.xlu0 %2769
      %2771 = vrot.lane.b32.xlu0 %v2698, 64
      %v2772 = vpop.permute.xlu0 %2771
      %2773 = vrot.lane.b32.xlu0 %v2700, 64
      %v2774 = vpop.permute.xlu0 %2773
      %2775 = vrot.lane.b32.xlu0 %v2702, 64
      %v2776 = vpop.permute.xlu0 %2775
      %2777 = vrot.lane.b32.xlu0 %v2704, 64
      %v2778 = vpop.permute.xlu0 %2777
      %2779 = vrot.lane.b32.xlu0 %v2706, 64
      %v2780 = vpop.permute.xlu0 %2779
      %2781 = vrot.lane.b32.xlu0 %v2708, 64
      %v2782 = vpop.permute.xlu0 %2781
      %2783 = vrot.lane.b32.xlu0 %v2710, 64
      %v2784 = vpop.permute.xlu0 %2783
      %2785 = vrot.lane.b32.xlu0 %v2712, 64
      %v2786 = vpop.permute.xlu0 %2785
      %2787 = vrot.lane.b32.xlu0 %v2714, 64
      %v2788 = vpop.permute.xlu0 %2787
      %2789 = vrot.lane.b32.xlu0 %v2716, 64
      %v2790 = vpop.permute.xlu0 %2789
      %2791 = vrot.lane.b32.xlu0 %v2718, 64
      %v2792 = vpop.permute.xlu0 %2791
      %2793 = vrot.lane.b32.xlu0 %v2720, 64
      %v2794 = vpop.permute.xlu0 %2793
      %2795 = vrot.lane.b32.xlu0 %v2722, 64
      %v2796 = vpop.permute.xlu0 %2795
      %2797 = vrot.lane.b32.xlu0 %v2724, 64
      %v2798 = vpop.permute.xlu0 %2797
      %2799 = vrot.lane.b32.xlu0 %v2726, 64
      %v2800 = vpop.permute.xlu0 %2799
      %2801 = vrot.lane.b32.xlu0 %v2728, 64
      %v2802 = vpop.permute.xlu0 %2801
      %2803 = vrot.lane.b32.xlu0 %v2730, 64
      %v2804 = vpop.permute.xlu0 %2803
      %2805 = vrot.lane.b32.xlu0 %v2732, 64
      %v2806 = vpop.permute.xlu0 %2805
      %v2844 = vadd.f32 %v2620, %v2734
      %v2845 = vadd.f32 %v2621, %v2736
      %v2846 = vadd.f32 %v2622, %v2738
      %v2847 = vadd.f32 %v2623, %v2740
      %v2848 = vadd.f32 %v2624, %v2742
      %v2849 = vadd.f32 %v2625, %v2744
      %v2850 = vadd.f32 %v2626, %v2746
      %v2851 = vadd.f32 %v2627, %v2748
      %v2852 = vadd.f32 %v2628, %v2750
      %v2853 = vadd.f32 %v2629, %v2752
      %v2854 = vadd.f32 %v2630, %v2754
      %v2855 = vadd.f32 %v2631, %v2756
      %v2856 = vadd.f32 %v2632, %v2758
      %v2857 = vadd.f32 %v2633, %v2760
      %v2858 = vadd.f32 %v2634, %v2762
      %v2859 = vadd.f32 %v2635, %v2764
      %v2860 = vadd.f32 %v2636, %v2766
      %v2861 = vadd.f32 %v2637, %v2768
      %v2862 = vadd.f32 %v2638, %v2770
      %v2863 = vadd.f32 %v2639, %v2772
      %v2864 = vadd.f32 %v2640, %v2774
      %v2865 = vadd.f32 %v2641, %v2776
      %v2866 = vadd.f32 %v2642, %v2778
      %v2867 = vadd.f32 %v2643, %v2780
      %v2868 = vadd.f32 %v2644, %v2782
      %v2869 = vadd.f32 %v2645, %v2784
      %v2870 = vadd.f32 %v2646, %v2786
      %v2871 = vadd.f32 %v2647, %v2788
      %v2872 = vadd.f32 %v2648, %v2790
      %v2873 = vadd.f32 %v2649, %v2792
      %v2874 = vadd.f32 %v2650, %v2794
      %v2875 = vadd.f32 %v2651, %v2796
      %v2876 = vadd.f32 %v2652, %v2798
      %v2877 = vadd.f32 %v2653, %v2800
      %v2878 = vadd.f32 %v2654, %v2802
      %v2879 = vadd.f32 %v2655, %v2804
      %v2880 = vadd.f32 %v2656, %v2806
      %v2883 = vrot.slane %v1556, 4
      %v2884 = vsel %vm2657, %v2731, %v2883
      %v2885 = vrot.slane %v1558, 4
      %v2886 = vsel %vm2657, %v2883, %v2885
      %2887 = vrot.lane.b32.xlu0 %v2664, 48
      %v2888 = vpop.permute.xlu0 %2887
      %2889 = vrot.lane.b32.xlu0 %v2666, 48
      %v2890 = vpop.permute.xlu0 %2889
      %2891 = vrot.lane.b32.xlu0 %v2668, 48
      %v2892 = vpop.permute.xlu0 %2891
      %2893 = vrot.lane.b32.xlu0 %v2670, 48
      %v2894 = vpop.permute.xlu0 %2893
      %2895 = vrot.lane.b32.xlu0 %v2672, 48
      %v2896 = vpop.permute.xlu0 %2895
      %2897 = vrot.lane.b32.xlu0 %v2674, 48
      %v2898 = vpop.permute.xlu0 %2897
      %2899 = vrot.lane.b32.xlu0 %v2676, 48
      %v2900 = vpop.permute.xlu0 %2899
      %2901 = vrot.lane.b32.xlu0 %v2678, 48
      %v2902 = vpop.permute.xlu0 %2901
      %2903 = vrot.lane.b32.xlu0 %v2680, 48
      %v2904 = vpop.permute.xlu0 %2903
      %2905 = vrot.lane.b32.xlu0 %v2682, 48
      %v2906 = vpop.permute.xlu0 %2905
      %2907 = vrot.lane.b32.xlu0 %v2684, 48
      %v2908 = vpop.permute.xlu0 %2907
      %2909 = vrot.lane.b32.xlu0 %v2686, 48
      %v2910 = vpop.permute.xlu0 %2909
      %2911 = vrot.lane.b32.xlu0 %v2688, 48
      %v2912 = vpop.permute.xlu0 %2911
      %2913 = vrot.lane.b32.xlu0 %v2690, 48
      %v2914 = vpop.permute.xlu0 %2913
      %2915 = vrot.lane.b32.xlu0 %v2692, 48
      %v2916 = vpop.permute.xlu0 %2915
      %2917 = vrot.lane.b32.xlu0 %v2694, 48
      %v2918 = vpop.permute.xlu0 %2917
      %2919 = vrot.lane.b32.xlu0 %v2696, 48
      %v2920 = vpop.permute.xlu0 %2919
      %2921 = vrot.lane.b32.xlu0 %v2698, 48
      %v2922 = vpop.permute.xlu0 %2921
      %2923 = vrot.lane.b32.xlu0 %v2700, 48
      %v2924 = vpop.permute.xlu0 %2923
      %2925 = vrot.lane.b32.xlu0 %v2702, 48
      %v2926 = vpop.permute.xlu0 %2925
      %2927 = vrot.lane.b32.xlu0 %v2704, 48
      %v2928 = vpop.permute.xlu0 %2927
      %2929 = vrot.lane.b32.xlu0 %v2706, 48
      %v2930 = vpop.permute.xlu0 %2929
      %2931 = vrot.lane.b32.xlu0 %v2708, 48
      %v2932 = vpop.permute.xlu0 %2931
      %2933 = vrot.lane.b32.xlu0 %v2710, 48
      %v2934 = vpop.permute.xlu0 %2933
      %2935 = vrot.lane.b32.xlu0 %v2712, 48
      %v2936 = vpop.permute.xlu0 %2935
      %2937 = vrot.lane.b32.xlu0 %v2714, 48
      %v2938 = vpop.permute.xlu0 %2937
      %2939 = vrot.lane.b32.xlu0 %v2716, 48
      %v2940 = vpop.permute.xlu0 %2939
      %2941 = vrot.lane.b32.xlu0 %v2718, 48
      %v2942 = vpop.permute.xlu0 %2941
      %2943 = vrot.lane.b32.xlu0 %v2720, 48
      %v2944 = vpop.permute.xlu0 %2943
      %2945 = vrot.lane.b32.xlu0 %v2722, 48
      %v2946 = vpop.permute.xlu0 %2945
      %2947 = vrot.lane.b32.xlu0 %v2724, 48
      %v2948 = vpop.permute.xlu0 %2947
      %2949 = vrot.lane.b32.xlu0 %v2726, 48
      %v2950 = vpop.permute.xlu0 %2949
      %2951 = vrot.lane.b32.xlu0 %v2728, 48
      %v2952 = vpop.permute.xlu0 %2951
      %2953 = vrot.lane.b32.xlu0 %v2730, 48
      %v2954 = vpop.permute.xlu0 %2953
      %2955 = vrot.lane.b32.xlu0 %v2732, 48
      %v2956 = vpop.permute.xlu0 %2955
      %2957 = vrot.lane.b32.xlu0 %v2884, 48
      %v2958 = vpop.permute.xlu0 %2957
      %2959 = vrot.lane.b32.xlu0 %v2886, 48
      %v2960 = vpop.permute.xlu0 %2959
      %v2998 = vadd.f32 %v2844, %v2888
      %v2999 = vadd.f32 %v2845, %v2890
      %v3000 = vadd.f32 %v2846, %v2892
      %v3001 = vadd.f32 %v2847, %v2894
      %v3002 = vadd.f32 %v2848, %v2896
      %v3003 = vadd.f32 %v2849, %v2898
      %v3004 = vadd.f32 %v2850, %v2900
      %v3005 = vadd.f32 %v2851, %v2902
      %v3006 = vadd.f32 %v2852, %v2904
      %v3007 = vadd.f32 %v2853, %v2906
      %v3008 = vadd.f32 %v2854, %v2908
      %v3009 = vadd.f32 %v2855, %v2910
      %v3010 = vadd.f32 %v2856, %v2912
      %v3011 = vadd.f32 %v2857, %v2914
      %v3012 = vadd.f32 %v2858, %v2916
      %v3013 = vadd.f32 %v2859, %v2918
      %v3014 = vadd.f32 %v2860, %v2920
      %v3015 = vadd.f32 %v2861, %v2922
      %v3016 = vadd.f32 %v2862, %v2924
      %v3017 = vadd.f32 %v2863, %v2926
      %v3018 = vadd.f32 %v2864, %v2928
      %v3019 = vadd.f32 %v2865, %v2930
      %v3020 = vadd.f32 %v2866, %v2932
      %v3021 = vadd.f32 %v2867, %v2934
      %v3022 = vadd.f32 %v2868, %v2936
      %v3023 = vadd.f32 %v2869, %v2938
      %v3024 = vadd.f32 %v2870, %v2940
      %v3025 = vadd.f32 %v2871, %v2942
      %v3026 = vadd.f32 %v2872, %v2944
      %v3027 = vadd.f32 %v2873, %v2946
      %v3028 = vadd.f32 %v2874, %v2948
      %v3029 = vadd.f32 %v2875, %v2950
      %v3030 = vadd.f32 %v2876, %v2952
      %v3031 = vadd.f32 %v2877, %v2954
      %v3032 = vadd.f32 %v2878, %v2956
      %v3033 = vadd.f32 %v2879, %v2958
      %v3034 = vadd.f32 %v2880, %v2960
      %vm3035 = vcmask 1042432
      %v3036 = vrot.slane %v1466, 5
      %v3037 = vrot.slane %v1468, 5
      %v3038 = vsel %vm3035, %v3036, %v3037
      %v3039 = vrot.slane %v1471, 5
      %v3040 = vsel %vm3035, %v3037, %v3039
      %v3041 = vrot.slane %v1473, 5
      %v3042 = vsel %vm3035, %v3039, %v3041
      %v3043 = vrot.slane %v1476, 5
      %v3044 = vsel %vm3035, %v3041, %v3043
      %v3045 = vrot.slane %v1478, 5
      %v3046 = vsel %vm3035, %v3043, %v3045
      %v3047 = vrot.slane %v1481, 5
      %v3048 = vsel %vm3035, %v3045, %v3047
      %v3049 = vrot.slane %v1483, 5
      %v3050 = vsel %vm3035, %v3047, %v3049
      %v3051 = vrot.slane %v1486, 5
      %v3052 = vsel %vm3035, %v3049, %v3051
      %v3053 = vrot.slane %v1488, 5
      %v3054 = vsel %vm3035, %v3051, %v3053
      %v3055 = vrot.slane %v1491, 5
      %v3056 = vsel %vm3035, %v3053, %v3055
      %v3057 = vrot.slane %v1493, 5
      %v3058 = vsel %vm3035, %v3055, %v3057
      %v3059 = vrot.slane %v1496, 5
      %v3060 = vsel %vm3035, %v3057, %v3059
      %v3061 = vrot.slane %v1498, 5
      %v3062 = vsel %vm3035, %v3059, %v3061
      %v3063 = vrot.slane %v1501, 5
      %v3064 = vsel %vm3035, %v3061, %v3063
      %v3065 = vrot.slane %v1503, 5
      %v3066 = vsel %vm3035, %v3063, %v3065
      %v3067 = vrot.slane %v1506, 5
      %v3068 = vsel %vm3035, %v3065, %v3067
      %v3069 = vrot.slane %v1508, 5
      %v3070 = vsel %vm3035, %v3067, %v3069
      %v3071 = vrot.slane %v1511, 5
      %v3072 = vsel %vm3035, %v3069, %v3071
      %v3073 = vrot.slane %v1513, 5
      %v3074 = vsel %vm3035, %v3071, %v3073
      %v3075 = vrot.slane %v1516, 5
      %v3076 = vsel %vm3035, %v3073, %v3075
      %v3077 = vrot.slane %v1518, 5
      %v3078 = vsel %vm3035, %v3075, %v3077
      %v3079 = vrot.slane %v1521, 5
      %v3080 = vsel %vm3035, %v3077, %v3079
      %v3081 = vrot.slane %v1523, 5
      %v3082 = vsel %vm3035, %v3079, %v3081
      %v3083 = vrot.slane %v1526, 5
      %v3084 = vsel %vm3035, %v3081, %v3083
      %v3085 = vrot.slane %v1528, 5
      %v3086 = vsel %vm3035, %v3083, %v3085
      %v3087 = vrot.slane %v1531, 5
      %v3088 = vsel %vm3035, %v3085, %v3087
      %v3089 = vrot.slane %v1533, 5
      %v3090 = vsel %vm3035, %v3087, %v3089
      %v3091 = vrot.slane %v1536, 5
      %v3092 = vsel %vm3035, %v3089, %v3091
      %v3093 = vrot.slane %v1538, 5
      %v3094 = vsel %vm3035, %v3091, %v3093
      %v3095 = vrot.slane %v1541, 5
      %v3096 = vsel %vm3035, %v3093, %v3095
      %v3097 = vrot.slane %v1543, 5
      %v3098 = vsel %vm3035, %v3095, %v3097
      %v3099 = vrot.slane %v1546, 5
      %v3100 = vsel %vm3035, %v3097, %v3099
      %v3101 = vrot.slane %v1548, 5
      %v3102 = vsel %vm3035, %v3099, %v3101
      %v3103 = vrot.slane %v1551, 5
      %v3104 = vsel %vm3035, %v3101, %v3103
      %v3105 = vrot.slane %v1553, 5
      %v3106 = vsel %vm3035, %v3103, %v3105
      %v3107 = vrot.slane %v1556, 5
      %v3108 = vsel %vm3035, %v3105, %v3107
      %v3109 = vrot.slane %v1558, 5
      %v3110 = vsel %vm3035, %v3107, %v3109
      %3111 = vrot.lane.b32.xlu0 %v3038, 32
      %v3112 = vpop.permute.xlu0 %3111
      %3113 = vrot.lane.b32.xlu0 %v3040, 32
      %v3114 = vpop.permute.xlu0 %3113
      %3115 = vrot.lane.b32.xlu0 %v3042, 32
      %v3116 = vpop.permute.xlu0 %3115
      %3117 = vrot.lane.b32.xlu0 %v3044, 32
      %v3118 = vpop.permute.xlu0 %3117
      %3119 = vrot.lane.b32.xlu0 %v3046, 32
      %v3120 = vpop.permute.xlu0 %3119
      %3121 = vrot.lane.b32.xlu0 %v3048, 32
      %v3122 = vpop.permute.xlu0 %3121
      %3123 = vrot.lane.b32.xlu0 %v3050, 32
      %v3124 = vpop.permute.xlu0 %3123
      %3125 = vrot.lane.b32.xlu0 %v3052, 32
      %v3126 = vpop.permute.xlu0 %3125
      %3127 = vrot.lane.b32.xlu0 %v3054, 32
      %v3128 = vpop.permute.xlu0 %3127
      %3129 = vrot.lane.b32.xlu0 %v3056, 32
      %v3130 = vpop.permute.xlu0 %3129
      %3131 = vrot.lane.b32.xlu0 %v3058, 32
      %v3132 = vpop.permute.xlu0 %3131
      %3133 = vrot.lane.b32.xlu0 %v3060, 32
      %v3134 = vpop.permute.xlu0 %3133
      %3135 = vrot.lane.b32.xlu0 %v3062, 32
      %v3136 = vpop.permute.xlu0 %3135
      %3137 = vrot.lane.b32.xlu0 %v3064, 32
      %v3138 = vpop.permute.xlu0 %3137
      %3139 = vrot.lane.b32.xlu0 %v3066, 32
      %v3140 = vpop.permute.xlu0 %3139
      %3141 = vrot.lane.b32.xlu0 %v3068, 32
      %v3142 = vpop.permute.xlu0 %3141
      %3143 = vrot.lane.b32.xlu0 %v3070, 32
      %v3144 = vpop.permute.xlu0 %3143
      %3145 = vrot.lane.b32.xlu0 %v3072, 32
      %v3146 = vpop.permute.xlu0 %3145
      %3147 = vrot.lane.b32.xlu0 %v3074, 32
      %v3148 = vpop.permute.xlu0 %3147
      %3149 = vrot.lane.b32.xlu0 %v3076, 32
      %v3150 = vpop.permute.xlu0 %3149
      %3151 = vrot.lane.b32.xlu0 %v3078, 32
      %v3152 = vpop.permute.xlu0 %3151
      %3153 = vrot.lane.b32.xlu0 %v3080, 32
      %v3154 = vpop.permute.xlu0 %3153
      %3155 = vrot.lane.b32.xlu0 %v3082, 32
      %v3156 = vpop.permute.xlu0 %3155
      %3157 = vrot.lane.b32.xlu0 %v3084, 32
      %v3158 = vpop.permute.xlu0 %3157
      %3159 = vrot.lane.b32.xlu0 %v3086, 32
      %v3160 = vpop.permute.xlu0 %3159
      %3161 = vrot.lane.b32.xlu0 %v3088, 32
      %v3162 = vpop.permute.xlu0 %3161
      %3163 = vrot.lane.b32.xlu0 %v3090, 32
      %v3164 = vpop.permute.xlu0 %3163
      %3165 = vrot.lane.b32.xlu0 %v3092, 32
      %v3166 = vpop.permute.xlu0 %3165
      %3167 = vrot.lane.b32.xlu0 %v3094, 32
      %v3168 = vpop.permute.xlu0 %3167
      %3169 = vrot.lane.b32.xlu0 %v3096, 32
      %v3170 = vpop.permute.xlu0 %3169
      %3171 = vrot.lane.b32.xlu0 %v3098, 32
      %v3172 = vpop.permute.xlu0 %3171
      %3173 = vrot.lane.b32.xlu0 %v3100, 32
      %v3174 = vpop.permute.xlu0 %3173
      %3175 = vrot.lane.b32.xlu0 %v3102, 32
      %v3176 = vpop.permute.xlu0 %3175
      %3177 = vrot.lane.b32.xlu0 %v3104, 32
      %v3178 = vpop.permute.xlu0 %3177
      %3179 = vrot.lane.b32.xlu0 %v3106, 32
      %v3180 = vpop.permute.xlu0 %3179
      %3181 = vrot.lane.b32.xlu0 %v3108, 32
      %v3182 = vpop.permute.xlu0 %3181
      %3183 = vrot.lane.b32.xlu0 %v3110, 32
      %v3184 = vpop.permute.xlu0 %3183
      %v3222 = vadd.f32 %v2998, %v3112
      %v3223 = vadd.f32 %v2999, %v3114
      %v3224 = vadd.f32 %v3000, %v3116
      %v3225 = vadd.f32 %v3001, %v3118
      %v3226 = vadd.f32 %v3002, %v3120
      %v3227 = vadd.f32 %v3003, %v3122
      %v3228 = vadd.f32 %v3004, %v3124
      %v3229 = vadd.f32 %v3005, %v3126
      %v3230 = vadd.f32 %v3006, %v3128
      %v3231 = vadd.f32 %v3007, %v3130
      %v3232 = vadd.f32 %v3008, %v3132
      %v3233 = vadd.f32 %v3009, %v3134
      %v3234 = vadd.f32 %v3010, %v3136
      %v3235 = vadd.f32 %v3011, %v3138
      %v3236 = vadd.f32 %v3012, %v3140
      %v3237 = vadd.f32 %v3013, %v3142
      %v3238 = vadd.f32 %v3014, %v3144
      %v3239 = vadd.f32 %v3015, %v3146
      %v3240 = vadd.f32 %v3016, %v3148
      %v3241 = vadd.f32 %v3017, %v3150
      %v3242 = vadd.f32 %v3018, %v3152
      %v3243 = vadd.f32 %v3019, %v3154
      %v3244 = vadd.f32 %v3020, %v3156
      %v3245 = vadd.f32 %v3021, %v3158
      %v3246 = vadd.f32 %v3022, %v3160
      %v3247 = vadd.f32 %v3023, %v3162
      %v3248 = vadd.f32 %v3024, %v3164
      %v3249 = vadd.f32 %v3025, %v3166
      %v3250 = vadd.f32 %v3026, %v3168
      %v3251 = vadd.f32 %v3027, %v3170
      %v3252 = vadd.f32 %v3028, %v3172
      %v3253 = vadd.f32 %v3029, %v3174
      %v3254 = vadd.f32 %v3030, %v3176
      %v3255 = vadd.f32 %v3031, %v3178
      %v3256 = vadd.f32 %v3032, %v3180
      %v3257 = vadd.f32 %v3033, %v3182
      %v3258 = vadd.f32 %v3034, %v3184
      %vm3259 = vcmask 1041408
      %v3260 = vrot.slane %v1466, 6
      %v3261 = vrot.slane %v1468, 6
      %v3262 = vsel %vm3259, %v3260, %v3261
      %v3263 = vrot.slane %v1471, 6
      %v3264 = vsel %vm3259, %v3261, %v3263
      %v3265 = vrot.slane %v1473, 6
      %v3266 = vsel %vm3259, %v3263, %v3265
      %v3267 = vrot.slane %v1476, 6
      %v3268 = vsel %vm3259, %v3265, %v3267
      %v3269 = vrot.slane %v1478, 6
      %v3270 = vsel %vm3259, %v3267, %v3269
      %v3271 = vrot.slane %v1481, 6
      %v3272 = vsel %vm3259, %v3269, %v3271
      %v3273 = vrot.slane %v1483, 6
      %v3274 = vsel %vm3259, %v3271, %v3273
      %v3275 = vrot.slane %v1486, 6
      %v3276 = vsel %vm3259, %v3273, %v3275
      %v3277 = vrot.slane %v1488, 6
      %v3278 = vsel %vm3259, %v3275, %v3277
      %v3279 = vrot.slane %v1491, 6
      %v3280 = vsel %vm3259, %v3277, %v3279
      %v3281 = vrot.slane %v1493, 6
      %v3282 = vsel %vm3259, %v3279, %v3281
      %v3283 = vrot.slane %v1496, 6
      %v3284 = vsel %vm3259, %v3281, %v3283
      %v3285 = vrot.slane %v1498, 6
      %v3286 = vsel %vm3259, %v3283, %v3285
      %v3287 = vrot.slane %v1501, 6
      %v3288 = vsel %vm3259, %v3285, %v3287
      %v3289 = vrot.slane %v1503, 6
      %v3290 = vsel %vm3259, %v3287, %v3289
      %v3291 = vrot.slane %v1506, 6
      %v3292 = vsel %vm3259, %v3289, %v3291
      %v3293 = vrot.slane %v1508, 6
      %v3294 = vsel %vm3259, %v3291, %v3293
      %v3295 = vrot.slane %v1511, 6
      %v3296 = vsel %vm3259, %v3293, %v3295
      %v3297 = vrot.slane %v1513, 6
      %v3298 = vsel %vm3259, %v3295, %v3297
      %v3299 = vrot.slane %v1516, 6
      %v3300 = vsel %vm3259, %v3297, %v3299
      %v3301 = vrot.slane %v1518, 6
      %v3302 = vsel %vm3259, %v3299, %v3301
      %v3303 = vrot.slane %v1521, 6
      %v3304 = vsel %vm3259, %v3301, %v3303
      %v3305 = vrot.slane %v1523, 6
      %v3306 = vsel %vm3259, %v3303, %v3305
      %v3307 = vrot.slane %v1526, 6
      %v3308 = vsel %vm3259, %v3305, %v3307
      %v3309 = vrot.slane %v1528, 6
      %v3310 = vsel %vm3259, %v3307, %v3309
      %v3311 = vrot.slane %v1531, 6
      %v3312 = vsel %vm3259, %v3309, %v3311
      %v3313 = vrot.slane %v1533, 6
      %v3314 = vsel %vm3259, %v3311, %v3313
      %v3315 = vrot.slane %v1536, 6
      %v3316 = vsel %vm3259, %v3313, %v3315
      %v3317 = vrot.slane %v1538, 6
      %v3318 = vsel %vm3259, %v3315, %v3317
      %v3319 = vrot.slane %v1541, 6
      %v3320 = vsel %vm3259, %v3317, %v3319
      %v3321 = vrot.slane %v1543, 6
      %v3322 = vsel %vm3259, %v3319, %v3321
      %v3323 = vrot.slane %v1546, 6
      %v3324 = vsel %vm3259, %v3321, %v3323
      %v3325 = vrot.slane %v1548, 6
      %v3326 = vsel %vm3259, %v3323, %v3325
      %v3327 = vrot.slane %v1551, 6
      %v3328 = vsel %vm3259, %v3325, %v3327
      %v3329 = vrot.slane %v1553, 6
      %v3330 = vsel %vm3259, %v3327, %v3329
      %v3331 = vrot.slane %v1556, 6
      %v3332 = vsel %vm3259, %v3329, %v3331
      %v3333 = vrot.slane %v1558, 6
      %v3334 = vsel %vm3259, %v3331, %v3333
      %3335 = vrot.lane.b32.xlu0 %v3262, 16
      %v3336 = vpop.permute.xlu0 %3335
      %3337 = vrot.lane.b32.xlu0 %v3264, 16
      %v3338 = vpop.permute.xlu0 %3337
      %3339 = vrot.lane.b32.xlu0 %v3266, 16
      %v3340 = vpop.permute.xlu0 %3339
      %3341 = vrot.lane.b32.xlu0 %v3268, 16
      %v3342 = vpop.permute.xlu0 %3341
      %3343 = vrot.lane.b32.xlu0 %v3270, 16
      %v3344 = vpop.permute.xlu0 %3343
      %3345 = vrot.lane.b32.xlu0 %v3272, 16
      %v3346 = vpop.permute.xlu0 %3345
      %3347 = vrot.lane.b32.xlu0 %v3274, 16
      %v3348 = vpop.permute.xlu0 %3347
      %3349 = vrot.lane.b32.xlu0 %v3276, 16
      %v3350 = vpop.permute.xlu0 %3349
      %3351 = vrot.lane.b32.xlu0 %v3278, 16
      %v3352 = vpop.permute.xlu0 %3351
      %3353 = vrot.lane.b32.xlu0 %v3280, 16
      %v3354 = vpop.permute.xlu0 %3353
      %3355 = vrot.lane.b32.xlu0 %v3282, 16
      %v3356 = vpop.permute.xlu0 %3355
      %3357 = vrot.lane.b32.xlu0 %v3284, 16
      %v3358 = vpop.permute.xlu0 %3357
      %3359 = vrot.lane.b32.xlu0 %v3286, 16
      %v3360 = vpop.permute.xlu0 %3359
      %3361 = vrot.lane.b32.xlu0 %v3288, 16
      %v3362 = vpop.permute.xlu0 %3361
      %3363 = vrot.lane.b32.xlu0 %v3290, 16
      %v3364 = vpop.permute.xlu0 %3363
      %3365 = vrot.lane.b32.xlu0 %v3292, 16
      %v3366 = vpop.permute.xlu0 %3365
      %3367 = vrot.lane.b32.xlu0 %v3294, 16
      %v3368 = vpop.permute.xlu0 %3367
      %3369 = vrot.lane.b32.xlu0 %v3296, 16
      %v3370 = vpop.permute.xlu0 %3369
      %3371 = vrot.lane.b32.xlu0 %v3298, 16
      %v3372 = vpop.permute.xlu0 %3371
      %3373 = vrot.lane.b32.xlu0 %v3300, 16
      %v3374 = vpop.permute.xlu0 %3373
      %3375 = vrot.lane.b32.xlu0 %v3302, 16
      %v3376 = vpop.permute.xlu0 %3375
      %3377 = vrot.lane.b32.xlu0 %v3304, 16
      %v3378 = vpop.permute.xlu0 %3377
      %3379 = vrot.lane.b32.xlu0 %v3306, 16
      %v3380 = vpop.permute.xlu0 %3379
      %3381 = vrot.lane.b32.xlu0 %v3308, 16
      %v3382 = vpop.permute.xlu0 %3381
      %3383 = vrot.lane.b32.xlu0 %v3310, 16
      %v3384 = vpop.permute.xlu0 %3383
      %3385 = vrot.lane.b32.xlu0 %v3312, 16
      %v3386 = vpop.permute.xlu0 %3385
      %3387 = vrot.lane.b32.xlu0 %v3314, 16
      %v3388 = vpop.permute.xlu0 %3387
      %3389 = vrot.lane.b32.xlu0 %v3316, 16
      %v3390 = vpop.permute.xlu0 %3389
      %3391 = vrot.lane.b32.xlu0 %v3318, 16
      %v3392 = vpop.permute.xlu0 %3391
      %3393 = vrot.lane.b32.xlu0 %v3320, 16
      %v3394 = vpop.permute.xlu0 %3393
      %3395 = vrot.lane.b32.xlu0 %v3322, 16
      %v3396 = vpop.permute.xlu0 %3395
      %3397 = vrot.lane.b32.xlu0 %v3324, 16
      %v3398 = vpop.permute.xlu0 %3397
      %3399 = vrot.lane.b32.xlu0 %v3326, 16
      %v3400 = vpop.permute.xlu0 %3399
      %3401 = vrot.lane.b32.xlu0 %v3328, 16
      %v3402 = vpop.permute.xlu0 %3401
      %3403 = vrot.lane.b32.xlu0 %v3330, 16
      %v3404 = vpop.permute.xlu0 %3403
      %3405 = vrot.lane.b32.xlu0 %v3332, 16
      %v3406 = vpop.permute.xlu0 %3405
      %3407 = vrot.lane.b32.xlu0 %v3334, 16
      %v3408 = vpop.permute.xlu0 %3407
      %v3446 = vadd.f32 %v3222, %v3336
      %v3447 = vadd.f32 %v3223, %v3338
      %v3448 = vadd.f32 %v3224, %v3340
      %v3449 = vadd.f32 %v3225, %v3342
      %v3450 = vadd.f32 %v3226, %v3344
      %v3451 = vadd.f32 %v3227, %v3346
      %v3452 = vadd.f32 %v3228, %v3348
      %v3453 = vadd.f32 %v3229, %v3350
      %v3454 = vadd.f32 %v3230, %v3352
      %v3455 = vadd.f32 %v3231, %v3354
      %v3456 = vadd.f32 %v3232, %v3356
      %v3457 = vadd.f32 %v3233, %v3358
      %v3458 = vadd.f32 %v3234, %v3360
      %v3459 = vadd.f32 %v3235, %v3362
      %v3460 = vadd.f32 %v3236, %v3364
      %v3461 = vadd.f32 %v3237, %v3366
      %v3462 = vadd.f32 %v3238, %v3368
      %v3463 = vadd.f32 %v3239, %v3370
      %v3464 = vadd.f32 %v3240, %v3372
      %v3465 = vadd.f32 %v3241, %v3374
      %v3466 = vadd.f32 %v3242, %v3376
      %v3467 = vadd.f32 %v3243, %v3378
      %v3468 = vadd.f32 %v3244, %v3380
      %v3469 = vadd.f32 %v3245, %v3382
      %v3470 = vadd.f32 %v3246, %v3384
      %v3471 = vadd.f32 %v3247, %v3386
      %v3472 = vadd.f32 %v3248, %v3388
      %v3473 = vadd.f32 %v3249, %v3390
      %v3474 = vadd.f32 %v3250, %v3392
      %v3475 = vadd.f32 %v3251, %v3394
      %v3476 = vadd.f32 %v3252, %v3396
      %v3477 = vadd.f32 %v3253, %v3398
      %v3478 = vadd.f32 %v3254, %v3400
      %v3479 = vadd.f32 %v3255, %v3402
      %v3480 = vadd.f32 %v3256, %v3404
      %v3481 = vadd.f32 %v3257, %v3406
      %v3482 = vadd.f32 %v3258, %v3408
      %vm3521 = vcmask 1040384
      %v3522 = vrot.slane %v1588, 7
      %v3523 = vrot.slane %v1590, 7
      %v3524 = vsel %vm3521, %v3522, %v3523
      %v3525 = vrot.slane %v1593, 7
      %v3526 = vsel %vm3521, %v3523, %v3525
      %v3527 = vrot.slane %v1595, 7
      %v3528 = vsel %vm3521, %v3525, %v3527
      %v3529 = vrot.slane %v1598, 7
      %v3530 = vsel %vm3521, %v3527, %v3529
      %v3531 = vrot.slane %v1600, 7
      %v3532 = vsel %vm3521, %v3529, %v3531
      %v3533 = vrot.slane %v1603, 7
      %v3534 = vsel %vm3521, %v3531, %v3533
      %v3535 = vrot.slane %v1605, 7
      %v3536 = vsel %vm3521, %v3533, %v3535
      %v3537 = vrot.slane %v1608, 7
      %v3538 = vsel %vm3521, %v3535, %v3537
      %v3539 = vrot.slane %v1610, 7
      %v3540 = vsel %vm3521, %v3537, %v3539
      %v3541 = vrot.slane %v1613, 7
      %v3542 = vsel %vm3521, %v3539, %v3541
      %v3543 = vrot.slane %v1615, 7
      %v3544 = vsel %vm3521, %v3541, %v3543
      %v3545 = vrot.slane %v1618, 7
      %v3546 = vsel %vm3521, %v3543, %v3545
      %v3547 = vrot.slane %v1620, 7
      %v3548 = vsel %vm3521, %v3545, %v3547
      %v3549 = vrot.slane %v1623, 7
      %v3550 = vsel %vm3521, %v3547, %v3549
      %v3551 = vrot.slane %v1625, 7
      %v3552 = vsel %vm3521, %v3549, %v3551
      %v3553 = vrot.slane %v1628, 7
      %v3554 = vsel %vm3521, %v3551, %v3553
      %v3555 = vrot.slane %v1630, 7
      %v3556 = vsel %vm3521, %v3553, %v3555
      %v3557 = vrot.slane %v1633, 7
      %v3558 = vsel %vm3521, %v3555, %v3557
      %v3559 = vrot.slane %v1635, 7
      %v3560 = vsel %vm3521, %v3557, %v3559
      %v3561 = vrot.slane %v1638, 7
      %v3562 = vsel %vm3521, %v3559, %v3561
      %v3563 = vrot.slane %v1640, 7
      %v3564 = vsel %vm3521, %v3561, %v3563
      %v3565 = vrot.slane %v1643, 7
      %v3566 = vsel %vm3521, %v3563, %v3565
      %v3567 = vrot.slane %v1645, 7
      %v3568 = vsel %vm3521, %v3565, %v3567
      %v3569 = vrot.slane %v1648, 7
      %v3570 = vsel %vm3521, %v3567, %v3569
      %v3571 = vrot.slane %v1650, 7
      %v3572 = vsel %vm3521, %v3569, %v3571
      %v3573 = vrot.slane %v1653, 7
      %v3574 = vsel %vm3521, %v3571, %v3573
      %v3575 = vrot.slane %v1655, 7
      %v3576 = vsel %vm3521, %v3573, %v3575
      %v3577 = vrot.slane %v1658, 7
      %v3578 = vsel %vm3521, %v3575, %v3577
      %v3579 = vrot.slane %v1660, 7
      %v3580 = vsel %vm3521, %v3577, %v3579
      %v3581 = vrot.slane %v1663, 7
      %v3582 = vsel %vm3521, %v3579, %v3581
      %v3583 = vrot.slane %v1665, 7
      %v3584 = vsel %vm3521, %v3581, %v3583
      %v3585 = vrot.slane %v1668, 7
      %v3586 = vsel %vm3521, %v3583, %v3585
      %v3587 = vrot.slane %v1670, 7
      %v3588 = vsel %vm3521, %v3585, %v3587
      %v3589 = vrot.slane %v1673, 7
      %v3590 = vsel %vm3521, %v3587, %v3589
      %v3591 = vrot.slane %v1675, 7
      %v3592 = vsel %vm3521, %v3589, %v3591
      %v3593 = vrot.slane %v1678, 7
      %v3594 = vsel %vm3521, %v3591, %v3593
      %v3595 = vrot.slane %v1680, 7
      %v3596 = vsel %vm3521, %v3593, %v3595
      %v3634 = vadd.f32 %v3446, %v3524
      %v3635 = vadd.f32 %v3447, %v3526
      %v3636 = vadd.f32 %v3448, %v3528
      %v3637 = vadd.f32 %v3449, %v3530
      %v3638 = vadd.f32 %v3450, %v3532
      %v3639 = vadd.f32 %v3451, %v3534
      %v3640 = vadd.f32 %v3452, %v3536
      %v3641 = vadd.f32 %v3453, %v3538
      %v3642 = vadd.f32 %v3454, %v3540
      %v3643 = vadd.f32 %v3455, %v3542
      %v3644 = vadd.f32 %v3456, %v3544
      %v3645 = vadd.f32 %v3457, %v3546
      %v3646 = vadd.f32 %v3458, %v3548
      %v3647 = vadd.f32 %v3459, %v3550
      %v3648 = vadd.f32 %v3460, %v3552
      %v3649 = vadd.f32 %v3461, %v3554
      %v3650 = vadd.f32 %v3462, %v3556
      %v3651 = vadd.f32 %v3463, %v3558
      %v3652 = vadd.f32 %v3464, %v3560
      %v3653 = vadd.f32 %v3465, %v3562
      %v3654 = vadd.f32 %v3466, %v3564
      %v3655 = vadd.f32 %v3467, %v3566
      %v3656 = vadd.f32 %v3468, %v3568
      %v3657 = vadd.f32 %v3469, %v3570
      %v3658 = vadd.f32 %v3470, %v3572
      %v3659 = vadd.f32 %v3471, %v3574
      %v3660 = vadd.f32 %v3472, %v3576
      %v3661 = vadd.f32 %v3473, %v3578
      %v3662 = vadd.f32 %v3474, %v3580
      %v3663 = vadd.f32 %v3475, %v3582
      %v3664 = vadd.f32 %v3476, %v3584
      %v3665 = vadd.f32 %v3477, %v3586
      %v3666 = vadd.f32 %v3478, %v3588
      %v3667 = vadd.f32 %v3479, %v3590
      %v3668 = vadd.f32 %v3480, %v3592
      %v3669 = vadd.f32 %v3481, %v3594
      %v3670 = vadd.f32 %v3482, %v3596
      %3671 = vrot.lane.b32.xlu0 %v1590, 112
      %v3672 = vpop.permute.xlu0 %3671
      %3673 = vrot.lane.b32.xlu0 %v1593, 112
      %v3674 = vpop.permute.xlu0 %3673
      %3675 = vrot.lane.b32.xlu0 %v1595, 112
      %v3676 = vpop.permute.xlu0 %3675
      %3677 = vrot.lane.b32.xlu0 %v1598, 112
      %v3678 = vpop.permute.xlu0 %3677
      %3679 = vrot.lane.b32.xlu0 %v1600, 112
      %v3680 = vpop.permute.xlu0 %3679
      %3681 = vrot.lane.b32.xlu0 %v1603, 112
      %v3682 = vpop.permute.xlu0 %3681
      %3683 = vrot.lane.b32.xlu0 %v1605, 112
      %v3684 = vpop.permute.xlu0 %3683
      %3685 = vrot.lane.b32.xlu0 %v1608, 112
      %v3686 = vpop.permute.xlu0 %3685
      %3687 = vrot.lane.b32.xlu0 %v1610, 112
      %v3688 = vpop.permute.xlu0 %3687
      %3689 = vrot.lane.b32.xlu0 %v1613, 112
      %v3690 = vpop.permute.xlu0 %3689
      %3691 = vrot.lane.b32.xlu0 %v1615, 112
      %v3692 = vpop.permute.xlu0 %3691
      %3693 = vrot.lane.b32.xlu0 %v1618, 112
      %v3694 = vpop.permute.xlu0 %3693
      %3695 = vrot.lane.b32.xlu0 %v1620, 112
      %v3696 = vpop.permute.xlu0 %3695
      %3697 = vrot.lane.b32.xlu0 %v1623, 112
      %v3698 = vpop.permute.xlu0 %3697
      %3699 = vrot.lane.b32.xlu0 %v1625, 112
      %v3700 = vpop.permute.xlu0 %3699
      %3701 = vrot.lane.b32.xlu0 %v1628, 112
      %v3702 = vpop.permute.xlu0 %3701
      %3703 = vrot.lane.b32.xlu0 %v1630, 112
      %v3704 = vpop.permute.xlu0 %3703
      %3705 = vrot.lane.b32.xlu0 %v1633, 112
      %v3706 = vpop.permute.xlu0 %3705
      %3707 = vrot.lane.b32.xlu0 %v1635, 112
      %v3708 = vpop.permute.xlu0 %3707
      %3709 = vrot.lane.b32.xlu0 %v1638, 112
      %v3710 = vpop.permute.xlu0 %3709
      %3711 = vrot.lane.b32.xlu0 %v1640, 112
      %v3712 = vpop.permute.xlu0 %3711
      %3713 = vrot.lane.b32.xlu0 %v1643, 112
      %v3714 = vpop.permute.xlu0 %3713
      %3715 = vrot.lane.b32.xlu0 %v1645, 112
      %v3716 = vpop.permute.xlu0 %3715
      %3717 = vrot.lane.b32.xlu0 %v1648, 112
      %v3718 = vpop.permute.xlu0 %3717
      %3719 = vrot.lane.b32.xlu0 %v1650, 112
      %v3720 = vpop.permute.xlu0 %3719
      %3721 = vrot.lane.b32.xlu0 %v1653, 112
      %v3722 = vpop.permute.xlu0 %3721
      %3723 = vrot.lane.b32.xlu0 %v1655, 112
      %v3724 = vpop.permute.xlu0 %3723
      %3725 = vrot.lane.b32.xlu0 %v1658, 112
      %v3726 = vpop.permute.xlu0 %3725
      %3727 = vrot.lane.b32.xlu0 %v1660, 112
      %v3728 = vpop.permute.xlu0 %3727
      %3729 = vrot.lane.b32.xlu0 %v1663, 112
      %v3730 = vpop.permute.xlu0 %3729
      %3731 = vrot.lane.b32.xlu0 %v1665, 112
      %v3732 = vpop.permute.xlu0 %3731
      %3733 = vrot.lane.b32.xlu0 %v1668, 112
      %v3734 = vpop.permute.xlu0 %3733
      %3735 = vrot.lane.b32.xlu0 %v1670, 112
      %v3736 = vpop.permute.xlu0 %3735
      %3737 = vrot.lane.b32.xlu0 %v1673, 112
      %v3738 = vpop.permute.xlu0 %3737
      %3739 = vrot.lane.b32.xlu0 %v1675, 112
      %v3740 = vpop.permute.xlu0 %3739
      %3741 = vrot.lane.b32.xlu0 %v1678, 112
      %v3742 = vpop.permute.xlu0 %3741
      %3743 = vrot.lane.b32.xlu0 %v1680, 112
      %v3744 = vpop.permute.xlu0 %3743
      %v3782 = vadd.f32 %v3634, %v3672
      %v3783 = vadd.f32 %v3635, %v3674
      %v3784 = vadd.f32 %v3636, %v3676
      %v3785 = vadd.f32 %v3637, %v3678
      %v3786 = vadd.f32 %v3638, %v3680
      %v3787 = vadd.f32 %v3639, %v3682
      %v3788 = vadd.f32 %v3640, %v3684
      %v3789 = vadd.f32 %v3641, %v3686
      %v3790 = vadd.f32 %v3642, %v3688
      %v3791 = vadd.f32 %v3643, %v3690
      %v3792 = vadd.f32 %v3644, %v3692
      %v3793 = vadd.f32 %v3645, %v3694
      %v3794 = vadd.f32 %v3646, %v3696
      %v3795 = vadd.f32 %v3647, %v3698
      %v3796 = vadd.f32 %v3648, %v3700
      %v3797 = vadd.f32 %v3649, %v3702
      %v3798 = vadd.f32 %v3650, %v3704
      %v3799 = vadd.f32 %v3651, %v3706
      %v3800 = vadd.f32 %v3652, %v3708
      %v3801 = vadd.f32 %v3653, %v3710
      %v3802 = vadd.f32 %v3654, %v3712
      %v3803 = vadd.f32 %v3655, %v3714
      %v3804 = vadd.f32 %v3656, %v3716
      %v3805 = vadd.f32 %v3657, %v3718
      %v3806 = vadd.f32 %v3658, %v3720
      %v3807 = vadd.f32 %v3659, %v3722
      %v3808 = vadd.f32 %v3660, %v3724
      %v3809 = vadd.f32 %v3661, %v3726
      %v3810 = vadd.f32 %v3662, %v3728
      %v3811 = vadd.f32 %v3663, %v3730
      %v3812 = vadd.f32 %v3664, %v3732
      %v3813 = vadd.f32 %v3665, %v3734
      %v3814 = vadd.f32 %v3666, %v3736
      %v3815 = vadd.f32 %v3667, %v3738
      %v3816 = vadd.f32 %v3668, %v3740
      %v3817 = vadd.f32 %v3669, %v3742
      %v3818 = vadd.f32 %v3670, %v3744
      %3821 = vrot.lane.b32.xlu0 %v1595, 96
      %v3822 = vpop.permute.xlu0 %3821
      %3823 = vrot.lane.b32.xlu0 %v1598, 96
      %v3824 = vpop.permute.xlu0 %3823
      %3825 = vrot.lane.b32.xlu0 %v1600, 96
      %v3826 = vpop.permute.xlu0 %3825
      %3827 = vrot.lane.b32.xlu0 %v1603, 96
      %v3828 = vpop.permute.xlu0 %3827
      %3829 = vrot.lane.b32.xlu0 %v1605, 96
      %v3830 = vpop.permute.xlu0 %3829
      %3831 = vrot.lane.b32.xlu0 %v1608, 96
      %v3832 = vpop.permute.xlu0 %3831
      %3833 = vrot.lane.b32.xlu0 %v1610, 96
      %v3834 = vpop.permute.xlu0 %3833
      %3835 = vrot.lane.b32.xlu0 %v1613, 96
      %v3836 = vpop.permute.xlu0 %3835
      %3837 = vrot.lane.b32.xlu0 %v1615, 96
      %v3838 = vpop.permute.xlu0 %3837
      %3839 = vrot.lane.b32.xlu0 %v1618, 96
      %v3840 = vpop.permute.xlu0 %3839
      %3841 = vrot.lane.b32.xlu0 %v1620, 96
      %v3842 = vpop.permute.xlu0 %3841
      %3843 = vrot.lane.b32.xlu0 %v1623, 96
      %v3844 = vpop.permute.xlu0 %3843
      %3845 = vrot.lane.b32.xlu0 %v1625, 96
      %v3846 = vpop.permute.xlu0 %3845
      %3847 = vrot.lane.b32.xlu0 %v1628, 96
      %v3848 = vpop.permute.xlu0 %3847
      %3849 = vrot.lane.b32.xlu0 %v1630, 96
      %v3850 = vpop.permute.xlu0 %3849
      %3851 = vrot.lane.b32.xlu0 %v1633, 96
      %v3852 = vpop.permute.xlu0 %3851
      %3853 = vrot.lane.b32.xlu0 %v1635, 96
      %v3854 = vpop.permute.xlu0 %3853
      %3855 = vrot.lane.b32.xlu0 %v1638, 96
      %v3856 = vpop.permute.xlu0 %3855
      %3857 = vrot.lane.b32.xlu0 %v1640, 96
      %v3858 = vpop.permute.xlu0 %3857
      %3859 = vrot.lane.b32.xlu0 %v1643, 96
      %v3860 = vpop.permute.xlu0 %3859
      %3861 = vrot.lane.b32.xlu0 %v1645, 96
      %v3862 = vpop.permute.xlu0 %3861
      %3863 = vrot.lane.b32.xlu0 %v1648, 96
      %v3864 = vpop.permute.xlu0 %3863
      %3865 = vrot.lane.b32.xlu0 %v1650, 96
      %v3866 = vpop.permute.xlu0 %3865
      %3867 = vrot.lane.b32.xlu0 %v1653, 96
      %v3868 = vpop.permute.xlu0 %3867
      %3869 = vrot.lane.b32.xlu0 %v1655, 96
      %v3870 = vpop.permute.xlu0 %3869
      %3871 = vrot.lane.b32.xlu0 %v1658, 96
      %v3872 = vpop.permute.xlu0 %3871
      %3873 = vrot.lane.b32.xlu0 %v1660, 96
      %v3874 = vpop.permute.xlu0 %3873
      %3875 = vrot.lane.b32.xlu0 %v1663, 96
      %v3876 = vpop.permute.xlu0 %3875
      %3877 = vrot.lane.b32.xlu0 %v1665, 96
      %v3878 = vpop.permute.xlu0 %3877
      %3879 = vrot.lane.b32.xlu0 %v1668, 96
      %v3880 = vpop.permute.xlu0 %3879
      %3881 = vrot.lane.b32.xlu0 %v1670, 96
      %v3882 = vpop.permute.xlu0 %3881
      %3883 = vrot.lane.b32.xlu0 %v1673, 96
      %v3884 = vpop.permute.xlu0 %3883
      %3885 = vrot.lane.b32.xlu0 %v1675, 96
      %v3886 = vpop.permute.xlu0 %3885
      %3887 = vrot.lane.b32.xlu0 %v1678, 96
      %v3888 = vpop.permute.xlu0 %3887
      %3889 = vrot.lane.b32.xlu0 %v1680, 96
      %v3890 = vpop.permute.xlu0 %3889
      %3891 = vrot.lane.b32.xlu0 %v1683, 96
      %v3892 = vpop.permute.xlu0 %3891
      %3893 = vrot.lane.b32.xlu0 %v1685, 96
      %v3894 = vpop.permute.xlu0 %3893
      %v3932 = vadd.f32 %v3782, %v3822
      %v3933 = vadd.f32 %v3783, %v3824
      %v3934 = vadd.f32 %v3784, %v3826
      %v3935 = vadd.f32 %v3785, %v3828
      %v3936 = vadd.f32 %v3786, %v3830
      %v3937 = vadd.f32 %v3787, %v3832
      %v3938 = vadd.f32 %v3788, %v3834
      %v3939 = vadd.f32 %v3789, %v3836
      %v3940 = vadd.f32 %v3790, %v3838
      %v3941 = vadd.f32 %v3791, %v3840
      %v3942 = vadd.f32 %v3792, %v3842
      %v3943 = vadd.f32 %v3793, %v3844
      %v3944 = vadd.f32 %v3794, %v3846
      %v3945 = vadd.f32 %v3795, %v3848
      %v3946 = vadd.f32 %v3796, %v3850
      %v3947 = vadd.f32 %v3797, %v3852
      %v3948 = vadd.f32 %v3798, %v3854
      %v3949 = vadd.f32 %v3799, %v3856
      %v3950 = vadd.f32 %v3800, %v3858
      %v3951 = vadd.f32 %v3801, %v3860
      %v3952 = vadd.f32 %v3802, %v3862
      %v3953 = vadd.f32 %v3803, %v3864
      %v3954 = vadd.f32 %v3804, %v3866
      %v3955 = vadd.f32 %v3805, %v3868
      %v3956 = vadd.f32 %v3806, %v3870
      %v3957 = vadd.f32 %v3807, %v3872
      %v3958 = vadd.f32 %v3808, %v3874
      %v3959 = vadd.f32 %v3809, %v3876
      %v3960 = vadd.f32 %v3810, %v3878
      %v3961 = vadd.f32 %v3811, %v3880
      %v3962 = vadd.f32 %v3812, %v3882
      %v3963 = vadd.f32 %v3813, %v3884
      %v3964 = vadd.f32 %v3814, %v3886
      %v3965 = vadd.f32 %v3815, %v3888
      %v3966 = vadd.f32 %v3816, %v3890
      %v3967 = vadd.f32 %v3817, %v3892
      %v3968 = vadd.f32 %v3818, %v3894
      %v3969 = vrot.slane %v1595, 1
      %v3970 = vrot.slane %v1598, 1
      %v3971 = vsel %vm1986, %v3969, %v3970
      %v3972 = vrot.slane %v1600, 1
      %v3973 = vsel %vm1986, %v3970, %v3972
      %v3974 = vrot.slane %v1603, 1
      %v3975 = vsel %vm1986, %v3972, %v3974
      %v3976 = vrot.slane %v1605, 1
      %v3977 = vsel %vm1986, %v3974, %v3976
      %v3978 = vrot.slane %v1608, 1
      %v3979 = vsel %vm1986, %v3976, %v3978
      %v3980 = vrot.slane %v1610, 1
      %v3981 = vsel %vm1986, %v3978, %v3980
      %v3982 = vrot.slane %v1613, 1
      %v3983 = vsel %vm1986, %v3980, %v3982
      %v3984 = vrot.slane %v1615, 1
      %v3985 = vsel %vm1986, %v3982, %v3984
      %v3986 = vrot.slane %v1618, 1
      %v3987 = vsel %vm1986, %v3984, %v3986
      %v3988 = vrot.slane %v1620, 1
      %v3989 = vsel %vm1986, %v3986, %v3988
      %v3990 = vrot.slane %v1623, 1
      %v3991 = vsel %vm1986, %v3988, %v3990
      %v3992 = vrot.slane %v1625, 1
      %v3993 = vsel %vm1986, %v3990, %v3992
      %v3994 = vrot.slane %v1628, 1
      %v3995 = vsel %vm1986, %v3992, %v3994
      %v3996 = vrot.slane %v1630, 1
      %v3997 = vsel %vm1986, %v3994, %v3996
      %v3998 = vrot.slane %v1633, 1
      %v3999 = vsel %vm1986, %v3996, %v3998
      %v4000 = vrot.slane %v1635, 1
      %v4001 = vsel %vm1986, %v3998, %v4000
      %v4002 = vrot.slane %v1638, 1
      %v4003 = vsel %vm1986, %v4000, %v4002
      %v4004 = vrot.slane %v1640, 1
      %v4005 = vsel %vm1986, %v4002, %v4004
      %v4006 = vrot.slane %v1643, 1
      %v4007 = vsel %vm1986, %v4004, %v4006
      %v4008 = vrot.slane %v1645, 1
      %v4009 = vsel %vm1986, %v4006, %v4008
      %v4010 = vrot.slane %v1648, 1
      %v4011 = vsel %vm1986, %v4008, %v4010
      %v4012 = vrot.slane %v1650, 1
      %v4013 = vsel %vm1986, %v4010, %v4012
      %v4014 = vrot.slane %v1653, 1
      %v4015 = vsel %vm1986, %v4012, %v4014
      %v4016 = vrot.slane %v1655, 1
      %v4017 = vsel %vm1986, %v4014, %v4016
      %v4018 = vrot.slane %v1658, 1
      %v4019 = vsel %vm1986, %v4016, %v4018
      %v4020 = vrot.slane %v1660, 1
      %v4021 = vsel %vm1986, %v4018, %v4020
      %v4022 = vrot.slane %v1663, 1
      %v4023 = vsel %vm1986, %v4020, %v4022
      %v4024 = vrot.slane %v1665, 1
      %v4025 = vsel %vm1986, %v4022, %v4024
      %v4026 = vrot.slane %v1668, 1
      %v4027 = vsel %vm1986, %v4024, %v4026
      %v4028 = vrot.slane %v1670, 1
      %v4029 = vsel %vm1986, %v4026, %v4028
      %v4030 = vrot.slane %v1673, 1
      %v4031 = vsel %vm1986, %v4028, %v4030
      %v4032 = vrot.slane %v1675, 1
      %v4033 = vsel %vm1986, %v4030, %v4032
      %v4034 = vrot.slane %v1678, 1
      %v4035 = vsel %vm1986, %v4032, %v4034
      %v4036 = vrot.slane %v1680, 1
      %v4037 = vsel %vm1986, %v4034, %v4036
      %v4038 = vrot.slane %v1683, 1
      %v4039 = vsel %vm1986, %v4036, %v4038
      %v4040 = vrot.slane %v1685, 1
      %v4041 = vsel %vm1986, %v4038, %v4040
      %4042 = vrot.lane.b32.xlu0 %v3971, 80
      %v4043 = vpop.permute.xlu0 %4042
      %4044 = vrot.lane.b32.xlu0 %v3973, 80
      %v4045 = vpop.permute.xlu0 %4044
      %4046 = vrot.lane.b32.xlu0 %v3975, 80
      %v4047 = vpop.permute.xlu0 %4046
      %4048 = vrot.lane.b32.xlu0 %v3977, 80
      %v4049 = vpop.permute.xlu0 %4048
      %4050 = vrot.lane.b32.xlu0 %v3979, 80
      %v4051 = vpop.permute.xlu0 %4050
      %4052 = vrot.lane.b32.xlu0 %v3981, 80
      %v4053 = vpop.permute.xlu0 %4052
      %4054 = vrot.lane.b32.xlu0 %v3983, 80
      %v4055 = vpop.permute.xlu0 %4054
      %4056 = vrot.lane.b32.xlu0 %v3985, 80
      %v4057 = vpop.permute.xlu0 %4056
      %4058 = vrot.lane.b32.xlu0 %v3987, 80
      %v4059 = vpop.permute.xlu0 %4058
      %4060 = vrot.lane.b32.xlu0 %v3989, 80
      %v4061 = vpop.permute.xlu0 %4060
      %4062 = vrot.lane.b32.xlu0 %v3991, 80
      %v4063 = vpop.permute.xlu0 %4062
      %4064 = vrot.lane.b32.xlu0 %v3993, 80
      %v4065 = vpop.permute.xlu0 %4064
      %4066 = vrot.lane.b32.xlu0 %v3995, 80
      %v4067 = vpop.permute.xlu0 %4066
      %4068 = vrot.lane.b32.xlu0 %v3997, 80
      %v4069 = vpop.permute.xlu0 %4068
      %4070 = vrot.lane.b32.xlu0 %v3999, 80
      %v4071 = vpop.permute.xlu0 %4070
      %4072 = vrot.lane.b32.xlu0 %v4001, 80
      %v4073 = vpop.permute.xlu0 %4072
      %4074 = vrot.lane.b32.xlu0 %v4003, 80
      %v4075 = vpop.permute.xlu0 %4074
      %4076 = vrot.lane.b32.xlu0 %v4005, 80
      %v4077 = vpop.permute.xlu0 %4076
      %4078 = vrot.lane.b32.xlu0 %v4007, 80
      %v4079 = vpop.permute.xlu0 %4078
      %4080 = vrot.lane.b32.xlu0 %v4009, 80
      %v4081 = vpop.permute.xlu0 %4080
      %4082 = vrot.lane.b32.xlu0 %v4011, 80
      %v4083 = vpop.permute.xlu0 %4082
      %4084 = vrot.lane.b32.xlu0 %v4013, 80
      %v4085 = vpop.permute.xlu0 %4084
      %4086 = vrot.lane.b32.xlu0 %v4015, 80
      %v4087 = vpop.permute.xlu0 %4086
      %4088 = vrot.lane.b32.xlu0 %v4017, 80
      %v4089 = vpop.permute.xlu0 %4088
      %4090 = vrot.lane.b32.xlu0 %v4019, 80
      %v4091 = vpop.permute.xlu0 %4090
      %4092 = vrot.lane.b32.xlu0 %v4021, 80
      %v4093 = vpop.permute.xlu0 %4092
      %4094 = vrot.lane.b32.xlu0 %v4023, 80
      %v4095 = vpop.permute.xlu0 %4094
      %4096 = vrot.lane.b32.xlu0 %v4025, 80
      %v4097 = vpop.permute.xlu0 %4096
      %4098 = vrot.lane.b32.xlu0 %v4027, 80
      %v4099 = vpop.permute.xlu0 %4098
      %4100 = vrot.lane.b32.xlu0 %v4029, 80
      %v4101 = vpop.permute.xlu0 %4100
      %4102 = vrot.lane.b32.xlu0 %v4031, 80
      %v4103 = vpop.permute.xlu0 %4102
      %4104 = vrot.lane.b32.xlu0 %v4033, 80
      %v4105 = vpop.permute.xlu0 %4104
      %4106 = vrot.lane.b32.xlu0 %v4035, 80
      %v4107 = vpop.permute.xlu0 %4106
      %4108 = vrot.lane.b32.xlu0 %v4037, 80
      %v4109 = vpop.permute.xlu0 %4108
      %4110 = vrot.lane.b32.xlu0 %v4039, 80
      %v4111 = vpop.permute.xlu0 %4110
      %4112 = vrot.lane.b32.xlu0 %v4041, 80
      %v4113 = vpop.permute.xlu0 %4112
      %4114 = vrot.lane.b32.xlu0 %v4040, 80
      %v4115 = vpop.permute.xlu0 %4114
      %v4153 = vadd.f32 %v3932, %v4043
      %v4154 = vadd.f32 %v3933, %v4045
      %v4155 = vadd.f32 %v3934, %v4047
      %v4156 = vadd.f32 %v3935, %v4049
      %v4157 = vadd.f32 %v3936, %v4051
      %v4158 = vadd.f32 %v3937, %v4053
      %v4159 = vadd.f32 %v3938, %v4055
      %v4160 = vadd.f32 %v3939, %v4057
      %v4161 = vadd.f32 %v3940, %v4059
      %v4162 = vadd.f32 %v3941, %v4061
      %v4163 = vadd.f32 %v3942, %v4063
      %v4164 = vadd.f32 %v3943, %v4065
      %v4165 = vadd.f32 %v3944, %v4067
      %v4166 = vadd.f32 %v3945, %v4069
      %v4167 = vadd.f32 %v3946, %v4071
      %v4168 = vadd.f32 %v3947, %v4073
      %v4169 = vadd.f32 %v3948, %v4075
      %v4170 = vadd.f32 %v3949, %v4077
      %v4171 = vadd.f32 %v3950, %v4079
      %v4172 = vadd.f32 %v3951, %v4081
      %v4173 = vadd.f32 %v3952, %v4083
      %v4174 = vadd.f32 %v3953, %v4085
      %v4175 = vadd.f32 %v3954, %v4087
      %v4176 = vadd.f32 %v3955, %v4089
      %v4177 = vadd.f32 %v3956, %v4091
      %v4178 = vadd.f32 %v3957, %v4093
      %v4179 = vadd.f32 %v3958, %v4095
      %v4180 = vadd.f32 %v3959, %v4097
      %v4181 = vadd.f32 %v3960, %v4099
      %v4182 = vadd.f32 %v3961, %v4101
      %v4183 = vadd.f32 %v3962, %v4103
      %v4184 = vadd.f32 %v3963, %v4105
      %v4185 = vadd.f32 %v3964, %v4107
      %v4186 = vadd.f32 %v3965, %v4109
      %v4187 = vadd.f32 %v3966, %v4111
      %v4188 = vadd.f32 %v3967, %v4113
      %v4189 = vadd.f32 %v3968, %v4115
      %v4191 = vrot.slane %v1595, 2
      %v4192 = vrot.slane %v1598, 2
      %v4193 = vsel %vm2209, %v4191, %v4192
      %v4194 = vrot.slane %v1600, 2
      %v4195 = vsel %vm2209, %v4192, %v4194
      %v4196 = vrot.slane %v1603, 2
      %v4197 = vsel %vm2209, %v4194, %v4196
      %v4198 = vrot.slane %v1605, 2
      %v4199 = vsel %vm2209, %v4196, %v4198
      %v4200 = vrot.slane %v1608, 2
      %v4201 = vsel %vm2209, %v4198, %v4200
      %v4202 = vrot.slane %v1610, 2
      %v4203 = vsel %vm2209, %v4200, %v4202
      %v4204 = vrot.slane %v1613, 2
      %v4205 = vsel %vm2209, %v4202, %v4204
      %v4206 = vrot.slane %v1615, 2
      %v4207 = vsel %vm2209, %v4204, %v4206
      %v4208 = vrot.slane %v1618, 2
      %v4209 = vsel %vm2209, %v4206, %v4208
      %v4210 = vrot.slane %v1620, 2
      %v4211 = vsel %vm2209, %v4208, %v4210
      %v4212 = vrot.slane %v1623, 2
      %v4213 = vsel %vm2209, %v4210, %v4212
      %v4214 = vrot.slane %v1625, 2
      %v4215 = vsel %vm2209, %v4212, %v4214
      %v4216 = vrot.slane %v1628, 2
      %v4217 = vsel %vm2209, %v4214, %v4216
      %v4218 = vrot.slane %v1630, 2
      %v4219 = vsel %vm2209, %v4216, %v4218
      %v4220 = vrot.slane %v1633, 2
      %v4221 = vsel %vm2209, %v4218, %v4220
      %v4222 = vrot.slane %v1635, 2
      %v4223 = vsel %vm2209, %v4220, %v4222
      %v4224 = vrot.slane %v1638, 2
      %v4225 = vsel %vm2209, %v4222, %v4224
      %v4226 = vrot.slane %v1640, 2
      %v4227 = vsel %vm2209, %v4224, %v4226
      %v4228 = vrot.slane %v1643, 2
      %v4229 = vsel %vm2209, %v4226, %v4228
      %v4230 = vrot.slane %v1645, 2
      %v4231 = vsel %vm2209, %v4228, %v4230
      %v4232 = vrot.slane %v1648, 2
      %v4233 = vsel %vm2209, %v4230, %v4232
      %v4234 = vrot.slane %v1650, 2
      %v4235 = vsel %vm2209, %v4232, %v4234
      %v4236 = vrot.slane %v1653, 2
      %v4237 = vsel %vm2209, %v4234, %v4236
      %v4238 = vrot.slane %v1655, 2
      %v4239 = vsel %vm2209, %v4236, %v4238
      %v4240 = vrot.slane %v1658, 2
      %v4241 = vsel %vm2209, %v4238, %v4240
      %v4242 = vrot.slane %v1660, 2
      %v4243 = vsel %vm2209, %v4240, %v4242
      %v4244 = vrot.slane %v1663, 2
      %v4245 = vsel %vm2209, %v4242, %v4244
      %v4246 = vrot.slane %v1665, 2
      %v4247 = vsel %vm2209, %v4244, %v4246
      %v4248 = vrot.slane %v1668, 2
      %v4249 = vsel %vm2209, %v4246, %v4248
      %v4250 = vrot.slane %v1670, 2
      %v4251 = vsel %vm2209, %v4248, %v4250
      %v4252 = vrot.slane %v1673, 2
      %v4253 = vsel %vm2209, %v4250, %v4252
      %v4254 = vrot.slane %v1675, 2
      %v4255 = vsel %vm2209, %v4252, %v4254
      %v4256 = vrot.slane %v1678, 2
      %v4257 = vsel %vm2209, %v4254, %v4256
      %v4258 = vrot.slane %v1680, 2
      %v4259 = vsel %vm2209, %v4256, %v4258
      %v4260 = vrot.slane %v1683, 2
      %v4261 = vsel %vm2209, %v4258, %v4260
      %v4262 = vrot.slane %v1685, 2
      %v4263 = vsel %vm2209, %v4260, %v4262
      %v4264 = vrot.slane %v1688, 2
      %v4265 = vsel %vm2209, %v4262, %v4264
      %4266 = vrot.lane.b32.xlu0 %v4193, 64
      %v4267 = vpop.permute.xlu0 %4266
      %4268 = vrot.lane.b32.xlu0 %v4195, 64
      %v4269 = vpop.permute.xlu0 %4268
      %4270 = vrot.lane.b32.xlu0 %v4197, 64
      %v4271 = vpop.permute.xlu0 %4270
      %4272 = vrot.lane.b32.xlu0 %v4199, 64
      %v4273 = vpop.permute.xlu0 %4272
      %4274 = vrot.lane.b32.xlu0 %v4201, 64
      %v4275 = vpop.permute.xlu0 %4274
      %4276 = vrot.lane.b32.xlu0 %v4203, 64
      %v4277 = vpop.permute.xlu0 %4276
      %4278 = vrot.lane.b32.xlu0 %v4205, 64
      %v4279 = vpop.permute.xlu0 %4278
      %4280 = vrot.lane.b32.xlu0 %v4207, 64
      %v4281 = vpop.permute.xlu0 %4280
      %4282 = vrot.lane.b32.xlu0 %v4209, 64
      %v4283 = vpop.permute.xlu0 %4282
      %4284 = vrot.lane.b32.xlu0 %v4211, 64
      %v4285 = vpop.permute.xlu0 %4284
      %4286 = vrot.lane.b32.xlu0 %v4213, 64
      %v4287 = vpop.permute.xlu0 %4286
      %4288 = vrot.lane.b32.xlu0 %v4215, 64
      %v4289 = vpop.permute.xlu0 %4288
      %4290 = vrot.lane.b32.xlu0 %v4217, 64
      %v4291 = vpop.permute.xlu0 %4290
      %4292 = vrot.lane.b32.xlu0 %v4219, 64
      %v4293 = vpop.permute.xlu0 %4292
      %4294 = vrot.lane.b32.xlu0 %v4221, 64
      %v4295 = vpop.permute.xlu0 %4294
      %4296 = vrot.lane.b32.xlu0 %v4223, 64
      %v4297 = vpop.permute.xlu0 %4296
      %4298 = vrot.lane.b32.xlu0 %v4225, 64
      %v4299 = vpop.permute.xlu0 %4298
      %4300 = vrot.lane.b32.xlu0 %v4227, 64
      %v4301 = vpop.permute.xlu0 %4300
      %4302 = vrot.lane.b32.xlu0 %v4229, 64
      %v4303 = vpop.permute.xlu0 %4302
      %4304 = vrot.lane.b32.xlu0 %v4231, 64
      %v4305 = vpop.permute.xlu0 %4304
      %4306 = vrot.lane.b32.xlu0 %v4233, 64
      %v4307 = vpop.permute.xlu0 %4306
      %4308 = vrot.lane.b32.xlu0 %v4235, 64
      %v4309 = vpop.permute.xlu0 %4308
      %4310 = vrot.lane.b32.xlu0 %v4237, 64
      %v4311 = vpop.permute.xlu0 %4310
      %4312 = vrot.lane.b32.xlu0 %v4239, 64
      %v4313 = vpop.permute.xlu0 %4312
      %4314 = vrot.lane.b32.xlu0 %v4241, 64
      %v4315 = vpop.permute.xlu0 %4314
      %4316 = vrot.lane.b32.xlu0 %v4243, 64
      %v4317 = vpop.permute.xlu0 %4316
      %4318 = vrot.lane.b32.xlu0 %v4245, 64
      %v4319 = vpop.permute.xlu0 %4318
      %4320 = vrot.lane.b32.xlu0 %v4247, 64
      %v4321 = vpop.permute.xlu0 %4320
      %4322 = vrot.lane.b32.xlu0 %v4249, 64
      %v4323 = vpop.permute.xlu0 %4322
      %4324 = vrot.lane.b32.xlu0 %v4251, 64
      %v4325 = vpop.permute.xlu0 %4324
      %4326 = vrot.lane.b32.xlu0 %v4253, 64
      %v4327 = vpop.permute.xlu0 %4326
      %4328 = vrot.lane.b32.xlu0 %v4255, 64
      %v4329 = vpop.permute.xlu0 %4328
      %4330 = vrot.lane.b32.xlu0 %v4257, 64
      %v4331 = vpop.permute.xlu0 %4330
      %4332 = vrot.lane.b32.xlu0 %v4259, 64
      %v4333 = vpop.permute.xlu0 %4332
      %4334 = vrot.lane.b32.xlu0 %v4261, 64
      %v4335 = vpop.permute.xlu0 %4334
      %4336 = vrot.lane.b32.xlu0 %v4263, 64
      %v4337 = vpop.permute.xlu0 %4336
      %4338 = vrot.lane.b32.xlu0 %v4265, 64
      %v4339 = vpop.permute.xlu0 %4338
      %v4377 = vadd.f32 %v4153, %v4267
      %v4378 = vadd.f32 %v4154, %v4269
      %v4379 = vadd.f32 %v4155, %v4271
      %v4380 = vadd.f32 %v4156, %v4273
      %v4381 = vadd.f32 %v4157, %v4275
      %v4382 = vadd.f32 %v4158, %v4277
      %v4383 = vadd.f32 %v4159, %v4279
      %v4384 = vadd.f32 %v4160, %v4281
      %v4385 = vadd.f32 %v4161, %v4283
      %v4386 = vadd.f32 %v4162, %v4285
      %v4387 = vadd.f32 %v4163, %v4287
      %v4388 = vadd.f32 %v4164, %v4289
      %v4389 = vadd.f32 %v4165, %v4291
      %v4390 = vadd.f32 %v4166, %v4293
      %v4391 = vadd.f32 %v4167, %v4295
      %v4392 = vadd.f32 %v4168, %v4297
      %v4393 = vadd.f32 %v4169, %v4299
      %v4394 = vadd.f32 %v4170, %v4301
      %v4395 = vadd.f32 %v4171, %v4303
      %v4396 = vadd.f32 %v4172, %v4305
      %v4397 = vadd.f32 %v4173, %v4307
      %v4398 = vadd.f32 %v4174, %v4309
      %v4399 = vadd.f32 %v4175, %v4311
      %v4400 = vadd.f32 %v4176, %v4313
      %v4401 = vadd.f32 %v4177, %v4315
      %v4402 = vadd.f32 %v4178, %v4317
      %v4403 = vadd.f32 %v4179, %v4319
      %v4404 = vadd.f32 %v4180, %v4321
      %v4405 = vadd.f32 %v4181, %v4323
      %v4406 = vadd.f32 %v4182, %v4325
      %v4407 = vadd.f32 %v4183, %v4327
      %v4408 = vadd.f32 %v4184, %v4329
      %v4409 = vadd.f32 %v4185, %v4331
      %v4410 = vadd.f32 %v4186, %v4333
      %v4411 = vadd.f32 %v4187, %v4335
      %v4412 = vadd.f32 %v4188, %v4337
      %v4413 = vadd.f32 %v4189, %v4339
      %v4414 = vrot.slane %v1595, 3
      %v4415 = vrot.slane %v1598, 3
      %v4416 = vsel %vm2433, %v4414, %v4415
      %v4417 = vrot.slane %v1600, 3
      %v4418 = vsel %vm2433, %v4415, %v4417
      %v4419 = vrot.slane %v1603, 3
      %v4420 = vsel %vm2433, %v4417, %v4419
      %v4421 = vrot.slane %v1605, 3
      %v4422 = vsel %vm2433, %v4419, %v4421
      %v4423 = vrot.slane %v1608, 3
      %v4424 = vsel %vm2433, %v4421, %v4423
      %v4425 = vrot.slane %v1610, 3
      %v4426 = vsel %vm2433, %v4423, %v4425
      %v4427 = vrot.slane %v1613, 3
      %v4428 = vsel %vm2433, %v4425, %v4427
      %v4429 = vrot.slane %v1615, 3
      %v4430 = vsel %vm2433, %v4427, %v4429
      %v4431 = vrot.slane %v1618, 3
      %v4432 = vsel %vm2433, %v4429, %v4431
      %v4433 = vrot.slane %v1620, 3
      %v4434 = vsel %vm2433, %v4431, %v4433
      %v4435 = vrot.slane %v1623, 3
      %v4436 = vsel %vm2433, %v4433, %v4435
      %v4437 = vrot.slane %v1625, 3
      %v4438 = vsel %vm2433, %v4435, %v4437
      %v4439 = vrot.slane %v1628, 3
      %v4440 = vsel %vm2433, %v4437, %v4439
      %v4441 = vrot.slane %v1630, 3
      %v4442 = vsel %vm2433, %v4439, %v4441
      %v4443 = vrot.slane %v1633, 3
      %v4444 = vsel %vm2433, %v4441, %v4443
      %v4445 = vrot.slane %v1635, 3
      %v4446 = vsel %vm2433, %v4443, %v4445
      %v4447 = vrot.slane %v1638, 3
      %v4448 = vsel %vm2433, %v4445, %v4447
      %v4449 = vrot.slane %v1640, 3
      %v4450 = vsel %vm2433, %v4447, %v4449
      %v4451 = vrot.slane %v1643, 3
      %v4452 = vsel %vm2433, %v4449, %v4451
      %v4453 = vrot.slane %v1645, 3
      %v4454 = vsel %vm2433, %v4451, %v4453
      %v4455 = vrot.slane %v1648, 3
      %v4456 = vsel %vm2433, %v4453, %v4455
      %v4457 = vrot.slane %v1650, 3
      %v4458 = vsel %vm2433, %v4455, %v4457
      %v4459 = vrot.slane %v1653, 3
      %v4460 = vsel %vm2433, %v4457, %v4459
      %v4461 = vrot.slane %v1655, 3
      %v4462 = vsel %vm2433, %v4459, %v4461
      %v4463 = vrot.slane %v1658, 3
      %v4464 = vsel %vm2433, %v4461, %v4463
      %v4465 = vrot.slane %v1660, 3
      %v4466 = vsel %vm2433, %v4463, %v4465
      %v4467 = vrot.slane %v1663, 3
      %v4468 = vsel %vm2433, %v4465, %v4467
      %v4469 = vrot.slane %v1665, 3
      %v4470 = vsel %vm2433, %v4467, %v4469
      %v4471 = vrot.slane %v1668, 3
      %v4472 = vsel %vm2433, %v4469, %v4471
      %v4473 = vrot.slane %v1670, 3
      %v4474 = vsel %vm2433, %v4471, %v4473
      %v4475 = vrot.slane %v1673, 3
      %v4476 = vsel %vm2433, %v4473, %v4475
      %v4477 = vrot.slane %v1675, 3
      %v4478 = vsel %vm2433, %v4475, %v4477
      %v4479 = vrot.slane %v1678, 3
      %v4480 = vsel %vm2433, %v4477, %v4479
      %v4481 = vrot.slane %v1680, 3
      %v4482 = vsel %vm2433, %v4479, %v4481
      %v4483 = vrot.slane %v1683, 3
      %v4484 = vsel %vm2433, %v4481, %v4483
      %v4485 = vrot.slane %v1685, 3
      %v4486 = vsel %vm2433, %v4483, %v4485
      %v4487 = vrot.slane %v1688, 3
      %v4488 = vsel %vm2433, %v4485, %v4487
      %4489 = vrot.lane.b32.xlu0 %v4416, 48
      %v4490 = vpop.permute.xlu0 %4489
      %4491 = vrot.lane.b32.xlu0 %v4418, 48
      %v4492 = vpop.permute.xlu0 %4491
      %4493 = vrot.lane.b32.xlu0 %v4420, 48
      %v4494 = vpop.permute.xlu0 %4493
      %4495 = vrot.lane.b32.xlu0 %v4422, 48
      %v4496 = vpop.permute.xlu0 %4495
      %4497 = vrot.lane.b32.xlu0 %v4424, 48
      %v4498 = vpop.permute.xlu0 %4497
      %4499 = vrot.lane.b32.xlu0 %v4426, 48
      %v4500 = vpop.permute.xlu0 %4499
      %4501 = vrot.lane.b32.xlu0 %v4428, 48
      %v4502 = vpop.permute.xlu0 %4501
      %4503 = vrot.lane.b32.xlu0 %v4430, 48
      %v4504 = vpop.permute.xlu0 %4503
      %4505 = vrot.lane.b32.xlu0 %v4432, 48
      %v4506 = vpop.permute.xlu0 %4505
      %4507 = vrot.lane.b32.xlu0 %v4434, 48
      %v4508 = vpop.permute.xlu0 %4507
      %4509 = vrot.lane.b32.xlu0 %v4436, 48
      %v4510 = vpop.permute.xlu0 %4509
      %4511 = vrot.lane.b32.xlu0 %v4438, 48
      %v4512 = vpop.permute.xlu0 %4511
      %4513 = vrot.lane.b32.xlu0 %v4440, 48
      %v4514 = vpop.permute.xlu0 %4513
      %4515 = vrot.lane.b32.xlu0 %v4442, 48
      %v4516 = vpop.permute.xlu0 %4515
      %4517 = vrot.lane.b32.xlu0 %v4444, 48
      %v4518 = vpop.permute.xlu0 %4517
      %4519 = vrot.lane.b32.xlu0 %v4446, 48
      %v4520 = vpop.permute.xlu0 %4519
      %4521 = vrot.lane.b32.xlu0 %v4448, 48
      %v4522 = vpop.permute.xlu0 %4521
      %4523 = vrot.lane.b32.xlu0 %v4450, 48
      %v4524 = vpop.permute.xlu0 %4523
      %4525 = vrot.lane.b32.xlu0 %v4452, 48
      %v4526 = vpop.permute.xlu0 %4525
      %4527 = vrot.lane.b32.xlu0 %v4454, 48
      %v4528 = vpop.permute.xlu0 %4527
      %4529 = vrot.lane.b32.xlu0 %v4456, 48
      %v4530 = vpop.permute.xlu0 %4529
      %4531 = vrot.lane.b32.xlu0 %v4458, 48
      %v4532 = vpop.permute.xlu0 %4531
      %4533 = vrot.lane.b32.xlu0 %v4460, 48
      %v4534 = vpop.permute.xlu0 %4533
      %4535 = vrot.lane.b32.xlu0 %v4462, 48
      %v4536 = vpop.permute.xlu0 %4535
      %4537 = vrot.lane.b32.xlu0 %v4464, 48
      %v4538 = vpop.permute.xlu0 %4537
      %4539 = vrot.lane.b32.xlu0 %v4466, 48
      %v4540 = vpop.permute.xlu0 %4539
      %4541 = vrot.lane.b32.xlu0 %v4468, 48
      %v4542 = vpop.permute.xlu0 %4541
      %4543 = vrot.lane.b32.xlu0 %v4470, 48
      %v4544 = vpop.permute.xlu0 %4543
      %4545 = vrot.lane.b32.xlu0 %v4472, 48
      %v4546 = vpop.permute.xlu0 %4545
      %4547 = vrot.lane.b32.xlu0 %v4474, 48
      %v4548 = vpop.permute.xlu0 %4547
      %4549 = vrot.lane.b32.xlu0 %v4476, 48
      %v4550 = vpop.permute.xlu0 %4549
      %4551 = vrot.lane.b32.xlu0 %v4478, 48
      %v4552 = vpop.permute.xlu0 %4551
      %4553 = vrot.lane.b32.xlu0 %v4480, 48
      %v4554 = vpop.permute.xlu0 %4553
      %4555 = vrot.lane.b32.xlu0 %v4482, 48
      %v4556 = vpop.permute.xlu0 %4555
      %4557 = vrot.lane.b32.xlu0 %v4484, 48
      %v4558 = vpop.permute.xlu0 %4557
      %4559 = vrot.lane.b32.xlu0 %v4486, 48
      %v4560 = vpop.permute.xlu0 %4559
      %4561 = vrot.lane.b32.xlu0 %v4488, 48
      %v4562 = vpop.permute.xlu0 %4561
      %v4600 = vadd.f32 %v4377, %v4490
      %v4601 = vadd.f32 %v4378, %v4492
      %v4602 = vadd.f32 %v4379, %v4494
      %v4603 = vadd.f32 %v4380, %v4496
      %v4604 = vadd.f32 %v4381, %v4498
      %v4605 = vadd.f32 %v4382, %v4500
      %v4606 = vadd.f32 %v4383, %v4502
      %v4607 = vadd.f32 %v4384, %v4504
      %v4608 = vadd.f32 %v4385, %v4506
      %v4609 = vadd.f32 %v4386, %v4508
      %v4610 = vadd.f32 %v4387, %v4510
      %v4611 = vadd.f32 %v4388, %v4512
      %v4612 = vadd.f32 %v4389, %v4514
      %v4613 = vadd.f32 %v4390, %v4516
      %v4614 = vadd.f32 %v4391, %v4518
      %v4615 = vadd.f32 %v4392, %v4520
      %v4616 = vadd.f32 %v4393, %v4522
      %v4617 = vadd.f32 %v4394, %v4524
      %v4618 = vadd.f32 %v4395, %v4526
      %v4619 = vadd.f32 %v4396, %v4528
      %v4620 = vadd.f32 %v4397, %v4530
      %v4621 = vadd.f32 %v4398, %v4532
      %v4622 = vadd.f32 %v4399, %v4534
      %v4623 = vadd.f32 %v4400, %v4536
      %v4624 = vadd.f32 %v4401, %v4538
      %v4625 = vadd.f32 %v4402, %v4540
      %v4626 = vadd.f32 %v4403, %v4542
      %v4627 = vadd.f32 %v4404, %v4544
      %v4628 = vadd.f32 %v4405, %v4546
      %v4629 = vadd.f32 %v4406, %v4548
      %v4630 = vadd.f32 %v4407, %v4550
      %v4631 = vadd.f32 %v4408, %v4552
      %v4632 = vadd.f32 %v4409, %v4554
      %v4633 = vadd.f32 %v4410, %v4556
      %v4634 = vadd.f32 %v4411, %v4558
      %v4635 = vadd.f32 %v4412, %v4560
      %v4636 = vadd.f32 %v4413, %v4562
      %v4637 = vrot.slane %v1595, 4
      %v4638 = vrot.slane %v1598, 4
      %v4639 = vsel %vm2657, %v4637, %v4638
      %v4640 = vrot.slane %v1600, 4
      %v4641 = vsel %vm2657, %v4638, %v4640
      %v4642 = vrot.slane %v1603, 4
      %v4643 = vsel %vm2657, %v4640, %v4642
      %v4644 = vrot.slane %v1605, 4
      %v4645 = vsel %vm2657, %v4642, %v4644
      %v4646 = vrot.slane %v1608, 4
      %v4647 = vsel %vm2657, %v4644, %v4646
      %v4648 = vrot.slane %v1610, 4
      %v4649 = vsel %vm2657, %v4646, %v4648
      %v4650 = vrot.slane %v1613, 4
      %v4651 = vsel %vm2657, %v4648, %v4650
      %v4652 = vrot.slane %v1615, 4
      %v4653 = vsel %vm2657, %v4650, %v4652
      %v4654 = vrot.slane %v1618, 4
      %v4655 = vsel %vm2657, %v4652, %v4654
      %v4656 = vrot.slane %v1620, 4
      %v4657 = vsel %vm2657, %v4654, %v4656
      %v4658 = vrot.slane %v1623, 4
      %v4659 = vsel %vm2657, %v4656, %v4658
      %v4660 = vrot.slane %v1625, 4
      %v4661 = vsel %vm2657, %v4658, %v4660
      %v4662 = vrot.slane %v1628, 4
      %v4663 = vsel %vm2657, %v4660, %v4662
      %v4664 = vrot.slane %v1630, 4
      %v4665 = vsel %vm2657, %v4662, %v4664
      %v4666 = vrot.slane %v1633, 4
      %v4667 = vsel %vm2657, %v4664, %v4666
      %v4668 = vrot.slane %v1635, 4
      %v4669 = vsel %vm2657, %v4666, %v4668
      %v4670 = vrot.slane %v1638, 4
      %v4671 = vsel %vm2657, %v4668, %v4670
      %v4672 = vrot.slane %v1640, 4
      %v4673 = vsel %vm2657, %v4670, %v4672
      %v4674 = vrot.slane %v1643, 4
      %v4675 = vsel %vm2657, %v4672, %v4674
      %v4676 = vrot.slane %v1645, 4
      %v4677 = vsel %vm2657, %v4674, %v4676
      %v4678 = vrot.slane %v1648, 4
      %v4679 = vsel %vm2657, %v4676, %v4678
      %v4680 = vrot.slane %v1650, 4
      %v4681 = vsel %vm2657, %v4678, %v4680
      %v4682 = vrot.slane %v1653, 4
      %v4683 = vsel %vm2657, %v4680, %v4682
      %v4684 = vrot.slane %v1655, 4
      %v4685 = vsel %vm2657, %v4682, %v4684
      %v4686 = vrot.slane %v1658, 4
      %v4687 = vsel %vm2657, %v4684, %v4686
      %v4688 = vrot.slane %v1660, 4
      %v4689 = vsel %vm2657, %v4686, %v4688
      %v4690 = vrot.slane %v1663, 4
      %v4691 = vsel %vm2657, %v4688, %v4690
      %v4692 = vrot.slane %v1665, 4
      %v4693 = vsel %vm2657, %v4690, %v4692
      %v4694 = vrot.slane %v1668, 4
      %v4695 = vsel %vm2657, %v4692, %v4694
      %v4696 = vrot.slane %v1670, 4
      %v4697 = vsel %vm2657, %v4694, %v4696
      %v4698 = vrot.slane %v1673, 4
      %v4699 = vsel %vm2657, %v4696, %v4698
      %v4700 = vrot.slane %v1675, 4
      %v4701 = vsel %vm2657, %v4698, %v4700
      %v4702 = vrot.slane %v1678, 4
      %v4703 = vsel %vm2657, %v4700, %v4702
      %v4704 = vrot.slane %v1680, 4
      %v4705 = vsel %vm2657, %v4702, %v4704
      %v4706 = vrot.slane %v1683, 4
      %v4707 = vsel %vm2657, %v4704, %v4706
      %v4708 = vrot.slane %v1685, 4
      %v4709 = vsel %vm2657, %v4706, %v4708
      %v4710 = vrot.slane %v1688, 4
      %v4711 = vsel %vm2657, %v4708, %v4710
      %4712 = vrot.lane.b32.xlu0 %v4639, 32
      %v4713 = vpop.permute.xlu0 %4712
      %4714 = vrot.lane.b32.xlu0 %v4641, 32
      %v4715 = vpop.permute.xlu0 %4714
      %4716 = vrot.lane.b32.xlu0 %v4643, 32
      %v4717 = vpop.permute.xlu0 %4716
      %4718 = vrot.lane.b32.xlu0 %v4645, 32
      %v4719 = vpop.permute.xlu0 %4718
      %4720 = vrot.lane.b32.xlu0 %v4647, 32
      %v4721 = vpop.permute.xlu0 %4720
      %4722 = vrot.lane.b32.xlu0 %v4649, 32
      %v4723 = vpop.permute.xlu0 %4722
      %4724 = vrot.lane.b32.xlu0 %v4651, 32
      %v4725 = vpop.permute.xlu0 %4724
      %4726 = vrot.lane.b32.xlu0 %v4653, 32
      %v4727 = vpop.permute.xlu0 %4726
      %4728 = vrot.lane.b32.xlu0 %v4655, 32
      %v4729 = vpop.permute.xlu0 %4728
      %4730 = vrot.lane.b32.xlu0 %v4657, 32
      %v4731 = vpop.permute.xlu0 %4730
      %4732 = vrot.lane.b32.xlu0 %v4659, 32
      %v4733 = vpop.permute.xlu0 %4732
      %4734 = vrot.lane.b32.xlu0 %v4661, 32
      %v4735 = vpop.permute.xlu0 %4734
      %4736 = vrot.lane.b32.xlu0 %v4663, 32
      %v4737 = vpop.permute.xlu0 %4736
      %4738 = vrot.lane.b32.xlu0 %v4665, 32
      %v4739 = vpop.permute.xlu0 %4738
      %4740 = vrot.lane.b32.xlu0 %v4667, 32
      %v4741 = vpop.permute.xlu0 %4740
      %4742 = vrot.lane.b32.xlu0 %v4669, 32
      %v4743 = vpop.permute.xlu0 %4742
      %4744 = vrot.lane.b32.xlu0 %v4671, 32
      %v4745 = vpop.permute.xlu0 %4744
      %4746 = vrot.lane.b32.xlu0 %v4673, 32
      %v4747 = vpop.permute.xlu0 %4746
      %4748 = vrot.lane.b32.xlu0 %v4675, 32
      %v4749 = vpop.permute.xlu0 %4748
      %4750 = vrot.lane.b32.xlu0 %v4677, 32
      %v4751 = vpop.permute.xlu0 %4750
      %4752 = vrot.lane.b32.xlu0 %v4679, 32
      %v4753 = vpop.permute.xlu0 %4752
      %4754 = vrot.lane.b32.xlu0 %v4681, 32
      %v4755 = vpop.permute.xlu0 %4754
      %4756 = vrot.lane.b32.xlu0 %v4683, 32
      %v4757 = vpop.permute.xlu0 %4756
      %4758 = vrot.lane.b32.xlu0 %v4685, 32
      %v4759 = vpop.permute.xlu0 %4758
      %4760 = vrot.lane.b32.xlu0 %v4687, 32
      %v4761 = vpop.permute.xlu0 %4760
      %4762 = vrot.lane.b32.xlu0 %v4689, 32
      %v4763 = vpop.permute.xlu0 %4762
      %4764 = vrot.lane.b32.xlu0 %v4691, 32
      %v4765 = vpop.permute.xlu0 %4764
      %4766 = vrot.lane.b32.xlu0 %v4693, 32
      %v4767 = vpop.permute.xlu0 %4766
      %4768 = vrot.lane.b32.xlu0 %v4695, 32
      %v4769 = vpop.permute.xlu0 %4768
      %4770 = vrot.lane.b32.xlu0 %v4697, 32
      %v4771 = vpop.permute.xlu0 %4770
      %4772 = vrot.lane.b32.xlu0 %v4699, 32
      %v4773 = vpop.permute.xlu0 %4772
      %4774 = vrot.lane.b32.xlu0 %v4701, 32
      %v4775 = vpop.permute.xlu0 %4774
      %4776 = vrot.lane.b32.xlu0 %v4703, 32
      %v4777 = vpop.permute.xlu0 %4776
      %4778 = vrot.lane.b32.xlu0 %v4705, 32
      %v4779 = vpop.permute.xlu0 %4778
      %4780 = vrot.lane.b32.xlu0 %v4707, 32
      %v4781 = vpop.permute.xlu0 %4780
      %4782 = vrot.lane.b32.xlu0 %v4709, 32
      %v4783 = vpop.permute.xlu0 %4782
      %4784 = vrot.lane.b32.xlu0 %v4711, 32
      %v4785 = vpop.permute.xlu0 %4784
      %v4823 = vadd.f32 %v4600, %v4713
      %v4824 = vadd.f32 %v4601, %v4715
      %v4825 = vadd.f32 %v4602, %v4717
      %v4826 = vadd.f32 %v4603, %v4719
      %v4827 = vadd.f32 %v4604, %v4721
      %v4828 = vadd.f32 %v4605, %v4723
      %v4829 = vadd.f32 %v4606, %v4725
      %v4830 = vadd.f32 %v4607, %v4727
      %v4831 = vadd.f32 %v4608, %v4729
      %v4832 = vadd.f32 %v4609, %v4731
      %v4833 = vadd.f32 %v4610, %v4733
      %v4834 = vadd.f32 %v4611, %v4735
      %v4835 = vadd.f32 %v4612, %v4737
      %v4836 = vadd.f32 %v4613, %v4739
      %v4837 = vadd.f32 %v4614, %v4741
      %v4838 = vadd.f32 %v4615, %v4743
      %v4839 = vadd.f32 %v4616, %v4745
      %v4840 = vadd.f32 %v4617, %v4747
      %v4841 = vadd.f32 %v4618, %v4749
      %v4842 = vadd.f32 %v4619, %v4751
      %v4843 = vadd.f32 %v4620, %v4753
      %v4844 = vadd.f32 %v4621, %v4755
      %v4845 = vadd.f32 %v4622, %v4757
      %v4846 = vadd.f32 %v4623, %v4759
      %v4847 = vadd.f32 %v4624, %v4761
      %v4848 = vadd.f32 %v4625, %v4763
      %v4849 = vadd.f32 %v4626, %v4765
      %v4850 = vadd.f32 %v4627, %v4767
      %v4851 = vadd.f32 %v4628, %v4769
      %v4852 = vadd.f32 %v4629, %v4771
      %v4853 = vadd.f32 %v4630, %v4773
      %v4854 = vadd.f32 %v4631, %v4775
      %v4855 = vadd.f32 %v4632, %v4777
      %v4856 = vadd.f32 %v4633, %v4779
      %v4857 = vadd.f32 %v4634, %v4781
      %v4858 = vadd.f32 %v4635, %v4783
      %v4859 = vadd.f32 %v4636, %v4785
      %v4862 = vrot.slane %v1690, 4
      %v4863 = vsel %vm2657, %v4710, %v4862
      %v4864 = vrot.slane %v1693, 4
      %v4865 = vsel %vm2657, %v4862, %v4864
      %4866 = vrot.lane.b32.xlu0 %v4643, 16
      %v4867 = vpop.permute.xlu0 %4866
      %4868 = vrot.lane.b32.xlu0 %v4645, 16
      %v4869 = vpop.permute.xlu0 %4868
      %4870 = vrot.lane.b32.xlu0 %v4647, 16
      %v4871 = vpop.permute.xlu0 %4870
      %4872 = vrot.lane.b32.xlu0 %v4649, 16
      %v4873 = vpop.permute.xlu0 %4872
      %4874 = vrot.lane.b32.xlu0 %v4651, 16
      %v4875 = vpop.permute.xlu0 %4874
      %4876 = vrot.lane.b32.xlu0 %v4653, 16
      %v4877 = vpop.permute.xlu0 %4876
      %4878 = vrot.lane.b32.xlu0 %v4655, 16
      %v4879 = vpop.permute.xlu0 %4878
      %4880 = vrot.lane.b32.xlu0 %v4657, 16
      %v4881 = vpop.permute.xlu0 %4880
      %4882 = vrot.lane.b32.xlu0 %v4659, 16
      %v4883 = vpop.permute.xlu0 %4882
      %4884 = vrot.lane.b32.xlu0 %v4661, 16
      %v4885 = vpop.permute.xlu0 %4884
      %4886 = vrot.lane.b32.xlu0 %v4663, 16
      %v4887 = vpop.permute.xlu0 %4886
      %4888 = vrot.lane.b32.xlu0 %v4665, 16
      %v4889 = vpop.permute.xlu0 %4888
      %4890 = vrot.lane.b32.xlu0 %v4667, 16
      %v4891 = vpop.permute.xlu0 %4890
      %4892 = vrot.lane.b32.xlu0 %v4669, 16
      %v4893 = vpop.permute.xlu0 %4892
      %4894 = vrot.lane.b32.xlu0 %v4671, 16
      %v4895 = vpop.permute.xlu0 %4894
      %4896 = vrot.lane.b32.xlu0 %v4673, 16
      %v4897 = vpop.permute.xlu0 %4896
      %4898 = vrot.lane.b32.xlu0 %v4675, 16
      %v4899 = vpop.permute.xlu0 %4898
      %4900 = vrot.lane.b32.xlu0 %v4677, 16
      %v4901 = vpop.permute.xlu0 %4900
      %4902 = vrot.lane.b32.xlu0 %v4679, 16
      %v4903 = vpop.permute.xlu0 %4902
      %4904 = vrot.lane.b32.xlu0 %v4681, 16
      %v4905 = vpop.permute.xlu0 %4904
      %4906 = vrot.lane.b32.xlu0 %v4683, 16
      %v4907 = vpop.permute.xlu0 %4906
      %4908 = vrot.lane.b32.xlu0 %v4685, 16
      %v4909 = vpop.permute.xlu0 %4908
      %4910 = vrot.lane.b32.xlu0 %v4687, 16
      %v4911 = vpop.permute.xlu0 %4910
      %4912 = vrot.lane.b32.xlu0 %v4689, 16
      %v4913 = vpop.permute.xlu0 %4912
      %4914 = vrot.lane.b32.xlu0 %v4691, 16
      %v4915 = vpop.permute.xlu0 %4914
      %4916 = vrot.lane.b32.xlu0 %v4693, 16
      %v4917 = vpop.permute.xlu0 %4916
      %4918 = vrot.lane.b32.xlu0 %v4695, 16
      %v4919 = vpop.permute.xlu0 %4918
      %4920 = vrot.lane.b32.xlu0 %v4697, 16
      %v4921 = vpop.permute.xlu0 %4920
      %4922 = vrot.lane.b32.xlu0 %v4699, 16
      %v4923 = vpop.permute.xlu0 %4922
      %4924 = vrot.lane.b32.xlu0 %v4701, 16
      %v4925 = vpop.permute.xlu0 %4924
      %4926 = vrot.lane.b32.xlu0 %v4703, 16
      %v4927 = vpop.permute.xlu0 %4926
      %4928 = vrot.lane.b32.xlu0 %v4705, 16
      %v4929 = vpop.permute.xlu0 %4928
      %4930 = vrot.lane.b32.xlu0 %v4707, 16
      %v4931 = vpop.permute.xlu0 %4930
      %4932 = vrot.lane.b32.xlu0 %v4709, 16
      %v4933 = vpop.permute.xlu0 %4932
      %4934 = vrot.lane.b32.xlu0 %v4711, 16
      %v4935 = vpop.permute.xlu0 %4934
      %4936 = vrot.lane.b32.xlu0 %v4863, 16
      %v4937 = vpop.permute.xlu0 %4936
      %4938 = vrot.lane.b32.xlu0 %v4865, 16
      %v4939 = vpop.permute.xlu0 %4938
      %v4977 = vadd.f32 %v4823, %v4867
      %v4978 = vadd.f32 %v4824, %v4869
      %v4979 = vadd.f32 %v4825, %v4871
      %v4980 = vadd.f32 %v4826, %v4873
      %v4981 = vadd.f32 %v4827, %v4875
      %v4982 = vadd.f32 %v4828, %v4877
      %v4983 = vadd.f32 %v4829, %v4879
      %v4984 = vadd.f32 %v4830, %v4881
      %v4985 = vadd.f32 %v4831, %v4883
      %v4986 = vadd.f32 %v4832, %v4885
      %v4987 = vadd.f32 %v4833, %v4887
      %v4988 = vadd.f32 %v4834, %v4889
      %v4989 = vadd.f32 %v4835, %v4891
      %v4990 = vadd.f32 %v4836, %v4893
      %v4991 = vadd.f32 %v4837, %v4895
      %v4992 = vadd.f32 %v4838, %v4897
      %v4993 = vadd.f32 %v4839, %v4899
      %v4994 = vadd.f32 %v4840, %v4901
      %v4995 = vadd.f32 %v4841, %v4903
      %v4996 = vadd.f32 %v4842, %v4905
      %v4997 = vadd.f32 %v4843, %v4907
      %v4998 = vadd.f32 %v4844, %v4909
      %v4999 = vadd.f32 %v4845, %v4911
      %v5000 = vadd.f32 %v4846, %v4913
      %v5001 = vadd.f32 %v4847, %v4915
      %v5002 = vadd.f32 %v4848, %v4917
      %v5003 = vadd.f32 %v4849, %v4919
      %v5004 = vadd.f32 %v4850, %v4921
      %v5005 = vadd.f32 %v4851, %v4923
      %v5006 = vadd.f32 %v4852, %v4925
      %v5007 = vadd.f32 %v4853, %v4927
      %v5008 = vadd.f32 %v4854, %v4929
      %v5009 = vadd.f32 %v4855, %v4931
      %v5010 = vadd.f32 %v4856, %v4933
      %v5011 = vadd.f32 %v4857, %v4935
      %v5012 = vadd.f32 %v4858, %v4937
      %v5013 = vadd.f32 %v4859, %v4939
      %v5052 = vrot.slane %v1722, 5
      %v5053 = vrot.slane %v1725, 5
      %v5054 = vsel %vm3035, %v5052, %v5053
      %v5055 = vrot.slane %v1727, 5
      %v5056 = vsel %vm3035, %v5053, %v5055
      %v5057 = vrot.slane %v1730, 5
      %v5058 = vsel %vm3035, %v5055, %v5057
      %v5059 = vrot.slane %v1732, 5
      %v5060 = vsel %vm3035, %v5057, %v5059
      %v5061 = vrot.slane %v1735, 5
      %v5062 = vsel %vm3035, %v5059, %v5061
      %v5063 = vrot.slane %v1737, 5
      %v5064 = vsel %vm3035, %v5061, %v5063
      %v5065 = vrot.slane %v1740, 5
      %v5066 = vsel %vm3035, %v5063, %v5065
      %v5067 = vrot.slane %v1742, 5
      %v5068 = vsel %vm3035, %v5065, %v5067
      %v5069 = vrot.slane %v1745, 5
      %v5070 = vsel %vm3035, %v5067, %v5069
      %v5071 = vrot.slane %v1747, 5
      %v5072 = vsel %vm3035, %v5069, %v5071
      %v5073 = vrot.slane %v1750, 5
      %v5074 = vsel %vm3035, %v5071, %v5073
      %v5075 = vrot.slane %v1752, 5
      %v5076 = vsel %vm3035, %v5073, %v5075
      %v5077 = vrot.slane %v1755, 5
      %v5078 = vsel %vm3035, %v5075, %v5077
      %v5079 = vrot.slane %v1757, 5
      %v5080 = vsel %vm3035, %v5077, %v5079
      %v5081 = vrot.slane %v1760, 5
      %v5082 = vsel %vm3035, %v5079, %v5081
      %v5083 = vrot.slane %v1762, 5
      %v5084 = vsel %vm3035, %v5081, %v5083
      %v5085 = vrot.slane %v1765, 5
      %v5086 = vsel %vm3035, %v5083, %v5085
      %v5087 = vrot.slane %v1767, 5
      %v5088 = vsel %vm3035, %v5085, %v5087
      %v5089 = vrot.slane %v1770, 5
      %v5090 = vsel %vm3035, %v5087, %v5089
      %v5091 = vrot.slane %v1772, 5
      %v5092 = vsel %vm3035, %v5089, %v5091
      %v5093 = vrot.slane %v1775, 5
      %v5094 = vsel %vm3035, %v5091, %v5093
      %v5095 = vrot.slane %v1777, 5
      %v5096 = vsel %vm3035, %v5093, %v5095
      %v5097 = vrot.slane %v1780, 5
      %v5098 = vsel %vm3035, %v5095, %v5097
      %v5099 = vrot.slane %v1782, 5
      %v5100 = vsel %vm3035, %v5097, %v5099
      %v5101 = vrot.slane %v1785, 5
      %v5102 = vsel %vm3035, %v5099, %v5101
      %v5103 = vrot.slane %v1787, 5
      %v5104 = vsel %vm3035, %v5101, %v5103
      %v5105 = vrot.slane %v1790, 5
      %v5106 = vsel %vm3035, %v5103, %v5105
      %v5107 = vrot.slane %v1792, 5
      %v5108 = vsel %vm3035, %v5105, %v5107
      %v5109 = vrot.slane %v1795, 5
      %v5110 = vsel %vm3035, %v5107, %v5109
      %v5111 = vrot.slane %v1797, 5
      %v5112 = vsel %vm3035, %v5109, %v5111
      %v5113 = vrot.slane %v1800, 5
      %v5114 = vsel %vm3035, %v5111, %v5113
      %v5115 = vrot.slane %v1802, 5
      %v5116 = vsel %vm3035, %v5113, %v5115
      %v5117 = vrot.slane %v1805, 5
      %v5118 = vsel %vm3035, %v5115, %v5117
      %v5119 = vrot.slane %v1807, 5
      %v5120 = vsel %vm3035, %v5117, %v5119
      %v5121 = vrot.slane %v1810, 5
      %v5122 = vsel %vm3035, %v5119, %v5121
      %v5123 = vrot.slane %v1812, 5
      %v5124 = vsel %vm3035, %v5121, %v5123
      %v5125 = vrot.slane %v1815, 5
      %v5126 = vsel %vm3035, %v5123, %v5125
      %v5164 = vadd.f32 %v4977, %v5054
      %v5165 = vadd.f32 %v4978, %v5056
      %v5166 = vadd.f32 %v4979, %v5058
      %v5167 = vadd.f32 %v4980, %v5060
      %v5168 = vadd.f32 %v4981, %v5062
      %v5169 = vadd.f32 %v4982, %v5064
      %v5170 = vadd.f32 %v4983, %v5066
      %v5171 = vadd.f32 %v4984, %v5068
      %v5172 = vadd.f32 %v4985, %v5070
      %v5173 = vadd.f32 %v4986, %v5072
      %v5174 = vadd.f32 %v4987, %v5074
      %v5175 = vadd.f32 %v4988, %v5076
      %v5176 = vadd.f32 %v4989, %v5078
      %v5177 = vadd.f32 %v4990, %v5080
      %v5178 = vadd.f32 %v4991, %v5082
      %v5179 = vadd.f32 %v4992, %v5084
      %v5180 = vadd.f32 %v4993, %v5086
      %v5181 = vadd.f32 %v4994, %v5088
      %v5182 = vadd.f32 %v4995, %v5090
      %v5183 = vadd.f32 %v4996, %v5092
      %v5184 = vadd.f32 %v4997, %v5094
      %v5185 = vadd.f32 %v4998, %v5096
      %v5186 = vadd.f32 %v4999, %v5098
      %v5187 = vadd.f32 %v5000, %v5100
      %v5188 = vadd.f32 %v5001, %v5102
      %v5189 = vadd.f32 %v5002, %v5104
      %v5190 = vadd.f32 %v5003, %v5106
      %v5191 = vadd.f32 %v5004, %v5108
      %v5192 = vadd.f32 %v5005, %v5110
      %v5193 = vadd.f32 %v5006, %v5112
      %v5194 = vadd.f32 %v5007, %v5114
      %v5195 = vadd.f32 %v5008, %v5116
      %v5196 = vadd.f32 %v5009, %v5118
      %v5197 = vadd.f32 %v5010, %v5120
      %v5198 = vadd.f32 %v5011, %v5122
      %v5199 = vadd.f32 %v5012, %v5124
      %v5200 = vadd.f32 %v5013, %v5126
      %v5201 = vrot.slane %v1722, 6
      %v5202 = vrot.slane %v1725, 6
      %v5203 = vsel %vm3259, %v5201, %v5202
      %v5204 = vrot.slane %v1727, 6
      %v5205 = vsel %vm3259, %v5202, %v5204
      %v5206 = vrot.slane %v1730, 6
      %v5207 = vsel %vm3259, %v5204, %v5206
      %v5208 = vrot.slane %v1732, 6
      %v5209 = vsel %vm3259, %v5206, %v5208
      %v5210 = vrot.slane %v1735, 6
      %v5211 = vsel %vm3259, %v5208, %v5210
      %v5212 = vrot.slane %v1737, 6
      %v5213 = vsel %vm3259, %v5210, %v5212
      %v5214 = vrot.slane %v1740, 6
      %v5215 = vsel %vm3259, %v5212, %v5214
      %v5216 = vrot.slane %v1742, 6
      %v5217 = vsel %vm3259, %v5214, %v5216
      %v5218 = vrot.slane %v1745, 6
      %v5219 = vsel %vm3259, %v5216, %v5218
      %v5220 = vrot.slane %v1747, 6
      %v5221 = vsel %vm3259, %v5218, %v5220
      %v5222 = vrot.slane %v1750, 6
      %v5223 = vsel %vm3259, %v5220, %v5222
      %v5224 = vrot.slane %v1752, 6
      %v5225 = vsel %vm3259, %v5222, %v5224
      %v5226 = vrot.slane %v1755, 6
      %v5227 = vsel %vm3259, %v5224, %v5226
      %v5228 = vrot.slane %v1757, 6
      %v5229 = vsel %vm3259, %v5226, %v5228
      %v5230 = vrot.slane %v1760, 6
      %v5231 = vsel %vm3259, %v5228, %v5230
      %v5232 = vrot.slane %v1762, 6
      %v5233 = vsel %vm3259, %v5230, %v5232
      %v5234 = vrot.slane %v1765, 6
      %v5235 = vsel %vm3259, %v5232, %v5234
      %v5236 = vrot.slane %v1767, 6
      %v5237 = vsel %vm3259, %v5234, %v5236
      %v5238 = vrot.slane %v1770, 6
      %v5239 = vsel %vm3259, %v5236, %v5238
      %v5240 = vrot.slane %v1772, 6
      %v5241 = vsel %vm3259, %v5238, %v5240
      %v5242 = vrot.slane %v1775, 6
      %v5243 = vsel %vm3259, %v5240, %v5242
      %v5244 = vrot.slane %v1777, 6
      %v5245 = vsel %vm3259, %v5242, %v5244
      %v5246 = vrot.slane %v1780, 6
      %v5247 = vsel %vm3259, %v5244, %v5246
      %v5248 = vrot.slane %v1782, 6
      %v5249 = vsel %vm3259, %v5246, %v5248
      %v5250 = vrot.slane %v1785, 6
      %v5251 = vsel %vm3259, %v5248, %v5250
      %v5252 = vrot.slane %v1787, 6
      %v5253 = vsel %vm3259, %v5250, %v5252
      %v5254 = vrot.slane %v1790, 6
      %v5255 = vsel %vm3259, %v5252, %v5254
      %v5256 = vrot.slane %v1792, 6
      %v5257 = vsel %vm3259, %v5254, %v5256
      %v5258 = vrot.slane %v1795, 6
      %v5259 = vsel %vm3259, %v5256, %v5258
      %v5260 = vrot.slane %v1797, 6
      %v5261 = vsel %vm3259, %v5258, %v5260
      %v5262 = vrot.slane %v1800, 6
      %v5263 = vsel %vm3259, %v5260, %v5262
      %v5264 = vrot.slane %v1802, 6
      %v5265 = vsel %vm3259, %v5262, %v5264
      %v5266 = vrot.slane %v1805, 6
      %v5267 = vsel %vm3259, %v5264, %v5266
      %v5268 = vrot.slane %v1807, 6
      %v5269 = vsel %vm3259, %v5266, %v5268
      %v5270 = vrot.slane %v1810, 6
      %v5271 = vsel %vm3259, %v5268, %v5270
      %v5272 = vrot.slane %v1812, 6
      %v5273 = vsel %vm3259, %v5270, %v5272
      %v5274 = vrot.slane %v1815, 6
      %v5275 = vsel %vm3259, %v5272, %v5274
      %5276 = vrot.lane.b32.xlu0 %v5203, 112
      %v5277 = vpop.permute.xlu0 %5276
      %5278 = vrot.lane.b32.xlu0 %v5205, 112
      %v5279 = vpop.permute.xlu0 %5278
      %5280 = vrot.lane.b32.xlu0 %v5207, 112
      %v5281 = vpop.permute.xlu0 %5280
      %5282 = vrot.lane.b32.xlu0 %v5209, 112
      %v5283 = vpop.permute.xlu0 %5282
      %5284 = vrot.lane.b32.xlu0 %v5211, 112
      %v5285 = vpop.permute.xlu0 %5284
      %5286 = vrot.lane.b32.xlu0 %v5213, 112
      %v5287 = vpop.permute.xlu0 %5286
      %5288 = vrot.lane.b32.xlu0 %v5215, 112
      %v5289 = vpop.permute.xlu0 %5288
      %5290 = vrot.lane.b32.xlu0 %v5217, 112
      %v5291 = vpop.permute.xlu0 %5290
      %5292 = vrot.lane.b32.xlu0 %v5219, 112
      %v5293 = vpop.permute.xlu0 %5292
      %5294 = vrot.lane.b32.xlu0 %v5221, 112
      %v5295 = vpop.permute.xlu0 %5294
      %5296 = vrot.lane.b32.xlu0 %v5223, 112
      %v5297 = vpop.permute.xlu0 %5296
      %5298 = vrot.lane.b32.xlu0 %v5225, 112
      %v5299 = vpop.permute.xlu0 %5298
      %5300 = vrot.lane.b32.xlu0 %v5227, 112
      %v5301 = vpop.permute.xlu0 %5300
      %5302 = vrot.lane.b32.xlu0 %v5229, 112
      %v5303 = vpop.permute.xlu0 %5302
      %5304 = vrot.lane.b32.xlu0 %v5231, 112
      %v5305 = vpop.permute.xlu0 %5304
      %5306 = vrot.lane.b32.xlu0 %v5233, 112
      %v5307 = vpop.permute.xlu0 %5306
      %5308 = vrot.lane.b32.xlu0 %v5235, 112
      %v5309 = vpop.permute.xlu0 %5308
      %5310 = vrot.lane.b32.xlu0 %v5237, 112
      %v5311 = vpop.permute.xlu0 %5310
      %5312 = vrot.lane.b32.xlu0 %v5239, 112
      %v5313 = vpop.permute.xlu0 %5312
      %5314 = vrot.lane.b32.xlu0 %v5241, 112
      %v5315 = vpop.permute.xlu0 %5314
      %5316 = vrot.lane.b32.xlu0 %v5243, 112
      %v5317 = vpop.permute.xlu0 %5316
      %5318 = vrot.lane.b32.xlu0 %v5245, 112
      %v5319 = vpop.permute.xlu0 %5318
      %5320 = vrot.lane.b32.xlu0 %v5247, 112
      %v5321 = vpop.permute.xlu0 %5320
      %5322 = vrot.lane.b32.xlu0 %v5249, 112
      %v5323 = vpop.permute.xlu0 %5322
      %5324 = vrot.lane.b32.xlu0 %v5251, 112
      %v5325 = vpop.permute.xlu0 %5324
      %5326 = vrot.lane.b32.xlu0 %v5253, 112
      %v5327 = vpop.permute.xlu0 %5326
      %5328 = vrot.lane.b32.xlu0 %v5255, 112
      %v5329 = vpop.permute.xlu0 %5328
      %5330 = vrot.lane.b32.xlu0 %v5257, 112
      %v5331 = vpop.permute.xlu0 %5330
      %5332 = vrot.lane.b32.xlu0 %v5259, 112
      %v5333 = vpop.permute.xlu0 %5332
      %5334 = vrot.lane.b32.xlu0 %v5261, 112
      %v5335 = vpop.permute.xlu0 %5334
      %5336 = vrot.lane.b32.xlu0 %v5263, 112
      %v5337 = vpop.permute.xlu0 %5336
      %5338 = vrot.lane.b32.xlu0 %v5265, 112
      %v5339 = vpop.permute.xlu0 %5338
      %5340 = vrot.lane.b32.xlu0 %v5267, 112
      %v5341 = vpop.permute.xlu0 %5340
      %5342 = vrot.lane.b32.xlu0 %v5269, 112
      %v5343 = vpop.permute.xlu0 %5342
      %5344 = vrot.lane.b32.xlu0 %v5271, 112
      %v5345 = vpop.permute.xlu0 %5344
      %5346 = vrot.lane.b32.xlu0 %v5273, 112
      %v5347 = vpop.permute.xlu0 %5346
      %5348 = vrot.lane.b32.xlu0 %v5275, 112
      %v5349 = vpop.permute.xlu0 %5348
      %v5387 = vadd.f32 %v5164, %v5277
      %v5388 = vadd.f32 %v5165, %v5279
      %v5389 = vadd.f32 %v5166, %v5281
      %v5390 = vadd.f32 %v5167, %v5283
      %v5391 = vadd.f32 %v5168, %v5285
      %v5392 = vadd.f32 %v5169, %v5287
      %v5393 = vadd.f32 %v5170, %v5289
      %v5394 = vadd.f32 %v5171, %v5291
      %v5395 = vadd.f32 %v5172, %v5293
      %v5396 = vadd.f32 %v5173, %v5295
      %v5397 = vadd.f32 %v5174, %v5297
      %v5398 = vadd.f32 %v5175, %v5299
      %v5399 = vadd.f32 %v5176, %v5301
      %v5400 = vadd.f32 %v5177, %v5303
      %v5401 = vadd.f32 %v5178, %v5305
      %v5402 = vadd.f32 %v5179, %v5307
      %v5403 = vadd.f32 %v5180, %v5309
      %v5404 = vadd.f32 %v5181, %v5311
      %v5405 = vadd.f32 %v5182, %v5313
      %v5406 = vadd.f32 %v5183, %v5315
      %v5407 = vadd.f32 %v5184, %v5317
      %v5408 = vadd.f32 %v5185, %v5319
      %v5409 = vadd.f32 %v5186, %v5321
      %v5410 = vadd.f32 %v5187, %v5323
      %v5411 = vadd.f32 %v5188, %v5325
      %v5412 = vadd.f32 %v5189, %v5327
      %v5413 = vadd.f32 %v5190, %v5329
      %v5414 = vadd.f32 %v5191, %v5331
      %v5415 = vadd.f32 %v5192, %v5333
      %v5416 = vadd.f32 %v5193, %v5335
      %v5417 = vadd.f32 %v5194, %v5337
      %v5418 = vadd.f32 %v5195, %v5339
      %v5419 = vadd.f32 %v5196, %v5341
      %v5420 = vadd.f32 %v5197, %v5343
      %v5421 = vadd.f32 %v5198, %v5345
      %v5422 = vadd.f32 %v5199, %v5347
      %v5423 = vadd.f32 %v5200, %v5349
      %v5424 = vrot.slane %v1722, 7
      %v5425 = vrot.slane %v1725, 7
      %v5426 = vsel %vm3521, %v5424, %v5425
      %v5427 = vrot.slane %v1727, 7
      %v5428 = vsel %vm3521, %v5425, %v5427
      %v5429 = vrot.slane %v1730, 7
      %v5430 = vsel %vm3521, %v5427, %v5429
      %v5431 = vrot.slane %v1732, 7
      %v5432 = vsel %vm3521, %v5429, %v5431
      %v5433 = vrot.slane %v1735, 7
      %v5434 = vsel %vm3521, %v5431, %v5433
      %v5435 = vrot.slane %v1737, 7
      %v5436 = vsel %vm3521, %v5433, %v5435
      %v5437 = vrot.slane %v1740, 7
      %v5438 = vsel %vm3521, %v5435, %v5437
      %v5439 = vrot.slane %v1742, 7
      %v5440 = vsel %vm3521, %v5437, %v5439
      %v5441 = vrot.slane %v1745, 7
      %v5442 = vsel %vm3521, %v5439, %v5441
      %v5443 = vrot.slane %v1747, 7
      %v5444 = vsel %vm3521, %v5441, %v5443
      %v5445 = vrot.slane %v1750, 7
      %v5446 = vsel %vm3521, %v5443, %v5445
      %v5447 = vrot.slane %v1752, 7
      %v5448 = vsel %vm3521, %v5445, %v5447
      %v5449 = vrot.slane %v1755, 7
      %v5450 = vsel %vm3521, %v5447, %v5449
      %v5451 = vrot.slane %v1757, 7
      %v5452 = vsel %vm3521, %v5449, %v5451
      %v5453 = vrot.slane %v1760, 7
      %v5454 = vsel %vm3521, %v5451, %v5453
      %v5455 = vrot.slane %v1762, 7
      %v5456 = vsel %vm3521, %v5453, %v5455
      %v5457 = vrot.slane %v1765, 7
      %v5458 = vsel %vm3521, %v5455, %v5457
      %v5459 = vrot.slane %v1767, 7
      %v5460 = vsel %vm3521, %v5457, %v5459
      %v5461 = vrot.slane %v1770, 7
      %v5462 = vsel %vm3521, %v5459, %v5461
      %v5463 = vrot.slane %v1772, 7
      %v5464 = vsel %vm3521, %v5461, %v5463
      %v5465 = vrot.slane %v1775, 7
      %v5466 = vsel %vm3521, %v5463, %v5465
      %v5467 = vrot.slane %v1777, 7
      %v5468 = vsel %vm3521, %v5465, %v5467
      %v5469 = vrot.slane %v1780, 7
      %v5470 = vsel %vm3521, %v5467, %v5469
      %v5471 = vrot.slane %v1782, 7
      %v5472 = vsel %vm3521, %v5469, %v5471
      %v5473 = vrot.slane %v1785, 7
      %v5474 = vsel %vm3521, %v5471, %v5473
      %v5475 = vrot.slane %v1787, 7
      %v5476 = vsel %vm3521, %v5473, %v5475
      %v5477 = vrot.slane %v1790, 7
      %v5478 = vsel %vm3521, %v5475, %v5477
      %v5479 = vrot.slane %v1792, 7
      %v5480 = vsel %vm3521, %v5477, %v5479
      %v5481 = vrot.slane %v1795, 7
      %v5482 = vsel %vm3521, %v5479, %v5481
      %v5483 = vrot.slane %v1797, 7
      %v5484 = vsel %vm3521, %v5481, %v5483
      %v5485 = vrot.slane %v1800, 7
      %v5486 = vsel %vm3521, %v5483, %v5485
      %v5487 = vrot.slane %v1802, 7
      %v5488 = vsel %vm3521, %v5485, %v5487
      %v5489 = vrot.slane %v1805, 7
      %v5490 = vsel %vm3521, %v5487, %v5489
      %v5491 = vrot.slane %v1807, 7
      %v5492 = vsel %vm3521, %v5489, %v5491
      %v5493 = vrot.slane %v1810, 7
      %v5494 = vsel %vm3521, %v5491, %v5493
      %v5495 = vrot.slane %v1812, 7
      %v5496 = vsel %vm3521, %v5493, %v5495
      %v5497 = vrot.slane %v1815, 7
      %v5498 = vsel %vm3521, %v5495, %v5497
      %5499 = vrot.lane.b32.xlu0 %v5426, 96
      %v5500 = vpop.permute.xlu0 %5499
      %5501 = vrot.lane.b32.xlu0 %v5428, 96
      %v5502 = vpop.permute.xlu0 %5501
      %5503 = vrot.lane.b32.xlu0 %v5430, 96
      %v5504 = vpop.permute.xlu0 %5503
      %5505 = vrot.lane.b32.xlu0 %v5432, 96
      %v5506 = vpop.permute.xlu0 %5505
      %5507 = vrot.lane.b32.xlu0 %v5434, 96
      %v5508 = vpop.permute.xlu0 %5507
      %5509 = vrot.lane.b32.xlu0 %v5436, 96
      %v5510 = vpop.permute.xlu0 %5509
      %5511 = vrot.lane.b32.xlu0 %v5438, 96
      %v5512 = vpop.permute.xlu0 %5511
      %5513 = vrot.lane.b32.xlu0 %v5440, 96
      %v5514 = vpop.permute.xlu0 %5513
      %5515 = vrot.lane.b32.xlu0 %v5442, 96
      %v5516 = vpop.permute.xlu0 %5515
      %5517 = vrot.lane.b32.xlu0 %v5444, 96
      %v5518 = vpop.permute.xlu0 %5517
      %5519 = vrot.lane.b32.xlu0 %v5446, 96
      %v5520 = vpop.permute.xlu0 %5519
      %5521 = vrot.lane.b32.xlu0 %v5448, 96
      %v5522 = vpop.permute.xlu0 %5521
      %5523 = vrot.lane.b32.xlu0 %v5450, 96
      %v5524 = vpop.permute.xlu0 %5523
      %5525 = vrot.lane.b32.xlu0 %v5452, 96
      %v5526 = vpop.permute.xlu0 %5525
      %5527 = vrot.lane.b32.xlu0 %v5454, 96
      %v5528 = vpop.permute.xlu0 %5527
      %5529 = vrot.lane.b32.xlu0 %v5456, 96
      %v5530 = vpop.permute.xlu0 %5529
      %5531 = vrot.lane.b32.xlu0 %v5458, 96
      %v5532 = vpop.permute.xlu0 %5531
      %5533 = vrot.lane.b32.xlu0 %v5460, 96
      %v5534 = vpop.permute.xlu0 %5533
      %5535 = vrot.lane.b32.xlu0 %v5462, 96
      %v5536 = vpop.permute.xlu0 %5535
      %5537 = vrot.lane.b32.xlu0 %v5464, 96
      %v5538 = vpop.permute.xlu0 %5537
      %5539 = vrot.lane.b32.xlu0 %v5466, 96
      %v5540 = vpop.permute.xlu0 %5539
      %5541 = vrot.lane.b32.xlu0 %v5468, 96
      %v5542 = vpop.permute.xlu0 %5541
      %5543 = vrot.lane.b32.xlu0 %v5470, 96
      %v5544 = vpop.permute.xlu0 %5543
      %5545 = vrot.lane.b32.xlu0 %v5472, 96
      %v5546 = vpop.permute.xlu0 %5545
      %5547 = vrot.lane.b32.xlu0 %v5474, 96
      %v5548 = vpop.permute.xlu0 %5547
      %5549 = vrot.lane.b32.xlu0 %v5476, 96
      %v5550 = vpop.permute.xlu0 %5549
      %5551 = vrot.lane.b32.xlu0 %v5478, 96
      %v5552 = vpop.permute.xlu0 %5551
      %5553 = vrot.lane.b32.xlu0 %v5480, 96
      %v5554 = vpop.permute.xlu0 %5553
      %5555 = vrot.lane.b32.xlu0 %v5482, 96
      %v5556 = vpop.permute.xlu0 %5555
      %5557 = vrot.lane.b32.xlu0 %v5484, 96
      %v5558 = vpop.permute.xlu0 %5557
      %5559 = vrot.lane.b32.xlu0 %v5486, 96
      %v5560 = vpop.permute.xlu0 %5559
      %5561 = vrot.lane.b32.xlu0 %v5488, 96
      %v5562 = vpop.permute.xlu0 %5561
      %5563 = vrot.lane.b32.xlu0 %v5490, 96
      %v5564 = vpop.permute.xlu0 %5563
      %5565 = vrot.lane.b32.xlu0 %v5492, 96
      %v5566 = vpop.permute.xlu0 %5565
      %5567 = vrot.lane.b32.xlu0 %v5494, 96
      %v5568 = vpop.permute.xlu0 %5567
      %5569 = vrot.lane.b32.xlu0 %v5496, 96
      %v5570 = vpop.permute.xlu0 %5569
      %5571 = vrot.lane.b32.xlu0 %v5498, 96
      %v5572 = vpop.permute.xlu0 %5571
      %v5610 = vadd.f32 %v5387, %v5500
      %v5611 = vadd.f32 %v5388, %v5502
      %v5612 = vadd.f32 %v5389, %v5504
      %v5613 = vadd.f32 %v5390, %v5506
      %v5614 = vadd.f32 %v5391, %v5508
      %v5615 = vadd.f32 %v5392, %v5510
      %v5616 = vadd.f32 %v5393, %v5512
      %v5617 = vadd.f32 %v5394, %v5514
      %v5618 = vadd.f32 %v5395, %v5516
      %v5619 = vadd.f32 %v5396, %v5518
      %v5620 = vadd.f32 %v5397, %v5520
      %v5621 = vadd.f32 %v5398, %v5522
      %v5622 = vadd.f32 %v5399, %v5524
      %v5623 = vadd.f32 %v5400, %v5526
      %v5624 = vadd.f32 %v5401, %v5528
      %v5625 = vadd.f32 %v5402, %v5530
      %v5626 = vadd.f32 %v5403, %v5532
      %v5627 = vadd.f32 %v5404, %v5534
      %v5628 = vadd.f32 %v5405, %v5536
      %v5629 = vadd.f32 %v5406, %v5538
      %v5630 = vadd.f32 %v5407, %v5540
      %v5631 = vadd.f32 %v5408, %v5542
      %v5632 = vadd.f32 %v5409, %v5544
      %v5633 = vadd.f32 %v5410, %v5546
      %v5634 = vadd.f32 %v5411, %v5548
      %v5635 = vadd.f32 %v5412, %v5550
      %v5636 = vadd.f32 %v5413, %v5552
      %v5637 = vadd.f32 %v5414, %v5554
      %v5638 = vadd.f32 %v5415, %v5556
      %v5639 = vadd.f32 %v5416, %v5558
      %v5640 = vadd.f32 %v5417, %v5560
      %v5641 = vadd.f32 %v5418, %v5562
      %v5642 = vadd.f32 %v5419, %v5564
      %v5643 = vadd.f32 %v5420, %v5566
      %v5644 = vadd.f32 %v5421, %v5568
      %v5645 = vadd.f32 %v5422, %v5570
      %v5646 = vadd.f32 %v5423, %v5572
      %5647 = vrot.lane.b32.xlu0 %v1725, 80
      %v5648 = vpop.permute.xlu0 %5647
      %5649 = vrot.lane.b32.xlu0 %v1727, 80
      %v5650 = vpop.permute.xlu0 %5649
      %5651 = vrot.lane.b32.xlu0 %v1730, 80
      %v5652 = vpop.permute.xlu0 %5651
      %5653 = vrot.lane.b32.xlu0 %v1732, 80
      %v5654 = vpop.permute.xlu0 %5653
      %5655 = vrot.lane.b32.xlu0 %v1735, 80
      %v5656 = vpop.permute.xlu0 %5655
      %5657 = vrot.lane.b32.xlu0 %v1737, 80
      %v5658 = vpop.permute.xlu0 %5657
      %5659 = vrot.lane.b32.xlu0 %v1740, 80
      %v5660 = vpop.permute.xlu0 %5659
      %5661 = vrot.lane.b32.xlu0 %v1742, 80
      %v5662 = vpop.permute.xlu0 %5661
      %5663 = vrot.lane.b32.xlu0 %v1745, 80
      %v5664 = vpop.permute.xlu0 %5663
      %5665 = vrot.lane.b32.xlu0 %v1747, 80
      %v5666 = vpop.permute.xlu0 %5665
      %5667 = vrot.lane.b32.xlu0 %v1750, 80
      %v5668 = vpop.permute.xlu0 %5667
      %5669 = vrot.lane.b32.xlu0 %v1752, 80
      %v5670 = vpop.permute.xlu0 %5669
      %5671 = vrot.lane.b32.xlu0 %v1755, 80
      %v5672 = vpop.permute.xlu0 %5671
      %5673 = vrot.lane.b32.xlu0 %v1757, 80
      %v5674 = vpop.permute.xlu0 %5673
      %5675 = vrot.lane.b32.xlu0 %v1760, 80
      %v5676 = vpop.permute.xlu0 %5675
      %5677 = vrot.lane.b32.xlu0 %v1762, 80
      %v5678 = vpop.permute.xlu0 %5677
      %5679 = vrot.lane.b32.xlu0 %v1765, 80
      %v5680 = vpop.permute.xlu0 %5679
      %5681 = vrot.lane.b32.xlu0 %v1767, 80
      %v5682 = vpop.permute.xlu0 %5681
      %5683 = vrot.lane.b32.xlu0 %v1770, 80
      %v5684 = vpop.permute.xlu0 %5683
      %5685 = vrot.lane.b32.xlu0 %v1772, 80
      %v5686 = vpop.permute.xlu0 %5685
      %5687 = vrot.lane.b32.xlu0 %v1775, 80
      %v5688 = vpop.permute.xlu0 %5687
      %5689 = vrot.lane.b32.xlu0 %v1777, 80
      %v5690 = vpop.permute.xlu0 %5689
      %5691 = vrot.lane.b32.xlu0 %v1780, 80
      %v5692 = vpop.permute.xlu0 %5691
      %5693 = vrot.lane.b32.xlu0 %v1782, 80
      %v5694 = vpop.permute.xlu0 %5693
      %5695 = vrot.lane.b32.xlu0 %v1785, 80
      %v5696 = vpop.permute.xlu0 %5695
      %5697 = vrot.lane.b32.xlu0 %v1787, 80
      %v5698 = vpop.permute.xlu0 %5697
      %5699 = vrot.lane.b32.xlu0 %v1790, 80
      %v5700 = vpop.permute.xlu0 %5699
      %5701 = vrot.lane.b32.xlu0 %v1792, 80
      %v5702 = vpop.permute.xlu0 %5701
      %5703 = vrot.lane.b32.xlu0 %v1795, 80
      %v5704 = vpop.permute.xlu0 %5703
      %5705 = vrot.lane.b32.xlu0 %v1797, 80
      %v5706 = vpop.permute.xlu0 %5705
      %5707 = vrot.lane.b32.xlu0 %v1800, 80
      %v5708 = vpop.permute.xlu0 %5707
      %5709 = vrot.lane.b32.xlu0 %v1802, 80
      %v5710 = vpop.permute.xlu0 %5709
      %5711 = vrot.lane.b32.xlu0 %v1805, 80
      %v5712 = vpop.permute.xlu0 %5711
      %5713 = vrot.lane.b32.xlu0 %v1807, 80
      %v5714 = vpop.permute.xlu0 %5713
      %5715 = vrot.lane.b32.xlu0 %v1810, 80
      %v5716 = vpop.permute.xlu0 %5715
      %5717 = vrot.lane.b32.xlu0 %v1812, 80
      %v5718 = vpop.permute.xlu0 %5717
      %5719 = vrot.lane.b32.xlu0 %v1815, 80
      %v5720 = vpop.permute.xlu0 %5719
      %v5758 = vadd.f32 %v5610, %v5648
      %v5759 = vadd.f32 %v5611, %v5650
      %v5760 = vadd.f32 %v5612, %v5652
      %v5761 = vadd.f32 %v5613, %v5654
      %v5762 = vadd.f32 %v5614, %v5656
      %v5763 = vadd.f32 %v5615, %v5658
      %v5764 = vadd.f32 %v5616, %v5660
      %v5765 = vadd.f32 %v5617, %v5662
      %v5766 = vadd.f32 %v5618, %v5664
      %v5767 = vadd.f32 %v5619, %v5666
      %v5768 = vadd.f32 %v5620, %v5668
      %v5769 = vadd.f32 %v5621, %v5670
      %v5770 = vadd.f32 %v5622, %v5672
      %v5771 = vadd.f32 %v5623, %v5674
      %v5772 = vadd.f32 %v5624, %v5676
      %v5773 = vadd.f32 %v5625, %v5678
      %v5774 = vadd.f32 %v5626, %v5680
      %v5775 = vadd.f32 %v5627, %v5682
      %v5776 = vadd.f32 %v5628, %v5684
      %v5777 = vadd.f32 %v5629, %v5686
      %v5778 = vadd.f32 %v5630, %v5688
      %v5779 = vadd.f32 %v5631, %v5690
      %v5780 = vadd.f32 %v5632, %v5692
      %v5781 = vadd.f32 %v5633, %v5694
      %v5782 = vadd.f32 %v5634, %v5696
      %v5783 = vadd.f32 %v5635, %v5698
      %v5784 = vadd.f32 %v5636, %v5700
      %v5785 = vadd.f32 %v5637, %v5702
      %v5786 = vadd.f32 %v5638, %v5704
      %v5787 = vadd.f32 %v5639, %v5706
      %v5788 = vadd.f32 %v5640, %v5708
      %v5789 = vadd.f32 %v5641, %v5710
      %v5790 = vadd.f32 %v5642, %v5712
      %v5791 = vadd.f32 %v5643, %v5714
      %v5792 = vadd.f32 %v5644, %v5716
      %v5793 = vadd.f32 %v5645, %v5718
      %v5794 = vadd.f32 %v5646, %v5720
      %5797 = vrot.lane.b32.xlu0 %v1730, 64
      %v5798 = vpop.permute.xlu0 %5797
      %5799 = vrot.lane.b32.xlu0 %v1732, 64
      %v5800 = vpop.permute.xlu0 %5799
      %5801 = vrot.lane.b32.xlu0 %v1735, 64
      %v5802 = vpop.permute.xlu0 %5801
      %5803 = vrot.lane.b32.xlu0 %v1737, 64
      %v5804 = vpop.permute.xlu0 %5803
      %5805 = vrot.lane.b32.xlu0 %v1740, 64
      %v5806 = vpop.permute.xlu0 %5805
      %5807 = vrot.lane.b32.xlu0 %v1742, 64
      %v5808 = vpop.permute.xlu0 %5807
      %5809 = vrot.lane.b32.xlu0 %v1745, 64
      %v5810 = vpop.permute.xlu0 %5809
      %5811 = vrot.lane.b32.xlu0 %v1747, 64
      %v5812 = vpop.permute.xlu0 %5811
      %5813 = vrot.lane.b32.xlu0 %v1750, 64
      %v5814 = vpop.permute.xlu0 %5813
      %5815 = vrot.lane.b32.xlu0 %v1752, 64
      %v5816 = vpop.permute.xlu0 %5815
      %5817 = vrot.lane.b32.xlu0 %v1755, 64
      %v5818 = vpop.permute.xlu0 %5817
      %5819 = vrot.lane.b32.xlu0 %v1757, 64
      %v5820 = vpop.permute.xlu0 %5819
      %5821 = vrot.lane.b32.xlu0 %v1760, 64
      %v5822 = vpop.permute.xlu0 %5821
      %5823 = vrot.lane.b32.xlu0 %v1762, 64
      %v5824 = vpop.permute.xlu0 %5823
      %5825 = vrot.lane.b32.xlu0 %v1765, 64
      %v5826 = vpop.permute.xlu0 %5825
      %5827 = vrot.lane.b32.xlu0 %v1767, 64
      %v5828 = vpop.permute.xlu0 %5827
      %5829 = vrot.lane.b32.xlu0 %v1770, 64
      %v5830 = vpop.permute.xlu0 %5829
      %5831 = vrot.lane.b32.xlu0 %v1772, 64
      %v5832 = vpop.permute.xlu0 %5831
      %5833 = vrot.lane.b32.xlu0 %v1775, 64
      %v5834 = vpop.permute.xlu0 %5833
      %5835 = vrot.lane.b32.xlu0 %v1777, 64
      %v5836 = vpop.permute.xlu0 %5835
      %5837 = vrot.lane.b32.xlu0 %v1780, 64
      %v5838 = vpop.permute.xlu0 %5837
      %5839 = vrot.lane.b32.xlu0 %v1782, 64
      %v5840 = vpop.permute.xlu0 %5839
      %5841 = vrot.lane.b32.xlu0 %v1785, 64
      %v5842 = vpop.permute.xlu0 %5841
      %5843 = vrot.lane.b32.xlu0 %v1787, 64
      %v5844 = vpop.permute.xlu0 %5843
      %5845 = vrot.lane.b32.xlu0 %v1790, 64
      %v5846 = vpop.permute.xlu0 %5845
      %5847 = vrot.lane.b32.xlu0 %v1792, 64
      %v5848 = vpop.permute.xlu0 %5847
      %5849 = vrot.lane.b32.xlu0 %v1795, 64
      %v5850 = vpop.permute.xlu0 %5849
      %5851 = vrot.lane.b32.xlu0 %v1797, 64
      %v5852 = vpop.permute.xlu0 %5851
      %5853 = vrot.lane.b32.xlu0 %v1800, 64
      %v5854 = vpop.permute.xlu0 %5853
      %5855 = vrot.lane.b32.xlu0 %v1802, 64
      %v5856 = vpop.permute.xlu0 %5855
      %5857 = vrot.lane.b32.xlu0 %v1805, 64
      %v5858 = vpop.permute.xlu0 %5857
      %5859 = vrot.lane.b32.xlu0 %v1807, 64
      %v5860 = vpop.permute.xlu0 %5859
      %5861 = vrot.lane.b32.xlu0 %v1810, 64
      %v5862 = vpop.permute.xlu0 %5861
      %5863 = vrot.lane.b32.xlu0 %v1812, 64
      %v5864 = vpop.permute.xlu0 %5863
      %5865 = vrot.lane.b32.xlu0 %v1815, 64
      %v5866 = vpop.permute.xlu0 %5865
      %5867 = vrot.lane.b32.xlu0 %v1817, 64
      %v5868 = vpop.permute.xlu0 %5867
      %5869 = vrot.lane.b32.xlu0 %v1820, 64
      %v5870 = vpop.permute.xlu0 %5869
      %v5908 = vadd.f32 %v5758, %v5798
      %v5909 = vadd.f32 %v5759, %v5800
      %v5910 = vadd.f32 %v5760, %v5802
      %v5911 = vadd.f32 %v5761, %v5804
      %v5912 = vadd.f32 %v5762, %v5806
      %v5913 = vadd.f32 %v5763, %v5808
      %v5914 = vadd.f32 %v5764, %v5810
      %v5915 = vadd.f32 %v5765, %v5812
      %v5916 = vadd.f32 %v5766, %v5814
      %v5917 = vadd.f32 %v5767, %v5816
      %v5918 = vadd.f32 %v5768, %v5818
      %v5919 = vadd.f32 %v5769, %v5820
      %v5920 = vadd.f32 %v5770, %v5822
      %v5921 = vadd.f32 %v5771, %v5824
      %v5922 = vadd.f32 %v5772, %v5826
      %v5923 = vadd.f32 %v5773, %v5828
      %v5924 = vadd.f32 %v5774, %v5830
      %v5925 = vadd.f32 %v5775, %v5832
      %v5926 = vadd.f32 %v5776, %v5834
      %v5927 = vadd.f32 %v5777, %v5836
      %v5928 = vadd.f32 %v5778, %v5838
      %v5929 = vadd.f32 %v5779, %v5840
      %v5930 = vadd.f32 %v5780, %v5842
      %v5931 = vadd.f32 %v5781, %v5844
      %v5932 = vadd.f32 %v5782, %v5846
      %v5933 = vadd.f32 %v5783, %v5848
      %v5934 = vadd.f32 %v5784, %v5850
      %v5935 = vadd.f32 %v5785, %v5852
      %v5936 = vadd.f32 %v5786, %v5854
      %v5937 = vadd.f32 %v5787, %v5856
      %v5938 = vadd.f32 %v5788, %v5858
      %v5939 = vadd.f32 %v5789, %v5860
      %v5940 = vadd.f32 %v5790, %v5862
      %v5941 = vadd.f32 %v5791, %v5864
      %v5942 = vadd.f32 %v5792, %v5866
      %v5943 = vadd.f32 %v5793, %v5868
      %v5944 = vadd.f32 %v5794, %v5870
      %v5945 = vrot.slane %v1730, 1
      %v5946 = vrot.slane %v1732, 1
      %v5947 = vsel %vm1986, %v5945, %v5946
      %v5948 = vrot.slane %v1735, 1
      %v5949 = vsel %vm1986, %v5946, %v5948
      %v5950 = vrot.slane %v1737, 1
      %v5951 = vsel %vm1986, %v5948, %v5950
      %v5952 = vrot.slane %v1740, 1
      %v5953 = vsel %vm1986, %v5950, %v5952
      %v5954 = vrot.slane %v1742, 1
      %v5955 = vsel %vm1986, %v5952, %v5954
      %v5956 = vrot.slane %v1745, 1
      %v5957 = vsel %vm1986, %v5954, %v5956
      %v5958 = vrot.slane %v1747, 1
      %v5959 = vsel %vm1986, %v5956, %v5958
      %v5960 = vrot.slane %v1750, 1
      %v5961 = vsel %vm1986, %v5958, %v5960
      %v5962 = vrot.slane %v1752, 1
      %v5963 = vsel %vm1986, %v5960, %v5962
      %v5964 = vrot.slane %v1755, 1
      %v5965 = vsel %vm1986, %v5962, %v5964
      %v5966 = vrot.slane %v1757, 1
      %v5967 = vsel %vm1986, %v5964, %v5966
      %v5968 = vrot.slane %v1760, 1
      %v5969 = vsel %vm1986, %v5966, %v5968
      %v5970 = vrot.slane %v1762, 1
      %v5971 = vsel %vm1986, %v5968, %v5970
      %v5972 = vrot.slane %v1765, 1
      %v5973 = vsel %vm1986, %v5970, %v5972
      %v5974 = vrot.slane %v1767, 1
      %v5975 = vsel %vm1986, %v5972, %v5974
      %v5976 = vrot.slane %v1770, 1
      %v5977 = vsel %vm1986, %v5974, %v5976
      %v5978 = vrot.slane %v1772, 1
      %v5979 = vsel %vm1986, %v5976, %v5978
      %v5980 = vrot.slane %v1775, 1
      %v5981 = vsel %vm1986, %v5978, %v5980
      %v5982 = vrot.slane %v1777, 1
      %v5983 = vsel %vm1986, %v5980, %v5982
      %v5984 = vrot.slane %v1780, 1
      %v5985 = vsel %vm1986, %v5982, %v5984
      %v5986 = vrot.slane %v1782, 1
      %v5987 = vsel %vm1986, %v5984, %v5986
      %v5988 = vrot.slane %v1785, 1
      %v5989 = vsel %vm1986, %v5986, %v5988
      %v5990 = vrot.slane %v1787, 1
      %v5991 = vsel %vm1986, %v5988, %v5990
      %v5992 = vrot.slane %v1790, 1
      %v5993 = vsel %vm1986, %v5990, %v5992
      %v5994 = vrot.slane %v1792, 1
      %v5995 = vsel %vm1986, %v5992, %v5994
      %v5996 = vrot.slane %v1795, 1
      %v5997 = vsel %vm1986, %v5994, %v5996
      %v5998 = vrot.slane %v1797, 1
      %v5999 = vsel %vm1986, %v5996, %v5998
      %v6000 = vrot.slane %v1800, 1
      %v6001 = vsel %vm1986, %v5998, %v6000
      %v6002 = vrot.slane %v1802, 1
      %v6003 = vsel %vm1986, %v6000, %v6002
      %v6004 = vrot.slane %v1805, 1
      %v6005 = vsel %vm1986, %v6002, %v6004
      %v6006 = vrot.slane %v1807, 1
      %v6007 = vsel %vm1986, %v6004, %v6006
      %v6008 = vrot.slane %v1810, 1
      %v6009 = vsel %vm1986, %v6006, %v6008
      %v6010 = vrot.slane %v1812, 1
      %v6011 = vsel %vm1986, %v6008, %v6010
      %v6012 = vrot.slane %v1815, 1
      %v6013 = vsel %vm1986, %v6010, %v6012
      %v6014 = vrot.slane %v1817, 1
      %v6015 = vsel %vm1986, %v6012, %v6014
      %v6016 = vrot.slane %v1820, 1
      %v6017 = vsel %vm1986, %v6014, %v6016
      %6018 = vrot.lane.b32.xlu0 %v5947, 48
      %v6019 = vpop.permute.xlu0 %6018
      %6020 = vrot.lane.b32.xlu0 %v5949, 48
      %v6021 = vpop.permute.xlu0 %6020
      %6022 = vrot.lane.b32.xlu0 %v5951, 48
      %v6023 = vpop.permute.xlu0 %6022
      %6024 = vrot.lane.b32.xlu0 %v5953, 48
      %v6025 = vpop.permute.xlu0 %6024
      %6026 = vrot.lane.b32.xlu0 %v5955, 48
      %v6027 = vpop.permute.xlu0 %6026
      %6028 = vrot.lane.b32.xlu0 %v5957, 48
      %v6029 = vpop.permute.xlu0 %6028
      %6030 = vrot.lane.b32.xlu0 %v5959, 48
      %v6031 = vpop.permute.xlu0 %6030
      %6032 = vrot.lane.b32.xlu0 %v5961, 48
      %v6033 = vpop.permute.xlu0 %6032
      %6034 = vrot.lane.b32.xlu0 %v5963, 48
      %v6035 = vpop.permute.xlu0 %6034
      %6036 = vrot.lane.b32.xlu0 %v5965, 48
      %v6037 = vpop.permute.xlu0 %6036
      %6038 = vrot.lane.b32.xlu0 %v5967, 48
      %v6039 = vpop.permute.xlu0 %6038
      %6040 = vrot.lane.b32.xlu0 %v5969, 48
      %v6041 = vpop.permute.xlu0 %6040
      %6042 = vrot.lane.b32.xlu0 %v5971, 48
      %v6043 = vpop.permute.xlu0 %6042
      %6044 = vrot.lane.b32.xlu0 %v5973, 48
      %v6045 = vpop.permute.xlu0 %6044
      %6046 = vrot.lane.b32.xlu0 %v5975, 48
      %v6047 = vpop.permute.xlu0 %6046
      %6048 = vrot.lane.b32.xlu0 %v5977, 48
      %v6049 = vpop.permute.xlu0 %6048
      %6050 = vrot.lane.b32.xlu0 %v5979, 48
      %v6051 = vpop.permute.xlu0 %6050
      %6052 = vrot.lane.b32.xlu0 %v5981, 48
      %v6053 = vpop.permute.xlu0 %6052
      %6054 = vrot.lane.b32.xlu0 %v5983, 48
      %v6055 = vpop.permute.xlu0 %6054
      %6056 = vrot.lane.b32.xlu0 %v5985, 48
      %v6057 = vpop.permute.xlu0 %6056
      %6058 = vrot.lane.b32.xlu0 %v5987, 48
      %v6059 = vpop.permute.xlu0 %6058
      %6060 = vrot.lane.b32.xlu0 %v5989, 48
      %v6061 = vpop.permute.xlu0 %6060
      %6062 = vrot.lane.b32.xlu0 %v5991, 48
      %v6063 = vpop.permute.xlu0 %6062
      %6064 = vrot.lane.b32.xlu0 %v5993, 48
      %v6065 = vpop.permute.xlu0 %6064
      %6066 = vrot.lane.b32.xlu0 %v5995, 48
      %v6067 = vpop.permute.xlu0 %6066
      %6068 = vrot.lane.b32.xlu0 %v5997, 48
      %v6069 = vpop.permute.xlu0 %6068
      %6070 = vrot.lane.b32.xlu0 %v5999, 48
      %v6071 = vpop.permute.xlu0 %6070
      %6072 = vrot.lane.b32.xlu0 %v6001, 48
      %v6073 = vpop.permute.xlu0 %6072
      %6074 = vrot.lane.b32.xlu0 %v6003, 48
      %v6075 = vpop.permute.xlu0 %6074
      %6076 = vrot.lane.b32.xlu0 %v6005, 48
      %v6077 = vpop.permute.xlu0 %6076
      %6078 = vrot.lane.b32.xlu0 %v6007, 48
      %v6079 = vpop.permute.xlu0 %6078
      %6080 = vrot.lane.b32.xlu0 %v6009, 48
      %v6081 = vpop.permute.xlu0 %6080
      %6082 = vrot.lane.b32.xlu0 %v6011, 48
      %v6083 = vpop.permute.xlu0 %6082
      %6084 = vrot.lane.b32.xlu0 %v6013, 48
      %v6085 = vpop.permute.xlu0 %6084
      %6086 = vrot.lane.b32.xlu0 %v6015, 48
      %v6087 = vpop.permute.xlu0 %6086
      %6088 = vrot.lane.b32.xlu0 %v6017, 48
      %v6089 = vpop.permute.xlu0 %6088
      %6090 = vrot.lane.b32.xlu0 %v6016, 48
      %v6091 = vpop.permute.xlu0 %6090
      %v6129 = vadd.f32 %v5908, %v6019
      %v6130 = vadd.f32 %v5909, %v6021
      %v6131 = vadd.f32 %v5910, %v6023
      %v6132 = vadd.f32 %v5911, %v6025
      %v6133 = vadd.f32 %v5912, %v6027
      %v6134 = vadd.f32 %v5913, %v6029
      %v6135 = vadd.f32 %v5914, %v6031
      %v6136 = vadd.f32 %v5915, %v6033
      %v6137 = vadd.f32 %v5916, %v6035
      %v6138 = vadd.f32 %v5917, %v6037
      %v6139 = vadd.f32 %v5918, %v6039
      %v6140 = vadd.f32 %v5919, %v6041
      %v6141 = vadd.f32 %v5920, %v6043
      %v6142 = vadd.f32 %v5921, %v6045
      %v6143 = vadd.f32 %v5922, %v6047
      %v6144 = vadd.f32 %v5923, %v6049
      %v6145 = vadd.f32 %v5924, %v6051
      %v6146 = vadd.f32 %v5925, %v6053
      %v6147 = vadd.f32 %v5926, %v6055
      %v6148 = vadd.f32 %v5927, %v6057
      %v6149 = vadd.f32 %v5928, %v6059
      %v6150 = vadd.f32 %v5929, %v6061
      %v6151 = vadd.f32 %v5930, %v6063
      %v6152 = vadd.f32 %v5931, %v6065
      %v6153 = vadd.f32 %v5932, %v6067
      %v6154 = vadd.f32 %v5933, %v6069
      %v6155 = vadd.f32 %v5934, %v6071
      %v6156 = vadd.f32 %v5935, %v6073
      %v6157 = vadd.f32 %v5936, %v6075
      %v6158 = vadd.f32 %v5937, %v6077
      %v6159 = vadd.f32 %v5938, %v6079
      %v6160 = vadd.f32 %v5939, %v6081
      %v6161 = vadd.f32 %v5940, %v6083
      %v6162 = vadd.f32 %v5941, %v6085
      %v6163 = vadd.f32 %v5942, %v6087
      %v6164 = vadd.f32 %v5943, %v6089
      %v6165 = vadd.f32 %v5944, %v6091
      %v6167 = vrot.slane %v1730, 2
      %v6168 = vrot.slane %v1732, 2
      %v6169 = vsel %vm2209, %v6167, %v6168
      %v6170 = vrot.slane %v1735, 2
      %v6171 = vsel %vm2209, %v6168, %v6170
      %v6172 = vrot.slane %v1737, 2
      %v6173 = vsel %vm2209, %v6170, %v6172
      %v6174 = vrot.slane %v1740, 2
      %v6175 = vsel %vm2209, %v6172, %v6174
      %v6176 = vrot.slane %v1742, 2
      %v6177 = vsel %vm2209, %v6174, %v6176
      %v6178 = vrot.slane %v1745, 2
      %v6179 = vsel %vm2209, %v6176, %v6178
      %v6180 = vrot.slane %v1747, 2
      %v6181 = vsel %vm2209, %v6178, %v6180
      %v6182 = vrot.slane %v1750, 2
      %v6183 = vsel %vm2209, %v6180, %v6182
      %v6184 = vrot.slane %v1752, 2
      %v6185 = vsel %vm2209, %v6182, %v6184
      %v6186 = vrot.slane %v1755, 2
      %v6187 = vsel %vm2209, %v6184, %v6186
      %v6188 = vrot.slane %v1757, 2
      %v6189 = vsel %vm2209, %v6186, %v6188
      %v6190 = vrot.slane %v1760, 2
      %v6191 = vsel %vm2209, %v6188, %v6190
      %v6192 = vrot.slane %v1762, 2
      %v6193 = vsel %vm2209, %v6190, %v6192
      %v6194 = vrot.slane %v1765, 2
      %v6195 = vsel %vm2209, %v6192, %v6194
      %v6196 = vrot.slane %v1767, 2
      %v6197 = vsel %vm2209, %v6194, %v6196
      %v6198 = vrot.slane %v1770, 2
      %v6199 = vsel %vm2209, %v6196, %v6198
      %v6200 = vrot.slane %v1772, 2
      %v6201 = vsel %vm2209, %v6198, %v6200
      %v6202 = vrot.slane %v1775, 2
      %v6203 = vsel %vm2209, %v6200, %v6202
      %v6204 = vrot.slane %v1777, 2
      %v6205 = vsel %vm2209, %v6202, %v6204
      %v6206 = vrot.slane %v1780, 2
      %v6207 = vsel %vm2209, %v6204, %v6206
      %v6208 = vrot.slane %v1782, 2
      %v6209 = vsel %vm2209, %v6206, %v6208
      %v6210 = vrot.slane %v1785, 2
      %v6211 = vsel %vm2209, %v6208, %v6210
      %v6212 = vrot.slane %v1787, 2
      %v6213 = vsel %vm2209, %v6210, %v6212
      %v6214 = vrot.slane %v1790, 2
      %v6215 = vsel %vm2209, %v6212, %v6214
      %v6216 = vrot.slane %v1792, 2
      %v6217 = vsel %vm2209, %v6214, %v6216
      %v6218 = vrot.slane %v1795, 2
      %v6219 = vsel %vm2209, %v6216, %v6218
      %v6220 = vrot.slane %v1797, 2
      %v6221 = vsel %vm2209, %v6218, %v6220
      %v6222 = vrot.slane %v1800, 2
      %v6223 = vsel %vm2209, %v6220, %v6222
      %v6224 = vrot.slane %v1802, 2
      %v6225 = vsel %vm2209, %v6222, %v6224
      %v6226 = vrot.slane %v1805, 2
      %v6227 = vsel %vm2209, %v6224, %v6226
      %v6228 = vrot.slane %v1807, 2
      %v6229 = vsel %vm2209, %v6226, %v6228
      %v6230 = vrot.slane %v1810, 2
      %v6231 = vsel %vm2209, %v6228, %v6230
      %v6232 = vrot.slane %v1812, 2
      %v6233 = vsel %vm2209, %v6230, %v6232
      %v6234 = vrot.slane %v1815, 2
      %v6235 = vsel %vm2209, %v6232, %v6234
      %v6236 = vrot.slane %v1817, 2
      %v6237 = vsel %vm2209, %v6234, %v6236
      %v6238 = vrot.slane %v1820, 2
      %v6239 = vsel %vm2209, %v6236, %v6238
      %v6240 = vrot.slane %v1822, 2
      %v6241 = vsel %vm2209, %v6238, %v6240
      %6242 = vrot.lane.b32.xlu0 %v6169, 32
      %v6243 = vpop.permute.xlu0 %6242
      %6244 = vrot.lane.b32.xlu0 %v6171, 32
      %v6245 = vpop.permute.xlu0 %6244
      %6246 = vrot.lane.b32.xlu0 %v6173, 32
      %v6247 = vpop.permute.xlu0 %6246
      %6248 = vrot.lane.b32.xlu0 %v6175, 32
      %v6249 = vpop.permute.xlu0 %6248
      %6250 = vrot.lane.b32.xlu0 %v6177, 32
      %v6251 = vpop.permute.xlu0 %6250
      %6252 = vrot.lane.b32.xlu0 %v6179, 32
      %v6253 = vpop.permute.xlu0 %6252
      %6254 = vrot.lane.b32.xlu0 %v6181, 32
      %v6255 = vpop.permute.xlu0 %6254
      %6256 = vrot.lane.b32.xlu0 %v6183, 32
      %v6257 = vpop.permute.xlu0 %6256
      %6258 = vrot.lane.b32.xlu0 %v6185, 32
      %v6259 = vpop.permute.xlu0 %6258
      %6260 = vrot.lane.b32.xlu0 %v6187, 32
      %v6261 = vpop.permute.xlu0 %6260
      %6262 = vrot.lane.b32.xlu0 %v6189, 32
      %v6263 = vpop.permute.xlu0 %6262
      %6264 = vrot.lane.b32.xlu0 %v6191, 32
      %v6265 = vpop.permute.xlu0 %6264
      %6266 = vrot.lane.b32.xlu0 %v6193, 32
      %v6267 = vpop.permute.xlu0 %6266
      %6268 = vrot.lane.b32.xlu0 %v6195, 32
      %v6269 = vpop.permute.xlu0 %6268
      %6270 = vrot.lane.b32.xlu0 %v6197, 32
      %v6271 = vpop.permute.xlu0 %6270
      %6272 = vrot.lane.b32.xlu0 %v6199, 32
      %v6273 = vpop.permute.xlu0 %6272
      %6274 = vrot.lane.b32.xlu0 %v6201, 32
      %v6275 = vpop.permute.xlu0 %6274
      %6276 = vrot.lane.b32.xlu0 %v6203, 32
      %v6277 = vpop.permute.xlu0 %6276
      %6278 = vrot.lane.b32.xlu0 %v6205, 32
      %v6279 = vpop.permute.xlu0 %6278
      %6280 = vrot.lane.b32.xlu0 %v6207, 32
      %v6281 = vpop.permute.xlu0 %6280
      %6282 = vrot.lane.b32.xlu0 %v6209, 32
      %v6283 = vpop.permute.xlu0 %6282
      %6284 = vrot.lane.b32.xlu0 %v6211, 32
      %v6285 = vpop.permute.xlu0 %6284
      %6286 = vrot.lane.b32.xlu0 %v6213, 32
      %v6287 = vpop.permute.xlu0 %6286
      %6288 = vrot.lane.b32.xlu0 %v6215, 32
      %v6289 = vpop.permute.xlu0 %6288
      %6290 = vrot.lane.b32.xlu0 %v6217, 32
      %v6291 = vpop.permute.xlu0 %6290
      %6292 = vrot.lane.b32.xlu0 %v6219, 32
      %v6293 = vpop.permute.xlu0 %6292
      %6294 = vrot.lane.b32.xlu0 %v6221, 32
      %v6295 = vpop.permute.xlu0 %6294
      %6296 = vrot.lane.b32.xlu0 %v6223, 32
      %v6297 = vpop.permute.xlu0 %6296
      %6298 = vrot.lane.b32.xlu0 %v6225, 32
      %v6299 = vpop.permute.xlu0 %6298
      %6300 = vrot.lane.b32.xlu0 %v6227, 32
      %v6301 = vpop.permute.xlu0 %6300
      %6302 = vrot.lane.b32.xlu0 %v6229, 32
      %v6303 = vpop.permute.xlu0 %6302
      %6304 = vrot.lane.b32.xlu0 %v6231, 32
      %v6305 = vpop.permute.xlu0 %6304
      %6306 = vrot.lane.b32.xlu0 %v6233, 32
      %v6307 = vpop.permute.xlu0 %6306
      %6308 = vrot.lane.b32.xlu0 %v6235, 32
      %v6309 = vpop.permute.xlu0 %6308
      %6310 = vrot.lane.b32.xlu0 %v6237, 32
      %v6311 = vpop.permute.xlu0 %6310
      %6312 = vrot.lane.b32.xlu0 %v6239, 32
      %v6313 = vpop.permute.xlu0 %6312
      %6314 = vrot.lane.b32.xlu0 %v6241, 32
      %v6315 = vpop.permute.xlu0 %6314
      %v6353 = vadd.f32 %v6129, %v6243
      %v6354 = vadd.f32 %v6130, %v6245
      %v6355 = vadd.f32 %v6131, %v6247
      %v6356 = vadd.f32 %v6132, %v6249
      %v6357 = vadd.f32 %v6133, %v6251
      %v6358 = vadd.f32 %v6134, %v6253
      %v6359 = vadd.f32 %v6135, %v6255
      %v6360 = vadd.f32 %v6136, %v6257
      %v6361 = vadd.f32 %v6137, %v6259
      %v6362 = vadd.f32 %v6138, %v6261
      %v6363 = vadd.f32 %v6139, %v6263
      %v6364 = vadd.f32 %v6140, %v6265
      %v6365 = vadd.f32 %v6141, %v6267
      %v6366 = vadd.f32 %v6142, %v6269
      %v6367 = vadd.f32 %v6143, %v6271
      %v6368 = vadd.f32 %v6144, %v6273
      %v6369 = vadd.f32 %v6145, %v6275
      %v6370 = vadd.f32 %v6146, %v6277
      %v6371 = vadd.f32 %v6147, %v6279
      %v6372 = vadd.f32 %v6148, %v6281
      %v6373 = vadd.f32 %v6149, %v6283
      %v6374 = vadd.f32 %v6150, %v6285
      %v6375 = vadd.f32 %v6151, %v6287
      %v6376 = vadd.f32 %v6152, %v6289
      %v6377 = vadd.f32 %v6153, %v6291
      %v6378 = vadd.f32 %v6154, %v6293
      %v6379 = vadd.f32 %v6155, %v6295
      %v6380 = vadd.f32 %v6156, %v6297
      %v6381 = vadd.f32 %v6157, %v6299
      %v6382 = vadd.f32 %v6158, %v6301
      %v6383 = vadd.f32 %v6159, %v6303
      %v6384 = vadd.f32 %v6160, %v6305
      %v6385 = vadd.f32 %v6161, %v6307
      %v6386 = vadd.f32 %v6162, %v6309
      %v6387 = vadd.f32 %v6163, %v6311
      %v6388 = vadd.f32 %v6164, %v6313
      %v6389 = vadd.f32 %v6165, %v6315
      %v6390 = vrot.slane %v1730, 3
      %v6391 = vrot.slane %v1732, 3
      %v6392 = vsel %vm2433, %v6390, %v6391
      %v6393 = vrot.slane %v1735, 3
      %v6394 = vsel %vm2433, %v6391, %v6393
      %v6395 = vrot.slane %v1737, 3
      %v6396 = vsel %vm2433, %v6393, %v6395
      %v6397 = vrot.slane %v1740, 3
      %v6398 = vsel %vm2433, %v6395, %v6397
      %v6399 = vrot.slane %v1742, 3
      %v6400 = vsel %vm2433, %v6397, %v6399
      %v6401 = vrot.slane %v1745, 3
      %v6402 = vsel %vm2433, %v6399, %v6401
      %v6403 = vrot.slane %v1747, 3
      %v6404 = vsel %vm2433, %v6401, %v6403
      %v6405 = vrot.slane %v1750, 3
      %v6406 = vsel %vm2433, %v6403, %v6405
      %v6407 = vrot.slane %v1752, 3
      %v6408 = vsel %vm2433, %v6405, %v6407
      %v6409 = vrot.slane %v1755, 3
      %v6410 = vsel %vm2433, %v6407, %v6409
      %v6411 = vrot.slane %v1757, 3
      %v6412 = vsel %vm2433, %v6409, %v6411
      %v6413 = vrot.slane %v1760, 3
      %v6414 = vsel %vm2433, %v6411, %v6413
      %v6415 = vrot.slane %v1762, 3
      %v6416 = vsel %vm2433, %v6413, %v6415
      %v6417 = vrot.slane %v1765, 3
      %v6418 = vsel %vm2433, %v6415, %v6417
      %v6419 = vrot.slane %v1767, 3
      %v6420 = vsel %vm2433, %v6417, %v6419
      %v6421 = vrot.slane %v1770, 3
      %v6422 = vsel %vm2433, %v6419, %v6421
      %v6423 = vrot.slane %v1772, 3
      %v6424 = vsel %vm2433, %v6421, %v6423
      %v6425 = vrot.slane %v1775, 3
      %v6426 = vsel %vm2433, %v6423, %v6425
      %v6427 = vrot.slane %v1777, 3
      %v6428 = vsel %vm2433, %v6425, %v6427
      %v6429 = vrot.slane %v1780, 3
      %v6430 = vsel %vm2433, %v6427, %v6429
      %v6431 = vrot.slane %v1782, 3
      %v6432 = vsel %vm2433, %v6429, %v6431
      %v6433 = vrot.slane %v1785, 3
      %v6434 = vsel %vm2433, %v6431, %v6433
      %v6435 = vrot.slane %v1787, 3
      %v6436 = vsel %vm2433, %v6433, %v6435
      %v6437 = vrot.slane %v1790, 3
      %v6438 = vsel %vm2433, %v6435, %v6437
      %v6439 = vrot.slane %v1792, 3
      %v6440 = vsel %vm2433, %v6437, %v6439
      %v6441 = vrot.slane %v1795, 3
      %v6442 = vsel %vm2433, %v6439, %v6441
      %v6443 = vrot.slane %v1797, 3
      %v6444 = vsel %vm2433, %v6441, %v6443
      %v6445 = vrot.slane %v1800, 3
      %v6446 = vsel %vm2433, %v6443, %v6445
      %v6447 = vrot.slane %v1802, 3
      %v6448 = vsel %vm2433, %v6445, %v6447
      %v6449 = vrot.slane %v1805, 3
      %v6450 = vsel %vm2433, %v6447, %v6449
      %v6451 = vrot.slane %v1807, 3
      %v6452 = vsel %vm2433, %v6449, %v6451
      %v6453 = vrot.slane %v1810, 3
      %v6454 = vsel %vm2433, %v6451, %v6453
      %v6455 = vrot.slane %v1812, 3
      %v6456 = vsel %vm2433, %v6453, %v6455
      %v6457 = vrot.slane %v1815, 3
      %v6458 = vsel %vm2433, %v6455, %v6457
      %v6459 = vrot.slane %v1817, 3
      %v6460 = vsel %vm2433, %v6457, %v6459
      %v6461 = vrot.slane %v1820, 3
      %v6462 = vsel %vm2433, %v6459, %v6461
      %v6463 = vrot.slane %v1822, 3
      %v6464 = vsel %vm2433, %v6461, %v6463
      %6465 = vrot.lane.b32.xlu0 %v6392, 16
      %v6466 = vpop.permute.xlu0 %6465
      %6467 = vrot.lane.b32.xlu0 %v6394, 16
      %v6468 = vpop.permute.xlu0 %6467
      %6469 = vrot.lane.b32.xlu0 %v6396, 16
      %v6470 = vpop.permute.xlu0 %6469
      %6471 = vrot.lane.b32.xlu0 %v6398, 16
      %v6472 = vpop.permute.xlu0 %6471
      %6473 = vrot.lane.b32.xlu0 %v6400, 16
      %v6474 = vpop.permute.xlu0 %6473
      %6475 = vrot.lane.b32.xlu0 %v6402, 16
      %v6476 = vpop.permute.xlu0 %6475
      %6477 = vrot.lane.b32.xlu0 %v6404, 16
      %v6478 = vpop.permute.xlu0 %6477
      %6479 = vrot.lane.b32.xlu0 %v6406, 16
      %v6480 = vpop.permute.xlu0 %6479
      %6481 = vrot.lane.b32.xlu0 %v6408, 16
      %v6482 = vpop.permute.xlu0 %6481
      %6483 = vrot.lane.b32.xlu0 %v6410, 16
      %v6484 = vpop.permute.xlu0 %6483
      %6485 = vrot.lane.b32.xlu0 %v6412, 16
      %v6486 = vpop.permute.xlu0 %6485
      %6487 = vrot.lane.b32.xlu0 %v6414, 16
      %v6488 = vpop.permute.xlu0 %6487
      %6489 = vrot.lane.b32.xlu0 %v6416, 16
      %v6490 = vpop.permute.xlu0 %6489
      %6491 = vrot.lane.b32.xlu0 %v6418, 16
      %v6492 = vpop.permute.xlu0 %6491
      %6493 = vrot.lane.b32.xlu0 %v6420, 16
      %v6494 = vpop.permute.xlu0 %6493
      %6495 = vrot.lane.b32.xlu0 %v6422, 16
      %v6496 = vpop.permute.xlu0 %6495
      %6497 = vrot.lane.b32.xlu0 %v6424, 16
      %v6498 = vpop.permute.xlu0 %6497
      %6499 = vrot.lane.b32.xlu0 %v6426, 16
      %v6500 = vpop.permute.xlu0 %6499
      %6501 = vrot.lane.b32.xlu0 %v6428, 16
      %v6502 = vpop.permute.xlu0 %6501
      %6503 = vrot.lane.b32.xlu0 %v6430, 16
      %v6504 = vpop.permute.xlu0 %6503
      %6505 = vrot.lane.b32.xlu0 %v6432, 16
      %v6506 = vpop.permute.xlu0 %6505
      %6507 = vrot.lane.b32.xlu0 %v6434, 16
      %v6508 = vpop.permute.xlu0 %6507
      %6509 = vrot.lane.b32.xlu0 %v6436, 16
      %v6510 = vpop.permute.xlu0 %6509
      %6511 = vrot.lane.b32.xlu0 %v6438, 16
      %v6512 = vpop.permute.xlu0 %6511
      %6513 = vrot.lane.b32.xlu0 %v6440, 16
      %v6514 = vpop.permute.xlu0 %6513
      %6515 = vrot.lane.b32.xlu0 %v6442, 16
      %v6516 = vpop.permute.xlu0 %6515
      %6517 = vrot.lane.b32.xlu0 %v6444, 16
      %v6518 = vpop.permute.xlu0 %6517
      %6519 = vrot.lane.b32.xlu0 %v6446, 16
      %v6520 = vpop.permute.xlu0 %6519
      %6521 = vrot.lane.b32.xlu0 %v6448, 16
      %v6522 = vpop.permute.xlu0 %6521
      %6523 = vrot.lane.b32.xlu0 %v6450, 16
      %v6524 = vpop.permute.xlu0 %6523
      %6525 = vrot.lane.b32.xlu0 %v6452, 16
      %v6526 = vpop.permute.xlu0 %6525
      %6527 = vrot.lane.b32.xlu0 %v6454, 16
      %v6528 = vpop.permute.xlu0 %6527
      %6529 = vrot.lane.b32.xlu0 %v6456, 16
      %v6530 = vpop.permute.xlu0 %6529
      %6531 = vrot.lane.b32.xlu0 %v6458, 16
      %v6532 = vpop.permute.xlu0 %6531
      %6533 = vrot.lane.b32.xlu0 %v6460, 16
      %v6534 = vpop.permute.xlu0 %6533
      %6535 = vrot.lane.b32.xlu0 %v6462, 16
      %v6536 = vpop.permute.xlu0 %6535
      %6537 = vrot.lane.b32.xlu0 %v6464, 16
      %v6538 = vpop.permute.xlu0 %6537
      %v6576 = vadd.f32 %v6353, %v6466
      %v6577 = vadd.f32 %v6354, %v6468
      %v6578 = vadd.f32 %v6355, %v6470
      %v6579 = vadd.f32 %v6356, %v6472
      %v6580 = vadd.f32 %v6357, %v6474
      %v6581 = vadd.f32 %v6358, %v6476
      %v6582 = vadd.f32 %v6359, %v6478
      %v6583 = vadd.f32 %v6360, %v6480
      %v6584 = vadd.f32 %v6361, %v6482
      %v6585 = vadd.f32 %v6362, %v6484
      %v6586 = vadd.f32 %v6363, %v6486
      %v6587 = vadd.f32 %v6364, %v6488
      %v6588 = vadd.f32 %v6365, %v6490
      %v6589 = vadd.f32 %v6366, %v6492
      %v6590 = vadd.f32 %v6367, %v6494
      %v6591 = vadd.f32 %v6368, %v6496
      %v6592 = vadd.f32 %v6369, %v6498
      %v6593 = vadd.f32 %v6370, %v6500
      %v6594 = vadd.f32 %v6371, %v6502
      %v6595 = vadd.f32 %v6372, %v6504
      %v6596 = vadd.f32 %v6373, %v6506
      %v6597 = vadd.f32 %v6374, %v6508
      %v6598 = vadd.f32 %v6375, %v6510
      %v6599 = vadd.f32 %v6376, %v6512
      %v6600 = vadd.f32 %v6377, %v6514
      %v6601 = vadd.f32 %v6378, %v6516
      %v6602 = vadd.f32 %v6379, %v6518
      %v6603 = vadd.f32 %v6380, %v6520
      %v6604 = vadd.f32 %v6381, %v6522
      %v6605 = vadd.f32 %v6382, %v6524
      %v6606 = vadd.f32 %v6383, %v6526
      %v6607 = vadd.f32 %v6384, %v6528
      %v6608 = vadd.f32 %v6385, %v6530
      %v6609 = vadd.f32 %v6386, %v6532
      %v6610 = vadd.f32 %v6387, %v6534
      %v6611 = vadd.f32 %v6388, %v6536
      %v6612 = vadd.f32 %v6389, %v6538
      %v6651 = vrot.slane %v1852, 4
      %v6652 = vrot.slane %v1854, 4
      %v6653 = vsel %vm2657, %v6651, %v6652
      %v6654 = vrot.slane %v1857, 4
      %v6655 = vsel %vm2657, %v6652, %v6654
      %v6656 = vrot.slane %v1859, 4
      %v6657 = vsel %vm2657, %v6654, %v6656
      %v6658 = vrot.slane %v1862, 4
      %v6659 = vsel %vm2657, %v6656, %v6658
      %v6660 = vrot.slane %v1864, 4
      %v6661 = vsel %vm2657, %v6658, %v6660
      %v6662 = vrot.slane %v1867, 4
      %v6663 = vsel %vm2657, %v6660, %v6662
      %v6664 = vrot.slane %v1869, 4
      %v6665 = vsel %vm2657, %v6662, %v6664
      %v6666 = vrot.slane %v1872, 4
      %v6667 = vsel %vm2657, %v6664, %v6666
      %v6668 = vrot.slane %v1874, 4
      %v6669 = vsel %vm2657, %v6666, %v6668
      %v6670 = vrot.slane %v1877, 4
      %v6671 = vsel %vm2657, %v6668, %v6670
      %v6672 = vrot.slane %v1879, 4
      %v6673 = vsel %vm2657, %v6670, %v6672
      %v6674 = vrot.slane %v1882, 4
      %v6675 = vsel %vm2657, %v6672, %v6674
      %v6676 = vrot.slane %v1884, 4
      %v6677 = vsel %vm2657, %v6674, %v6676
      %v6678 = vrot.slane %v1887, 4
      %v6679 = vsel %vm2657, %v6676, %v6678
      %v6680 = vrot.slane %v1889, 4
      %v6681 = vsel %vm2657, %v6678, %v6680
      %v6682 = vrot.slane %v1892, 4
      %v6683 = vsel %vm2657, %v6680, %v6682
      %v6684 = vrot.slane %v1894, 4
      %v6685 = vsel %vm2657, %v6682, %v6684
      %v6686 = vrot.slane %v1897, 4
      %v6687 = vsel %vm2657, %v6684, %v6686
      %v6688 = vrot.slane %v1899, 4
      %v6689 = vsel %vm2657, %v6686, %v6688
      %v6690 = vrot.slane %v1902, 4
      %v6691 = vsel %vm2657, %v6688, %v6690
      %v6692 = vrot.slane %v1904, 4
      %v6693 = vsel %vm2657, %v6690, %v6692
      %v6694 = vrot.slane %v1907, 4
      %v6695 = vsel %vm2657, %v6692, %v6694
      %v6696 = vrot.slane %v1909, 4
      %v6697 = vsel %vm2657, %v6694, %v6696
      %v6698 = vrot.slane %v1912, 4
      %v6699 = vsel %vm2657, %v6696, %v6698
      %v6700 = vrot.slane %v1914, 4
      %v6701 = vsel %vm2657, %v6698, %v6700
      %v6702 = vrot.slane %v1917, 4
      %v6703 = vsel %vm2657, %v6700, %v6702
      %v6704 = vrot.slane %v1919, 4
      %v6705 = vsel %vm2657, %v6702, %v6704
      %v6706 = vrot.slane %v1922, 4
      %v6707 = vsel %vm2657, %v6704, %v6706
      %v6708 = vrot.slane %v1924, 4
      %v6709 = vsel %vm2657, %v6706, %v6708
      %v6710 = vrot.slane %v1927, 4
      %v6711 = vsel %vm2657, %v6708, %v6710
      %v6712 = vrot.slane %v1929, 4
      %v6713 = vsel %vm2657, %v6710, %v6712
      %v6714 = vrot.slane %v1932, 4
      %v6715 = vsel %vm2657, %v6712, %v6714
      %v6716 = vrot.slane %v1934, 4
      %v6717 = vsel %vm2657, %v6714, %v6716
      %v6718 = vrot.slane %v1937, 4
      %v6719 = vsel %vm2657, %v6716, %v6718
      %v6720 = vrot.slane %v1939, 4
      %v6721 = vsel %vm2657, %v6718, %v6720
      %v6722 = vrot.slane %v1942, 4
      %v6723 = vsel %vm2657, %v6720, %v6722
      %v6724 = vrot.slane %v1944, 4
      %v6725 = vsel %vm2657, %v6722, %v6724
      %v6763 = vadd.f32 %v6576, %v6653
      %v6764 = vadd.f32 %v6577, %v6655
      %v6765 = vadd.f32 %v6578, %v6657
      %v6766 = vadd.f32 %v6579, %v6659
      %v6767 = vadd.f32 %v6580, %v6661
      %v6768 = vadd.f32 %v6581, %v6663
      %v6769 = vadd.f32 %v6582, %v6665
      %v6770 = vadd.f32 %v6583, %v6667
      %v6771 = vadd.f32 %v6584, %v6669
      %v6772 = vadd.f32 %v6585, %v6671
      %v6773 = vadd.f32 %v6586, %v6673
      %v6774 = vadd.f32 %v6587, %v6675
      %v6775 = vadd.f32 %v6588, %v6677
      %v6776 = vadd.f32 %v6589, %v6679
      %v6777 = vadd.f32 %v6590, %v6681
      %v6778 = vadd.f32 %v6591, %v6683
      %v6779 = vadd.f32 %v6592, %v6685
      %v6780 = vadd.f32 %v6593, %v6687
      %v6781 = vadd.f32 %v6594, %v6689
      %v6782 = vadd.f32 %v6595, %v6691
      %v6783 = vadd.f32 %v6596, %v6693
      %v6784 = vadd.f32 %v6597, %v6695
      %v6785 = vadd.f32 %v6598, %v6697
      %v6786 = vadd.f32 %v6599, %v6699
      %v6787 = vadd.f32 %v6600, %v6701
      %v6788 = vadd.f32 %v6601, %v6703
      %v6789 = vadd.f32 %v6602, %v6705
      %v6790 = vadd.f32 %v6603, %v6707
      %v6791 = vadd.f32 %v6604, %v6709
      %v6792 = vadd.f32 %v6605, %v6711
      %v6793 = vadd.f32 %v6606, %v6713
      %v6794 = vadd.f32 %v6607, %v6715
      %v6795 = vadd.f32 %v6608, %v6717
      %v6796 = vadd.f32 %v6609, %v6719
      %v6797 = vadd.f32 %v6610, %v6721
      %v6798 = vadd.f32 %v6611, %v6723
      %v6799 = vadd.f32 %v6612, %v6725
      %v6800 = vld [vmem:[%s6] sm:$0xff]
      %v6801 = vld [vmem:[%s6 + $0x8] sm:$0xff]
      %v6802 = vld [vmem:[%s6 + $0x10] sm:$0xff]
      %v6803 = vld [vmem:[%s6 + $0x18] sm:$0xff]
      %v6804 = vld [vmem:[%s6 + $0x20] sm:$0xff]
      %v6805 = vld [vmem:[%s6 + $0x28] sm:$0xff]
      %v6806 = vld [vmem:[%s6 + $0x30] sm:$0xff]
      %v6807 = vld [vmem:[%s6 + $0x38] sm:$0xff]
      %v6808 = vld [vmem:[%s6 + $0x40] sm:$0xff]
      %v6809 = vld [vmem:[%s6 + $0x48] sm:$0xff]
      %v6810 = vld [vmem:[%s6 + $0x50] sm:$0xff]
      %v6811 = vld [vmem:[%s6 + $0x58] sm:$0xff]
      %v6812 = vld [vmem:[%s6 + $0x60] sm:$0xff]
      %v6813 = vld [vmem:[%s6 + $0x68] sm:$0xff]
      %v6814 = vld [vmem:[%s6 + $0x70] sm:$0xff]
      %v6815 = vld [vmem:[%s6 + $0x78] sm:$0xff]
      %v6816 = vld [vmem:[%s6 + $0x80] sm:$0xff]
      %v6817 = vld [vmem:[%s6 + $0x88] sm:$0xff]
      %v6818 = vld [vmem:[%s6 + $0x90] sm:$0xff]
      %v6819 = vld [vmem:[%s6 + $0x98] sm:$0xff]
      %v6820 = vld [vmem:[%s6 + $0xa0] sm:$0xff]
      %v6821 = vld [vmem:[%s6 + $0xa8] sm:$0xff]
      %v6822 = vld [vmem:[%s6 + $0xb0] sm:$0xff]
      %v6823 = vld [vmem:[%s6 + $0xb8] sm:$0xff]
      %v6824 = vld [vmem:[%s6 + $0xc0] sm:$0xff]
      %v6825 = vld [vmem:[%s6 + $0xc8] sm:$0xff]
      %v6826 = vld [vmem:[%s6 + $0xd0] sm:$0xff]
      %v6827 = vld [vmem:[%s6 + $0xd8] sm:$0xff]
      %v6828 = vld [vmem:[%s6 + $0xe0] sm:$0xff]
      %v6829 = vld [vmem:[%s6 + $0xe8] sm:$0xff]
      %v6830 = vld [vmem:[%s6 + $0xf0] sm:$0xff]
      %v6831 = vld [vmem:[%s6 + $0xf8] sm:$0xff]
      %v6832 = vld [vmem:[%s6 + $0x100] sm:$0xff]
      %v6833 = vld [vmem:[%s6 + $0x108] sm:$0xff]
      %v6834 = vld [vmem:[%s6 + $0x110] sm:$0xff]
      %v6835 = vld [vmem:[%s6 + $0x118] sm:$0xff]
      %v6836 = vld [vmem:[%s6 + $0x120] sm:$0xff]
      %v6837 = vld [vmem:[%s6 + $0x128] sm:$0xff]
      %v6838 = vld [vmem:[%s6 + $0x130] sm:$0xff]
      %v6839 = vld [vmem:[%s6 + $0x138] sm:$0xff]
      %v6840 = vld [vmem:[%s6 + $0x140] sm:$0xff]
      %v6841 = vld [vmem:[%s6 + $0x148] sm:$0xff]
      %v6842 = vld [vmem:[%s6 + $0x150] sm:$0xff]
      %v6843 = vld [vmem:[%s6 + $0x158] sm:$0xff]
      %v6844 = vld [vmem:[%s6 + $0x160] sm:$0xff]
      %v6845 = vld [vmem:[%s6 + $0x168] sm:$0xff]
      %v6846 = vld [vmem:[%s6 + $0x170] sm:$0xff]
      %v6847 = vld [vmem:[%s6 + $0x178] sm:$0xff]
      %v6848 = vld [vmem:[%s6 + $0x180] sm:$0xff]
      %v6849 = vld [vmem:[%s6 + $0x188] sm:$0xff]
      %v6850 = vld [vmem:[%s6 + $0x190] sm:$0xff]
      %v6851 = vld [vmem:[%s6 + $0x198] sm:$0xff]
      %v6852 = vld [vmem:[%s6 + $0x1a0] sm:$0xff]
      %v6853 = vld [vmem:[%s6 + $0x1a8] sm:$0xff]
      %v6854 = vld [vmem:[%s5] sm:$0x1]
      %v6856 = vperm.slane %v6854, 0
      %vm6858 = vcmask 318464
      %v6860 = vsel %vm6858, %v6802, 0
      %v6863 = vsel %vm6858, %v6805, 0
      %v6866 = vsel %vm6858, %v6808, 0
      %v6869 = vsel %vm6858, %v6811, 0
      %v6872 = vsel %vm6858, %v6814, 0
      %v6875 = vsel %vm6858, %v6817, 0
      %v6878 = vsel %vm6858, %v6820, 0
      %v6881 = vsel %vm6858, %v6823, 0
      %v6884 = vsel %vm6858, %v6826, 0
      %v6887 = vsel %vm6858, %v6829, 0
      %v6890 = vsel %vm6858, %v6832, 0
      %v6893 = vsel %vm6858, %v6835, 0
      %v6896 = vsel %vm6858, %v6838, 0
      %v6899 = vsel %vm6858, %v6841, 0
      %v6902 = vsel %vm6858, %v6844, 0
      %v6905 = vsel %vm6858, %v6847, 0
      %v6908 = vsel %vm6858, %v6850, 0
      %v6911 = vsel %vm6858, %v6853, 0
      %v6914 = vsel %vm1986, %v6799, 0
      %6916 = vmatpush.msra.mxu0 %v6778
      %6917 = vmatpush.msra.mxu0 %v6777
      %6918 = vmatpush.msra.mxu0 %v6776
      %6919 = vmatpush.msra.mxu0 %v6775
      %6920 = vmatpush.msra.mxu0 %v6774
      %6921 = vmatpush.msra.mxu0 %v6773
      %6922 = vmatpush.msra.mxu0 %v6772
      %6923 = vmatpush.msra.mxu0 %v6771
      %6924 = vmatpush.msra.mxu0 %v6770
      %6925 = vmatpush.msra.mxu0 %v6769
      %6926 = vmatpush.msra.mxu0 %v6768
      %6927 = vmatpush.msra.mxu0 %v6767
      %6928 = vmatpush.msra.mxu0 %v6766
      %6929 = vmatpush.msra.mxu0 %v6765
      %6930 = vmatpush.msra.mxu0 %v6764
      %6931 = vmatpush.msra.mxu0 %v6763
      %6932 = vmatmul.f32.gmra.mxu0 %v6800
      %v6933 = vpop.f32.mrf.mxu0
      %v6934 = vadd.f32 %v6856, %v6933
      %6935 = vmatmul.f32.gmra.mxu0 %v6803
      %v6936 = vpop.f32.mrf.mxu0
      %v6937 = vadd.f32 %v6856, %v6936
      %6938 = vmatmul.f32.gmra.mxu0 %v6806
      %v6939 = vpop.f32.mrf.mxu0
      %v6940 = vadd.f32 %v6856, %v6939
      %6941 = vmatmul.f32.gmra.mxu0 %v6809
      %v6942 = vpop.f32.mrf.mxu0
      %v6943 = vadd.f32 %v6856, %v6942
      %6944 = vmatmul.f32.gmra.mxu0 %v6812
      %v6945 = vpop.f32.mrf.mxu0
      %v6946 = vadd.f32 %v6856, %v6945
      %6947 = vmatmul.f32.gmra.mxu0 %v6815
      %v6948 = vpop.f32.mrf.mxu0
      %v6949 = vadd.f32 %v6856, %v6948
      %6950 = vmatmul.f32.gmra.mxu0 %v6818
      %v6951 = vpop.f32.mrf.mxu0
      %v6952 = vadd.f32 %v6856, %v6951
      %6953 = vmatmul.f32.gmra.mxu0 %v6821
      %v6954 = vpop.f32.mrf.mxu0
      %v6955 = vadd.f32 %v6856, %v6954
      %6956 = vmatmul.f32.gmra.mxu0 %v6824
      %v6957 = vpop.f32.mrf.mxu0
      %v6958 = vadd.f32 %v6856, %v6957
      %6959 = vmatmul.f32.gmra.mxu0 %v6827
      %v6960 = vpop.f32.mrf.mxu0
      %v6961 = vadd.f32 %v6856, %v6960
      %6962 = vmatmul.f32.gmra.mxu0 %v6830
      %v6963 = vpop.f32.mrf.mxu0
      %v6964 = vadd.f32 %v6856, %v6963
      %6965 = vmatmul.f32.gmra.mxu0 %v6833
      %v6966 = vpop.f32.mrf.mxu0
      %v6967 = vadd.f32 %v6856, %v6966
      %6968 = vmatmul.f32.gmra.mxu0 %v6836
      %v6969 = vpop.f32.mrf.mxu0
      %v6970 = vadd.f32 %v6856, %v6969
      %6971 = vmatmul.f32.gmra.mxu0 %v6839
      %v6972 = vpop.f32.mrf.mxu0
      %v6973 = vadd.f32 %v6856, %v6972
      %6974 = vmatmul.f32.gmra.mxu0 %v6842
      %v6975 = vpop.f32.mrf.mxu0
      %v6976 = vadd.f32 %v6856, %v6975
      %6977 = vmatmul.f32.gmra.mxu0 %v6845
      %v6978 = vpop.f32.mrf.mxu0
      %v6979 = vadd.f32 %v6856, %v6978
      %6980 = vmatmul.f32.gmra.mxu0 %v6848
      %v6981 = vpop.f32.mrf.mxu0
      %v6982 = vadd.f32 %v6856, %v6981
      %6983 = vmatmul.f32.gmra.mxu0 %v6851
      %v6984 = vpop.f32.mrf.mxu0
      %v6985 = vadd.f32 %v6856, %v6984
      %6986 = vdwg.mxu0
      %6987 = vmatpush.msra.mxu0 %v6794
      %6988 = vmatpush.msra.mxu0 %v6793
      %6989 = vmatpush.msra.mxu0 %v6792
      %6990 = vmatpush.msra.mxu0 %v6791
      %6991 = vmatpush.msra.mxu0 %v6790
      %6992 = vmatpush.msra.mxu0 %v6789
      %6993 = vmatpush.msra.mxu0 %v6788
      %6994 = vmatpush.msra.mxu0 %v6787
      %6995 = vmatpush.msra.mxu0 %v6786
      %6996 = vmatpush.msra.mxu0 %v6785
      %6997 = vmatpush.msra.mxu0 %v6784
      %6998 = vmatpush.msra.mxu0 %v6783
      %6999 = vmatpush.msra.mxu0 %v6782
      %7000 = vmatpush.msra.mxu0 %v6781
      %7001 = vmatpush.msra.mxu0 %v6780
      %7002 = vmatpush.msra.mxu0 %v6779
      %7003 = vmatmul.f32.gmra.mxu0 %v6801
      %v7004 = vpop.f32.mrf.mxu0
      %v7005 = vadd.f32 %v6934, %v7004
      %7006 = vmatmul.f32.gmra.mxu0 %v6804
      %v7007 = vpop.f32.mrf.mxu0
      %v7008 = vadd.f32 %v6937, %v7007
      %7009 = vmatmul.f32.gmra.mxu0 %v6807
      %v7010 = vpop.f32.mrf.mxu0
      %v7011 = vadd.f32 %v6940, %v7010
      %7012 = vmatmul.f32.gmra.mxu0 %v6810
      %v7013 = vpop.f32.mrf.mxu0
      %v7014 = vadd.f32 %v6943, %v7013
      %7015 = vmatmul.f32.gmra.mxu0 %v6813
      %v7016 = vpop.f32.mrf.mxu0
      %v7017 = vadd.f32 %v6946, %v7016
      %7018 = vmatmul.f32.gmra.mxu0 %v6816
      %v7019 = vpop.f32.mrf.mxu0
      %v7020 = vadd.f32 %v6949, %v7019
      %7021 = vmatmul.f32.gmra.mxu0 %v6819
      %v7022 = vpop.f32.mrf.mxu0
      %v7023 = vadd.f32 %v6952, %v7022
      %7024 = vmatmul.f32.gmra.mxu0 %v6822
      %v7025 = vpop.f32.mrf.mxu0
      %v7026 = vadd.f32 %v6955, %v7025
      %7027 = vmatmul.f32.gmra.mxu0 %v6825
      %v7028 = vpop.f32.mrf.mxu0
      %v7029 = vadd.f32 %v6958, %v7028
      %7030 = vmatmul.f32.gmra.mxu0 %v6828
      %v7031 = vpop.f32.mrf.mxu0
      %v7032 = vadd.f32 %v6961, %v7031
      %7033 = vmatmul.f32.gmra.mxu0 %v6831
      %v7034 = vpop.f32.mrf.mxu0
      %v7035 = vadd.f32 %v6964, %v7034
      %7036 = vmatmul.f32.gmra.mxu0 %v6834
      %v7037 = vpop.f32.mrf.mxu0
      %v7038 = vadd.f32 %v6967, %v7037
      %7039 = vmatmul.f32.gmra.mxu0 %v6837
      %v7040 = vpop.f32.mrf.mxu0
      %v7041 = vadd.f32 %v6970, %v7040
      %7042 = vmatmul.f32.gmra.mxu0 %v6840
      %v7043 = vpop.f32.mrf.mxu0
      %v7044 = vadd.f32 %v6973, %v7043
      %7045 = vmatmul.f32.gmra.mxu0 %v6843
      %v7046 = vpop.f32.mrf.mxu0
      %v7047 = vadd.f32 %v6976, %v7046
      %7048 = vmatmul.f32.gmra.mxu0 %v6846
      %v7049 = vpop.f32.mrf.mxu0
      %v7050 = vadd.f32 %v6979, %v7049
      %7051 = vmatmul.f32.gmra.mxu0 %v6849
      %v7052 = vpop.f32.mrf.mxu0
      %v7053 = vadd.f32 %v6982, %v7052
      %7054 = vmatmul.f32.gmra.mxu0 %v6852
      %v7055 = vpop.f32.mrf.mxu0
      %v7056 = vadd.f32 %v6985, %v7055
      %7057 = vdwg.mxu0
      %7058 = vmatpush.msra.mxu0 0.0
      %7059 = vmatpush.msra.mxu0 0.0
      %7060 = vmatpush.msra.mxu0 0.0
      %7061 = vmatpush.msra.mxu0 0.0
      %7062 = vmatpush.msra.mxu0 0.0
      %7063 = vmatpush.msra.mxu0 0.0
      %7064 = vmatpush.msra.mxu0 0.0
      %7065 = vmatpush.msra.mxu0 0.0
      %7066 = vmatpush.msra.mxu0 0.0
      %7067 = vmatpush.msra.mxu0 0.0
      %7068 = vmatpush.msra.mxu0 0.0
      %7069 = vmatpush.msra.mxu0 %v6914
      %7070 = vmatpush.msra.mxu0 %v6798
      %7071 = vmatpush.msra.mxu0 %v6797
      %7072 = vmatpush.msra.mxu0 %v6796
      %7073 = vmatpush.msra.mxu0 %v6795
      %7074 = vmatmul.f32.gmra.mxu0 %v6860
      %v7075 = vpop.f32.mrf.mxu0
      %v7076 = vadd.f32 %v7005, %v7075
      %7077 = vmatmul.f32.gmra.mxu0 %v6863
      %v7078 = vpop.f32.mrf.mxu0
      %v7079 = vadd.f32 %v7008, %v7078
      %7080 = vmatmul.f32.gmra.mxu0 %v6866
      %v7081 = vpop.f32.mrf.mxu0
      %v7082 = vadd.f32 %v7011, %v7081
      %7083 = vmatmul.f32.gmra.mxu0 %v6869
      %v7084 = vpop.f32.mrf.mxu0
      %v7085 = vadd.f32 %v7014, %v7084
      %7086 = vmatmul.f32.gmra.mxu0 %v6872
      %v7087 = vpop.f32.mrf.mxu0
      %v7088 = vadd.f32 %v7017, %v7087
      %7089 = vmatmul.f32.gmra.mxu0 %v6875
      %v7090 = vpop.f32.mrf.mxu0
      %v7091 = vadd.f32 %v7020, %v7090
      %7092 = vmatmul.f32.gmra.mxu0 %v6878
      %v7093 = vpop.f32.mrf.mxu0
      %v7094 = vadd.f32 %v7023, %v7093
      %7095 = vmatmul.f32.gmra.mxu0 %v6881
      %v7096 = vpop.f32.mrf.mxu0
      %v7097 = vadd.f32 %v7026, %v7096
      %7098 = vmatmul.f32.gmra.mxu0 %v6884
      %v7099 = vpop.f32.mrf.mxu0
      %v7100 = vadd.f32 %v7029, %v7099
      %7101 = vmatmul.f32.gmra.mxu0 %v6887
      %v7102 = vpop.f32.mrf.mxu0
      %v7103 = vadd.f32 %v7032, %v7102
      %7104 = vmatmul.f32.gmra.mxu0 %v6890
      %v7105 = vpop.f32.mrf.mxu0
      %v7106 = vadd.f32 %v7035, %v7105
      %7107 = vmatmul.f32.gmra.mxu0 %v6893
      %v7108 = vpop.f32.mrf.mxu0
      %v7109 = vadd.f32 %v7038, %v7108
      %7110 = vmatmul.f32.gmra.mxu0 %v6896
      %v7111 = vpop.f32.mrf.mxu0
      %v7112 = vadd.f32 %v7041, %v7111
      %7113 = vmatmul.f32.gmra.mxu0 %v6899
      %v7114 = vpop.f32.mrf.mxu0
      %v7115 = vadd.f32 %v7044, %v7114
      %7116 = vmatmul.f32.gmra.mxu0 %v6902
      %v7117 = vpop.f32.mrf.mxu0
      %v7118 = vadd.f32 %v7047, %v7117
      %7119 = vmatmul.f32.gmra.mxu0 %v6905
      %v7120 = vpop.f32.mrf.mxu0
      %v7121 = vadd.f32 %v7050, %v7120
      %7122 = vmatmul.f32.gmra.mxu0 %v6908
      %v7123 = vpop.f32.mrf.mxu0
      %v7124 = vadd.f32 %v7053, %v7123
      %7125 = vmatmul.f32.gmra.mxu0 %v6911
      %v7126 = vpop.f32.mrf.mxu0
      %v7127 = vadd.f32 %v7056, %v7126
      %7128 = vdwg.mxu0
      %v7129 = vmax.f32 %v7076, 0.0
      %v7130 = vmax.f32 %v7079, 0.0
      %v7131 = vmax.f32 %v7082, 0.0
      %v7132 = vmax.f32 %v7085, 0.0
      %v7133 = vmax.f32 %v7088, 0.0
      %v7134 = vmax.f32 %v7091, 0.0
      %v7135 = vmax.f32 %v7094, 0.0
      %v7136 = vmax.f32 %v7097, 0.0
      %v7137 = vmax.f32 %v7100, 0.0
      %v7138 = vmax.f32 %v7103, 0.0
      %v7139 = vmax.f32 %v7106, 0.0
      %v7140 = vmax.f32 %v7109, 0.0
      %v7141 = vmax.f32 %v7112, 0.0
      %v7142 = vmax.f32 %v7115, 0.0
      %v7143 = vmax.f32 %v7118, 0.0
      %v7144 = vmax.f32 %v7121, 0.0
      %v7145 = vmax.f32 %v7124, 0.0
      %v7146 = vmax.f32 %v7127, 0.0
      %v7147 = vld [vmem:[%s7] sm:$0xff]
      %v7148 = vld [vmem:[%s7 + $0x8] sm:$0xff]
      %v7149 = vld [vmem:[%s7 + $0x10] sm:$0xff]
      %v7150 = vld [vmem:[%s7 + $0x18] sm:$0xff]
      %v7151 = vld [vmem:[%s7 + $0x20] sm:$0xff]
      %v7152 = vld [vmem:[%s7 + $0x28] sm:$0xff]
      %v7153 = vld [vmem:[%s7 + $0x30] sm:$0xff]
      %v7154 = vld [vmem:[%s7 + $0x38] sm:$0xff]
      %v7155 = vld [vmem:[%s7 + $0x40] sm:$0xff]
      %v7156 = vld [vmem:[%s7 + $0x48] sm:$0xff]
      %v7157 = vld [vmem:[%s7 + $0x50] sm:$0xff]
      %v7158 = vld [vmem:[%s7 + $0x58] sm:$0xff]
      %v7159 = vld [vmem:[%s7 + $0x60] sm:$0xff]
      %v7160 = vld [vmem:[%s7 + $0x68] sm:$0xff]
      %v7161 = vld [vmem:[%s7 + $0x70] sm:$0xff]
      %v7162 = vld [vmem:[%s7 + $0x78] sm:$0xff]
      %v7163 = vld [vmem:[%s7 + $0x80] sm:$0xff]
      %v7164 = vld [vmem:[%s7 + $0x88] sm:$0xff]
      %7166 = vset.pattern.permute.xlu0 0
      %7167 = vperm.xlu0 %7166, %v7147
      %v7168 = vpop.permute.xlu0 %7167
      %7171 = vset.pattern.permute.xlu0 0
      %7172 = vperm.xlu0 %7171, %v7148
      %v7173 = vpop.permute.xlu0 %7172
      %7176 = vset.pattern.permute.xlu0 0
      %7177 = vperm.xlu0 %7176, %v7149
      %v7178 = vpop.permute.xlu0 %7177
      %7181 = vset.pattern.permute.xlu0 0
      %7182 = vperm.xlu0 %7181, %v7150
      %v7183 = vpop.permute.xlu0 %7182
      %7186 = vset.pattern.permute.xlu0 0
      %7187 = vperm.xlu0 %7186, %v7151
      %v7188 = vpop.permute.xlu0 %7187
      %7191 = vset.pattern.permute.xlu0 0
      %7192 = vperm.xlu0 %7191, %v7152
      %v7193 = vpop.permute.xlu0 %7192
      %7196 = vset.pattern.permute.xlu0 0
      %7197 = vperm.xlu0 %7196, %v7153
      %v7198 = vpop.permute.xlu0 %7197
      %7201 = vset.pattern.permute.xlu0 0
      %7202 = vperm.xlu0 %7201, %v7154
      %v7203 = vpop.permute.xlu0 %7202
      %7206 = vset.pattern.permute.xlu0 0
      %7207 = vperm.xlu0 %7206, %v7155
      %v7208 = vpop.permute.xlu0 %7207
      %7211 = vset.pattern.permute.xlu0 0
      %7212 = vperm.xlu0 %7211, %v7156
      %v7213 = vpop.permute.xlu0 %7212
      %7216 = vset.pattern.permute.xlu0 0
      %7217 = vperm.xlu0 %7216, %v7157
      %v7218 = vpop.permute.xlu0 %7217
      %7221 = vset.pattern.permute.xlu0 0
      %7222 = vperm.xlu0 %7221, %v7158
      %v7223 = vpop.permute.xlu0 %7222
      %7226 = vset.pattern.permute.xlu0 0
      %7227 = vperm.xlu0 %7226, %v7159
      %v7228 = vpop.permute.xlu0 %7227
      %7231 = vset.pattern.permute.xlu0 0
      %7232 = vperm.xlu0 %7231, %v7160
      %v7233 = vpop.permute.xlu0 %7232
      %7236 = vset.pattern.permute.xlu0 0
      %7237 = vperm.xlu0 %7236, %v7161
      %v7238 = vpop.permute.xlu0 %7237
      %7241 = vset.pattern.permute.xlu0 0
      %7242 = vperm.xlu0 %7241, %v7162
      %v7243 = vpop.permute.xlu0 %7242
      %7246 = vset.pattern.permute.xlu0 0
      %7247 = vperm.xlu0 %7246, %v7163
      %v7248 = vpop.permute.xlu0 %7247
      %7251 = vset.pattern.permute.xlu0 0
      %7252 = vperm.xlu0 %7251, %v7164
      %v7253 = vpop.permute.xlu0 %7252
      %v7255 = vmul.f32 %v7129, %v7168
      %v7256 = vmul.f32 %v7130, %v7173
      %v7257 = vmul.f32 %v7131, %v7178
      %v7258 = vmul.f32 %v7132, %v7183
      %v7259 = vmul.f32 %v7133, %v7188
      %v7260 = vmul.f32 %v7134, %v7193
      %v7261 = vmul.f32 %v7135, %v7198
      %v7262 = vmul.f32 %v7136, %v7203
      %v7263 = vmul.f32 %v7137, %v7208
      %v7264 = vmul.f32 %v7138, %v7213
      %v7265 = vmul.f32 %v7139, %v7218
      %v7266 = vmul.f32 %v7140, %v7223
      %v7267 = vmul.f32 %v7141, %v7228
      %v7268 = vmul.f32 %v7142, %v7233
      %v7269 = vmul.f32 %v7143, %v7238
      %v7270 = vmul.f32 %v7144, %v7243
      %v7271 = vmul.f32 %v7145, %v7248
      %v7272 = vmul.f32 %v7146, %v7253
      %v7273 = vpack.c.bf16 %v7256, %v7255
      %v7274 = vpack.c.bf16 %v7258, %v7257
      %v7275 = vpack.c.bf16 %v7260, %v7259
      %v7276 = vpack.c.bf16 %v7262, %v7261
      %v7277 = vpack.c.bf16 %v7264, %v7263
      %v7278 = vpack.c.bf16 %v7266, %v7265
      %v7279 = vpack.c.bf16 %v7268, %v7267
      %v7280 = vpack.c.bf16 %v7270, %v7269
      %v7281 = vpack.c.bf16 %v7272, %v7271
      %v7282 = vld [vmem:[%s8] sm:$0xff]
      %v7283 = vld [vmem:[%s8 + $0x8] sm:$0xff]
      %v7286 = vunpack.c.l.b16 %v7282
      %v7287 = vunpack.c.h.b16 %v7282
      %v7288 = vunpack.c.l.b16 %v7283
      %v7289 = vunpack.c.h.b16 %v7283
      %v7290 = vpack.c.b16 %v7288, %v7286
      %v7291 = vpack.c.b16 %v7289, %v7287
      %vm7294 = vcmask 130048
      %v7296 = vsel %vm7294, %v7273, 0
      %v7299 = vsel %vm7294, %v7274, 0
      %v7302 = vsel %vm7294, %v7275, 0
      %v7305 = vsel %vm7294, %v7276, 0
      %v7308 = vsel %vm7294, %v7277, 0
      %v7311 = vsel %vm7294, %v7278, 0
      %v7314 = vsel %vm7294, %v7279, 0
      %v7317 = vsel %vm7294, %v7280, 0
      %v7320 = vsel %vm7294, %v7281, 0
      %7322 = vmatpush.bf16.msra.mxu0 0
      %7323 = vmatpush.bf16.msra.mxu0 0
      %7324 = vmatpush.bf16.msra.mxu0 0
      %7325 = vmatpush.bf16.msra.mxu0 0
      %7326 = vmatpush.bf16.msra.mxu0 0
      %7327 = vmatpush.bf16.msra.mxu0 0
      %7328 = vmatpush.bf16.msra.mxu0 0
      %7329 = vmatpush.bf16.msra.mxu0 %v7290
      %7330 = vmatmul.bf16.gmra.mxu0 %v7296
      %v7331 = vpop.f32.mrf.mxu0
      %v7332 = vadd.f32 0.0, %v7331
      %v7333 = vpop.f32.mrf.mxu0
      %v7334 = vadd.f32 0.0, %v7333
      %7335 = vmatmul.bf16.gmra.mxu0 %v7299
      %v7336 = vpop.f32.mrf.mxu0
      %v7337 = vadd.f32 0.0, %v7336
      %v7338 = vpop.f32.mrf.mxu0
      %v7339 = vadd.f32 0.0, %v7338
      %7340 = vmatmul.bf16.gmra.mxu0 %v7302
      %v7341 = vpop.f32.mrf.mxu0
      %v7342 = vadd.f32 0.0, %v7341
      %v7343 = vpop.f32.mrf.mxu0
      %v7344 = vadd.f32 0.0, %v7343
      %7345 = vmatmul.bf16.gmra.mxu0 %v7305
      %v7346 = vpop.f32.mrf.mxu0
      %v7347 = vadd.f32 0.0, %v7346
      %v7348 = vpop.f32.mrf.mxu0
      %v7349 = vadd.f32 0.0, %v7348
      %7350 = vmatmul.bf16.gmra.mxu0 %v7308
      %v7351 = vpop.f32.mrf.mxu0
      %v7352 = vadd.f32 0.0, %v7351
      %v7353 = vpop.f32.mrf.mxu0
      %v7354 = vadd.f32 0.0, %v7353
      %7355 = vmatmul.bf16.gmra.mxu0 %v7311
      %v7356 = vpop.f32.mrf.mxu0
      %v7357 = vadd.f32 0.0, %v7356
      %v7358 = vpop.f32.mrf.mxu0
      %v7359 = vadd.f32 0.0, %v7358
      %7360 = vmatmul.bf16.gmra.mxu0 %v7314
      %v7361 = vpop.f32.mrf.mxu0
      %v7362 = vadd.f32 0.0, %v7361
      %v7363 = vpop.f32.mrf.mxu0
      %v7364 = vadd.f32 0.0, %v7363
      %7365 = vmatmul.bf16.gmra.mxu0 %v7317
      %v7366 = vpop.f32.mrf.mxu0
      %v7367 = vadd.f32 0.0, %v7366
      %v7368 = vpop.f32.mrf.mxu0
      %7369 = vmatmul.bf16.gmra.mxu0 %v7320
      %v7370 = vpop.f32.mrf.mxu0
      %v7371 = vpop.f32.mrf.mxu0
      %7372 = vdwg.mxu0
      %7373 = vmatpush.bf16.msra.mxu0 0
      %7374 = vmatpush.bf16.msra.mxu0 0
      %7375 = vmatpush.bf16.msra.mxu0 0
      %7376 = vmatpush.bf16.msra.mxu0 0
      %7377 = vmatpush.bf16.msra.mxu0 0
      %7378 = vmatpush.bf16.msra.mxu0 0
      %7379 = vmatpush.bf16.msra.mxu0 0
      %7380 = vmatpush.bf16.msra.mxu0 %v7291
      %7381 = vmatmul.bf16.gmra.mxu0 %v7296
      %v7382 = vpop.f32.mrf.mxu0
      %v7383 = vpop.f32.mrf.mxu0
      %7384 = vmatmul.bf16.gmra.mxu0 %v7299
      %v7385 = vpop.f32.mrf.mxu0
      %v7386 = vpop.f32.mrf.mxu0
      %7387 = vmatmul.bf16.gmra.mxu0 %v7302
      %v7388 = vpop.f32.mrf.mxu0
      %v7389 = vadd.f32 0.0, %v7388
      %v7390 = vpop.f32.mrf.mxu0
      %v7391 = vadd.f32 0.0, %v7390
      %7392 = vmatmul.bf16.gmra.mxu0 %v7305
      %v7393 = vpop.f32.mrf.mxu0
      %v7394 = vadd.f32 0.0, %v7393
      %v7395 = vpop.f32.mrf.mxu0
      %v7396 = vadd.f32 0.0, %v7395
      %7397 = vmatmul.bf16.gmra.mxu0 %v7308
      %v7398 = vpop.f32.mrf.mxu0
      %v7399 = vadd.f32 0.0, %v7398
      %v7400 = vpop.f32.mrf.mxu0
      %v7401 = vadd.f32 0.0, %v7400
      %7402 = vmatmul.bf16.gmra.mxu0 %v7311
      %v7403 = vpop.f32.mrf.mxu0
      %v7404 = vadd.f32 0.0, %v7403
      %v7405 = vpop.f32.mrf.mxu0
      %v7406 = vadd.f32 0.0, %v7405
      %7407 = vmatmul.bf16.gmra.mxu0 %v7314
      %v7408 = vpop.f32.mrf.mxu0
      %v7409 = vadd.f32 0.0, %v7408
      %v7410 = vpop.f32.mrf.mxu0
      %v7411 = vadd.f32 0.0, %v7410
      %7412 = vmatmul.bf16.gmra.mxu0 %v7317
      %v7413 = vpop.f32.mrf.mxu0
      %v7414 = vadd.f32 0.0, %v7413
      %v7415 = vpop.f32.mrf.mxu0
      %v7416 = vadd.f32 0.0, %v7415
      %7417 = vmatmul.bf16.gmra.mxu0 %v7320
      %v7418 = vpop.f32.mrf.mxu0
      %v7419 = vadd.f32 0.0, %v7418
      %v7420 = vpop.f32.mrf.mxu0
      %7421 = vdwg.mxu0
      %v7432 = vrot.slane %v7332, 1
      %v7433 = vrot.slane %v7334, 1
      %v7434 = vsel %vm1986, %v7432, %v7433
      %v7435 = vrot.slane %v7337, 1
      %v7436 = vsel %vm1986, %v7433, %v7435
      %v7437 = vrot.slane %v7339, 1
      %v7438 = vsel %vm1986, %v7435, %v7437
      %v7439 = vrot.slane %v7342, 1
      %v7440 = vsel %vm1986, %v7437, %v7439
      %v7441 = vrot.slane %v7344, 1
      %v7442 = vsel %vm1986, %v7439, %v7441
      %v7443 = vrot.slane %v7347, 1
      %v7444 = vsel %vm1986, %v7441, %v7443
      %v7445 = vrot.slane %v7349, 1
      %v7446 = vsel %vm1986, %v7443, %v7445
      %v7447 = vrot.slane %v7352, 1
      %v7448 = vsel %vm1986, %v7445, %v7447
      %v7449 = vrot.slane %v7354, 1
      %v7450 = vsel %vm1986, %v7447, %v7449
      %7451 = vrot.lane.b32.xlu0 %v7434, 120
      %v7452 = vpop.permute.xlu0 %7451
      %7453 = vrot.lane.b32.xlu0 %v7436, 120
      %v7454 = vpop.permute.xlu0 %7453
      %7455 = vrot.lane.b32.xlu0 %v7438, 120
      %v7456 = vpop.permute.xlu0 %7455
      %7457 = vrot.lane.b32.xlu0 %v7440, 120
      %v7458 = vpop.permute.xlu0 %7457
      %7459 = vrot.lane.b32.xlu0 %v7442, 120
      %v7460 = vpop.permute.xlu0 %7459
      %7461 = vrot.lane.b32.xlu0 %v7444, 120
      %v7462 = vpop.permute.xlu0 %7461
      %7463 = vrot.lane.b32.xlu0 %v7446, 120
      %v7464 = vpop.permute.xlu0 %7463
      %7465 = vrot.lane.b32.xlu0 %v7448, 120
      %v7466 = vpop.permute.xlu0 %7465
      %7467 = vrot.lane.b32.xlu0 %v7450, 120
      %v7468 = vpop.permute.xlu0 %7467
      %7469 = vrot.lane.b32.xlu0 %v7449, 120
      %v7470 = vpop.permute.xlu0 %7469
      %v7481 = vadd.f32 %v7332, %v7452
      %v7482 = vadd.f32 %v7334, %v7454
      %v7483 = vadd.f32 %v7337, %v7456
      %v7484 = vadd.f32 %v7339, %v7458
      %v7485 = vadd.f32 %v7342, %v7460
      %v7486 = vadd.f32 %v7344, %v7462
      %v7487 = vadd.f32 %v7347, %v7464
      %v7488 = vadd.f32 %v7349, %v7466
      %v7489 = vadd.f32 %v7352, %v7468
      %v7490 = vadd.f32 %v7354, %v7470
      %v7492 = vrot.slane %v7332, 2
      %v7493 = vrot.slane %v7334, 2
      %v7494 = vsel %vm2209, %v7492, %v7493
      %v7495 = vrot.slane %v7337, 2
      %v7496 = vsel %vm2209, %v7493, %v7495
      %v7497 = vrot.slane %v7339, 2
      %v7498 = vsel %vm2209, %v7495, %v7497
      %v7499 = vrot.slane %v7342, 2
      %v7500 = vsel %vm2209, %v7497, %v7499
      %v7501 = vrot.slane %v7344, 2
      %v7502 = vsel %vm2209, %v7499, %v7501
      %v7503 = vrot.slane %v7347, 2
      %v7504 = vsel %vm2209, %v7501, %v7503
      %v7505 = vrot.slane %v7349, 2
      %v7506 = vsel %vm2209, %v7503, %v7505
      %v7507 = vrot.slane %v7352, 2
      %v7508 = vsel %vm2209, %v7505, %v7507
      %v7509 = vrot.slane %v7354, 2
      %v7510 = vsel %vm2209, %v7507, %v7509
      %v7511 = vrot.slane %v7357, 2
      %v7512 = vsel %vm2209, %v7509, %v7511
      %7513 = vrot.lane.b32.xlu0 %v7494, 112
      %v7514 = vpop.permute.xlu0 %7513
      %7515 = vrot.lane.b32.xlu0 %v7496, 112
      %v7516 = vpop.permute.xlu0 %7515
      %7517 = vrot.lane.b32.xlu0 %v7498, 112
      %v7518 = vpop.permute.xlu0 %7517
      %7519 = vrot.lane.b32.xlu0 %v7500, 112
      %v7520 = vpop.permute.xlu0 %7519
      %7521 = vrot.lane.b32.xlu0 %v7502, 112
      %v7522 = vpop.permute.xlu0 %7521
      %7523 = vrot.lane.b32.xlu0 %v7504, 112
      %v7524 = vpop.permute.xlu0 %7523
      %7525 = vrot.lane.b32.xlu0 %v7506, 112
      %v7526 = vpop.permute.xlu0 %7525
      %7527 = vrot.lane.b32.xlu0 %v7508, 112
      %v7528 = vpop.permute.xlu0 %7527
      %7529 = vrot.lane.b32.xlu0 %v7510, 112
      %v7530 = vpop.permute.xlu0 %7529
      %7531 = vrot.lane.b32.xlu0 %v7512, 112
      %v7532 = vpop.permute.xlu0 %7531
      %v7543 = vadd.f32 %v7481, %v7514
      %v7544 = vadd.f32 %v7482, %v7516
      %v7545 = vadd.f32 %v7483, %v7518
      %v7546 = vadd.f32 %v7484, %v7520
      %v7547 = vadd.f32 %v7485, %v7522
      %v7548 = vadd.f32 %v7486, %v7524
      %v7549 = vadd.f32 %v7487, %v7526
      %v7550 = vadd.f32 %v7488, %v7528
      %v7551 = vadd.f32 %v7489, %v7530
      %v7552 = vadd.f32 %v7490, %v7532
      %v7553 = vrot.slane %v7332, 3
      %v7554 = vrot.slane %v7334, 3
      %v7555 = vsel %vm2433, %v7553, %v7554
      %v7556 = vrot.slane %v7337, 3
      %v7557 = vsel %vm2433, %v7554, %v7556
      %v7558 = vrot.slane %v7339, 3
      %v7559 = vsel %vm2433, %v7556, %v7558
      %v7560 = vrot.slane %v7342, 3
      %v7561 = vsel %vm2433, %v7558, %v7560
      %v7562 = vrot.slane %v7344, 3
      %v7563 = vsel %vm2433, %v7560, %v7562
      %v7564 = vrot.slane %v7347, 3
      %v7565 = vsel %vm2433, %v7562, %v7564
      %v7566 = vrot.slane %v7349, 3
      %v7567 = vsel %vm2433, %v7564, %v7566
      %v7568 = vrot.slane %v7352, 3
      %v7569 = vsel %vm2433, %v7566, %v7568
      %v7570 = vrot.slane %v7354, 3
      %v7571 = vsel %vm2433, %v7568, %v7570
      %v7572 = vrot.slane %v7357, 3
      %v7573 = vsel %vm2433, %v7570, %v7572
      %7574 = vrot.lane.b32.xlu0 %v7555, 104
      %v7575 = vpop.permute.xlu0 %7574
      %7576 = vrot.lane.b32.xlu0 %v7557, 104
      %v7577 = vpop.permute.xlu0 %7576
      %7578 = vrot.lane.b32.xlu0 %v7559, 104
      %v7579 = vpop.permute.xlu0 %7578
      %7580 = vrot.lane.b32.xlu0 %v7561, 104
      %v7581 = vpop.permute.xlu0 %7580
      %7582 = vrot.lane.b32.xlu0 %v7563, 104
      %v7583 = vpop.permute.xlu0 %7582
      %7584 = vrot.lane.b32.xlu0 %v7565, 104
      %v7585 = vpop.permute.xlu0 %7584
      %7586 = vrot.lane.b32.xlu0 %v7567, 104
      %v7587 = vpop.permute.xlu0 %7586
      %7588 = vrot.lane.b32.xlu0 %v7569, 104
      %v7589 = vpop.permute.xlu0 %7588
      %7590 = vrot.lane.b32.xlu0 %v7571, 104
      %v7591 = vpop.permute.xlu0 %7590
      %7592 = vrot.lane.b32.xlu0 %v7573, 104
      %v7593 = vpop.permute.xlu0 %7592
      %v7604 = vadd.f32 %v7543, %v7575
      %v7605 = vadd.f32 %v7544, %v7577
      %v7606 = vadd.f32 %v7545, %v7579
      %v7607 = vadd.f32 %v7546, %v7581
      %v7608 = vadd.f32 %v7547, %v7583
      %v7609 = vadd.f32 %v7548, %v7585
      %v7610 = vadd.f32 %v7549, %v7587
      %v7611 = vadd.f32 %v7550, %v7589
      %v7612 = vadd.f32 %v7551, %v7591
      %v7613 = vadd.f32 %v7552, %v7593
      %v7614 = vrot.slane %v7332, 4
      %v7615 = vrot.slane %v7334, 4
      %v7616 = vsel %vm2657, %v7614, %v7615
      %v7617 = vrot.slane %v7337, 4
      %v7618 = vsel %vm2657, %v7615, %v7617
      %v7619 = vrot.slane %v7339, 4
      %v7620 = vsel %vm2657, %v7617, %v7619
      %v7621 = vrot.slane %v7342, 4
      %v7622 = vsel %vm2657, %v7619, %v7621
      %v7623 = vrot.slane %v7344, 4
      %v7624 = vsel %vm2657, %v7621, %v7623
      %v7625 = vrot.slane %v7347, 4
      %v7626 = vsel %vm2657, %v7623, %v7625
      %v7627 = vrot.slane %v7349, 4
      %v7628 = vsel %vm2657, %v7625, %v7627
      %v7629 = vrot.slane %v7352, 4
      %v7630 = vsel %vm2657, %v7627, %v7629
      %v7631 = vrot.slane %v7354, 4
      %v7632 = vsel %vm2657, %v7629, %v7631
      %v7633 = vrot.slane %v7357, 4
      %v7634 = vsel %vm2657, %v7631, %v7633
      %7635 = vrot.lane.b32.xlu0 %v7616, 96
      %v7636 = vpop.permute.xlu0 %7635
      %7637 = vrot.lane.b32.xlu0 %v7618, 96
      %v7638 = vpop.permute.xlu0 %7637
      %7639 = vrot.lane.b32.xlu0 %v7620, 96
      %v7640 = vpop.permute.xlu0 %7639
      %7641 = vrot.lane.b32.xlu0 %v7622, 96
      %v7642 = vpop.permute.xlu0 %7641
      %7643 = vrot.lane.b32.xlu0 %v7624, 96
      %v7644 = vpop.permute.xlu0 %7643
      %7645 = vrot.lane.b32.xlu0 %v7626, 96
      %v7646 = vpop.permute.xlu0 %7645
      %7647 = vrot.lane.b32.xlu0 %v7628, 96
      %v7648 = vpop.permute.xlu0 %7647
      %7649 = vrot.lane.b32.xlu0 %v7630, 96
      %v7650 = vpop.permute.xlu0 %7649
      %7651 = vrot.lane.b32.xlu0 %v7632, 96
      %v7652 = vpop.permute.xlu0 %7651
      %7653 = vrot.lane.b32.xlu0 %v7634, 96
      %v7654 = vpop.permute.xlu0 %7653
      %v7665 = vadd.f32 %v7604, %v7636
      %v7666 = vadd.f32 %v7605, %v7638
      %v7667 = vadd.f32 %v7606, %v7640
      %v7668 = vadd.f32 %v7607, %v7642
      %v7669 = vadd.f32 %v7608, %v7644
      %v7670 = vadd.f32 %v7609, %v7646
      %v7671 = vadd.f32 %v7610, %v7648
      %v7672 = vadd.f32 %v7611, %v7650
      %v7673 = vadd.f32 %v7612, %v7652
      %v7674 = vadd.f32 %v7613, %v7654
      %v7676 = vrot.slane %v7359, 4
      %v7677 = vsel %vm2657, %v7633, %v7676
      %7678 = vrot.lane.b32.xlu0 %v7618, 88
      %v7679 = vpop.permute.xlu0 %7678
      %7680 = vrot.lane.b32.xlu0 %v7620, 88
      %v7681 = vpop.permute.xlu0 %7680
      %7682 = vrot.lane.b32.xlu0 %v7622, 88
      %v7683 = vpop.permute.xlu0 %7682
      %7684 = vrot.lane.b32.xlu0 %v7624, 88
      %v7685 = vpop.permute.xlu0 %7684
      %7686 = vrot.lane.b32.xlu0 %v7626, 88
      %v7687 = vpop.permute.xlu0 %7686
      %7688 = vrot.lane.b32.xlu0 %v7628, 88
      %v7689 = vpop.permute.xlu0 %7688
      %7690 = vrot.lane.b32.xlu0 %v7630, 88
      %v7691 = vpop.permute.xlu0 %7690
      %7692 = vrot.lane.b32.xlu0 %v7632, 88
      %v7693 = vpop.permute.xlu0 %7692
      %7694 = vrot.lane.b32.xlu0 %v7634, 88
      %v7695 = vpop.permute.xlu0 %7694
      %7696 = vrot.lane.b32.xlu0 %v7677, 88
      %v7697 = vpop.permute.xlu0 %7696
      %v7708 = vadd.f32 %v7665, %v7679
      %v7709 = vadd.f32 %v7666, %v7681
      %v7710 = vadd.f32 %v7667, %v7683
      %v7711 = vadd.f32 %v7668, %v7685
      %v7712 = vadd.f32 %v7669, %v7687
      %v7713 = vadd.f32 %v7670, %v7689
      %v7714 = vadd.f32 %v7671, %v7691
      %v7715 = vadd.f32 %v7672, %v7693
      %v7716 = vadd.f32 %v7673, %v7695
      %v7717 = vadd.f32 %v7674, %v7697
      %v7718 = vrot.slane %v7334, 5
      %v7719 = vrot.slane %v7337, 5
      %v7720 = vsel %vm3035, %v7718, %v7719
      %v7721 = vrot.slane %v7339, 5
      %v7722 = vsel %vm3035, %v7719, %v7721
      %v7723 = vrot.slane %v7342, 5
      %v7724 = vsel %vm3035, %v7721, %v7723
      %v7725 = vrot.slane %v7344, 5
      %v7726 = vsel %vm3035, %v7723, %v7725
      %v7727 = vrot.slane %v7347, 5
      %v7728 = vsel %vm3035, %v7725, %v7727
      %v7729 = vrot.slane %v7349, 5
      %v7730 = vsel %vm3035, %v7727, %v7729
      %v7731 = vrot.slane %v7352, 5
      %v7732 = vsel %vm3035, %v7729, %v7731
      %v7733 = vrot.slane %v7354, 5
      %v7734 = vsel %vm3035, %v7731, %v7733
      %v7735 = vrot.slane %v7357, 5
      %v7736 = vsel %vm3035, %v7733, %v7735
      %v7737 = vrot.slane %v7359, 5
      %v7738 = vsel %vm3035, %v7735, %v7737
      %7739 = vrot.lane.b32.xlu0 %v7720, 80
      %v7740 = vpop.permute.xlu0 %7739
      %7741 = vrot.lane.b32.xlu0 %v7722, 80
      %v7742 = vpop.permute.xlu0 %7741
      %7743 = vrot.lane.b32.xlu0 %v7724, 80
      %v7744 = vpop.permute.xlu0 %7743
      %7745 = vrot.lane.b32.xlu0 %v7726, 80
      %v7746 = vpop.permute.xlu0 %7745
      %7747 = vrot.lane.b32.xlu0 %v7728, 80
      %v7748 = vpop.permute.xlu0 %7747
      %7749 = vrot.lane.b32.xlu0 %v7730, 80
      %v7750 = vpop.permute.xlu0 %7749
      %7751 = vrot.lane.b32.xlu0 %v7732, 80
      %v7752 = vpop.permute.xlu0 %7751
      %7753 = vrot.lane.b32.xlu0 %v7734, 80
      %v7754 = vpop.permute.xlu0 %7753
      %7755 = vrot.lane.b32.xlu0 %v7736, 80
      %v7756 = vpop.permute.xlu0 %7755
      %7757 = vrot.lane.b32.xlu0 %v7738, 80
      %v7758 = vpop.permute.xlu0 %7757
      %v7769 = vadd.f32 %v7708, %v7740
      %v7770 = vadd.f32 %v7709, %v7742
      %v7771 = vadd.f32 %v7710, %v7744
      %v7772 = vadd.f32 %v7711, %v7746
      %v7773 = vadd.f32 %v7712, %v7748
      %v7774 = vadd.f32 %v7713, %v7750
      %v7775 = vadd.f32 %v7714, %v7752
      %v7776 = vadd.f32 %v7715, %v7754
      %v7777 = vadd.f32 %v7716, %v7756
      %v7778 = vadd.f32 %v7717, %v7758
      %v7779 = vrot.slane %v7334, 6
      %v7780 = vrot.slane %v7337, 6
      %v7781 = vsel %vm3259, %v7779, %v7780
      %v7782 = vrot.slane %v7339, 6
      %v7783 = vsel %vm3259, %v7780, %v7782
      %v7784 = vrot.slane %v7342, 6
      %v7785 = vsel %vm3259, %v7782, %v7784
      %v7786 = vrot.slane %v7344, 6
      %v7787 = vsel %vm3259, %v7784, %v7786
      %v7788 = vrot.slane %v7347, 6
      %v7789 = vsel %vm3259, %v7786, %v7788
      %v7790 = vrot.slane %v7349, 6
      %v7791 = vsel %vm3259, %v7788, %v7790
      %v7792 = vrot.slane %v7352, 6
      %v7793 = vsel %vm3259, %v7790, %v7792
      %v7794 = vrot.slane %v7354, 6
      %v7795 = vsel %vm3259, %v7792, %v7794
      %v7796 = vrot.slane %v7357, 6
      %v7797 = vsel %vm3259, %v7794, %v7796
      %v7798 = vrot.slane %v7359, 6
      %v7799 = vsel %vm3259, %v7796, %v7798
      %7800 = vrot.lane.b32.xlu0 %v7781, 72
      %v7801 = vpop.permute.xlu0 %7800
      %7802 = vrot.lane.b32.xlu0 %v7783, 72
      %v7803 = vpop.permute.xlu0 %7802
      %7804 = vrot.lane.b32.xlu0 %v7785, 72
      %v7805 = vpop.permute.xlu0 %7804
      %7806 = vrot.lane.b32.xlu0 %v7787, 72
      %v7807 = vpop.permute.xlu0 %7806
      %7808 = vrot.lane.b32.xlu0 %v7789, 72
      %v7809 = vpop.permute.xlu0 %7808
      %7810 = vrot.lane.b32.xlu0 %v7791, 72
      %v7811 = vpop.permute.xlu0 %7810
      %7812 = vrot.lane.b32.xlu0 %v7793, 72
      %v7813 = vpop.permute.xlu0 %7812
      %7814 = vrot.lane.b32.xlu0 %v7795, 72
      %v7815 = vpop.permute.xlu0 %7814
      %7816 = vrot.lane.b32.xlu0 %v7797, 72
      %v7817 = vpop.permute.xlu0 %7816
      %7818 = vrot.lane.b32.xlu0 %v7799, 72
      %v7819 = vpop.permute.xlu0 %7818
      %v7830 = vadd.f32 %v7769, %v7801
      %v7831 = vadd.f32 %v7770, %v7803
      %v7832 = vadd.f32 %v7771, %v7805
      %v7833 = vadd.f32 %v7772, %v7807
      %v7834 = vadd.f32 %v7773, %v7809
      %v7835 = vadd.f32 %v7774, %v7811
      %v7836 = vadd.f32 %v7775, %v7813
      %v7837 = vadd.f32 %v7776, %v7815
      %v7838 = vadd.f32 %v7777, %v7817
      %v7839 = vadd.f32 %v7778, %v7819
      %v7840 = vrot.slane %v7334, 7
      %v7841 = vrot.slane %v7337, 7
      %v7842 = vsel %vm3521, %v7840, %v7841
      %v7843 = vrot.slane %v7339, 7
      %v7844 = vsel %vm3521, %v7841, %v7843
      %v7845 = vrot.slane %v7342, 7
      %v7846 = vsel %vm3521, %v7843, %v7845
      %v7847 = vrot.slane %v7344, 7
      %v7848 = vsel %vm3521, %v7845, %v7847
      %v7849 = vrot.slane %v7347, 7
      %v7850 = vsel %vm3521, %v7847, %v7849
      %v7851 = vrot.slane %v7349, 7
      %v7852 = vsel %vm3521, %v7849, %v7851
      %v7853 = vrot.slane %v7352, 7
      %v7854 = vsel %vm3521, %v7851, %v7853
      %v7855 = vrot.slane %v7354, 7
      %v7856 = vsel %vm3521, %v7853, %v7855
      %v7857 = vrot.slane %v7357, 7
      %v7858 = vsel %vm3521, %v7855, %v7857
      %v7859 = vrot.slane %v7359, 7
      %v7860 = vsel %vm3521, %v7857, %v7859
      %7861 = vrot.lane.b32.xlu0 %v7842, 64
      %v7862 = vpop.permute.xlu0 %7861
      %7863 = vrot.lane.b32.xlu0 %v7844, 64
      %v7864 = vpop.permute.xlu0 %7863
      %7865 = vrot.lane.b32.xlu0 %v7846, 64
      %v7866 = vpop.permute.xlu0 %7865
      %7867 = vrot.lane.b32.xlu0 %v7848, 64
      %v7868 = vpop.permute.xlu0 %7867
      %7869 = vrot.lane.b32.xlu0 %v7850, 64
      %v7870 = vpop.permute.xlu0 %7869
      %7871 = vrot.lane.b32.xlu0 %v7852, 64
      %v7872 = vpop.permute.xlu0 %7871
      %7873 = vrot.lane.b32.xlu0 %v7854, 64
      %v7874 = vpop.permute.xlu0 %7873
      %7875 = vrot.lane.b32.xlu0 %v7856, 64
      %v7876 = vpop.permute.xlu0 %7875
      %7877 = vrot.lane.b32.xlu0 %v7858, 64
      %v7878 = vpop.permute.xlu0 %7877
      %7879 = vrot.lane.b32.xlu0 %v7860, 64
      %v7880 = vpop.permute.xlu0 %7879
      %v7891 = vadd.f32 %v7830, %v7862
      %v7892 = vadd.f32 %v7831, %v7864
      %v7893 = vadd.f32 %v7832, %v7866
      %v7894 = vadd.f32 %v7833, %v7868
      %v7895 = vadd.f32 %v7834, %v7870
      %v7896 = vadd.f32 %v7835, %v7872
      %v7897 = vadd.f32 %v7836, %v7874
      %v7898 = vadd.f32 %v7837, %v7876
      %v7899 = vadd.f32 %v7838, %v7878
      %v7900 = vadd.f32 %v7839, %v7880
      %7901 = vrot.lane.b32.xlu0 %v7337, 56
      %v7902 = vpop.permute.xlu0 %7901
      %7903 = vrot.lane.b32.xlu0 %v7339, 56
      %v7904 = vpop.permute.xlu0 %7903
      %7905 = vrot.lane.b32.xlu0 %v7342, 56
      %v7906 = vpop.permute.xlu0 %7905
      %7907 = vrot.lane.b32.xlu0 %v7344, 56
      %v7908 = vpop.permute.xlu0 %7907
      %7909 = vrot.lane.b32.xlu0 %v7347, 56
      %v7910 = vpop.permute.xlu0 %7909
      %7911 = vrot.lane.b32.xlu0 %v7349, 56
      %v7912 = vpop.permute.xlu0 %7911
      %7913 = vrot.lane.b32.xlu0 %v7352, 56
      %v7914 = vpop.permute.xlu0 %7913
      %7915 = vrot.lane.b32.xlu0 %v7354, 56
      %v7916 = vpop.permute.xlu0 %7915
      %7917 = vrot.lane.b32.xlu0 %v7357, 56
      %v7918 = vpop.permute.xlu0 %7917
      %7919 = vrot.lane.b32.xlu0 %v7359, 56
      %v7920 = vpop.permute.xlu0 %7919
      %v7931 = vadd.f32 %v7891, %v7902
      %v7932 = vadd.f32 %v7892, %v7904
      %v7933 = vadd.f32 %v7893, %v7906
      %v7934 = vadd.f32 %v7894, %v7908
      %v7935 = vadd.f32 %v7895, %v7910
      %v7936 = vadd.f32 %v7896, %v7912
      %v7937 = vadd.f32 %v7897, %v7914
      %v7938 = vadd.f32 %v7898, %v7916
      %v7939 = vadd.f32 %v7899, %v7918
      %v7940 = vadd.f32 %v7900, %v7920
      %7942 = vrot.lane.b32.xlu0 %v7339, 48
      %v7943 = vpop.permute.xlu0 %7942
      %7944 = vrot.lane.b32.xlu0 %v7342, 48
      %v7945 = vpop.permute.xlu0 %7944
      %7946 = vrot.lane.b32.xlu0 %v7344, 48
      %v7947 = vpop.permute.xlu0 %7946
      %7948 = vrot.lane.b32.xlu0 %v7347, 48
      %v7949 = vpop.permute.xlu0 %7948
      %7950 = vrot.lane.b32.xlu0 %v7349, 48
      %v7951 = vpop.permute.xlu0 %7950
      %7952 = vrot.lane.b32.xlu0 %v7352, 48
      %v7953 = vpop.permute.xlu0 %7952
      %7954 = vrot.lane.b32.xlu0 %v7354, 48
      %v7955 = vpop.permute.xlu0 %7954
      %7956 = vrot.lane.b32.xlu0 %v7357, 48
      %v7957 = vpop.permute.xlu0 %7956
      %7958 = vrot.lane.b32.xlu0 %v7359, 48
      %v7959 = vpop.permute.xlu0 %7958
      %7960 = vrot.lane.b32.xlu0 %v7362, 48
      %v7961 = vpop.permute.xlu0 %7960
      %v7972 = vadd.f32 %v7931, %v7943
      %v7973 = vadd.f32 %v7932, %v7945
      %v7974 = vadd.f32 %v7933, %v7947
      %v7975 = vadd.f32 %v7934, %v7949
      %v7976 = vadd.f32 %v7935, %v7951
      %v7977 = vadd.f32 %v7936, %v7953
      %v7978 = vadd.f32 %v7937, %v7955
      %v7979 = vadd.f32 %v7938, %v7957
      %v7980 = vadd.f32 %v7939, %v7959
      %v7981 = vadd.f32 %v7940, %v7961
      %v7982 = vrot.slane %v7357, 1
      %v7983 = vsel %vm1986, %v7449, %v7982
      %v7984 = vrot.slane %v7359, 1
      %v7985 = vsel %vm1986, %v7982, %v7984
      %v7986 = vrot.slane %v7362, 1
      %v7987 = vsel %vm1986, %v7984, %v7986
      %7988 = vrot.lane.b32.xlu0 %v7440, 40
      %v7989 = vpop.permute.xlu0 %7988
      %7990 = vrot.lane.b32.xlu0 %v7442, 40
      %v7991 = vpop.permute.xlu0 %7990
      %7992 = vrot.lane.b32.xlu0 %v7444, 40
      %v7993 = vpop.permute.xlu0 %7992
      %7994 = vrot.lane.b32.xlu0 %v7446, 40
      %v7995 = vpop.permute.xlu0 %7994
      %7996 = vrot.lane.b32.xlu0 %v7448, 40
      %v7997 = vpop.permute.xlu0 %7996
      %7998 = vrot.lane.b32.xlu0 %v7450, 40
      %v7999 = vpop.permute.xlu0 %7998
      %8000 = vrot.lane.b32.xlu0 %v7983, 40
      %v8001 = vpop.permute.xlu0 %8000
      %8002 = vrot.lane.b32.xlu0 %v7985, 40
      %v8003 = vpop.permute.xlu0 %8002
      %8004 = vrot.lane.b32.xlu0 %v7987, 40
      %v8005 = vpop.permute.xlu0 %8004
      %8006 = vrot.lane.b32.xlu0 %v7986, 40
      %v8007 = vpop.permute.xlu0 %8006
      %v8018 = vadd.f32 %v7972, %v7989
      %v8019 = vadd.f32 %v7973, %v7991
      %v8020 = vadd.f32 %v7974, %v7993
      %v8021 = vadd.f32 %v7975, %v7995
      %v8022 = vadd.f32 %v7976, %v7997
      %v8023 = vadd.f32 %v7977, %v7999
      %v8024 = vadd.f32 %v7978, %v8001
      %v8025 = vadd.f32 %v7979, %v8003
      %v8026 = vadd.f32 %v7980, %v8005
      %v8027 = vadd.f32 %v7981, %v8007
      %v8029 = vrot.slane %v7359, 2
      %v8030 = vsel %vm2209, %v7511, %v8029
      %v8031 = vrot.slane %v7362, 2
      %v8032 = vsel %vm2209, %v8029, %v8031
      %v8033 = vrot.slane %v7364, 2
      %v8034 = vsel %vm2209, %v8031, %v8033
      %8035 = vrot.lane.b32.xlu0 %v7500, 32
      %v8036 = vpop.permute.xlu0 %8035
      %8037 = vrot.lane.b32.xlu0 %v7502, 32
      %v8038 = vpop.permute.xlu0 %8037
      %8039 = vrot.lane.b32.xlu0 %v7504, 32
      %v8040 = vpop.permute.xlu0 %8039
      %8041 = vrot.lane.b32.xlu0 %v7506, 32
      %v8042 = vpop.permute.xlu0 %8041
      %8043 = vrot.lane.b32.xlu0 %v7508, 32
      %v8044 = vpop.permute.xlu0 %8043
      %8045 = vrot.lane.b32.xlu0 %v7510, 32
      %v8046 = vpop.permute.xlu0 %8045
      %8047 = vrot.lane.b32.xlu0 %v7512, 32
      %v8048 = vpop.permute.xlu0 %8047
      %8049 = vrot.lane.b32.xlu0 %v8030, 32
      %v8050 = vpop.permute.xlu0 %8049
      %8051 = vrot.lane.b32.xlu0 %v8032, 32
      %v8052 = vpop.permute.xlu0 %8051
      %8053 = vrot.lane.b32.xlu0 %v8034, 32
      %v8054 = vpop.permute.xlu0 %8053
      %v8065 = vadd.f32 %v8018, %v8036
      %v8066 = vadd.f32 %v8019, %v8038
      %v8067 = vadd.f32 %v8020, %v8040
      %v8068 = vadd.f32 %v8021, %v8042
      %v8069 = vadd.f32 %v8022, %v8044
      %v8070 = vadd.f32 %v8023, %v8046
      %v8071 = vadd.f32 %v8024, %v8048
      %v8072 = vadd.f32 %v8025, %v8050
      %v8073 = vadd.f32 %v8026, %v8052
      %v8074 = vadd.f32 %v8027, %v8054
      %v8075 = vrot.slane %v7359, 3
      %v8076 = vsel %vm2433, %v7572, %v8075
      %v8077 = vrot.slane %v7362, 3
      %v8078 = vsel %vm2433, %v8075, %v8077
      %v8079 = vrot.slane %v7364, 3
      %v8080 = vsel %vm2433, %v8077, %v8079
      %8081 = vrot.lane.b32.xlu0 %v7561, 24
      %v8082 = vpop.permute.xlu0 %8081
      %8083 = vrot.lane.b32.xlu0 %v7563, 24
      %v8084 = vpop.permute.xlu0 %8083
      %8085 = vrot.lane.b32.xlu0 %v7565, 24
      %v8086 = vpop.permute.xlu0 %8085
      %8087 = vrot.lane.b32.xlu0 %v7567, 24
      %v8088 = vpop.permute.xlu0 %8087
      %8089 = vrot.lane.b32.xlu0 %v7569, 24
      %v8090 = vpop.permute.xlu0 %8089
      %8091 = vrot.lane.b32.xlu0 %v7571, 24
      %v8092 = vpop.permute.xlu0 %8091
      %8093 = vrot.lane.b32.xlu0 %v7573, 24
      %v8094 = vpop.permute.xlu0 %8093
      %8095 = vrot.lane.b32.xlu0 %v8076, 24
      %v8096 = vpop.permute.xlu0 %8095
      %8097 = vrot.lane.b32.xlu0 %v8078, 24
      %v8098 = vpop.permute.xlu0 %8097
      %8099 = vrot.lane.b32.xlu0 %v8080, 24
      %v8100 = vpop.permute.xlu0 %8099
      %v8111 = vadd.f32 %v8065, %v8082
      %v8112 = vadd.f32 %v8066, %v8084
      %v8113 = vadd.f32 %v8067, %v8086
      %v8114 = vadd.f32 %v8068, %v8088
      %v8115 = vadd.f32 %v8069, %v8090
      %v8116 = vadd.f32 %v8070, %v8092
      %v8117 = vadd.f32 %v8071, %v8094
      %v8118 = vadd.f32 %v8072, %v8096
      %v8119 = vadd.f32 %v8073, %v8098
      %v8120 = vadd.f32 %v8074, %v8100
      %v8121 = vrot.slane %v7362, 4
      %v8122 = vsel %vm2657, %v7676, %v8121
      %v8123 = vrot.slane %v7364, 4
      %v8124 = vsel %vm2657, %v8121, %v8123
      %8125 = vrot.lane.b32.xlu0 %v7622, 16
      %v8126 = vpop.permute.xlu0 %8125
      %8127 = vrot.lane.b32.xlu0 %v7624, 16
      %v8128 = vpop.permute.xlu0 %8127
      %8129 = vrot.lane.b32.xlu0 %v7626, 16
      %v8130 = vpop.permute.xlu0 %8129
      %8131 = vrot.lane.b32.xlu0 %v7628, 16
      %v8132 = vpop.permute.xlu0 %8131
      %8133 = vrot.lane.b32.xlu0 %v7630, 16
      %v8134 = vpop.permute.xlu0 %8133
      %8135 = vrot.lane.b32.xlu0 %v7632, 16
      %v8136 = vpop.permute.xlu0 %8135
      %8137 = vrot.lane.b32.xlu0 %v7634, 16
      %v8138 = vpop.permute.xlu0 %8137
      %8139 = vrot.lane.b32.xlu0 %v7677, 16
      %v8140 = vpop.permute.xlu0 %8139
      %8141 = vrot.lane.b32.xlu0 %v8122, 16
      %v8142 = vpop.permute.xlu0 %8141
      %8143 = vrot.lane.b32.xlu0 %v8124, 16
      %v8144 = vpop.permute.xlu0 %8143
      %v8155 = vadd.f32 %v8111, %v8126
      %v8156 = vadd.f32 %v8112, %v8128
      %v8157 = vadd.f32 %v8113, %v8130
      %v8158 = vadd.f32 %v8114, %v8132
      %v8159 = vadd.f32 %v8115, %v8134
      %v8160 = vadd.f32 %v8116, %v8136
      %v8161 = vadd.f32 %v8117, %v8138
      %v8162 = vadd.f32 %v8118, %v8140
      %v8163 = vadd.f32 %v8119, %v8142
      %v8164 = vadd.f32 %v8120, %v8144
      %v8166 = vrot.slane %v7367, 4
      %v8167 = vsel %vm2657, %v8123, %v8166
      %8168 = vrot.lane.b32.xlu0 %v7624, 8
      %v8169 = vpop.permute.xlu0 %8168
      %8170 = vrot.lane.b32.xlu0 %v7626, 8
      %v8171 = vpop.permute.xlu0 %8170
      %8172 = vrot.lane.b32.xlu0 %v7628, 8
      %v8173 = vpop.permute.xlu0 %8172
      %8174 = vrot.lane.b32.xlu0 %v7630, 8
      %v8175 = vpop.permute.xlu0 %8174
      %8176 = vrot.lane.b32.xlu0 %v7632, 8
      %v8177 = vpop.permute.xlu0 %8176
      %8178 = vrot.lane.b32.xlu0 %v7634, 8
      %v8179 = vpop.permute.xlu0 %8178
      %8180 = vrot.lane.b32.xlu0 %v7677, 8
      %v8181 = vpop.permute.xlu0 %8180
      %8182 = vrot.lane.b32.xlu0 %v8122, 8
      %v8183 = vpop.permute.xlu0 %8182
      %8184 = vrot.lane.b32.xlu0 %v8124, 8
      %v8185 = vpop.permute.xlu0 %8184
      %8186 = vrot.lane.b32.xlu0 %v8167, 8
      %v8187 = vpop.permute.xlu0 %8186
      %v8198 = vadd.f32 %v8155, %v8169
      %v8199 = vadd.f32 %v8156, %v8171
      %v8200 = vadd.f32 %v8157, %v8173
      %v8201 = vadd.f32 %v8158, %v8175
      %v8202 = vadd.f32 %v8159, %v8177
      %v8203 = vadd.f32 %v8160, %v8179
      %v8204 = vadd.f32 %v8161, %v8181
      %v8205 = vadd.f32 %v8162, %v8183
      %v8206 = vadd.f32 %v8163, %v8185
      %v8207 = vadd.f32 %v8164, %v8187
      %v8219 = vrot.slane %v7389, 5
      %v8220 = vrot.slane %v7391, 5
      %v8221 = vsel %vm3035, %v8219, %v8220
      %v8222 = vrot.slane %v7394, 5
      %v8223 = vsel %vm3035, %v8220, %v8222
      %v8224 = vrot.slane %v7396, 5
      %v8225 = vsel %vm3035, %v8222, %v8224
      %v8226 = vrot.slane %v7399, 5
      %v8227 = vsel %vm3035, %v8224, %v8226
      %v8228 = vrot.slane %v7401, 5
      %v8229 = vsel %vm3035, %v8226, %v8228
      %v8230 = vrot.slane %v7404, 5
      %v8231 = vsel %vm3035, %v8228, %v8230
      %v8232 = vrot.slane %v7406, 5
      %v8233 = vsel %vm3035, %v8230, %v8232
      %v8234 = vrot.slane %v7409, 5
      %v8235 = vsel %vm3035, %v8232, %v8234
      %v8236 = vrot.slane %v7411, 5
      %v8237 = vsel %vm3035, %v8234, %v8236
      %v8238 = vrot.slane %v7414, 5
      %v8239 = vsel %vm3035, %v8236, %v8238
      %v8250 = vadd.f32 %v8198, %v8221
      %v8251 = vadd.f32 %v8199, %v8223
      %v8252 = vadd.f32 %v8200, %v8225
      %v8253 = vadd.f32 %v8201, %v8227
      %v8254 = vadd.f32 %v8202, %v8229
      %v8255 = vadd.f32 %v8203, %v8231
      %v8256 = vadd.f32 %v8204, %v8233
      %v8257 = vadd.f32 %v8205, %v8235
      %v8258 = vadd.f32 %v8206, %v8237
      %v8259 = vadd.f32 %v8207, %v8239
      %v8260 = vrot.slane %v7389, 6
      %v8261 = vrot.slane %v7391, 6
      %v8262 = vsel %vm3259, %v8260, %v8261
      %v8263 = vrot.slane %v7394, 6
      %v8264 = vsel %vm3259, %v8261, %v8263
      %v8265 = vrot.slane %v7396, 6
      %v8266 = vsel %vm3259, %v8263, %v8265
      %v8267 = vrot.slane %v7399, 6
      %v8268 = vsel %vm3259, %v8265, %v8267
      %v8269 = vrot.slane %v7401, 6
      %v8270 = vsel %vm3259, %v8267, %v8269
      %v8271 = vrot.slane %v7404, 6
      %v8272 = vsel %vm3259, %v8269, %v8271
      %v8273 = vrot.slane %v7406, 6
      %v8274 = vsel %vm3259, %v8271, %v8273
      %v8275 = vrot.slane %v7409, 6
      %v8276 = vsel %vm3259, %v8273, %v8275
      %v8277 = vrot.slane %v7411, 6
      %v8278 = vsel %vm3259, %v8275, %v8277
      %v8279 = vrot.slane %v7414, 6
      %v8280 = vsel %vm3259, %v8277, %v8279
      %8281 = vrot.lane.b32.xlu0 %v8262, 120
      %v8282 = vpop.permute.xlu0 %8281
      %8283 = vrot.lane.b32.xlu0 %v8264, 120
      %v8284 = vpop.permute.xlu0 %8283
      %8285 = vrot.lane.b32.xlu0 %v8266, 120
      %v8286 = vpop.permute.xlu0 %8285
      %8287 = vrot.lane.b32.xlu0 %v8268, 120
      %v8288 = vpop.permute.xlu0 %8287
      %8289 = vrot.lane.b32.xlu0 %v8270, 120
      %v8290 = vpop.permute.xlu0 %8289
      %8291 = vrot.lane.b32.xlu0 %v8272, 120
      %v8292 = vpop.permute.xlu0 %8291
      %8293 = vrot.lane.b32.xlu0 %v8274, 120
      %v8294 = vpop.permute.xlu0 %8293
      %8295 = vrot.lane.b32.xlu0 %v8276, 120
      %v8296 = vpop.permute.xlu0 %8295
      %8297 = vrot.lane.b32.xlu0 %v8278, 120
      %v8298 = vpop.permute.xlu0 %8297
      %8299 = vrot.lane.b32.xlu0 %v8280, 120
      %v8300 = vpop.permute.xlu0 %8299
      %v8311 = vadd.f32 %v8250, %v8282
      %v8312 = vadd.f32 %v8251, %v8284
      %v8313 = vadd.f32 %v8252, %v8286
      %v8314 = vadd.f32 %v8253, %v8288
      %v8315 = vadd.f32 %v8254, %v8290
      %v8316 = vadd.f32 %v8255, %v8292
      %v8317 = vadd.f32 %v8256, %v8294
      %v8318 = vadd.f32 %v8257, %v8296
      %v8319 = vadd.f32 %v8258, %v8298
      %v8320 = vadd.f32 %v8259, %v8300
      %v8321 = vrot.slane %v7389, 7
      %v8322 = vrot.slane %v7391, 7
      %v8323 = vsel %vm3521, %v8321, %v8322
      %v8324 = vrot.slane %v7394, 7
      %v8325 = vsel %vm3521, %v8322, %v8324
      %v8326 = vrot.slane %v7396, 7
      %v8327 = vsel %vm3521, %v8324, %v8326
      %v8328 = vrot.slane %v7399, 7
      %v8329 = vsel %vm3521, %v8326, %v8328
      %v8330 = vrot.slane %v7401, 7
      %v8331 = vsel %vm3521, %v8328, %v8330
      %v8332 = vrot.slane %v7404, 7
      %v8333 = vsel %vm3521, %v8330, %v8332
      %v8334 = vrot.slane %v7406, 7
      %v8335 = vsel %vm3521, %v8332, %v8334
      %v8336 = vrot.slane %v7409, 7
      %v8337 = vsel %vm3521, %v8334, %v8336
      %v8338 = vrot.slane %v7411, 7
      %v8339 = vsel %vm3521, %v8336, %v8338
      %v8340 = vrot.slane %v7414, 7
      %v8341 = vsel %vm3521, %v8338, %v8340
      %8342 = vrot.lane.b32.xlu0 %v8323, 112
      %v8343 = vpop.permute.xlu0 %8342
      %8344 = vrot.lane.b32.xlu0 %v8325, 112
      %v8345 = vpop.permute.xlu0 %8344
      %8346 = vrot.lane.b32.xlu0 %v8327, 112
      %v8347 = vpop.permute.xlu0 %8346
      %8348 = vrot.lane.b32.xlu0 %v8329, 112
      %v8349 = vpop.permute.xlu0 %8348
      %8350 = vrot.lane.b32.xlu0 %v8331, 112
      %v8351 = vpop.permute.xlu0 %8350
      %8352 = vrot.lane.b32.xlu0 %v8333, 112
      %v8353 = vpop.permute.xlu0 %8352
      %8354 = vrot.lane.b32.xlu0 %v8335, 112
      %v8355 = vpop.permute.xlu0 %8354
      %8356 = vrot.lane.b32.xlu0 %v8337, 112
      %v8357 = vpop.permute.xlu0 %8356
      %8358 = vrot.lane.b32.xlu0 %v8339, 112
      %v8359 = vpop.permute.xlu0 %8358
      %8360 = vrot.lane.b32.xlu0 %v8341, 112
      %v8361 = vpop.permute.xlu0 %8360
      %v8372 = vadd.f32 %v8311, %v8343
      %v8373 = vadd.f32 %v8312, %v8345
      %v8374 = vadd.f32 %v8313, %v8347
      %v8375 = vadd.f32 %v8314, %v8349
      %v8376 = vadd.f32 %v8315, %v8351
      %v8377 = vadd.f32 %v8316, %v8353
      %v8378 = vadd.f32 %v8317, %v8355
      %v8379 = vadd.f32 %v8318, %v8357
      %v8380 = vadd.f32 %v8319, %v8359
      %v8381 = vadd.f32 %v8320, %v8361
      %8382 = vrot.lane.b32.xlu0 %v7391, 104
      %v8383 = vpop.permute.xlu0 %8382
      %8384 = vrot.lane.b32.xlu0 %v7394, 104
      %v8385 = vpop.permute.xlu0 %8384
      %8386 = vrot.lane.b32.xlu0 %v7396, 104
      %v8387 = vpop.permute.xlu0 %8386
      %8388 = vrot.lane.b32.xlu0 %v7399, 104
      %v8389 = vpop.permute.xlu0 %8388
      %8390 = vrot.lane.b32.xlu0 %v7401, 104
      %v8391 = vpop.permute.xlu0 %8390
      %8392 = vrot.lane.b32.xlu0 %v7404, 104
      %v8393 = vpop.permute.xlu0 %8392
      %8394 = vrot.lane.b32.xlu0 %v7406, 104
      %v8395 = vpop.permute.xlu0 %8394
      %8396 = vrot.lane.b32.xlu0 %v7409, 104
      %v8397 = vpop.permute.xlu0 %8396
      %8398 = vrot.lane.b32.xlu0 %v7411, 104
      %v8399 = vpop.permute.xlu0 %8398
      %8400 = vrot.lane.b32.xlu0 %v7414, 104
      %v8401 = vpop.permute.xlu0 %8400
      %v8412 = vadd.f32 %v8372, %v8383
      %v8413 = vadd.f32 %v8373, %v8385
      %v8414 = vadd.f32 %v8374, %v8387
      %v8415 = vadd.f32 %v8375, %v8389
      %v8416 = vadd.f32 %v8376, %v8391
      %v8417 = vadd.f32 %v8377, %v8393
      %v8418 = vadd.f32 %v8378, %v8395
      %v8419 = vadd.f32 %v8379, %v8397
      %v8420 = vadd.f32 %v8380, %v8399
      %v8421 = vadd.f32 %v8381, %v8401
      %8423 = vrot.lane.b32.xlu0 %v7394, 96
      %v8424 = vpop.permute.xlu0 %8423
      %8425 = vrot.lane.b32.xlu0 %v7396, 96
      %v8426 = vpop.permute.xlu0 %8425
      %8427 = vrot.lane.b32.xlu0 %v7399, 96
      %v8428 = vpop.permute.xlu0 %8427
      %8429 = vrot.lane.b32.xlu0 %v7401, 96
      %v8430 = vpop.permute.xlu0 %8429
      %8431 = vrot.lane.b32.xlu0 %v7404, 96
      %v8432 = vpop.permute.xlu0 %8431
      %8433 = vrot.lane.b32.xlu0 %v7406, 96
      %v8434 = vpop.permute.xlu0 %8433
      %8435 = vrot.lane.b32.xlu0 %v7409, 96
      %v8436 = vpop.permute.xlu0 %8435
      %8437 = vrot.lane.b32.xlu0 %v7411, 96
      %v8438 = vpop.permute.xlu0 %8437
      %8439 = vrot.lane.b32.xlu0 %v7414, 96
      %v8440 = vpop.permute.xlu0 %8439
      %8441 = vrot.lane.b32.xlu0 %v7416, 96
      %v8442 = vpop.permute.xlu0 %8441
      %v8453 = vadd.f32 %v8412, %v8424
      %v8454 = vadd.f32 %v8413, %v8426
      %v8455 = vadd.f32 %v8414, %v8428
      %v8456 = vadd.f32 %v8415, %v8430
      %v8457 = vadd.f32 %v8416, %v8432
      %v8458 = vadd.f32 %v8417, %v8434
      %v8459 = vadd.f32 %v8418, %v8436
      %v8460 = vadd.f32 %v8419, %v8438
      %v8461 = vadd.f32 %v8420, %v8440
      %v8462 = vadd.f32 %v8421, %v8442
      %v8463 = vrot.slane %v7394, 1
      %v8464 = vrot.slane %v7396, 1
      %v8465 = vsel %vm1986, %v8463, %v8464
      %v8466 = vrot.slane %v7399, 1
      %v8467 = vsel %vm1986, %v8464, %v8466
      %v8468 = vrot.slane %v7401, 1
      %v8469 = vsel %vm1986, %v8466, %v8468
      %v8470 = vrot.slane %v7404, 1
      %v8471 = vsel %vm1986, %v8468, %v8470
      %v8472 = vrot.slane %v7406, 1
      %v8473 = vsel %vm1986, %v8470, %v8472
      %v8474 = vrot.slane %v7409, 1
      %v8475 = vsel %vm1986, %v8472, %v8474
      %v8476 = vrot.slane %v7411, 1
      %v8477 = vsel %vm1986, %v8474, %v8476
      %v8478 = vrot.slane %v7414, 1
      %v8479 = vsel %vm1986, %v8476, %v8478
      %v8480 = vrot.slane %v7416, 1
      %v8481 = vsel %vm1986, %v8478, %v8480
      %8482 = vrot.lane.b32.xlu0 %v8465, 88
      %v8483 = vpop.permute.xlu0 %8482
      %8484 = vrot.lane.b32.xlu0 %v8467, 88
      %v8485 = vpop.permute.xlu0 %8484
      %8486 = vrot.lane.b32.xlu0 %v8469, 88
      %v8487 = vpop.permute.xlu0 %8486
      %8488 = vrot.lane.b32.xlu0 %v8471, 88
      %v8489 = vpop.permute.xlu0 %8488
      %8490 = vrot.lane.b32.xlu0 %v8473, 88
      %v8491 = vpop.permute.xlu0 %8490
      %8492 = vrot.lane.b32.xlu0 %v8475, 88
      %v8493 = vpop.permute.xlu0 %8492
      %8494 = vrot.lane.b32.xlu0 %v8477, 88
      %v8495 = vpop.permute.xlu0 %8494
      %8496 = vrot.lane.b32.xlu0 %v8479, 88
      %v8497 = vpop.permute.xlu0 %8496
      %8498 = vrot.lane.b32.xlu0 %v8481, 88
      %v8499 = vpop.permute.xlu0 %8498
      %8500 = vrot.lane.b32.xlu0 %v8480, 88
      %v8501 = vpop.permute.xlu0 %8500
      %v8512 = vadd.f32 %v8453, %v8483
      %v8513 = vadd.f32 %v8454, %v8485
      %v8514 = vadd.f32 %v8455, %v8487
      %v8515 = vadd.f32 %v8456, %v8489
      %v8516 = vadd.f32 %v8457, %v8491
      %v8517 = vadd.f32 %v8458, %v8493
      %v8518 = vadd.f32 %v8459, %v8495
      %v8519 = vadd.f32 %v8460, %v8497
      %v8520 = vadd.f32 %v8461, %v8499
      %v8521 = vadd.f32 %v8462, %v8501
      %v8523 = vrot.slane %v7394, 2
      %v8524 = vrot.slane %v7396, 2
      %v8525 = vsel %vm2209, %v8523, %v8524
      %v8526 = vrot.slane %v7399, 2
      %v8527 = vsel %vm2209, %v8524, %v8526
      %v8528 = vrot.slane %v7401, 2
      %v8529 = vsel %vm2209, %v8526, %v8528
      %v8530 = vrot.slane %v7404, 2
      %v8531 = vsel %vm2209, %v8528, %v8530
      %v8532 = vrot.slane %v7406, 2
      %v8533 = vsel %vm2209, %v8530, %v8532
      %v8534 = vrot.slane %v7409, 2
      %v8535 = vsel %vm2209, %v8532, %v8534
      %v8536 = vrot.slane %v7411, 2
      %v8537 = vsel %vm2209, %v8534, %v8536
      %v8538 = vrot.slane %v7414, 2
      %v8539 = vsel %vm2209, %v8536, %v8538
      %v8540 = vrot.slane %v7416, 2
      %v8541 = vsel %vm2209, %v8538, %v8540
      %v8542 = vrot.slane %v7419, 2
      %v8543 = vsel %vm2209, %v8540, %v8542
      %8544 = vrot.lane.b32.xlu0 %v8525, 80
      %v8545 = vpop.permute.xlu0 %8544
      %8546 = vrot.lane.b32.xlu0 %v8527, 80
      %v8547 = vpop.permute.xlu0 %8546
      %8548 = vrot.lane.b32.xlu0 %v8529, 80
      %v8549 = vpop.permute.xlu0 %8548
      %8550 = vrot.lane.b32.xlu0 %v8531, 80
      %v8551 = vpop.permute.xlu0 %8550
      %8552 = vrot.lane.b32.xlu0 %v8533, 80
      %v8553 = vpop.permute.xlu0 %8552
      %8554 = vrot.lane.b32.xlu0 %v8535, 80
      %v8555 = vpop.permute.xlu0 %8554
      %8556 = vrot.lane.b32.xlu0 %v8537, 80
      %v8557 = vpop.permute.xlu0 %8556
      %8558 = vrot.lane.b32.xlu0 %v8539, 80
      %v8559 = vpop.permute.xlu0 %8558
      %8560 = vrot.lane.b32.xlu0 %v8541, 80
      %v8561 = vpop.permute.xlu0 %8560
      %8562 = vrot.lane.b32.xlu0 %v8543, 80
      %v8563 = vpop.permute.xlu0 %8562
      %v8574 = vadd.f32 %v8512, %v8545
      %v8575 = vadd.f32 %v8513, %v8547
      %v8576 = vadd.f32 %v8514, %v8549
      %v8577 = vadd.f32 %v8515, %v8551
      %v8578 = vadd.f32 %v8516, %v8553
      %v8579 = vadd.f32 %v8517, %v8555
      %v8580 = vadd.f32 %v8518, %v8557
      %v8581 = vadd.f32 %v8519, %v8559
      %v8582 = vadd.f32 %v8520, %v8561
      %v8583 = vadd.f32 %v8521, %v8563
      %v8584 = vrot.slane %v7394, 3
      %v8585 = vrot.slane %v7396, 3
      %v8586 = vsel %vm2433, %v8584, %v8585
      %v8587 = vrot.slane %v7399, 3
      %v8588 = vsel %vm2433, %v8585, %v8587
      %v8589 = vrot.slane %v7401, 3
      %v8590 = vsel %vm2433, %v8587, %v8589
      %v8591 = vrot.slane %v7404, 3
      %v8592 = vsel %vm2433, %v8589, %v8591
      %v8593 = vrot.slane %v7406, 3
      %v8594 = vsel %vm2433, %v8591, %v8593
      %v8595 = vrot.slane %v7409, 3
      %v8596 = vsel %vm2433, %v8593, %v8595
      %v8597 = vrot.slane %v7411, 3
      %v8598 = vsel %vm2433, %v8595, %v8597
      %v8599 = vrot.slane %v7414, 3
      %v8600 = vsel %vm2433, %v8597, %v8599
      %v8601 = vrot.slane %v7416, 3
      %v8602 = vsel %vm2433, %v8599, %v8601
      %v8603 = vrot.slane %v7419, 3
      %v8604 = vsel %vm2433, %v8601, %v8603
      %8605 = vrot.lane.b32.xlu0 %v8586, 72
      %v8606 = vpop.permute.xlu0 %8605
      %8607 = vrot.lane.b32.xlu0 %v8588, 72
      %v8608 = vpop.permute.xlu0 %8607
      %8609 = vrot.lane.b32.xlu0 %v8590, 72
      %v8610 = vpop.permute.xlu0 %8609
      %8611 = vrot.lane.b32.xlu0 %v8592, 72
      %v8612 = vpop.permute.xlu0 %8611
      %8613 = vrot.lane.b32.xlu0 %v8594, 72
      %v8614 = vpop.permute.xlu0 %8613
      %8615 = vrot.lane.b32.xlu0 %v8596, 72
      %v8616 = vpop.permute.xlu0 %8615
      %8617 = vrot.lane.b32.xlu0 %v8598, 72
      %v8618 = vpop.permute.xlu0 %8617
      %8619 = vrot.lane.b32.xlu0 %v8600, 72
      %v8620 = vpop.permute.xlu0 %8619
      %8621 = vrot.lane.b32.xlu0 %v8602, 72
      %v8622 = vpop.permute.xlu0 %8621
      %8623 = vrot.lane.b32.xlu0 %v8604, 72
      %v8624 = vpop.permute.xlu0 %8623
      %v8635 = vadd.f32 %v8574, %v8606
      %v8636 = vadd.f32 %v8575, %v8608
      %v8637 = vadd.f32 %v8576, %v8610
      %v8638 = vadd.f32 %v8577, %v8612
      %v8639 = vadd.f32 %v8578, %v8614
      %v8640 = vadd.f32 %v8579, %v8616
      %v8641 = vadd.f32 %v8580, %v8618
      %v8642 = vadd.f32 %v8581, %v8620
      %v8643 = vadd.f32 %v8582, %v8622
      %v8644 = vadd.f32 %v8583, %v8624
      %v8645 = vrot.slane %v7394, 4
      %v8646 = vrot.slane %v7396, 4
      %v8647 = vsel %vm2657, %v8645, %v8646
      %v8648 = vrot.slane %v7399, 4
      %v8649 = vsel %vm2657, %v8646, %v8648
      %v8650 = vrot.slane %v7401, 4
      %v8651 = vsel %vm2657, %v8648, %v8650
      %v8652 = vrot.slane %v7404, 4
      %v8653 = vsel %vm2657, %v8650, %v8652
      %v8654 = vrot.slane %v7406, 4
      %v8655 = vsel %vm2657, %v8652, %v8654
      %v8656 = vrot.slane %v7409, 4
      %v8657 = vsel %vm2657, %v8654, %v8656
      %v8658 = vrot.slane %v7411, 4
      %v8659 = vsel %vm2657, %v8656, %v8658
      %v8660 = vrot.slane %v7414, 4
      %v8661 = vsel %vm2657, %v8658, %v8660
      %v8662 = vrot.slane %v7416, 4
      %v8663 = vsel %vm2657, %v8660, %v8662
      %v8664 = vrot.slane %v7419, 4
      %v8665 = vsel %vm2657, %v8662, %v8664
      %8666 = vrot.lane.b32.xlu0 %v8647, 64
      %v8667 = vpop.permute.xlu0 %8666
      %8668 = vrot.lane.b32.xlu0 %v8649, 64
      %v8669 = vpop.permute.xlu0 %8668
      %8670 = vrot.lane.b32.xlu0 %v8651, 64
      %v8671 = vpop.permute.xlu0 %8670
      %8672 = vrot.lane.b32.xlu0 %v8653, 64
      %v8673 = vpop.permute.xlu0 %8672
      %8674 = vrot.lane.b32.xlu0 %v8655, 64
      %v8675 = vpop.permute.xlu0 %8674
      %8676 = vrot.lane.b32.xlu0 %v8657, 64
      %v8677 = vpop.permute.xlu0 %8676
      %8678 = vrot.lane.b32.xlu0 %v8659, 64
      %v8679 = vpop.permute.xlu0 %8678
      %8680 = vrot.lane.b32.xlu0 %v8661, 64
      %v8681 = vpop.permute.xlu0 %8680
      %8682 = vrot.lane.b32.xlu0 %v8663, 64
      %v8683 = vpop.permute.xlu0 %8682
      %8684 = vrot.lane.b32.xlu0 %v8665, 64
      %v8685 = vpop.permute.xlu0 %8684
      %v8696 = vadd.f32 %v8635, %v8667
      %v8697 = vadd.f32 %v8636, %v8669
      %v8698 = vadd.f32 %v8637, %v8671
      %v8699 = vadd.f32 %v8638, %v8673
      %v8700 = vadd.f32 %v8639, %v8675
      %v8701 = vadd.f32 %v8640, %v8677
      %v8702 = vadd.f32 %v8641, %v8679
      %v8703 = vadd.f32 %v8642, %v8681
      %v8704 = vadd.f32 %v8643, %v8683
      %v8705 = vadd.f32 %v8644, %v8685
      %v8706 = vld [vmem:[%s10] sm:$0xff]
      %v8707 = vld [vmem:[%s10 + $0x8] sm:$0xff]
      %v8708 = vld [vmem:[%s9] sm:$0x1]
      %v8710 = vperm.slane %v8708, 0
      %vm8712 = vcmask 646144
      %v8714 = vsel %vm8712, %v8706, 0
      %v8717 = vsel %vm8712, %v8707, 0
      %v8720 = vsel %vm1986, %v8705, 0
      %8722 = vmatpush.msra.mxu0 0.0
      %8723 = vmatpush.msra.mxu0 0.0
      %8724 = vmatpush.msra.mxu0 0.0
      %8725 = vmatpush.msra.mxu0 0.0
      %8726 = vmatpush.msra.mxu0 0.0
      %8727 = vmatpush.msra.mxu0 0.0
      %8728 = vmatpush.msra.mxu0 %v8720
      %8729 = vmatpush.msra.mxu0 %v8704
      %8730 = vmatpush.msra.mxu0 %v8703
      %8731 = vmatpush.msra.mxu0 %v8702
      %8732 = vmatpush.msra.mxu0 %v8701
      %8733 = vmatpush.msra.mxu0 %v8700
      %8734 = vmatpush.msra.mxu0 %v8699
      %8735 = vmatpush.msra.mxu0 %v8698
      %8736 = vmatpush.msra.mxu0 %v8697
      %8737 = vmatpush.msra.mxu0 %v8696
      %8738 = vmatmul.f32.gmra.mxu0 %v8714
      %v8739 = vpop.f32.mrf.mxu0
      %v8740 = vadd.f32 %v8710, %v8739
      %8741 = vmatmul.f32.gmra.mxu0 %v8717
      %v8742 = vpop.f32.mrf.mxu0
      %v8743 = vadd.f32 %v8710, %v8742
      %8744 = vdwg.mxu0
      %v8745 = vmax.f32 %v8740, 0.0
      %v8746 = vmax.f32 %v8743, 0.0
      %v8747 = vld [vmem:[%s12] sm:$0x1]
      %v8748 = vld [vmem:[%s13] sm:$0x1]
      %v8749 = vld [vmem:[#allocation2] sm:$0x1]
      %v8750 = vld [vmem:[%s11] sm:$0xff]
      %v8751 = vld [vmem:[%s11 + $0x8] sm:$0xff]
      %v8752 = vmul.f32 %v8745, %v8750
      %v8753 = vmul.f32 %v8746, %v8751
      %vm8754 = vcmask 64512
      %v8755 = vsel %vm8754, %v8752, 0.0
      %8756 = vadd.xlane.f32.xlu0 %v8755
      %v8757 = vpop.xlane.xlu0 %8756
      %v8758 = vsel %vm8754, %v8753, 0.0
      %8759 = vadd.xlane.f32.xlu0 %v8758
      %v8760 = vpop.xlane.xlu0 %8759
      %v8761 = vadd.f32 %v8757, %v8760
      %v8762 = vrot.slane %v8761, 4
      %v8763 = vadd.f32 %v8761, %v8762
      %v8764 = vrot.slane %v8763, 2
      %v8765 = vadd.f32 %v8763, %v8764
      %v8766 = vrot.slane %v8765, 1
      %v8767 = vadd.f32 %v8765, %v8766
      %v8768 = vadd.f32 %v8767, %v8747
      %v8769 = vmax.f32 %v8768, 0.0
      %v8770 = vmul.f32 %v8769, %v8748
      %v8771 = vadd.f32 %v8749, %v8770
      %s8772 = scalar_lea.vmem %s11, 16
      %v8773 = vld [vmem:[%s8772] sm:$0xff]
      %v8774 = vld [vmem:[%s8772 + $0x8] sm:$0xff]
      %v8775 = vmul.f32 %v8745, %v8773
      %v8776 = vmul.f32 %v8746, %v8774
      %v8777 = vsel %vm8754, %v8775, 0.0
      %8778 = vadd.xlane.f32.xlu0 %v8777
      %v8779 = vpop.xlane.xlu0 %8778
      %v8780 = vsel %vm8754, %v8776, 0.0
      %8781 = vadd.xlane.f32.xlu0 %v8780
      %v8782 = vpop.xlane.xlu0 %8781
      %v8783 = vadd.f32 %v8779, %v8782
      %v8784 = vrot.slane %v8783, 4
      %v8785 = vadd.f32 %v8783, %v8784
      %v8786 = vrot.slane %v8785, 2
      %v8787 = vadd.f32 %v8785, %v8786
      %v8788 = vrot.slane %v8787, 1
      %v8789 = vadd.f32 %v8787, %v8788
      %v8790 = vadd.f32 %v8789, %v8747
      %v8791 = vmax.f32 %v8790, 0.0
      %v8792 = vmul.f32 %v8791, %v8748
      %8794 = vrot.lane.b32.xlu0 %v8792, 127
      %v8795 = vpop.permute.xlu0 %8794
      %v8797 = vadd.f32 %v8771, %v8795
      %s8798 = scalar_lea.vmem %s11, 32
      %v8799 = vld [vmem:[%s8798] sm:$0xff]
      %v8800 = vld [vmem:[%s8798 + $0x8] sm:$0xff]
      %v8801 = vmul.f32 %v8745, %v8799
      %v8802 = vmul.f32 %v8746, %v8800
      %v8803 = vsel %vm8754, %v8801, 0.0
      %8804 = vadd.xlane.f32.xlu0 %v8803
      %v8805 = vpop.xlane.xlu0 %8804
      %v8806 = vsel %vm8754, %v8802, 0.0
      %8807 = vadd.xlane.f32.xlu0 %v8806
      %v8808 = vpop.xlane.xlu0 %8807
      %v8809 = vadd.f32 %v8805, %v8808
      %v8810 = vrot.slane %v8809, 4
      %v8811 = vadd.f32 %v8809, %v8810
      %v8812 = vrot.slane %v8811, 2
      %v8813 = vadd.f32 %v8811, %v8812
      %v8814 = vrot.slane %v8813, 1
      %v8815 = vadd.f32 %v8813, %v8814
      %v8816 = vadd.f32 %v8815, %v8747
      %v8817 = vmax.f32 %v8816, 0.0
      %v8818 = vmul.f32 %v8817, %v8748
      %8820 = vrot.lane.b32.xlu0 %v8818, 126
      %v8821 = vpop.permute.xlu0 %8820
      %v8823 = vadd.f32 %v8797, %v8821
      %s8824 = scalar_lea.vmem %s11, 48
      %v8825 = vld [vmem:[%s8824] sm:$0xff]
      %v8826 = vld [vmem:[%s8824 + $0x8] sm:$0xff]
      %v8827 = vmul.f32 %v8745, %v8825
      %v8828 = vmul.f32 %v8746, %v8826
      %v8829 = vsel %vm8754, %v8827, 0.0
      %8830 = vadd.xlane.f32.xlu0 %v8829
      %v8831 = vpop.xlane.xlu0 %8830
      %v8832 = vsel %vm8754, %v8828, 0.0
      %8833 = vadd.xlane.f32.xlu0 %v8832
      %v8834 = vpop.xlane.xlu0 %8833
      %v8835 = vadd.f32 %v8831, %v8834
      %v8836 = vrot.slane %v8835, 4
      %v8837 = vadd.f32 %v8835, %v8836
      %v8838 = vrot.slane %v8837, 2
      %v8839 = vadd.f32 %v8837, %v8838
      %v8840 = vrot.slane %v8839, 1
      %v8841 = vadd.f32 %v8839, %v8840
      %v8842 = vadd.f32 %v8841, %v8747
      %v8843 = vmax.f32 %v8842, 0.0
      %v8844 = vmul.f32 %v8843, %v8748
      %8846 = vrot.lane.b32.xlu0 %v8844, 125
      %v8847 = vpop.permute.xlu0 %8846
      %v8849 = vadd.f32 %v8823, %v8847
      %vm8850 = vcmask 0
      %8851 = vst.msk [vmem:[%s492] sm:$0x1] %vm8850, %v8849
      %p8852 = scmp.lt.s32.totalorder %s28, 1
      %s8853 = scalar_select %p8852, %s28, 1
      %s8854 = scalar_lea.vmem %s15, %s8853
      // Predicated region
      $region81: #{discriminator_forward.1} parent=79 // pred_check
        %p8855 = pneg %p366
      $region82: #{discriminator_forward.1} parent=79 // pred_check_branch
        %8857 = sbr.rel (%p8855) target = $region84
      $region83: #{discriminator_forward.1} parent=79 // pred_region
        _
      $region84: #{discriminator_forward.1} parent=79 // pred_fallthru
        _
    $region80: #{discriminator_forward.1} parent=5 // pred_fallthru
      _
    %p8858 = scmp.le.s32.totalorder 2, %s23
    // Predicated region
    $region85: #{discriminator_forward.1} parent=5 // pred_check
      %p8859 = pneg %p8858
    $region86: #{discriminator_forward.1} parent=5 // pred_check_branch
      %8861 = sbr.rel (%p8859) target = $region88
    $region87: #{discriminator_forward.1} parent=5 // pred_region
      %s8862 = ssub.s32 %s23, 2
      // Predicated region
      $region89: #{discriminator_forward.1} parent=87 // pred_check
        %p8863 = pneg %p372
      $region90: #{discriminator_forward.1} parent=87 // pred_check_branch
        %8865 = sbr.rel (%p8863) target = $region92
      $region91: #{discriminator_forward.1} parent=87 // pred_region
        %p8866 = scmp.lt.s32.totalorder %s29, 1
        %s8867 = scalar_select %p8866, %s29, 1
        %s8868 = scalar_lea.vmem %s15, %s8867
      $region92: #{discriminator_forward.1} parent=87 // pred_fallthru
        _
    $region88: #{discriminator_forward.1} parent=5 // pred_fallthru
      _
  $region6: #{discriminator_forward.1} parent=0 // loop_footer
    %s27 = sadd.s32 1, %s23
  $region7: #{discriminator_forward.1} parent=0 // loop_footer_branch
    %22 = sbr.rel target = $region3
  $region8: #{discriminator_forward.1} parent=0 // loop_exit
    _

</llo_original>
